<compile_context>
chip_gen: v7x
topology: tpu7x:2x2x1
jax: 0.10.0
libtpu: 0.0.40
codegen_flags: <defaults>
</compile_context>

<pallas_src>
import functools

import jax
import jax.numpy as jnp
from jax import lax
from jax.experimental import pallas as pl
from jax.experimental.pallas import tpu as pltpu

F32 = jnp.float32
BF16 = jnp.bfloat16
BN_EPS = 1e-5


def _round_up(x, m):
    return ((x + m - 1) // m) * m


def _vmem_limit(nbytes, lo=32 * 1024 * 1024, hi=56 * 1024 * 1024):
    # computed budget, clamped below v7x's 64 MiB physical VMEM
    return int(min(max(nbytes, lo), hi))


# ----------------------------------------------------------------------------
# Kernel 1: fused 4-layer MLP.  BN + linear bias pre-folded host-side, so each
# layer is:  bf16 matmul (f32 accumulate) -> + bias -> relu.
# ----------------------------------------------------------------------------
def _mlp_kernel(x_ref, w1, b1, w2, b2, w3, b3, w4, b4, o_ref):
    h = jnp.dot(x_ref[...], w1[...], preferred_element_type=F32) + b1[...]
    h = jnp.maximum(h, 0.0)
    h = jnp.dot(h.astype(BF16), w2[...], preferred_element_type=F32) + b2[...]
    h = jnp.maximum(h, 0.0)
    h = jnp.dot(h.astype(BF16), w3[...], preferred_element_type=F32) + b3[...]
    h = jnp.maximum(h, 0.0)
    h = jnp.dot(h.astype(BF16), w4[...], preferred_element_type=F32) + b4[...]
    o_ref[...] = jnp.maximum(h, 0.0)


def mlp_forward(x, p, *, rows_pad=None, cols_pad=None):
    """x: (n, in_dim) f32.  Returns (rows_pad, cols_pad) f32 (zero-padded)."""
    n, in_dim = x.shape
    out_dim = p["w4"].shape[1]
    rows = rows_pad if rows_pad is not None else _round_up(n, 128)
    cols = cols_pad if cols_pad is not None else _round_up(out_dim, 128)
    in_pad = _round_up(in_dim, 128)
    tile_m = 256 if rows % 256 == 0 else 128
    assert rows % tile_m == 0

    # ---- host-side prep: fold BN + bias, pad to lane-aligned shapes, cast ----
    def fold(w, b, g, be, rm, rv):
        s = g / jnp.sqrt(rv + BN_EPS)                 # f32 fold, before bf16 cast
        return w * s.reshape(1, -1), s * (b - rm) + be

    w1f, b1f = fold(p["w1"], p["b1"], p["g1"], p["be1"], p["rm1"], p["rv1"])
    w2f, b2f = fold(p["w2"], p["b2"], p["g2"], p["be2"], p["rm2"], p["rv2"])
    w3f, b3f = fold(p["w3"], p["b3"], p["g3"], p["be3"], p["rm3"], p["rv3"])
    w4f, b4f = p["w4"], p["b4"]

    if rows > n or in_pad > in_dim:
        x = jnp.pad(x, ((0, rows - n), (0, in_pad - in_dim)))
    if in_pad > in_dim:
        w1f = jnp.pad(w1f, ((0, in_pad - in_dim), (0, 0)))
    if cols > out_dim:
        w4f = jnp.pad(w4f, ((0, 0), (0, cols - out_dim)))
        b4f = jnp.pad(b4f, ((0, cols - out_dim),))

    x = x.astype(BF16)
    w1f, w2f, w3f, w4f = (w.astype(BF16) for w in (w1f, w2f, w3f, w4f))
    b1f, b2f, b3f, b4f = (b.reshape(1, -1).astype(F32)
                          for b in (b1f, b2f, b3f, b4f))

    args = (x, w1f, b1f, w2f, b2f, w3f, b3f, w4f, b4f)

    def resident(a):
        # whole array stays resident in VMEM across the entire row grid
        return pl.BlockSpec(a.shape, lambda i: (0, 0))

    in_specs = [pl.BlockSpec((tile_m, in_pad), lambda i: (i, 0))]
    in_specs += [resident(a) for a in args[1:]]

    w_bytes = sum(int(w.size) * 2 for w in (w1f, w2f, w3f, w4f)) \
        + sum(int(b.size) * 4 for b in (b1f, b2f, b3f, b4f))
    budget = (w_bytes
              + 2 * tile_m * in_pad * 2            # double-buffered x tile
              + 2 * tile_m * cols * 4              # double-buffered out tile
              + tile_m * (512 + 1024 + 512 + cols) * 4   # f32 intermediates
              + tile_m * (1024 + cols) * 2               # bf16 casts
              + (4 << 20))

    return pl.pallas_call(
        _mlp_kernel,
        out_shape=jax.ShapeDtypeStruct((rows, cols), F32),
        grid=(rows // tile_m,),
        in_specs=in_specs,
        out_specs=pl.BlockSpec((tile_m, cols), lambda i: (i, 0)),
        compiler_params=pltpu.CompilerParams(
            dimension_semantics=("parallel",),
            vmem_limit_bytes=_vmem_limit(budget)),
    )(*args)


# ----------------------------------------------------------------------------
# Kernel 2: streamed per-row top-k mean of  sim = 1 - (A + B^T)
#   called with (px, py) -> CSLS column statistics (no full transpose needed)
# ----------------------------------------------------------------------------
def _row_topk_kernel(a_ref, b_ref, nv_ref, *, k, n_valid):
    # sim[r, c] = 1 - (A[g, c] + B[c, g]),  g = program_id(0) * TILE_R + r
    sim = 1.0 - (a_ref[...] + b_ref[...].T)           # (TILE_R, NP)
    npad = sim.shape[1]
    if n_valid < npad:                                # mask padded columns
        col = lax.broadcasted_iota(jnp.int32, (1, npad), 1)
        sim = jnp.where(col < n_valid, sim, -jnp.inf)
    acc = jnp.zeros((sim.shape[0], 1), F32)
    cur = sim
    for _ in range(k):                                # top-k via max + mask
        m = jnp.max(cur, axis=1, keepdims=True)
        acc = acc + m
        cur = jnp.where(cur == m, -jnp.inf, cur)
    nv_ref[...] = acc * (1.0 / float(k))


def row_topk_mean(a, b, *, k, n_valid, tile_r=128):
    npad = a.shape[0]
    assert a.shape == b.shape == (npad, npad) and npad % tile_r == 0
    strip = tile_r * npad * 4
    budget = 2 * 2 * strip + 6 * strip + (4 << 20)
    kern = functools.partial(_row_topk_kernel, k=k, n_valid=n_valid)
    return pl.pallas_call(
        kern,
        out_shape=jax.ShapeDtypeStruct((npad, 1), F32),
        grid=(npad // tile_r,),
        in_specs=[pl.BlockSpec((tile_r, npad), lambda i: (i, 0)),   # A row strip
                  pl.BlockSpec((npad, tile_r), lambda i: (0, i))],  # B col strip
        out_specs=pl.BlockSpec((tile_r, 1), lambda i: (i, 0)),
        compiler_params=pltpu.CompilerParams(
            dimension_semantics=("parallel",),
            vmem_limit_bytes=_vmem_limit(budget)),
    )(a, b)


# ----------------------------------------------------------------------------
# Kernel 3: streamed CSLS + MSE + relative-rank loss (scalar output).
# The CSLS row statistic (top-k mean over columns) is strip-local, so it is
# computed inline here instead of in a separate streaming pass.
# ----------------------------------------------------------------------------
def _loss_kernel(py_ref, px_ref, pyd_ref, pxd_ref, tgt_ref,
                 nvc_row_ref, nvc_blk_ref,
                 loss_ref, mse_acc, rank_acc, *, k, n_valid, weight):
    i = pl.program_id(0)
    tr, npad = py_ref.shape

    @pl.when(i == 0)
    def _init():
        mse_acc[...] = jnp.zeros_like(mse_acc)
        rank_acc[...] = jnp.zeros_like(rank_acc)

    # similarity strip: sim[r, c] = 1 - (py[g, c] + px[c, g]),  g = i*tr + r
    sim = 1.0 - (py_ref[...] + px_ref[...].T)          # (TR, NP)

    col = lax.broadcasted_iota(jnp.int32, (1, npad), 1)            # (1, NP)
    g = lax.broadcasted_iota(jnp.int32, (tr, 1), 0) + i * tr       # (TR, 1)
    col_valid = col < n_valid
    row_valid = g < n_valid

    # --- inline CSLS row statistic: top-k mean over valid columns ---
    cur = jnp.where(col_valid, sim, -jnp.inf) if n_valid < npad else sim
    acc = jnp.zeros((tr, 1), F32)
    for _ in range(k):
        m = jnp.max(cur, axis=1, keepdims=True)
        acc = acc + m
        cur = jnp.where(cur == m, -jnp.inf, cur)
    nvr = acc * (1.0 / float(k))                       # (TR, 1)

    # --- CSLS + back to distance ---
    csls = 2.0 * sim - nvr - nvc_row_ref[...]          # (TR, NP)
    pred_d = 1.0 - csls

    # --- MSE partial sums (per local row, accumulated across strips) ---
    diff = pred_d - tgt_ref[...]
    if n_valid < npad:
        diff = jnp.where(jnp.logical_and(col_valid, row_valid), diff, 0.0)
    mse_acc[...] += jnp.sum(diff * diff, axis=1, keepdims=True)

    # --- diagonal entries pred_d[g, g] from the (TR, TR) diagonal blocks ---
    er = lax.broadcasted_iota(jnp.int32, (tr, 1), 0)
    ec = lax.broadcasted_iota(jnp.int32, (1, tr), 1)
    eye = er == ec
    pred_diag = jnp.sum(jnp.where(eye, pyd_ref[...] + pxd_ref[...], 0.0),
                        axis=1, keepdims=True)         # (TR, 1) = py[g,g]+px[g,g]
    d = 1.0 - (2.0 * (1.0 - pred_diag) - nvr - nvc_blk_ref[...])   # pred_d[g, g]

    # --- stable-sort rank of the diagonal within each row ---
    less = (pred_d < d).astype(F32)
    ties = jnp.logical_and(pred_d == d, col < g).astype(F32)
    contrib = less + ties
    if n_valid < npad:
        contrib = jnp.where(col_valid, contrib, 0.0)
    rank = jnp.sum(contrib, axis=1, keepdims=True)     # (TR, 1)
    if n_valid < npad:
        rank = jnp.where(row_valid, rank, 0.0)
    rank_acc[...] += rank

    @pl.when(i == pl.num_programs(0) - 1)
    def _finalize():
        n_f = float(n_valid)
        mse = jnp.sum(mse_acc[...]) / (n_f * n_f)
        # torch loops over test_left AND test_right, both reading
        # pred_distance[idx, :]  ->  relative = 2*sum(rank)/n, averaged over 2n.
        avg_rel = jnp.sum(rank_acc[...]) / (n_f * n_f)
        loss_ref[0, 0] = mse + float(weight) * avg_rel


def ranker_loss(pred_y, pred_x, target, nv_col, *, csls_k, n_valid,
                weight=2.0, tile_r=128):
    npad = pred_y.shape[0]
    assert npad % tile_r == 0
    nvc_row = nv_col.reshape(1, npad)
    strip = tile_r * npad * 4
    budget = 3 * 2 * strip + 8 * strip + (4 << 20)
    kern = functools.partial(_loss_kernel, k=csls_k, n_valid=n_valid,
                             weight=weight)
    out = pl.pallas_call(
        kern,
        out_shape=jax.ShapeDtypeStruct((1, 1), F32),
        grid=(npad // tile_r,),
        in_specs=[
            pl.BlockSpec((tile_r, npad), lambda i: (i, 0)),    # pred_y row strip
            pl.BlockSpec((npad, tile_r), lambda i: (0, i)),    # pred_x col strip
            pl.BlockSpec((tile_r, tile_r), lambda i: (i, i)),  # pred_y diag block
            pl.BlockSpec((tile_r, tile_r), lambda i: (i, i)),  # pred_x diag block
            pl.BlockSpec((tile_r, npad), lambda i: (i, 0)),    # target row strip
            pl.BlockSpec((1, npad), lambda i: (0, 0)),         # nv_col (row vector)
            pl.BlockSpec((tile_r, 1), lambda i: (i, 0)),       # nv_col (col layout)
        ],
        out_specs=pl.BlockSpec((1, 1), lambda i: (0, 0)),
        scratch_shapes=[pltpu.VMEM((tile_r, 1), F32),
                        pltpu.VMEM((tile_r, 1), F32)],
        compiler_params=pltpu.CompilerParams(
            dimension_semantics=("arbitrary",),
            vmem_limit_bytes=_vmem_limit(budget)),
    )(pred_y, pred_x, pred_y, pred_x, target, nvc_row, nv_col)
    return out[0, 0]


# ----------------------------------------------------------------------------
# Deterministic parameter construction (shapes from MLP.__init__)
# ----------------------------------------------------------------------------
def init_mlp_params(key, in_dim, out_dim, h1=512, h2=1024, h3=512):
    dims = [in_dim, h1, h2, h3, out_dim]
    keys = iter(jax.random.split(key, 20))
    p = {}
    for i in range(4):
        fan_in = dims[i]
        p[f"w{i + 1}"] = (jax.random.normal(next(keys), (dims[i], dims[i + 1]), F32)
                          / jnp.sqrt(float(fan_in)))
        p[f"b{i + 1}"] = 0.01 * jax.random.normal(next(keys), (dims[i + 1],), F32)
    for i in range(1, 4):
        h = dims[i]
        p[f"g{i}"] = 1.0 + 0.1 * jax.random.normal(next(keys), (h,), F32)
        p[f"be{i}"] = 0.1 * jax.random.normal(next(keys), (h,), F32)
        p[f"rm{i}"] = 0.1 * jax.random.normal(next(keys), (h,), F32)
        p[f"rv{i}"] = 1.0 + 0.1 * jnp.abs(jax.random.normal(next(keys), (h,), F32))
    return p


# ----------------------------------------------------------------------------
# Driver (RANKER.forward)
# ----------------------------------------------------------------------------
def ranker_forward(params_left, params_right, target_distance, final_emb,
                   test_left, test_right, csls_k):
    # gather is glue (plain JAX); the matmul / CSLS / loss hot path is Pallas.
    x_left = final_emb[test_left]
    x_right = final_emb[test_right]
    n = x_left.shape[0]
    assert target_distance.shape == (n, n)
    npad = _round_up(n, 128)

    # MLPs produce lane-dense (npad, npad) f32 predictions (padded rows/cols
    # are masked inside the loss; no slicing copies between MLP and loss).
    pred_y = mlp_forward(x_left, params_left, rows_pad=npad, cols_pad=npad)
    pred_x = mlp_forward(x_right, params_right, rows_pad=npad, cols_pad=npad)

    tgt = target_distance
    if npad > n:
        tgt = jnp.pad(tgt, ((0, npad - n), (0, npad - n)))

    # CSLS column statistic: row top-k means of sim^T = 1 - (px + py^T)
    # (no full N x N transpose needed).  The row statistic is computed inline
    # inside the loss kernel.
    nv_col = row_topk_mean(pred_x, pred_y, k=csls_k, n_valid=n)

    return ranker_loss(pred_y, pred_x, tgt, nv_col,
                       csls_k=csls_k, n_valid=n, weight=2.0)


if __name__ == "__main__":
    # small shapes consistent with the module: MLP(300, output_dim) where the
    # output_dim must equal the number of test entities (5000 in the original,
    # shrunk to 128 here).
    EMB_DIM = 300
    N_TEST = 128          # stands in for the 5000 test entities
    N_ENT = 256
    CSLS_K = 3

    key = jax.random.PRNGKey(0)
    k_emb, k_tgt, k_pl, k_pr = jax.random.split(key, 4)

    final_emb = jax.random.normal(k_emb, (N_ENT, EMB_DIM), F32)
    test_left = jnp.arange(0, N_TEST, dtype=jnp.int32)
    test_right = jnp.arange(N_TEST, 2 * N_TEST, dtype=jnp.int32)
    target_distance = jax.random.uniform(k_tgt, (N_TEST, N_TEST), dtype=F32)

    params_left = init_mlp_params(k_pl, EMB_DIM, N_TEST)
    params_right = init_mlp_params(k_pr, EMB_DIM, N_TEST)

    loss = ranker_forward(params_left, params_right, target_distance,
                          final_emb, test_left, test_right, CSLS_K)
    loss = jax.block_until_ready(loss)
    assert bool(jnp.isfinite(loss)), "rank loss is not finite"
    print("KERNEL_OK")
</pallas_src>

<mosaic_0001>
module attributes {stable_mosaic.version = 11 : i64} {
  func.func @_mlp_kernel(%arg0: i32, %arg1: memref<128x384xbf16, #tpu.memory_space<vmem>>, %arg2: memref<384x512xbf16, #tpu.memory_space<vmem>>, %arg3: memref<1x512xf32, #tpu.memory_space<vmem>>, %arg4: memref<512x1024xbf16, #tpu.memory_space<vmem>>, %arg5: memref<1x1024xf32, #tpu.memory_space<vmem>>, %arg6: memref<1024x512xbf16, #tpu.memory_space<vmem>>, %arg7: memref<1x512xf32, #tpu.memory_space<vmem>>, %arg8: memref<512x128xbf16, #tpu.memory_space<vmem>>, %arg9: memref<1x128xf32, #tpu.memory_space<vmem>>, %arg10: memref<128x128xf32, #tpu.memory_space<vmem>>) attributes {dimension_semantics = [#tpu.dimension_semantics<parallel>], iteration_bounds = array<i64: 1>, scalar_prefetch = 0 : i64, scratch_operands = 0 : i64, tpu.core_type = #tpu.core_type<tc>, window_params = [{transform_indices = @transform_0, window_bounds = array<i64: 128, 384>}, {pipeline_mode = #tpu.pipeline_mode<synchronous>, transform_indices = @transform_1, window_bounds = array<i64: 384, 512>}, {pipeline_mode = #tpu.pipeline_mode<synchronous>, transform_indices = @transform_2, window_bounds = array<i64: 1, 512>}, {pipeline_mode = #tpu.pipeline_mode<synchronous>, transform_indices = @transform_3, window_bounds = array<i64: 512, 1024>}, {pipeline_mode = #tpu.pipeline_mode<synchronous>, transform_indices = @transform_4, window_bounds = array<i64: 1, 1024>}, {pipeline_mode = #tpu.pipeline_mode<synchronous>, transform_indices = @transform_5, window_bounds = array<i64: 1024, 512>}, {pipeline_mode = #tpu.pipeline_mode<synchronous>, transform_indices = @transform_6, window_bounds = array<i64: 1, 512>}, {pipeline_mode = #tpu.pipeline_mode<synchronous>, transform_indices = @transform_7, window_bounds = array<i64: 512, 128>}, {pipeline_mode = #tpu.pipeline_mode<synchronous>, transform_indices = @transform_8, window_bounds = array<i64: 1, 128>}, {transform_indices = @transform_9, window_bounds = array<i64: 128, 128>}]} {
    %c0 = arith.constant 0 : index
    %c0_0 = arith.constant 0 : index
    %0 = vector.load %arg1[%c0, %c0_0] : memref<128x384xbf16, #tpu.memory_space<vmem>>, vector<128x384xbf16>
    %c0_1 = arith.constant 0 : index
    %c0_2 = arith.constant 0 : index
    %1 = vector.load %arg2[%c0_1, %c0_2] : memref<384x512xbf16, #tpu.memory_space<vmem>>, vector<384x512xbf16>
    %cst = arith.constant dense<0.000000e+00> : vector<128x512xf32>
    %2 = tpu.matmul %0, %1, %cst {dimension_numbers = #tpu.dot_dimension_numbers<[1], [0], [0], [1], [0, 0, 1, 1], [], []>} : vector<128x384xbf16>, vector<384x512xbf16>, vector<128x512xf32> -> vector<128x512xf32>
    %c0_3 = arith.constant 0 : index
    %c0_4 = arith.constant 0 : index
    %3 = vector.load %arg3[%c0_3, %c0_4] : memref<1x512xf32, #tpu.memory_space<vmem>>, vector<1x512xf32>
    %4 = vector.broadcast %3 : vector<1x512xf32> to vector<128x512xf32>
    %5 = arith.addf %2, %4 : vector<128x512xf32>
    %cst_5 = arith.constant 0.000000e+00 : f32
    %6 = vector.broadcast %cst_5 : f32 to vector<128x512xf32>
    %7 = arith.maximumf %5, %6 : vector<128x512xf32>
    %8 = arith.truncf %7 : vector<128x512xf32> to vector<128x512xbf16>
    %c0_6 = arith.constant 0 : index
    %c0_7 = arith.constant 0 : index
    %9 = vector.load %arg4[%c0_6, %c0_7] : memref<512x1024xbf16, #tpu.memory_space<vmem>>, vector<512x1024xbf16>
    %cst_8 = arith.constant dense<0.000000e+00> : vector<128x1024xf32>
    %10 = tpu.matmul %8, %9, %cst_8 {dimension_numbers = #tpu.dot_dimension_numbers<[1], [0], [0], [1], [0, 0, 1, 1], [], []>} : vector<128x512xbf16>, vector<512x1024xbf16>, vector<128x1024xf32> -> vector<128x1024xf32>
    %c0_9 = arith.constant 0 : index
    %c0_10 = arith.constant 0 : index
    %11 = vector.load %arg5[%c0_9, %c0_10] : memref<1x1024xf32, #tpu.memory_space<vmem>>, vector<1x1024xf32>
    %12 = vector.broadcast %11 : vector<1x1024xf32> to vector<128x1024xf32>
    %13 = arith.addf %10, %12 : vector<128x1024xf32>
    %cst_11 = arith.constant 0.000000e+00 : f32
    %14 = vector.broadcast %cst_11 : f32 to vector<128x1024xf32>
    %15 = arith.maximumf %13, %14 : vector<128x1024xf32>
    %16 = arith.truncf %15 : vector<128x1024xf32> to vector<128x1024xbf16>
    %c0_12 = arith.constant 0 : index
    %c0_13 = arith.constant 0 : index
    %17 = vector.load %arg6[%c0_12, %c0_13] : memref<1024x512xbf16, #tpu.memory_space<vmem>>, vector<1024x512xbf16>
    %cst_14 = arith.constant dense<0.000000e+00> : vector<128x512xf32>
    %18 = tpu.matmul %16, %17, %cst_14 {dimension_numbers = #tpu.dot_dimension_numbers<[1], [0], [0], [1], [0, 0, 1, 1], [], []>} : vector<128x1024xbf16>, vector<1024x512xbf16>, vector<128x512xf32> -> vector<128x512xf32>
    %c0_15 = arith.constant 0 : index
    %c0_16 = arith.constant 0 : index
    %19 = vector.load %arg7[%c0_15, %c0_16] : memref<1x512xf32, #tpu.memory_space<vmem>>, vector<1x512xf32>
    %20 = vector.broadcast %19 : vector<1x512xf32> to vector<128x512xf32>
    %21 = arith.addf %18, %20 : vector<128x512xf32>
    %cst_17 = arith.constant 0.000000e+00 : f32
    %22 = vector.broadcast %cst_17 : f32 to vector<128x512xf32>
    %23 = arith.maximumf %21, %22 : vector<128x512xf32>
    %24 = arith.truncf %23 : vector<128x512xf32> to vector<128x512xbf16>
    %c0_18 = arith.constant 0 : index
    %c0_19 = arith.constant 0 : index
    %25 = vector.load %arg8[%c0_18, %c0_19] : memref<512x128xbf16, #tpu.memory_space<vmem>>, vector<512x128xbf16>
    %cst_20 = arith.constant dense<0.000000e+00> : vector<128x128xf32>
    %26 = tpu.matmul %24, %25, %cst_20 {dimension_numbers = #tpu.dot_dimension_numbers<[1], [0], [0], [1], [0, 0, 1, 1], [], []>} : vector<128x512xbf16>, vector<512x128xbf16>, vector<128x128xf32> -> vector<128x128xf32>
    %c0_21 = arith.constant 0 : index
    %c0_22 = arith.constant 0 : index
    %27 = vector.load %arg9[%c0_21, %c0_22] : memref<1x128xf32, #tpu.memory_space<vmem>>, vector<1x128xf32>
    %28 = vector.broadcast %27 : vector<1x128xf32> to vector<128x128xf32>
    %29 = arith.addf %26, %28 : vector<128x128xf32>
    %cst_23 = arith.constant 0.000000e+00 : f32
    %30 = vector.broadcast %cst_23 : f32 to vector<128x128xf32>
    %31 = arith.maximumf %29, %30 : vector<128x128xf32>
    %c0_24 = arith.constant 0 : index
    %c0_25 = arith.constant 0 : index
    %32 = vector.load %arg10[%c0_24, %c0_25] : memref<128x128xf32, #tpu.memory_space<vmem>>, vector<128x128xf32>
    tpu.vector_store %arg10[%c0_24, %c0_25], %31 {strides = array<i32>} : memref<128x128xf32, #tpu.memory_space<vmem>>, vector<128x128xf32>,
    return
  }
  func.func @transform_0(%arg0: i32) -> (i32, i32) {
    %c0_i32 = arith.constant 0 : i32
    %c0_i32_0 = arith.constant 0 : i32
    return %arg0, %c0_i32 : i32, i32
  }
  func.func @transform_1(%arg0: i32) -> (i32, i32) {
    %c0_i32 = arith.constant 0 : i32
    %c0_i32_0 = arith.constant 0 : i32
    %c0_i32_1 = arith.constant 0 : i32
    return %c0_i32, %c0_i32_0 : i32, i32
  }
  func.func @transform_2(%arg0: i32) -> (i32, i32) {
    %c0_i32 = arith.constant 0 : i32
    %c0_i32_0 = arith.constant 0 : i32
    %c0_i32_1 = arith.constant 0 : i32
    return %c0_i32, %c0_i32_0 : i32, i32
  }
  func.func @transform_3(%arg0: i32) -> (i32, i32) {
    %c0_i32 = arith.constant 0 : i32
    %c0_i32_0 = arith.constant 0 : i32
    %c0_i32_1 = arith.constant 0 : i32
    return %c0_i32, %c0_i32_0 : i32, i32
  }
  func.func @transform_4(%arg0: i32) -> (i32, i32) {
    %c0_i32 = arith.constant 0 : i32
    %c0_i32_0 = arith.constant 0 : i32
    %c0_i32_1 = arith.constant 0 : i32
    return %c0_i32, %c0_i32_0 : i32, i32
  }
  func.func @transform_5(%arg0: i32) -> (i32, i32) {
    %c0_i32 = arith.constant 0 : i32
    %c0_i32_0 = arith.constant 0 : i32
    %c0_i32_1 = arith.constant 0 : i32
    return %c0_i32, %c0_i32_0 : i32, i32
  }
  func.func @transform_6(%arg0: i32) -> (i32, i32) {
    %c0_i32 = arith.constant 0 : i32
    %c0_i32_0 = arith.constant 0 : i32
    %c0_i32_1 = arith.constant 0 : i32
    return %c0_i32, %c0_i32_0 : i32, i32
  }
  func.func @transform_7(%arg0: i32) -> (i32, i32) {
    %c0_i32 = arith.constant 0 : i32
    %c0_i32_0 = arith.constant 0 : i32
    %c0_i32_1 = arith.constant 0 : i32
    return %c0_i32, %c0_i32_0 : i32, i32
  }
  func.func @transform_8(%arg0: i32) -> (i32, i32) {
    %c0_i32 = arith.constant 0 : i32
    %c0_i32_0 = arith.constant 0 : i32
    %c0_i32_1 = arith.constant 0 : i32
    return %c0_i32, %c0_i32_0 : i32, i32
  }
  func.func @transform_9(%arg0: i32) -> (i32, i32) {
    %c0_i32 = arith.constant 0 : i32
    %c0_i32_0 = arith.constant 0 : i32
    return %arg0, %c0_i32 : i32, i32
  }
}

</mosaic_0001>

<llo_original>
// kernel: tpu_custom_call.1
$region0: #{tpu_custom_call.1}
  #allocation0 [shape = 'u32[]', space=smem, size = 0x4, offset = 0x4, fixed_abs, tag = 'smem constant byte address 0x4 - core index']
  #allocation1 [shape = 'u32[144,128]{1,0:T(1,128)}', space=vmem, size = 0x12000, scoped, tag = 'internal scratch']
  %s0 = inlined_call_operand.hbm [shape: bf16[128,384], index: 0, kind: input, shape index: {}]
  %s1 = inlined_call_operand.hbm [shape: bf16[384,512], index: 1, kind: input, shape index: {}]
  %s2 = inlined_call_operand.vmem [shape: f32[1,512], index: 2, kind: input, shape index: {}]
  %s3 = inlined_call_operand.hbm [shape: bf16[512,1024], index: 3, kind: input, shape index: {}]
  %s4 = inlined_call_operand.vmem [shape: f32[1,1024], index: 4, kind: input, shape index: {}]
  %s5 = inlined_call_operand.hbm [shape: bf16[1024,512], index: 5, kind: input, shape index: {}]
  %s6 = inlined_call_operand.vmem [shape: f32[1,512], index: 6, kind: input, shape index: {}]
  %s7 = inlined_call_operand.hbm [shape: bf16[512,128], index: 7, kind: input, shape index: {}]
  %s8 = inlined_call_operand.vmem [shape: f32[1,128], index: 8, kind: input, shape index: {}]
  %s9 = inlined_call_operand.hbm [shape: f32[128,128], index: 9, kind: output, shape index: {}]
  %s10 = sld [smem:[#allocation0]]
  $region66: #{tpu_custom_call.1} parent=0
    _
  %s12 = ssub.s32 1, %s10
  %s13 = scalar_select 0, %s12, %s10
  $region1: #{tpu_custom_call.1} parent=0
    #allocation2 [shape = 'u8[98304]{0}', space=vmem, size = 0x18000, scoped, tag = 'input window, operand 0, single buffered']
    #allocation3 [shape = 's32[1]{0}', space=sflag, size = 0x4, scoped, tag = 'scoped memory for tpu_custom_call.1']
    #allocation4 [shape = 's32[1]{0}', space=sflag, size = 0x4, scoped, tag = 'scoped memory for tpu_custom_call.1']
    #allocation5 [shape = 'u8[393216]{0}', space=vmem, size = 0x60000, scoped, tag = 'input window, operand 1, single buffered']
    #allocation6 [shape = 's32[1]{0}', space=sflag, size = 0x4, scoped, tag = 'scoped memory for tpu_custom_call.1']
    #allocation7 [shape = 'u8[1048576]{0}', space=vmem, size = 0x100000, scoped, tag = 'input window, operand 3, single buffered']
    #allocation8 [shape = 'u8[1048576]{0}', space=vmem, size = 0x100000, scoped, tag = 'input window, operand 5, single buffered']
    #allocation9 [shape = 's32[1]{0}', space=sflag, size = 0x4, scoped, tag = 'scoped memory for tpu_custom_call.1']
    #allocation10 [shape = 'u8[131072]{0}', space=vmem, size = 0x20000, scoped, tag = 'input window, operand 7, single buffered']
    #allocation11 [shape = 'u8[65536]{0}', space=vmem, size = 0x10000, scoped, tag = 'output window, operand 0, single buffered']
    %14 = vsyncpa [#allocation3], 0
    %15 = vsyncpa [#allocation6], 0
    %16 = vsyncpa [#allocation9], 0
    %17 = vsyncpa [#allocation4], 0
    // Predicated region
    $region2: #{tpu_custom_call.1} parent=1 // pred_check
      _
    $region3: #{tpu_custom_call.1} parent=1 // pred_check_branch
      %19 = sbr.rel (0) target = $region5
    $region4: #{tpu_custom_call.1} parent=1 // pred_region
      %s21 = ssub.s32 3072, 3072
      %22 = vsyncadd [#allocation3], %s21
      %s23 = sshll.u32 [#allocation2], 4
      %s24 = int_to_ptr.vmem [resolvable:$true] %s23
      %29 = dma.hbm_to_vmem [thread:$0]  %s0, 3072, %s24, [#allocation3], 192, 192, 12
    $region5: #{tpu_custom_call.1} parent=1 // pred_fallthru
      _
    // Predicated region
    $region6: #{tpu_custom_call.1} parent=1 // pred_check
      _
    $region7: #{tpu_custom_call.1} parent=1 // pred_check_branch
      %31 = sbr.rel (0) target = $region9
    $region8: #{tpu_custom_call.1} parent=1 // pred_region
      %s33 = ssub.s32 12288, 12288
      %34 = vsyncadd [#allocation6], %s33
      %s35 = sshll.u32 [#allocation5], 4
      %s36 = int_to_ptr.vmem [resolvable:$true] %s35
      %41 = dma.hbm_to_vmem [thread:$0]  %s1, 12288, %s36, [#allocation6], 256, 256, 16
    $region9: #{tpu_custom_call.1} parent=1 // pred_fallthru
      _
    // Predicated region
    $region10: #{tpu_custom_call.1} parent=1 // pred_check
      _
    $region11: #{tpu_custom_call.1} parent=1 // pred_check_branch
      %43 = sbr.rel (0) target = $region13
    $region12: #{tpu_custom_call.1} parent=1 // pred_region
      _
    $region13: #{tpu_custom_call.1} parent=1 // pred_fallthru
      _
    // Predicated region
    $region14: #{tpu_custom_call.1} parent=1 // pred_check
      _
    $region15: #{tpu_custom_call.1} parent=1 // pred_check_branch
      %45 = sbr.rel (0) target = $region17
    $region16: #{tpu_custom_call.1} parent=1 // pred_region
      %s47 = ssub.s32 32768, 32768
      %48 = vsyncadd [#allocation6], %s47
      %s49 = sshll.u32 [#allocation7], 4
      %s50 = int_to_ptr.vmem [resolvable:$true] %s49
      %55 = dma.hbm_to_vmem [thread:$0]  %s3, 32768, %s50, [#allocation6], 512, 512, 32
    $region17: #{tpu_custom_call.1} parent=1 // pred_fallthru
      _
    // Predicated region
    $region18: #{tpu_custom_call.1} parent=1 // pred_check
      _
    $region19: #{tpu_custom_call.1} parent=1 // pred_check_branch
      %57 = sbr.rel (0) target = $region21
    $region20: #{tpu_custom_call.1} parent=1 // pred_region
      _
    $region21: #{tpu_custom_call.1} parent=1 // pred_fallthru
      _
    // Predicated region
    $region22: #{tpu_custom_call.1} parent=1 // pred_check
      _
    $region23: #{tpu_custom_call.1} parent=1 // pred_check_branch
      %59 = sbr.rel (0) target = $region25
    $region24: #{tpu_custom_call.1} parent=1 // pred_region
      %s61 = ssub.s32 32768, 32768
      %62 = vsyncadd [#allocation9], %s61
      %s63 = sshll.u32 [#allocation8], 4
      %s64 = int_to_ptr.vmem [resolvable:$true] %s63
      %69 = dma.hbm_to_vmem [thread:$0]  %s5, 32768, %s64, [#allocation9], 256, 256, 16
    $region25: #{tpu_custom_call.1} parent=1 // pred_fallthru
      _
    // Predicated region
    $region26: #{tpu_custom_call.1} parent=1 // pred_check
      _
    $region27: #{tpu_custom_call.1} parent=1 // pred_check_branch
      %71 = sbr.rel (0) target = $region29
    $region28: #{tpu_custom_call.1} parent=1 // pred_region
      _
    $region29: #{tpu_custom_call.1} parent=1 // pred_fallthru
      _
    // Predicated region
    $region30: #{tpu_custom_call.1} parent=1 // pred_check
      _
    $region31: #{tpu_custom_call.1} parent=1 // pred_check_branch
      %73 = sbr.rel (0) target = $region33
    $region32: #{tpu_custom_call.1} parent=1 // pred_region
      %s75 = ssub.s32 4096, 4096
      %76 = vsyncadd [#allocation9], %s75
      %s77 = sshll.u32 [#allocation10], 4
      %s78 = int_to_ptr.vmem [resolvable:$true] %s77
      %83 = dma.hbm_to_vmem [thread:$0]  %s7, 4096, %s78, [#allocation9], 64, 64, 4
    $region33: #{tpu_custom_call.1} parent=1 // pred_fallthru
      _
    // Predicated region
    $region34: #{tpu_custom_call.1} parent=1 // pred_check
      _
    $region35: #{tpu_custom_call.1} parent=1 // pred_check_branch
      %85 = sbr.rel (0) target = $region37
    $region36: #{tpu_custom_call.1} parent=1 // pred_region
      _
    $region37: #{tpu_custom_call.1} parent=1 // pred_fallthru
      _
    // Predicated region
    $region38: #{tpu_custom_call.1} parent=1 // pred_check
      _
    $region39: #{tpu_custom_call.1} parent=1 // pred_check_branch
      %87 = sbr.rel (0) target = $region41
    $region40: #{tpu_custom_call.1} parent=1 // pred_region
      %88 = dma.done [#allocation3], 3072
    $region41: #{tpu_custom_call.1} parent=1 // pred_fallthru
      _
    // Predicated region
    $region42: #{tpu_custom_call.1} parent=1 // pred_check
      _
    $region43: #{tpu_custom_call.1} parent=1 // pred_check_branch
      %90 = sbr.rel (0) target = $region45
    $region44: #{tpu_custom_call.1} parent=1 // pred_region
      %91 = dma.done [#allocation6], 12288
    $region45: #{tpu_custom_call.1} parent=1 // pred_fallthru
      _
    // Predicated region
    $region46: #{tpu_custom_call.1} parent=1 // pred_check
      _
    $region47: #{tpu_custom_call.1} parent=1 // pred_check_branch
      %93 = sbr.rel (0) target = $region49
    $region48: #{tpu_custom_call.1} parent=1 // pred_region
      %94 = dma.done [#allocation6], 32768
    $region49: #{tpu_custom_call.1} parent=1 // pred_fallthru
      _
    // Predicated region
    $region50: #{tpu_custom_call.1} parent=1 // pred_check
      _
    $region51: #{tpu_custom_call.1} parent=1 // pred_check_branch
      %96 = sbr.rel (0) target = $region53
    $region52: #{tpu_custom_call.1} parent=1 // pred_region
      %97 = dma.done [#allocation9], 32768
    $region53: #{tpu_custom_call.1} parent=1 // pred_fallthru
      _
    // Predicated region
    $region54: #{tpu_custom_call.1} parent=1 // pred_check
      _
    $region55: #{tpu_custom_call.1} parent=1 // pred_check_branch
      %99 = sbr.rel (0) target = $region57
    $region56: #{tpu_custom_call.1} parent=1 // pred_region
      %100 = dma.done [#allocation9], 4096
    $region57: #{tpu_custom_call.1} parent=1 // pred_fallthru
      _
    %v102 = vld [vmem:[#allocation2] sm:$0xff]
    %v103 = vld [vmem:[#allocation2 + $0x8] sm:$0xf]
    %v104 = vld [vmem:[#allocation2 + $0xc] sm:$0xff]
    %v105 = vld [vmem:[#allocation2 + $0x14] sm:$0xf]
    %v106 = vld [vmem:[#allocation2 + $0x18] sm:$0xff]
    %v107 = vld [vmem:[#allocation2 + $0x20] sm:$0xf]
    %v108 = vld [vmem:[#allocation2 + $0x24] sm:$0xff]
    %v109 = vld [vmem:[#allocation2 + $0x2c] sm:$0xf]
    %v110 = vld [vmem:[#allocation2 + $0x30] sm:$0xff]
    %v111 = vld [vmem:[#allocation2 + $0x38] sm:$0xf]
    %v112 = vld [vmem:[#allocation2 + $0x3c] sm:$0xff]
    %v113 = vld [vmem:[#allocation2 + $0x44] sm:$0xf]
    %v114 = vld [vmem:[#allocation2 + $0x48] sm:$0xff]
    %v115 = vld [vmem:[#allocation2 + $0x50] sm:$0xf]
    %v116 = vld [vmem:[#allocation2 + $0x54] sm:$0xff]
    %v117 = vld [vmem:[#allocation2 + $0x5c] sm:$0xf]
    %v118 = vld [vmem:[#allocation2 + $0x60] sm:$0xff]
    %v119 = vld [vmem:[#allocation2 + $0x68] sm:$0xf]
    %v120 = vld [vmem:[#allocation2 + $0x6c] sm:$0xff]
    %v121 = vld [vmem:[#allocation2 + $0x74] sm:$0xf]
    %v122 = vld [vmem:[#allocation2 + $0x78] sm:$0xff]
    %v123 = vld [vmem:[#allocation2 + $0x80] sm:$0xf]
    %v124 = vld [vmem:[#allocation2 + $0x84] sm:$0xff]
    %v125 = vld [vmem:[#allocation2 + $0x8c] sm:$0xf]
    %v126 = vld [vmem:[#allocation2 + $0x90] sm:$0xff]
    %v127 = vld [vmem:[#allocation2 + $0x98] sm:$0xf]
    %v128 = vld [vmem:[#allocation2 + $0x9c] sm:$0xff]
    %v129 = vld [vmem:[#allocation2 + $0xa4] sm:$0xf]
    %v130 = vld [vmem:[#allocation2 + $0xa8] sm:$0xff]
    %v131 = vld [vmem:[#allocation2 + $0xb0] sm:$0xf]
    %v132 = vld [vmem:[#allocation2 + $0xb4] sm:$0xff]
    %v133 = vld [vmem:[#allocation2 + $0xbc] sm:$0xf]
    %v134 = vld [vmem:[#allocation5] sm:$0xff]
    %v135 = vld [vmem:[#allocation5 + $0x8] sm:$0xff]
    %v136 = vld [vmem:[#allocation5 + $0x10] sm:$0xff]
    %v137 = vld [vmem:[#allocation5 + $0x18] sm:$0xff]
    %v138 = vld [vmem:[#allocation5 + $0x20] sm:$0xff]
    %v139 = vld [vmem:[#allocation5 + $0x28] sm:$0xff]
    %v140 = vld [vmem:[#allocation5 + $0x30] sm:$0xff]
    %v141 = vld [vmem:[#allocation5 + $0x38] sm:$0xff]
    %v142 = vld [vmem:[#allocation5 + $0x40] sm:$0xff]
    %v143 = vld [vmem:[#allocation5 + $0x48] sm:$0xff]
    %v144 = vld [vmem:[#allocation5 + $0x50] sm:$0xff]
    %v145 = vld [vmem:[#allocation5 + $0x58] sm:$0xff]
    %v146 = vld [vmem:[#allocation5 + $0x60] sm:$0xff]
    %v147 = vld [vmem:[#allocation5 + $0x68] sm:$0xff]
    %v148 = vld [vmem:[#allocation5 + $0x70] sm:$0xff]
    %v149 = vld [vmem:[#allocation5 + $0x78] sm:$0xff]
    %v150 = vld [vmem:[#allocation5 + $0x80] sm:$0xff]
    %v151 = vld [vmem:[#allocation5 + $0x88] sm:$0xff]
    %v152 = vld [vmem:[#allocation5 + $0x90] sm:$0xff]
    %v153 = vld [vmem:[#allocation5 + $0x98] sm:$0xff]
    %v154 = vld [vmem:[#allocation5 + $0xa0] sm:$0xff]
    %v155 = vld [vmem:[#allocation5 + $0xa8] sm:$0xff]
    %v156 = vld [vmem:[#allocation5 + $0xb0] sm:$0xff]
    %v157 = vld [vmem:[#allocation5 + $0xb8] sm:$0xff]
    %v158 = vld [vmem:[#allocation5 + $0xc0] sm:$0xff]
    %v159 = vld [vmem:[#allocation5 + $0xc8] sm:$0xff]
    %v160 = vld [vmem:[#allocation5 + $0xd0] sm:$0xff]
    %v161 = vld [vmem:[#allocation5 + $0xd8] sm:$0xff]
    %v162 = vld [vmem:[#allocation5 + $0xe0] sm:$0xff]
    %v163 = vld [vmem:[#allocation5 + $0xe8] sm:$0xff]
    %v164 = vld [vmem:[#allocation5 + $0xf0] sm:$0xff]
    %v165 = vld [vmem:[#allocation5 + $0xf8] sm:$0xff]
    %v166 = vld [vmem:[#allocation5 + $0x100] sm:$0xff]
    %v167 = vld [vmem:[#allocation5 + $0x108] sm:$0xff]
    %v168 = vld [vmem:[#allocation5 + $0x110] sm:$0xff]
    %v169 = vld [vmem:[#allocation5 + $0x118] sm:$0xff]
    %v170 = vld [vmem:[#allocation5 + $0x120] sm:$0xff]
    %v171 = vld [vmem:[#allocation5 + $0x128] sm:$0xff]
    %v172 = vld [vmem:[#allocation5 + $0x130] sm:$0xff]
    %v173 = vld [vmem:[#allocation5 + $0x138] sm:$0xff]
    %v174 = vld [vmem:[#allocation5 + $0x140] sm:$0xff]
    %v175 = vld [vmem:[#allocation5 + $0x148] sm:$0xff]
    %v176 = vld [vmem:[#allocation5 + $0x150] sm:$0xff]
    %v177 = vld [vmem:[#allocation5 + $0x158] sm:$0xff]
    %v178 = vld [vmem:[#allocation5 + $0x160] sm:$0xff]
    %v179 = vld [vmem:[#allocation5 + $0x168] sm:$0xff]
    %v180 = vld [vmem:[#allocation5 + $0x170] sm:$0xff]
    %v181 = vld [vmem:[#allocation5 + $0x178] sm:$0xff]
    %v182 = vld [vmem:[#allocation5 + $0x180] sm:$0xff]
    %v183 = vld [vmem:[#allocation5 + $0x188] sm:$0xff]
    %v184 = vld [vmem:[#allocation5 + $0x190] sm:$0xff]
    %v185 = vld [vmem:[#allocation5 + $0x198] sm:$0xff]
    %v186 = vld [vmem:[#allocation5 + $0x1a0] sm:$0xff]
    %v187 = vld [vmem:[#allocation5 + $0x1a8] sm:$0xff]
    %v188 = vld [vmem:[#allocation5 + $0x1b0] sm:$0xff]
    %v189 = vld [vmem:[#allocation5 + $0x1b8] sm:$0xff]
    %v190 = vld [vmem:[#allocation5 + $0x1c0] sm:$0xff]
    %v191 = vld [vmem:[#allocation5 + $0x1c8] sm:$0xff]
    %v192 = vld [vmem:[#allocation5 + $0x1d0] sm:$0xff]
    %v193 = vld [vmem:[#allocation5 + $0x1d8] sm:$0xff]
    %v194 = vld [vmem:[#allocation5 + $0x1e0] sm:$0xff]
    %v195 = vld [vmem:[#allocation5 + $0x1e8] sm:$0xff]
    %v196 = vld [vmem:[#allocation5 + $0x1f0] sm:$0xff]
    %v197 = vld [vmem:[#allocation5 + $0x1f8] sm:$0xff]
    %v198 = vld [vmem:[#allocation5 + $0x200] sm:$0xff]
    %v199 = vld [vmem:[#allocation5 + $0x208] sm:$0xff]
    %v200 = vld [vmem:[#allocation5 + $0x210] sm:$0xff]
    %v201 = vld [vmem:[#allocation5 + $0x218] sm:$0xff]
    %v202 = vld [vmem:[#allocation5 + $0x220] sm:$0xff]
    %v203 = vld [vmem:[#allocation5 + $0x228] sm:$0xff]
    %v204 = vld [vmem:[#allocation5 + $0x230] sm:$0xff]
    %v205 = vld [vmem:[#allocation5 + $0x238] sm:$0xff]
    %v206 = vld [vmem:[#allocation5 + $0x240] sm:$0xff]
    %v207 = vld [vmem:[#allocation5 + $0x248] sm:$0xff]
    %v208 = vld [vmem:[#allocation5 + $0x250] sm:$0xff]
    %v209 = vld [vmem:[#allocation5 + $0x258] sm:$0xff]
    %v210 = vld [vmem:[#allocation5 + $0x260] sm:$0xff]
    %v211 = vld [vmem:[#allocation5 + $0x268] sm:$0xff]
    %v212 = vld [vmem:[#allocation5 + $0x270] sm:$0xff]
    %v213 = vld [vmem:[#allocation5 + $0x278] sm:$0xff]
    %v214 = vld [vmem:[#allocation5 + $0x280] sm:$0xff]
    %v215 = vld [vmem:[#allocation5 + $0x288] sm:$0xff]
    %v216 = vld [vmem:[#allocation5 + $0x290] sm:$0xff]
    %v217 = vld [vmem:[#allocation5 + $0x298] sm:$0xff]
    %v218 = vld [vmem:[#allocation5 + $0x2a0] sm:$0xff]
    %v219 = vld [vmem:[#allocation5 + $0x2a8] sm:$0xff]
    %v220 = vld [vmem:[#allocation5 + $0x2b0] sm:$0xff]
    %v221 = vld [vmem:[#allocation5 + $0x2b8] sm:$0xff]
    %v222 = vld [vmem:[#allocation5 + $0x2c0] sm:$0xff]
    %v223 = vld [vmem:[#allocation5 + $0x2c8] sm:$0xff]
    %v224 = vld [vmem:[#allocation5 + $0x2d0] sm:$0xff]
    %v225 = vld [vmem:[#allocation5 + $0x2d8] sm:$0xff]
    %v226 = vld [vmem:[#allocation5 + $0x2e0] sm:$0xff]
    %v227 = vld [vmem:[#allocation5 + $0x2e8] sm:$0xff]
    %v228 = vld [vmem:[#allocation5 + $0x2f0] sm:$0xff]
    %v229 = vld [vmem:[#allocation5 + $0x2f8] sm:$0xff]
    %v230 = vld [vmem:[%s2] sm:$0xf]
    %v232 = vlaneseq
    %v233 = vshrl.u32 %v232, 7
    %v234 = vsub.s32 0, %v233
    %v235 = vrot.slane %v230, %v234
    %v236 = vlaneseq
    %v237 = vshrl.u32 %v236, 7
    %v238 = vsub.s32 1, %v237
    %v239 = vrot.slane %v230, %v238
    %v240 = vlaneseq
    %v241 = vshrl.u32 %v240, 7
    %v242 = vsub.s32 2, %v241
    %v243 = vrot.slane %v230, %v242
    %v244 = vlaneseq
    %v245 = vshrl.u32 %v244, 7
    %v246 = vsub.s32 3, %v245
    %v247 = vrot.slane %v230, %v246
    %v284 = vunpack.c.l.b16 %v102
    %v285 = vunpack.c.h.b16 %v102
    %v286 = vunpack.c.l.b16 %v103
    %v287 = vunpack.c.l.b16 %v104
    %v288 = vunpack.c.h.b16 %v104
    %v289 = vunpack.c.l.b16 %v105
    %v290 = vunpack.c.l.b16 %v106
    %v291 = vunpack.c.h.b16 %v106
    %v292 = vunpack.c.l.b16 %v107
    %v293 = vunpack.c.l.b16 %v108
    %v294 = vunpack.c.h.b16 %v108
    %v295 = vunpack.c.l.b16 %v109
    %v296 = vunpack.c.l.b16 %v110
    %v297 = vunpack.c.h.b16 %v110
    %v298 = vunpack.c.l.b16 %v111
    %v299 = vunpack.c.l.b16 %v112
    %v300 = vunpack.c.h.b16 %v112
    %v301 = vunpack.c.l.b16 %v113
    %v302 = vunpack.c.l.b16 %v114
    %v303 = vunpack.c.h.b16 %v114
    %v304 = vunpack.c.l.b16 %v115
    %v305 = vunpack.c.l.b16 %v116
    %v306 = vunpack.c.h.b16 %v116
    %v307 = vunpack.c.l.b16 %v117
    %v308 = vunpack.c.l.b16 %v118
    %v309 = vunpack.c.h.b16 %v118
    %v310 = vunpack.c.l.b16 %v119
    %v311 = vunpack.c.l.b16 %v120
    %v312 = vunpack.c.h.b16 %v120
    %v313 = vunpack.c.l.b16 %v121
    %v314 = vunpack.c.l.b16 %v122
    %v315 = vunpack.c.h.b16 %v122
    %v316 = vunpack.c.l.b16 %v123
    %v317 = vunpack.c.l.b16 %v124
    %v318 = vunpack.c.h.b16 %v124
    %v319 = vunpack.c.l.b16 %v125
    %v320 = vunpack.c.l.b16 %v126
    %v321 = vunpack.c.h.b16 %v126
    %v322 = vunpack.c.l.b16 %v127
    %v323 = vunpack.c.l.b16 %v128
    %v324 = vunpack.c.h.b16 %v128
    %v325 = vunpack.c.l.b16 %v129
    %v326 = vunpack.c.l.b16 %v130
    %v327 = vunpack.c.h.b16 %v130
    %v328 = vunpack.c.l.b16 %v131
    %v329 = vunpack.c.l.b16 %v132
    %v330 = vunpack.c.h.b16 %v132
    %v331 = vunpack.c.l.b16 %v133
    %v332 = vpack.c.b16 %v287, %v284
    %v333 = vpack.c.b16 %v288, %v285
    %v334 = vpack.c.b16 %v289, %v286
    %v335 = vpack.c.b16 %v293, %v290
    %v336 = vpack.c.b16 %v294, %v291
    %v337 = vpack.c.b16 %v295, %v292
    %v338 = vpack.c.b16 %v299, %v296
    %v339 = vpack.c.b16 %v300, %v297
    %v340 = vpack.c.b16 %v301, %v298
    %v341 = vpack.c.b16 %v305, %v302
    %v342 = vpack.c.b16 %v306, %v303
    %v343 = vpack.c.b16 %v307, %v304
    %v344 = vpack.c.b16 %v311, %v308
    %v345 = vpack.c.b16 %v312, %v309
    %v346 = vpack.c.b16 %v313, %v310
    %v347 = vpack.c.b16 %v317, %v314
    %v348 = vpack.c.b16 %v318, %v315
    %v349 = vpack.c.b16 %v319, %v316
    %v350 = vpack.c.b16 %v323, %v320
    %v351 = vpack.c.b16 %v324, %v321
    %v352 = vpack.c.b16 %v325, %v322
    %v353 = vpack.c.b16 %v329, %v326
    %v354 = vpack.c.b16 %v330, %v327
    %v355 = vpack.c.b16 %v331, %v328
    %v476 = vunpack.c.l.b16 %v134
    %v477 = vunpack.c.h.b16 %v134
    %v478 = vunpack.c.l.b16 %v135
    %v479 = vunpack.c.h.b16 %v135
    %v480 = vunpack.c.l.b16 %v136
    %v481 = vunpack.c.h.b16 %v136
    %v482 = vunpack.c.l.b16 %v137
    %v483 = vunpack.c.h.b16 %v137
    %v484 = vunpack.c.l.b16 %v138
    %v485 = vunpack.c.h.b16 %v138
    %v486 = vunpack.c.l.b16 %v139
    %v487 = vunpack.c.h.b16 %v139
    %v488 = vunpack.c.l.b16 %v140
    %v489 = vunpack.c.h.b16 %v140
    %v490 = vunpack.c.l.b16 %v141
    %v491 = vunpack.c.h.b16 %v141
    %v492 = vunpack.c.l.b16 %v142
    %v493 = vunpack.c.h.b16 %v142
    %v494 = vunpack.c.l.b16 %v143
    %v495 = vunpack.c.h.b16 %v143
    %v496 = vunpack.c.l.b16 %v144
    %v497 = vunpack.c.h.b16 %v144
    %v498 = vunpack.c.l.b16 %v145
    %v499 = vunpack.c.h.b16 %v145
    %v500 = vunpack.c.l.b16 %v146
    %v501 = vunpack.c.h.b16 %v146
    %v502 = vunpack.c.l.b16 %v147
    %v503 = vunpack.c.h.b16 %v147
    %v504 = vunpack.c.l.b16 %v148
    %v505 = vunpack.c.h.b16 %v148
    %v506 = vunpack.c.l.b16 %v149
    %v507 = vunpack.c.h.b16 %v149
    %v508 = vunpack.c.l.b16 %v150
    %v509 = vunpack.c.h.b16 %v150
    %v510 = vunpack.c.l.b16 %v151
    %v511 = vunpack.c.h.b16 %v151
    %v512 = vunpack.c.l.b16 %v152
    %v513 = vunpack.c.h.b16 %v152
    %v514 = vunpack.c.l.b16 %v153
    %v515 = vunpack.c.h.b16 %v153
    %v516 = vunpack.c.l.b16 %v154
    %v517 = vunpack.c.h.b16 %v154
    %v518 = vunpack.c.l.b16 %v155
    %v519 = vunpack.c.h.b16 %v155
    %v520 = vunpack.c.l.b16 %v156
    %v521 = vunpack.c.h.b16 %v156
    %v522 = vunpack.c.l.b16 %v157
    %v523 = vunpack.c.h.b16 %v157
    %v524 = vunpack.c.l.b16 %v158
    %v525 = vunpack.c.h.b16 %v158
    %v526 = vunpack.c.l.b16 %v159
    %v527 = vunpack.c.h.b16 %v159
    %v528 = vunpack.c.l.b16 %v160
    %v529 = vunpack.c.h.b16 %v160
    %v530 = vunpack.c.l.b16 %v161
    %v531 = vunpack.c.h.b16 %v161
    %v532 = vunpack.c.l.b16 %v162
    %v533 = vunpack.c.h.b16 %v162
    %v534 = vunpack.c.l.b16 %v163
    %v535 = vunpack.c.h.b16 %v163
    %v536 = vunpack.c.l.b16 %v164
    %v537 = vunpack.c.h.b16 %v164
    %v538 = vunpack.c.l.b16 %v165
    %v539 = vunpack.c.h.b16 %v165
    %v540 = vunpack.c.l.b16 %v166
    %v541 = vunpack.c.h.b16 %v166
    %v542 = vunpack.c.l.b16 %v167
    %v543 = vunpack.c.h.b16 %v167
    %v544 = vunpack.c.l.b16 %v168
    %v545 = vunpack.c.h.b16 %v168
    %v546 = vunpack.c.l.b16 %v169
    %v547 = vunpack.c.h.b16 %v169
    %v548 = vunpack.c.l.b16 %v170
    %v549 = vunpack.c.h.b16 %v170
    %v550 = vunpack.c.l.b16 %v171
    %v551 = vunpack.c.h.b16 %v171
    %v552 = vunpack.c.l.b16 %v172
    %v553 = vunpack.c.h.b16 %v172
    %v554 = vunpack.c.l.b16 %v173
    %v555 = vunpack.c.h.b16 %v173
    %v556 = vunpack.c.l.b16 %v174
    %v557 = vunpack.c.h.b16 %v174
    %v558 = vunpack.c.l.b16 %v175
    %v559 = vunpack.c.h.b16 %v175
    %v560 = vunpack.c.l.b16 %v176
    %v561 = vunpack.c.h.b16 %v176
    %v562 = vunpack.c.l.b16 %v177
    %v563 = vunpack.c.h.b16 %v177
    %v564 = vunpack.c.l.b16 %v178
    %v565 = vunpack.c.h.b16 %v178
    %v566 = vunpack.c.l.b16 %v179
    %v567 = vunpack.c.h.b16 %v179
    %v568 = vunpack.c.l.b16 %v180
    %v569 = vunpack.c.h.b16 %v180
    %v570 = vunpack.c.l.b16 %v181
    %v571 = vunpack.c.h.b16 %v181
    %v572 = vunpack.c.l.b16 %v182
    %v573 = vunpack.c.h.b16 %v182
    %v574 = vunpack.c.l.b16 %v183
    %v575 = vunpack.c.h.b16 %v183
    %v576 = vunpack.c.l.b16 %v184
    %v577 = vunpack.c.h.b16 %v184
    %v578 = vunpack.c.l.b16 %v185
    %v579 = vunpack.c.h.b16 %v185
    %v580 = vunpack.c.l.b16 %v186
    %v581 = vunpack.c.h.b16 %v186
    %v582 = vunpack.c.l.b16 %v187
    %v583 = vunpack.c.h.b16 %v187
    %v584 = vunpack.c.l.b16 %v188
    %v585 = vunpack.c.h.b16 %v188
    %v586 = vunpack.c.l.b16 %v189
    %v587 = vunpack.c.h.b16 %v189
    %v588 = vunpack.c.l.b16 %v190
    %v589 = vunpack.c.h.b16 %v190
    %v590 = vunpack.c.l.b16 %v191
    %v591 = vunpack.c.h.b16 %v191
    %v592 = vunpack.c.l.b16 %v192
    %v593 = vunpack.c.h.b16 %v192
    %v594 = vunpack.c.l.b16 %v193
    %v595 = vunpack.c.h.b16 %v193
    %v596 = vunpack.c.l.b16 %v194
    %v597 = vunpack.c.h.b16 %v194
    %v598 = vunpack.c.l.b16 %v195
    %v599 = vunpack.c.h.b16 %v195
    %v600 = vunpack.c.l.b16 %v196
    %v601 = vunpack.c.h.b16 %v196
    %v602 = vunpack.c.l.b16 %v197
    %v603 = vunpack.c.h.b16 %v197
    %v604 = vunpack.c.l.b16 %v198
    %v605 = vunpack.c.h.b16 %v198
    %v606 = vunpack.c.l.b16 %v199
    %v607 = vunpack.c.h.b16 %v199
    %v608 = vunpack.c.l.b16 %v200
    %v609 = vunpack.c.h.b16 %v200
    %v610 = vunpack.c.l.b16 %v201
    %v611 = vunpack.c.h.b16 %v201
    %v612 = vunpack.c.l.b16 %v202
    %v613 = vunpack.c.h.b16 %v202
    %v614 = vunpack.c.l.b16 %v203
    %v615 = vunpack.c.h.b16 %v203
    %v616 = vunpack.c.l.b16 %v204
    %v617 = vunpack.c.h.b16 %v204
    %v618 = vunpack.c.l.b16 %v205
    %v619 = vunpack.c.h.b16 %v205
    %v620 = vunpack.c.l.b16 %v206
    %v621 = vunpack.c.h.b16 %v206
    %v622 = vunpack.c.l.b16 %v207
    %v623 = vunpack.c.h.b16 %v207
    %v624 = vunpack.c.l.b16 %v208
    %v625 = vunpack.c.h.b16 %v208
    %v626 = vunpack.c.l.b16 %v209
    %v627 = vunpack.c.h.b16 %v209
    %v628 = vunpack.c.l.b16 %v210
    %v629 = vunpack.c.h.b16 %v210
    %v630 = vunpack.c.l.b16 %v211
    %v631 = vunpack.c.h.b16 %v211
    %v632 = vunpack.c.l.b16 %v212
    %v633 = vunpack.c.h.b16 %v212
    %v634 = vunpack.c.l.b16 %v213
    %v635 = vunpack.c.h.b16 %v213
    %v636 = vunpack.c.l.b16 %v214
    %v637 = vunpack.c.h.b16 %v214
    %v638 = vunpack.c.l.b16 %v215
    %v639 = vunpack.c.h.b16 %v215
    %v640 = vunpack.c.l.b16 %v216
    %v641 = vunpack.c.h.b16 %v216
    %v642 = vunpack.c.l.b16 %v217
    %v643 = vunpack.c.h.b16 %v217
    %v644 = vunpack.c.l.b16 %v218
    %v645 = vunpack.c.h.b16 %v218
    %v646 = vunpack.c.l.b16 %v219
    %v647 = vunpack.c.h.b16 %v219
    %v648 = vunpack.c.l.b16 %v220
    %v649 = vunpack.c.h.b16 %v220
    %v650 = vunpack.c.l.b16 %v221
    %v651 = vunpack.c.h.b16 %v221
    %v652 = vunpack.c.l.b16 %v222
    %v653 = vunpack.c.h.b16 %v222
    %v654 = vunpack.c.l.b16 %v223
    %v655 = vunpack.c.h.b16 %v223
    %v656 = vunpack.c.l.b16 %v224
    %v657 = vunpack.c.h.b16 %v224
    %v658 = vunpack.c.l.b16 %v225
    %v659 = vunpack.c.h.b16 %v225
    %v660 = vunpack.c.l.b16 %v226
    %v661 = vunpack.c.h.b16 %v226
    %v662 = vunpack.c.l.b16 %v227
    %v663 = vunpack.c.h.b16 %v227
    %v664 = vunpack.c.l.b16 %v228
    %v665 = vunpack.c.h.b16 %v228
    %v666 = vunpack.c.l.b16 %v229
    %v667 = vunpack.c.h.b16 %v229
    %v668 = vpack.c.b16 %v480, %v476
    %v669 = vpack.c.b16 %v481, %v477
    %v670 = vpack.c.b16 %v482, %v478
    %v671 = vpack.c.b16 %v483, %v479
    %v672 = vpack.c.b16 %v488, %v484
    %v673 = vpack.c.b16 %v489, %v485
    %v674 = vpack.c.b16 %v490, %v486
    %v675 = vpack.c.b16 %v491, %v487
    %v676 = vpack.c.b16 %v496, %v492
    %v677 = vpack.c.b16 %v497, %v493
    %v678 = vpack.c.b16 %v498, %v494
    %v679 = vpack.c.b16 %v499, %v495
    %v680 = vpack.c.b16 %v504, %v500
    %v681 = vpack.c.b16 %v505, %v501
    %v682 = vpack.c.b16 %v506, %v502
    %v683 = vpack.c.b16 %v507, %v503
    %v684 = vpack.c.b16 %v512, %v508
    %v685 = vpack.c.b16 %v513, %v509
    %v686 = vpack.c.b16 %v514, %v510
    %v687 = vpack.c.b16 %v515, %v511
    %v688 = vpack.c.b16 %v520, %v516
    %v689 = vpack.c.b16 %v521, %v517
    %v690 = vpack.c.b16 %v522, %v518
    %v691 = vpack.c.b16 %v523, %v519
    %v692 = vpack.c.b16 %v528, %v524
    %v693 = vpack.c.b16 %v529, %v525
    %v694 = vpack.c.b16 %v530, %v526
    %v695 = vpack.c.b16 %v531, %v527
    %v696 = vpack.c.b16 %v536, %v532
    %v697 = vpack.c.b16 %v537, %v533
    %v698 = vpack.c.b16 %v538, %v534
    %v699 = vpack.c.b16 %v539, %v535
    %v700 = vpack.c.b16 %v544, %v540
    %v701 = vpack.c.b16 %v545, %v541
    %v702 = vpack.c.b16 %v546, %v542
    %v703 = vpack.c.b16 %v547, %v543
    %v704 = vpack.c.b16 %v552, %v548
    %v705 = vpack.c.b16 %v553, %v549
    %v706 = vpack.c.b16 %v554, %v550
    %v707 = vpack.c.b16 %v555, %v551
    %v708 = vpack.c.b16 %v560, %v556
    %v709 = vpack.c.b16 %v561, %v557
    %v710 = vpack.c.b16 %v562, %v558
    %v711 = vpack.c.b16 %v563, %v559
    %v712 = vpack.c.b16 %v568, %v564
    %v713 = vpack.c.b16 %v569, %v565
    %v714 = vpack.c.b16 %v570, %v566
    %v715 = vpack.c.b16 %v571, %v567
    %v716 = vpack.c.b16 %v576, %v572
    %v717 = vpack.c.b16 %v577, %v573
    %v718 = vpack.c.b16 %v578, %v574
    %v719 = vpack.c.b16 %v579, %v575
    %v720 = vpack.c.b16 %v584, %v580
    %v721 = vpack.c.b16 %v585, %v581
    %v722 = vpack.c.b16 %v586, %v582
    %v723 = vpack.c.b16 %v587, %v583
    %v724 = vpack.c.b16 %v592, %v588
    %v725 = vpack.c.b16 %v593, %v589
    %v726 = vpack.c.b16 %v594, %v590
    %v727 = vpack.c.b16 %v595, %v591
    %v728 = vpack.c.b16 %v600, %v596
    %v729 = vpack.c.b16 %v601, %v597
    %v730 = vpack.c.b16 %v602, %v598
    %v731 = vpack.c.b16 %v603, %v599
    %v732 = vpack.c.b16 %v608, %v604
    %v733 = vpack.c.b16 %v609, %v605
    %v734 = vpack.c.b16 %v610, %v606
    %v735 = vpack.c.b16 %v611, %v607
    %v736 = vpack.c.b16 %v616, %v612
    %v737 = vpack.c.b16 %v617, %v613
    %v738 = vpack.c.b16 %v618, %v614
    %v739 = vpack.c.b16 %v619, %v615
    %v740 = vpack.c.b16 %v624, %v620
    %v741 = vpack.c.b16 %v625, %v621
    %v742 = vpack.c.b16 %v626, %v622
    %v743 = vpack.c.b16 %v627, %v623
    %v744 = vpack.c.b16 %v632, %v628
    %v745 = vpack.c.b16 %v633, %v629
    %v746 = vpack.c.b16 %v634, %v630
    %v747 = vpack.c.b16 %v635, %v631
    %v748 = vpack.c.b16 %v640, %v636
    %v749 = vpack.c.b16 %v641, %v637
    %v750 = vpack.c.b16 %v642, %v638
    %v751 = vpack.c.b16 %v643, %v639
    %v752 = vpack.c.b16 %v648, %v644
    %v753 = vpack.c.b16 %v649, %v645
    %v754 = vpack.c.b16 %v650, %v646
    %v755 = vpack.c.b16 %v651, %v647
    %v756 = vpack.c.b16 %v656, %v652
    %v757 = vpack.c.b16 %v657, %v653
    %v758 = vpack.c.b16 %v658, %v654
    %v759 = vpack.c.b16 %v659, %v655
    %v760 = vpack.c.b16 %v664, %v660
    %v761 = vpack.c.b16 %v665, %v661
    %v762 = vpack.c.b16 %v666, %v662
    %v763 = vpack.c.b16 %v667, %v663
    %860 = vmatprep.subr.bf16.mxu0 %v669
    %861 = vmatpush1.bf16.msra.mxu0 %v668
    %862 = vmatprep.subr.bf16.mxu0 %v673
    %863 = vmatpush1.bf16.msra.mxu0 %v672
    %864 = vmatprep.subr.bf16.mxu0 %v677
    %865 = vmatpush1.bf16.msra.mxu0 %v676
    %866 = vmatprep.subr.bf16.mxu0 %v681
    %867 = vmatpush1.bf16.msra.mxu0 %v680
    %868 = vmatprep.subr.bf16.mxu0 %v685
    %869 = vmatpush1.bf16.msra.mxu0 %v684
    %870 = vmatprep.subr.bf16.mxu0 %v689
    %871 = vmatpush1.bf16.msra.mxu0 %v688
    %872 = vmatprep.subr.bf16.mxu0 %v693
    %873 = vmatpush1.bf16.msra.mxu0 %v692
    %874 = vmatprep.subr.bf16.mxu0 %v697
    %875 = vmatpush1.bf16.msra.mxu0 %v696
    %876 = vmatprep.subr.bf16.mxu0 %v701
    %877 = vmatpush1.bf16.msra.mxu0 %v700
    %878 = vmatprep.subr.bf16.mxu0 %v705
    %879 = vmatpush1.bf16.msra.mxu0 %v704
    %880 = vmatprep.subr.bf16.mxu0 %v709
    %881 = vmatpush1.bf16.msra.mxu0 %v708
    %882 = vmatprep.subr.bf16.mxu0 %v713
    %883 = vmatpush1.bf16.msra.mxu0 %v712
    %884 = vmatprep.subr.bf16.mxu0 %v717
    %885 = vmatpush1.bf16.msra.mxu0 %v716
    %886 = vmatprep.subr.bf16.mxu0 %v721
    %887 = vmatpush1.bf16.msra.mxu0 %v720
    %888 = vmatprep.subr.bf16.mxu0 %v725
    %889 = vmatpush1.bf16.msra.mxu0 %v724
    %890 = vmatprep.subr.bf16.mxu0 %v729
    %891 = vmatpush1.bf16.msra.mxu0 %v728
    %892 = vmatprep.mubr.bf16.mxu0 %v333
    %893 = vmatmul.mubr.bf16.gmra.mrb[0].mxu0 %v332
    %v894 = vpop.f32.mrb[0].mxu0
    %v895 = vadd.f32 %v235, %v894
    %v896 = vpop.f32.mrb[0].mxu0
    %v897 = vadd.f32 %v239, %v896
    %v898 = vpop.f32.mrb[0].mxu0
    %v899 = vadd.f32 %v235, %v898
    %v900 = vpop.f32.mrb[0].mxu0
    %v901 = vadd.f32 %v239, %v900
    %902 = vmatprep.mubr.bf16.mxu0 %v336
    %903 = vmatmul.mubr.bf16.gmra.mrb[0].mxu0 %v335
    %v904 = vpop.f32.mrb[0].mxu0
    %v905 = vadd.f32 %v235, %v904
    %v906 = vpop.f32.mrb[0].mxu0
    %v907 = vadd.f32 %v239, %v906
    %v908 = vpop.f32.mrb[0].mxu0
    %v909 = vadd.f32 %v235, %v908
    %v910 = vpop.f32.mrb[0].mxu0
    %v911 = vadd.f32 %v239, %v910
    %912 = vmatprep.mubr.bf16.mxu0 %v339
    %913 = vmatmul.mubr.bf16.gmra.mrb[0].mxu0 %v338
    %v914 = vpop.f32.mrb[0].mxu0
    %v915 = vadd.f32 %v235, %v914
    %v916 = vpop.f32.mrb[0].mxu0
    %v917 = vadd.f32 %v239, %v916
    %v918 = vpop.f32.mrb[0].mxu0
    %v919 = vadd.f32 %v235, %v918
    %v920 = vpop.f32.mrb[0].mxu0
    %v921 = vadd.f32 %v239, %v920
    %922 = vmatprep.mubr.bf16.mxu0 %v342
    %923 = vmatmul.mubr.bf16.gmra.mrb[0].mxu0 %v341
    %v924 = vpop.f32.mrb[0].mxu0
    %v925 = vadd.f32 %v235, %v924
    %v926 = vpop.f32.mrb[0].mxu0
    %v927 = vadd.f32 %v239, %v926
    %v928 = vpop.f32.mrb[0].mxu0
    %v929 = vadd.f32 %v235, %v928
    %v930 = vpop.f32.mrb[0].mxu0
    %v931 = vadd.f32 %v239, %v930
    %932 = vmatprep.mubr.bf16.mxu0 %v345
    %933 = vmatmul.mubr.bf16.gmra.mrb[0].mxu0 %v344
    %v934 = vpop.f32.mrb[0].mxu0
    %v935 = vadd.f32 %v235, %v934
    %v936 = vpop.f32.mrb[0].mxu0
    %v937 = vadd.f32 %v239, %v936
    %v938 = vpop.f32.mrb[0].mxu0
    %v939 = vadd.f32 %v235, %v938
    %v940 = vpop.f32.mrb[0].mxu0
    %v941 = vadd.f32 %v239, %v940
    %942 = vmatprep.mubr.bf16.mxu0 %v348
    %943 = vmatmul.mubr.bf16.gmra.mrb[0].mxu0 %v347
    %v944 = vpop.f32.mrb[0].mxu0
    %v945 = vadd.f32 %v235, %v944
    %v946 = vpop.f32.mrb[0].mxu0
    %v947 = vadd.f32 %v239, %v946
    %v948 = vpop.f32.mrb[0].mxu0
    %v949 = vadd.f32 %v235, %v948
    %v950 = vpop.f32.mrb[0].mxu0
    %v951 = vadd.f32 %v239, %v950
    %952 = vmatprep.mubr.bf16.mxu0 %v351
    %953 = vmatmul.mubr.bf16.gmra.mrb[0].mxu0 %v350
    %v954 = vpop.f32.mrb[0].mxu0
    %v955 = vadd.f32 %v235, %v954
    %v956 = vpop.f32.mrb[0].mxu0
    %v957 = vadd.f32 %v239, %v956
    %v958 = vpop.f32.mrb[0].mxu0
    %v959 = vadd.f32 %v235, %v958
    %v960 = vpop.f32.mrb[0].mxu0
    %v961 = vadd.f32 %v239, %v960
    %962 = vmatprep.mubr.bf16.mxu0 %v354
    %963 = vmatmul.mubr.bf16.gmra.mrb[0].mxu0 %v353
    %v964 = vpop.f32.mrb[0].mxu0
    %v965 = vadd.f32 %v235, %v964
    %v966 = vpop.f32.mrb[0].mxu0
    %v967 = vadd.f32 %v239, %v966
    %v968 = vpop.f32.mrb[0].mxu0
    %v969 = vadd.f32 %v235, %v968
    %v970 = vpop.f32.mrb[0].mxu0
    %v971 = vadd.f32 %v239, %v970
    %972 = vdwg.mxu0
    %973 = vmatprep.subr.bf16.mxu0 %v733
    %974 = vmatpush1.bf16.msra.mxu0 %v732
    %975 = vmatprep.subr.bf16.mxu0 %v737
    %976 = vmatpush1.bf16.msra.mxu0 %v736
    %977 = vmatprep.subr.bf16.mxu0 %v741
    %978 = vmatpush1.bf16.msra.mxu0 %v740
    %979 = vmatprep.subr.bf16.mxu0 %v745
    %980 = vmatpush1.bf16.msra.mxu0 %v744
    %981 = vmatprep.subr.bf16.mxu0 %v749
    %982 = vmatpush1.bf16.msra.mxu0 %v748
    %983 = vmatprep.subr.bf16.mxu0 %v753
    %984 = vmatpush1.bf16.msra.mxu0 %v752
    %985 = vmatprep.subr.bf16.mxu0 %v757
    %986 = vmatpush1.bf16.msra.mxu0 %v756
    %987 = vmatprep.subr.bf16.mxu0 %v761
    %988 = vmatpush1.bf16.msra.mxu0 %v760
    %989 = vmatprep.subr.bf16.mxu0 0
    %990 = vmatpush1.bf16.msra.mxu0 0
    %991 = vmatprep.subr.bf16.mxu0 0
    %992 = vmatpush1.bf16.msra.mxu0 0
    %993 = vmatprep.subr.bf16.mxu0 0
    %994 = vmatpush1.bf16.msra.mxu0 0
    %995 = vmatprep.subr.bf16.mxu0 0
    %996 = vmatpush1.bf16.msra.mxu0 0
    %997 = vmatprep.subr.bf16.mxu0 0
    %998 = vmatpush1.bf16.msra.mxu0 0
    %999 = vmatprep.subr.bf16.mxu0 0
    %1000 = vmatpush1.bf16.msra.mxu0 0
    %1001 = vmatprep.subr.bf16.mxu0 0
    %1002 = vmatpush1.bf16.msra.mxu0 0
    %1003 = vmatprep.subr.bf16.mxu0 0
    %1004 = vmatpush1.bf16.msra.mxu0 0
    %1005 = vmatprep.mubr.bf16.mxu0 0
    %1006 = vmatmul.mubr.bf16.gmra.mrb[0].mxu0 %v334
    %v1007 = vpop.f32.mrb[0].mxu0
    %v1008 = vadd.f32 %v895, %v1007
    %v1009 = vpop.f32.mrb[0].mxu0
    %v1010 = vadd.f32 %v897, %v1009
    %v1011 = vpop.f32.mrb[0].mxu0
    %v1012 = vadd.f32 %v899, %v1011
    %v1013 = vpop.f32.mrb[0].mxu0
    %v1014 = vadd.f32 %v901, %v1013
    %1015 = vmatprep.mubr.bf16.mxu0 0
    %1016 = vmatmul.mubr.bf16.gmra.mrb[0].mxu0 %v337
    %v1017 = vpop.f32.mrb[0].mxu0
    %v1018 = vadd.f32 %v905, %v1017
    %v1019 = vpop.f32.mrb[0].mxu0
    %v1020 = vadd.f32 %v907, %v1019
    %v1021 = vpop.f32.mrb[0].mxu0
    %v1022 = vadd.f32 %v909, %v1021
    %v1023 = vpop.f32.mrb[0].mxu0
    %v1024 = vadd.f32 %v911, %v1023
    %1025 = vmatprep.mubr.bf16.mxu0 0
    %1026 = vmatmul.mubr.bf16.gmra.mrb[0].mxu0 %v340
    %v1027 = vpop.f32.mrb[0].mxu0
    %v1028 = vadd.f32 %v915, %v1027
    %v1029 = vpop.f32.mrb[0].mxu0
    %v1030 = vadd.f32 %v917, %v1029
    %v1031 = vpop.f32.mrb[0].mxu0
    %v1032 = vadd.f32 %v919, %v1031
    %v1033 = vpop.f32.mrb[0].mxu0
    %v1034 = vadd.f32 %v921, %v1033
    %1035 = vmatprep.mubr.bf16.mxu0 0
    %1036 = vmatmul.mubr.bf16.gmra.mrb[0].mxu0 %v343
    %v1037 = vpop.f32.mrb[0].mxu0
    %v1038 = vadd.f32 %v925, %v1037
    %v1039 = vpop.f32.mrb[0].mxu0
    %v1040 = vadd.f32 %v927, %v1039
    %v1041 = vpop.f32.mrb[0].mxu0
    %v1042 = vadd.f32 %v929, %v1041
    %v1043 = vpop.f32.mrb[0].mxu0
    %v1044 = vadd.f32 %v931, %v1043
    %1045 = vmatprep.mubr.bf16.mxu0 0
    %1046 = vmatmul.mubr.bf16.gmra.mrb[0].mxu0 %v346
    %v1047 = vpop.f32.mrb[0].mxu0
    %v1048 = vadd.f32 %v935, %v1047
    %v1049 = vpop.f32.mrb[0].mxu0
    %v1050 = vadd.f32 %v937, %v1049
    %v1051 = vpop.f32.mrb[0].mxu0
    %v1052 = vadd.f32 %v939, %v1051
    %v1053 = vpop.f32.mrb[0].mxu0
    %v1054 = vadd.f32 %v941, %v1053
    %1055 = vmatprep.mubr.bf16.mxu0 0
    %1056 = vmatmul.mubr.bf16.gmra.mrb[0].mxu0 %v349
    %v1057 = vpop.f32.mrb[0].mxu0
    %v1058 = vadd.f32 %v945, %v1057
    %v1059 = vpop.f32.mrb[0].mxu0
    %v1060 = vadd.f32 %v947, %v1059
    %v1061 = vpop.f32.mrb[0].mxu0
    %v1062 = vadd.f32 %v949, %v1061
    %v1063 = vpop.f32.mrb[0].mxu0
    %v1064 = vadd.f32 %v951, %v1063
    %1065 = vmatprep.mubr.bf16.mxu0 0
    %1066 = vmatmul.mubr.bf16.gmra.mrb[0].mxu0 %v352
    %v1067 = vpop.f32.mrb[0].mxu0
    %v1068 = vadd.f32 %v955, %v1067
    %v1069 = vpop.f32.mrb[0].mxu0
    %v1070 = vadd.f32 %v957, %v1069
    %v1071 = vpop.f32.mrb[0].mxu0
    %v1072 = vadd.f32 %v959, %v1071
    %v1073 = vpop.f32.mrb[0].mxu0
    %v1074 = vadd.f32 %v961, %v1073
    %1075 = vmatprep.mubr.bf16.mxu0 0
    %1076 = vmatmul.mubr.bf16.gmra.mrb[0].mxu0 %v355
    %v1077 = vpop.f32.mrb[0].mxu0
    %v1078 = vadd.f32 %v965, %v1077
    %v1079 = vpop.f32.mrb[0].mxu0
    %v1080 = vadd.f32 %v967, %v1079
    %v1081 = vpop.f32.mrb[0].mxu0
    %v1082 = vadd.f32 %v969, %v1081
    %v1083 = vpop.f32.mrb[0].mxu0
    %v1084 = vadd.f32 %v971, %v1083
    %1085 = vdwg.mxu0
    %1086 = vmatprep.subr.bf16.mxu0 %v671
    %1087 = vmatpush1.bf16.msra.mxu0 %v670
    %1088 = vmatprep.subr.bf16.mxu0 %v675
    %1089 = vmatpush1.bf16.msra.mxu0 %v674
    %1090 = vmatprep.subr.bf16.mxu0 %v679
    %1091 = vmatpush1.bf16.msra.mxu0 %v678
    %1092 = vmatprep.subr.bf16.mxu0 %v683
    %1093 = vmatpush1.bf16.msra.mxu0 %v682
    %1094 = vmatprep.subr.bf16.mxu0 %v687
    %1095 = vmatpush1.bf16.msra.mxu0 %v686
    %1096 = vmatprep.subr.bf16.mxu0 %v691
    %1097 = vmatpush1.bf16.msra.mxu0 %v690
    %1098 = vmatprep.subr.bf16.mxu0 %v695
    %1099 = vmatpush1.bf16.msra.mxu0 %v694
    %1100 = vmatprep.subr.bf16.mxu0 %v699
    %1101 = vmatpush1.bf16.msra.mxu0 %v698
    %1102 = vmatprep.subr.bf16.mxu0 %v703
    %1103 = vmatpush1.bf16.msra.mxu0 %v702
    %1104 = vmatprep.subr.bf16.mxu0 %v707
    %1105 = vmatpush1.bf16.msra.mxu0 %v706
    %1106 = vmatprep.subr.bf16.mxu0 %v711
    %1107 = vmatpush1.bf16.msra.mxu0 %v710
    %1108 = vmatprep.subr.bf16.mxu0 %v715
    %1109 = vmatpush1.bf16.msra.mxu0 %v714
    %1110 = vmatprep.subr.bf16.mxu0 %v719
    %1111 = vmatpush1.bf16.msra.mxu0 %v718
    %1112 = vmatprep.subr.bf16.mxu0 %v723
    %1113 = vmatpush1.bf16.msra.mxu0 %v722
    %1114 = vmatprep.subr.bf16.mxu0 %v727
    %1115 = vmatpush1.bf16.msra.mxu0 %v726
    %1116 = vmatprep.subr.bf16.mxu0 %v731
    %1117 = vmatpush1.bf16.msra.mxu0 %v730
    %1118 = vmatprep.mubr.bf16.mxu0 %v333
    %1119 = vmatmul.mubr.bf16.gmra.mrb[0].mxu0 %v332
    %v1120 = vpop.f32.mrb[0].mxu0
    %v1121 = vadd.f32 %v243, %v1120
    %v1122 = vpop.f32.mrb[0].mxu0
    %v1123 = vadd.f32 %v247, %v1122
    %v1124 = vpop.f32.mrb[0].mxu0
    %v1125 = vadd.f32 %v243, %v1124
    %v1126 = vpop.f32.mrb[0].mxu0
    %v1127 = vadd.f32 %v247, %v1126
    %1128 = vmatprep.mubr.bf16.mxu0 %v336
    %1129 = vmatmul.mubr.bf16.gmra.mrb[0].mxu0 %v335
    %v1130 = vpop.f32.mrb[0].mxu0
    %v1131 = vadd.f32 %v243, %v1130
    %v1132 = vpop.f32.mrb[0].mxu0
    %v1133 = vadd.f32 %v247, %v1132
    %v1134 = vpop.f32.mrb[0].mxu0
    %v1135 = vadd.f32 %v243, %v1134
    %v1136 = vpop.f32.mrb[0].mxu0
    %v1137 = vadd.f32 %v247, %v1136
    %1138 = vmatprep.mubr.bf16.mxu0 %v339
    %1139 = vmatmul.mubr.bf16.gmra.mrb[0].mxu0 %v338
    %v1140 = vpop.f32.mrb[0].mxu0
    %v1141 = vadd.f32 %v243, %v1140
    %v1142 = vpop.f32.mrb[0].mxu0
    %v1143 = vadd.f32 %v247, %v1142
    %v1144 = vpop.f32.mrb[0].mxu0
    %v1145 = vadd.f32 %v243, %v1144
    %v1146 = vpop.f32.mrb[0].mxu0
    %v1147 = vadd.f32 %v247, %v1146
    %1148 = vmatprep.mubr.bf16.mxu0 %v342
    %1149 = vmatmul.mubr.bf16.gmra.mrb[0].mxu0 %v341
    %v1150 = vpop.f32.mrb[0].mxu0
    %v1151 = vadd.f32 %v243, %v1150
    %v1152 = vpop.f32.mrb[0].mxu0
    %v1153 = vadd.f32 %v247, %v1152
    %v1154 = vpop.f32.mrb[0].mxu0
    %v1155 = vadd.f32 %v243, %v1154
    %v1156 = vpop.f32.mrb[0].mxu0
    %v1157 = vadd.f32 %v247, %v1156
    %1158 = vmatprep.mubr.bf16.mxu0 %v345
    %1159 = vmatmul.mubr.bf16.gmra.mrb[0].mxu0 %v344
    %v1160 = vpop.f32.mrb[0].mxu0
    %v1161 = vadd.f32 %v243, %v1160
    %v1162 = vpop.f32.mrb[0].mxu0
    %v1163 = vadd.f32 %v247, %v1162
    %v1164 = vpop.f32.mrb[0].mxu0
    %v1165 = vadd.f32 %v243, %v1164
    %v1166 = vpop.f32.mrb[0].mxu0
    %v1167 = vadd.f32 %v247, %v1166
    %1168 = vmatprep.mubr.bf16.mxu0 %v348
    %1169 = vmatmul.mubr.bf16.gmra.mrb[0].mxu0 %v347
    %v1170 = vpop.f32.mrb[0].mxu0
    %v1171 = vadd.f32 %v243, %v1170
    %v1172 = vpop.f32.mrb[0].mxu0
    %v1173 = vadd.f32 %v247, %v1172
    %v1174 = vpop.f32.mrb[0].mxu0
    %v1175 = vadd.f32 %v243, %v1174
    %v1176 = vpop.f32.mrb[0].mxu0
    %v1177 = vadd.f32 %v247, %v1176
    %1178 = vmatprep.mubr.bf16.mxu0 %v351
    %1179 = vmatmul.mubr.bf16.gmra.mrb[0].mxu0 %v350
    %v1180 = vpop.f32.mrb[0].mxu0
    %v1181 = vadd.f32 %v243, %v1180
    %v1182 = vpop.f32.mrb[0].mxu0
    %v1183 = vadd.f32 %v247, %v1182
    %v1184 = vpop.f32.mrb[0].mxu0
    %v1185 = vadd.f32 %v243, %v1184
    %v1186 = vpop.f32.mrb[0].mxu0
    %v1187 = vadd.f32 %v247, %v1186
    %1188 = vmatprep.mubr.bf16.mxu0 %v354
    %1189 = vmatmul.mubr.bf16.gmra.mrb[0].mxu0 %v353
    %v1190 = vpop.f32.mrb[0].mxu0
    %v1191 = vadd.f32 %v243, %v1190
    %v1192 = vpop.f32.mrb[0].mxu0
    %v1193 = vadd.f32 %v247, %v1192
    %v1194 = vpop.f32.mrb[0].mxu0
    %v1195 = vadd.f32 %v243, %v1194
    %v1196 = vpop.f32.mrb[0].mxu0
    %v1197 = vadd.f32 %v247, %v1196
    %1198 = vdwg.mxu0
    %1199 = vmatprep.subr.bf16.mxu0 %v735
    %1200 = vmatpush1.bf16.msra.mxu0 %v734
    %1201 = vmatprep.subr.bf16.mxu0 %v739
    %1202 = vmatpush1.bf16.msra.mxu0 %v738
    %1203 = vmatprep.subr.bf16.mxu0 %v743
    %1204 = vmatpush1.bf16.msra.mxu0 %v742
    %1205 = vmatprep.subr.bf16.mxu0 %v747
    %1206 = vmatpush1.bf16.msra.mxu0 %v746
    %1207 = vmatprep.subr.bf16.mxu0 %v751
    %1208 = vmatpush1.bf16.msra.mxu0 %v750
    %1209 = vmatprep.subr.bf16.mxu0 %v755
    %1210 = vmatpush1.bf16.msra.mxu0 %v754
    %1211 = vmatprep.subr.bf16.mxu0 %v759
    %1212 = vmatpush1.bf16.msra.mxu0 %v758
    %1213 = vmatprep.subr.bf16.mxu0 %v763
    %1214 = vmatpush1.bf16.msra.mxu0 %v762
    %1215 = vmatprep.subr.bf16.mxu0 0
    %1216 = vmatpush1.bf16.msra.mxu0 0
    %1217 = vmatprep.subr.bf16.mxu0 0
    %1218 = vmatpush1.bf16.msra.mxu0 0
    %1219 = vmatprep.subr.bf16.mxu0 0
    %1220 = vmatpush1.bf16.msra.mxu0 0
    %1221 = vmatprep.subr.bf16.mxu0 0
    %1222 = vmatpush1.bf16.msra.mxu0 0
    %1223 = vmatprep.subr.bf16.mxu0 0
    %1224 = vmatpush1.bf16.msra.mxu0 0
    %1225 = vmatprep.subr.bf16.mxu0 0
    %1226 = vmatpush1.bf16.msra.mxu0 0
    %1227 = vmatprep.subr.bf16.mxu0 0
    %1228 = vmatpush1.bf16.msra.mxu0 0
    %1229 = vmatprep.subr.bf16.mxu0 0
    %1230 = vmatpush1.bf16.msra.mxu0 0
    %1231 = vmatprep.mubr.bf16.mxu0 0
    %1232 = vmatmul.mubr.bf16.gmra.mrb[0].mxu0 %v334
    %v1233 = vpop.f32.mrb[0].mxu0
    %v1234 = vadd.f32 %v1121, %v1233
    %v1235 = vpop.f32.mrb[0].mxu0
    %v1236 = vadd.f32 %v1123, %v1235
    %v1237 = vpop.f32.mrb[0].mxu0
    %v1238 = vadd.f32 %v1125, %v1237
    %v1239 = vpop.f32.mrb[0].mxu0
    %v1240 = vadd.f32 %v1127, %v1239
    %1241 = vmatprep.mubr.bf16.mxu0 0
    %1242 = vmatmul.mubr.bf16.gmra.mrb[0].mxu0 %v337
    %v1243 = vpop.f32.mrb[0].mxu0
    %v1244 = vadd.f32 %v1131, %v1243
    %v1245 = vpop.f32.mrb[0].mxu0
    %v1246 = vadd.f32 %v1133, %v1245
    %v1247 = vpop.f32.mrb[0].mxu0
    %v1248 = vadd.f32 %v1135, %v1247
    %v1249 = vpop.f32.mrb[0].mxu0
    %v1250 = vadd.f32 %v1137, %v1249
    %1251 = vmatprep.mubr.bf16.mxu0 0
    %1252 = vmatmul.mubr.bf16.gmra.mrb[0].mxu0 %v340
    %v1253 = vpop.f32.mrb[0].mxu0
    %v1254 = vadd.f32 %v1141, %v1253
    %v1255 = vpop.f32.mrb[0].mxu0
    %v1256 = vadd.f32 %v1143, %v1255
    %v1257 = vpop.f32.mrb[0].mxu0
    %v1258 = vadd.f32 %v1145, %v1257
    %v1259 = vpop.f32.mrb[0].mxu0
    %v1260 = vadd.f32 %v1147, %v1259
    %1261 = vmatprep.mubr.bf16.mxu0 0
    %1262 = vmatmul.mubr.bf16.gmra.mrb[0].mxu0 %v343
    %v1263 = vpop.f32.mrb[0].mxu0
    %v1264 = vadd.f32 %v1151, %v1263
    %v1265 = vpop.f32.mrb[0].mxu0
    %v1266 = vadd.f32 %v1153, %v1265
    %v1267 = vpop.f32.mrb[0].mxu0
    %v1268 = vadd.f32 %v1155, %v1267
    %v1269 = vpop.f32.mrb[0].mxu0
    %v1270 = vadd.f32 %v1157, %v1269
    %1271 = vmatprep.mubr.bf16.mxu0 0
    %1272 = vmatmul.mubr.bf16.gmra.mrb[0].mxu0 %v346
    %v1273 = vpop.f32.mrb[0].mxu0
    %v1274 = vadd.f32 %v1161, %v1273
    %v1275 = vpop.f32.mrb[0].mxu0
    %v1276 = vadd.f32 %v1163, %v1275
    %v1277 = vpop.f32.mrb[0].mxu0
    %v1278 = vadd.f32 %v1165, %v1277
    %v1279 = vpop.f32.mrb[0].mxu0
    %v1280 = vadd.f32 %v1167, %v1279
    %1281 = vmatprep.mubr.bf16.mxu0 0
    %1282 = vmatmul.mubr.bf16.gmra.mrb[0].mxu0 %v349
    %v1283 = vpop.f32.mrb[0].mxu0
    %v1284 = vadd.f32 %v1171, %v1283
    %v1285 = vpop.f32.mrb[0].mxu0
    %v1286 = vadd.f32 %v1173, %v1285
    %v1287 = vpop.f32.mrb[0].mxu0
    %v1288 = vadd.f32 %v1175, %v1287
    %v1289 = vpop.f32.mrb[0].mxu0
    %v1290 = vadd.f32 %v1177, %v1289
    %1291 = vmatprep.mubr.bf16.mxu0 0
    %1292 = vmatmul.mubr.bf16.gmra.mrb[0].mxu0 %v352
    %v1293 = vpop.f32.mrb[0].mxu0
    %v1294 = vadd.f32 %v1181, %v1293
    %v1295 = vpop.f32.mrb[0].mxu0
    %v1296 = vadd.f32 %v1183, %v1295
    %v1297 = vpop.f32.mrb[0].mxu0
    %v1298 = vadd.f32 %v1185, %v1297
    %v1299 = vpop.f32.mrb[0].mxu0
    %v1300 = vadd.f32 %v1187, %v1299
    %1301 = vmatprep.mubr.bf16.mxu0 0
    %1302 = vmatmul.mubr.bf16.gmra.mrb[0].mxu0 %v355
    %v1303 = vpop.f32.mrb[0].mxu0
    %v1304 = vadd.f32 %v1191, %v1303
    %v1305 = vpop.f32.mrb[0].mxu0
    %v1306 = vadd.f32 %v1193, %v1305
    %v1307 = vpop.f32.mrb[0].mxu0
    %v1308 = vadd.f32 %v1195, %v1307
    %v1309 = vpop.f32.mrb[0].mxu0
    %v1310 = vadd.f32 %v1197, %v1309
    %1311 = vdwg.mxu0
    %v1312 = vmax.f32 %v1008, 0.0
    %v1313 = vmax.f32 %v1010, 0.0
    %v1314 = vmax.f32 %v1234, 0.0
    %v1315 = vmax.f32 %v1236, 0.0
    %v1316 = vmax.f32 %v1012, 0.0
    %v1317 = vmax.f32 %v1014, 0.0
    %v1318 = vmax.f32 %v1238, 0.0
    %v1319 = vmax.f32 %v1240, 0.0
    %v1320 = vmax.f32 %v1018, 0.0
    %v1321 = vmax.f32 %v1020, 0.0
    %v1322 = vmax.f32 %v1244, 0.0
    %v1323 = vmax.f32 %v1246, 0.0
    %v1324 = vmax.f32 %v1022, 0.0
    %v1325 = vmax.f32 %v1024, 0.0
    %v1326 = vmax.f32 %v1248, 0.0
    %v1327 = vmax.f32 %v1250, 0.0
    %v1328 = vmax.f32 %v1028, 0.0
    %v1329 = vmax.f32 %v1030, 0.0
    %v1330 = vmax.f32 %v1254, 0.0
    %v1331 = vmax.f32 %v1256, 0.0
    %v1332 = vmax.f32 %v1032, 0.0
    %v1333 = vmax.f32 %v1034, 0.0
    %v1334 = vmax.f32 %v1258, 0.0
    %v1335 = vmax.f32 %v1260, 0.0
    %v1336 = vmax.f32 %v1038, 0.0
    %v1337 = vmax.f32 %v1040, 0.0
    %v1338 = vmax.f32 %v1264, 0.0
    %v1339 = vmax.f32 %v1266, 0.0
    %v1340 = vmax.f32 %v1042, 0.0
    %v1341 = vmax.f32 %v1044, 0.0
    %v1342 = vmax.f32 %v1268, 0.0
    %v1343 = vmax.f32 %v1270, 0.0
    %v1344 = vmax.f32 %v1048, 0.0
    %v1345 = vmax.f32 %v1050, 0.0
    %v1346 = vmax.f32 %v1274, 0.0
    %v1347 = vmax.f32 %v1276, 0.0
    %v1348 = vmax.f32 %v1052, 0.0
    %v1349 = vmax.f32 %v1054, 0.0
    %v1350 = vmax.f32 %v1278, 0.0
    %v1351 = vmax.f32 %v1280, 0.0
    %v1352 = vmax.f32 %v1058, 0.0
    %v1353 = vmax.f32 %v1060, 0.0
    %v1354 = vmax.f32 %v1284, 0.0
    %v1355 = vmax.f32 %v1286, 0.0
    %v1356 = vmax.f32 %v1062, 0.0
    %v1357 = vmax.f32 %v1064, 0.0
    %v1358 = vmax.f32 %v1288, 0.0
    %v1359 = vmax.f32 %v1290, 0.0
    %v1360 = vmax.f32 %v1068, 0.0
    %v1361 = vmax.f32 %v1070, 0.0
    %v1362 = vmax.f32 %v1294, 0.0
    %v1363 = vmax.f32 %v1296, 0.0
    %v1364 = vmax.f32 %v1072, 0.0
    %v1365 = vmax.f32 %v1074, 0.0
    %v1366 = vmax.f32 %v1298, 0.0
    %v1367 = vmax.f32 %v1300, 0.0
    %v1368 = vmax.f32 %v1078, 0.0
    %v1369 = vmax.f32 %v1080, 0.0
    %v1370 = vmax.f32 %v1304, 0.0
    %v1371 = vmax.f32 %v1306, 0.0
    %v1372 = vmax.f32 %v1082, 0.0
    %v1373 = vmax.f32 %v1084, 0.0
    %v1374 = vmax.f32 %v1308, 0.0
    %v1375 = vmax.f32 %v1310, 0.0
    %v1376 = vpack.c.bf16 %v1316, %v1312
    %v1377 = vpack.c.bf16 %v1317, %v1313
    %v1378 = vpack.c.bf16 %v1318, %v1314
    %v1379 = vpack.c.bf16 %v1319, %v1315
    %v1380 = vpack.c.bf16 %v1324, %v1320
    %v1381 = vpack.c.bf16 %v1325, %v1321
    %v1382 = vpack.c.bf16 %v1326, %v1322
    %v1383 = vpack.c.bf16 %v1327, %v1323
    %v1384 = vpack.c.bf16 %v1332, %v1328
    %v1385 = vpack.c.bf16 %v1333, %v1329
    %v1386 = vpack.c.bf16 %v1334, %v1330
    %v1387 = vpack.c.bf16 %v1335, %v1331
    %v1388 = vpack.c.bf16 %v1340, %v1336
    %v1389 = vpack.c.bf16 %v1341, %v1337
    %v1390 = vpack.c.bf16 %v1342, %v1338
    %v1391 = vpack.c.bf16 %v1343, %v1339
    %v1392 = vpack.c.bf16 %v1348, %v1344
    %v1393 = vpack.c.bf16 %v1349, %v1345
    %v1394 = vpack.c.bf16 %v1350, %v1346
    %v1395 = vpack.c.bf16 %v1351, %v1347
    %v1396 = vpack.c.bf16 %v1356, %v1352
    %v1397 = vpack.c.bf16 %v1357, %v1353
    %v1398 = vpack.c.bf16 %v1358, %v1354
    %v1399 = vpack.c.bf16 %v1359, %v1355
    %v1400 = vpack.c.bf16 %v1364, %v1360
    %v1401 = vpack.c.bf16 %v1365, %v1361
    %v1402 = vpack.c.bf16 %v1366, %v1362
    %v1403 = vpack.c.bf16 %v1367, %v1363
    %v1404 = vpack.c.bf16 %v1372, %v1368
    %v1405 = vpack.c.bf16 %v1373, %v1369
    %v1406 = vpack.c.bf16 %v1374, %v1370
    %v1407 = vpack.c.bf16 %v1375, %v1371
    %v1408 = vld [vmem:[#allocation7] sm:$0xff]
    %v1409 = vld [vmem:[#allocation7 + $0x8] sm:$0xff]
    %v1410 = vld [vmem:[#allocation7 + $0x10] sm:$0xff]
    %v1411 = vld [vmem:[#allocation7 + $0x18] sm:$0xff]
    %v1412 = vld [vmem:[#allocation7 + $0x20] sm:$0xff]
    %v1413 = vld [vmem:[#allocation7 + $0x28] sm:$0xff]
    %v1414 = vld [vmem:[#allocation7 + $0x30] sm:$0xff]
    %v1415 = vld [vmem:[#allocation7 + $0x38] sm:$0xff]
    %v1416 = vld [vmem:[#allocation7 + $0x40] sm:$0xff]
    %v1417 = vld [vmem:[#allocation7 + $0x48] sm:$0xff]
    %v1418 = vld [vmem:[#allocation7 + $0x50] sm:$0xff]
    %v1419 = vld [vmem:[#allocation7 + $0x58] sm:$0xff]
    %v1420 = vld [vmem:[#allocation7 + $0x60] sm:$0xff]
    %v1421 = vld [vmem:[#allocation7 + $0x68] sm:$0xff]
    %v1422 = vld [vmem:[#allocation7 + $0x70] sm:$0xff]
    %v1423 = vld [vmem:[#allocation7 + $0x78] sm:$0xff]
    %v1424 = vld [vmem:[#allocation7 + $0x80] sm:$0xff]
    %v1425 = vld [vmem:[#allocation7 + $0x88] sm:$0xff]
    %v1426 = vld [vmem:[#allocation7 + $0x90] sm:$0xff]
    %v1427 = vld [vmem:[#allocation7 + $0x98] sm:$0xff]
    %v1428 = vld [vmem:[#allocation7 + $0xa0] sm:$0xff]
    %v1429 = vld [vmem:[#allocation7 + $0xa8] sm:$0xff]
    %v1430 = vld [vmem:[#allocation7 + $0xb0] sm:$0xff]
    %v1431 = vld [vmem:[#allocation7 + $0xb8] sm:$0xff]
    %v1432 = vld [vmem:[#allocation7 + $0xc0] sm:$0xff]
    %v1433 = vld [vmem:[#allocation7 + $0xc8] sm:$0xff]
    %v1434 = vld [vmem:[#allocation7 + $0xd0] sm:$0xff]
    %v1435 = vld [vmem:[#allocation7 + $0xd8] sm:$0xff]
    %v1436 = vld [vmem:[#allocation7 + $0xe0] sm:$0xff]
    %v1437 = vld [vmem:[#allocation7 + $0xe8] sm:$0xff]
    %v1438 = vld [vmem:[#allocation7 + $0xf0] sm:$0xff]
    %v1439 = vld [vmem:[#allocation7 + $0xf8] sm:$0xff]
    %v1440 = vld [vmem:[#allocation7 + $0x100] sm:$0xff]
    %v1441 = vld [vmem:[#allocation7 + $0x108] sm:$0xff]
    %v1442 = vld [vmem:[#allocation7 + $0x110] sm:$0xff]
    %v1443 = vld [vmem:[#allocation7 + $0x118] sm:$0xff]
    %v1444 = vld [vmem:[#allocation7 + $0x120] sm:$0xff]
    %v1445 = vld [vmem:[#allocation7 + $0x128] sm:$0xff]
    %v1446 = vld [vmem:[#allocation7 + $0x130] sm:$0xff]
    %v1447 = vld [vmem:[#allocation7 + $0x138] sm:$0xff]
    %v1448 = vld [vmem:[#allocation7 + $0x140] sm:$0xff]
    %v1449 = vld [vmem:[#allocation7 + $0x148] sm:$0xff]
    %v1450 = vld [vmem:[#allocation7 + $0x150] sm:$0xff]
    %v1451 = vld [vmem:[#allocation7 + $0x158] sm:$0xff]
    %v1452 = vld [vmem:[#allocation7 + $0x160] sm:$0xff]
    %v1453 = vld [vmem:[#allocation7 + $0x168] sm:$0xff]
    %v1454 = vld [vmem:[#allocation7 + $0x170] sm:$0xff]
    %v1455 = vld [vmem:[#allocation7 + $0x178] sm:$0xff]
    %v1456 = vld [vmem:[#allocation7 + $0x180] sm:$0xff]
    %v1457 = vld [vmem:[#allocation7 + $0x188] sm:$0xff]
    %v1458 = vld [vmem:[#allocation7 + $0x190] sm:$0xff]
    %v1459 = vld [vmem:[#allocation7 + $0x198] sm:$0xff]
    %v1460 = vld [vmem:[#allocation7 + $0x1a0] sm:$0xff]
    %v1461 = vld [vmem:[#allocation7 + $0x1a8] sm:$0xff]
    %v1462 = vld [vmem:[#allocation7 + $0x1b0] sm:$0xff]
    %v1463 = vld [vmem:[#allocation7 + $0x1b8] sm:$0xff]
    %v1464 = vld [vmem:[#allocation7 + $0x1c0] sm:$0xff]
    %v1465 = vld [vmem:[#allocation7 + $0x1c8] sm:$0xff]
    %v1466 = vld [vmem:[#allocation7 + $0x1d0] sm:$0xff]
    %v1467 = vld [vmem:[#allocation7 + $0x1d8] sm:$0xff]
    %v1468 = vld [vmem:[#allocation7 + $0x1e0] sm:$0xff]
    %v1469 = vld [vmem:[#allocation7 + $0x1e8] sm:$0xff]
    %v1470 = vld [vmem:[#allocation7 + $0x1f0] sm:$0xff]
    %v1471 = vld [vmem:[#allocation7 + $0x1f8] sm:$0xff]
    %v1472 = vld [vmem:[#allocation7 + $0x200] sm:$0xff]
    %v1473 = vld [vmem:[#allocation7 + $0x208] sm:$0xff]
    %v1474 = vld [vmem:[#allocation7 + $0x210] sm:$0xff]
    %v1475 = vld [vmem:[#allocation7 + $0x218] sm:$0xff]
    %v1476 = vld [vmem:[#allocation7 + $0x220] sm:$0xff]
    %v1477 = vld [vmem:[#allocation7 + $0x228] sm:$0xff]
    %v1478 = vld [vmem:[#allocation7 + $0x230] sm:$0xff]
    %v1479 = vld [vmem:[#allocation7 + $0x238] sm:$0xff]
    %v1480 = vld [vmem:[#allocation7 + $0x240] sm:$0xff]
    %v1481 = vld [vmem:[#allocation7 + $0x248] sm:$0xff]
    %v1482 = vld [vmem:[#allocation7 + $0x250] sm:$0xff]
    %v1483 = vld [vmem:[#allocation7 + $0x258] sm:$0xff]
    %v1484 = vld [vmem:[#allocation7 + $0x260] sm:$0xff]
    %v1485 = vld [vmem:[#allocation7 + $0x268] sm:$0xff]
    %v1486 = vld [vmem:[#allocation7 + $0x270] sm:$0xff]
    %v1487 = vld [vmem:[#allocation7 + $0x278] sm:$0xff]
    %v1488 = vld [vmem:[#allocation7 + $0x280] sm:$0xff]
    %v1489 = vld [vmem:[#allocation7 + $0x288] sm:$0xff]
    %v1490 = vld [vmem:[#allocation7 + $0x290] sm:$0xff]
    %v1491 = vld [vmem:[#allocation7 + $0x298] sm:$0xff]
    %v1492 = vld [vmem:[#allocation7 + $0x2a0] sm:$0xff]
    %v1493 = vld [vmem:[#allocation7 + $0x2a8] sm:$0xff]
    %v1494 = vld [vmem:[#allocation7 + $0x2b0] sm:$0xff]
    %v1495 = vld [vmem:[#allocation7 + $0x2b8] sm:$0xff]
    %v1496 = vld [vmem:[#allocation7 + $0x2c0] sm:$0xff]
    %v1497 = vld [vmem:[#allocation7 + $0x2c8] sm:$0xff]
    %v1498 = vld [vmem:[#allocation7 + $0x2d0] sm:$0xff]
    %v1499 = vld [vmem:[#allocation7 + $0x2d8] sm:$0xff]
    %v1500 = vld [vmem:[#allocation7 + $0x2e0] sm:$0xff]
    %v1501 = vld [vmem:[#allocation7 + $0x2e8] sm:$0xff]
    %v1502 = vld [vmem:[#allocation7 + $0x2f0] sm:$0xff]
    %v1503 = vld [vmem:[#allocation7 + $0x2f8] sm:$0xff]
    %v1504 = vld [vmem:[#allocation7 + $0x300] sm:$0xff]
    %v1505 = vld [vmem:[#allocation7 + $0x308] sm:$0xff]
    %v1506 = vld [vmem:[#allocation7 + $0x310] sm:$0xff]
    %v1507 = vld [vmem:[#allocation7 + $0x318] sm:$0xff]
    %v1508 = vld [vmem:[#allocation7 + $0x320] sm:$0xff]
    %v1509 = vld [vmem:[#allocation7 + $0x328] sm:$0xff]
    %v1510 = vld [vmem:[#allocation7 + $0x330] sm:$0xff]
    %v1511 = vld [vmem:[#allocation7 + $0x338] sm:$0xff]
    %v1512 = vld [vmem:[#allocation7 + $0x340] sm:$0xff]
    %v1513 = vld [vmem:[#allocation7 + $0x348] sm:$0xff]
    %v1514 = vld [vmem:[#allocation7 + $0x350] sm:$0xff]
    %v1515 = vld [vmem:[#allocation7 + $0x358] sm:$0xff]
    %v1516 = vld [vmem:[#allocation7 + $0x360] sm:$0xff]
    %v1517 = vld [vmem:[#allocation7 + $0x368] sm:$0xff]
    %v1518 = vld [vmem:[#allocation7 + $0x370] sm:$0xff]
    %v1519 = vld [vmem:[#allocation7 + $0x378] sm:$0xff]
    %v1520 = vld [vmem:[#allocation7 + $0x380] sm:$0xff]
    %v1521 = vld [vmem:[#allocation7 + $0x388] sm:$0xff]
    %v1522 = vld [vmem:[#allocation7 + $0x390] sm:$0xff]
    %v1523 = vld [vmem:[#allocation7 + $0x398] sm:$0xff]
    %v1524 = vld [vmem:[#allocation7 + $0x3a0] sm:$0xff]
    %v1525 = vld [vmem:[#allocation7 + $0x3a8] sm:$0xff]
    %v1526 = vld [vmem:[#allocation7 + $0x3b0] sm:$0xff]
    %v1527 = vld [vmem:[#allocation7 + $0x3b8] sm:$0xff]
    %v1528 = vld [vmem:[#allocation7 + $0x3c0] sm:$0xff]
    %v1529 = vld [vmem:[#allocation7 + $0x3c8] sm:$0xff]
    %v1530 = vld [vmem:[#allocation7 + $0x3d0] sm:$0xff]
    %v1531 = vld [vmem:[#allocation7 + $0x3d8] sm:$0xff]
    %v1532 = vld [vmem:[#allocation7 + $0x3e0] sm:$0xff]
    %v1533 = vld [vmem:[#allocation7 + $0x3e8] sm:$0xff]
    %v1534 = vld [vmem:[#allocation7 + $0x3f0] sm:$0xff]
    %v1535 = vld [vmem:[#allocation7 + $0x3f8] sm:$0xff]
    %v1536 = vld [vmem:[#allocation7 + $0x400] sm:$0xff]
    %v1537 = vld [vmem:[#allocation7 + $0x408] sm:$0xff]
    %v1538 = vld [vmem:[#allocation7 + $0x410] sm:$0xff]
    %v1539 = vld [vmem:[#allocation7 + $0x418] sm:$0xff]
    %v1540 = vld [vmem:[#allocation7 + $0x420] sm:$0xff]
    %v1541 = vld [vmem:[#allocation7 + $0x428] sm:$0xff]
    %v1542 = vld [vmem:[#allocation7 + $0x430] sm:$0xff]
    %v1543 = vld [vmem:[#allocation7 + $0x438] sm:$0xff]
    %v1544 = vld [vmem:[#allocation7 + $0x440] sm:$0xff]
    %v1545 = vld [vmem:[#allocation7 + $0x448] sm:$0xff]
    %v1546 = vld [vmem:[#allocation7 + $0x450] sm:$0xff]
    %v1547 = vld [vmem:[#allocation7 + $0x458] sm:$0xff]
    %v1548 = vld [vmem:[#allocation7 + $0x460] sm:$0xff]
    %v1549 = vld [vmem:[#allocation7 + $0x468] sm:$0xff]
    %v1550 = vld [vmem:[#allocation7 + $0x470] sm:$0xff]
    %v1551 = vld [vmem:[#allocation7 + $0x478] sm:$0xff]
    %v1552 = vld [vmem:[#allocation7 + $0x480] sm:$0xff]
    %v1553 = vld [vmem:[#allocation7 + $0x488] sm:$0xff]
    %v1554 = vld [vmem:[#allocation7 + $0x490] sm:$0xff]
    %v1555 = vld [vmem:[#allocation7 + $0x498] sm:$0xff]
    %v1556 = vld [vmem:[#allocation7 + $0x4a0] sm:$0xff]
    %v1557 = vld [vmem:[#allocation7 + $0x4a8] sm:$0xff]
    %v1558 = vld [vmem:[#allocation7 + $0x4b0] sm:$0xff]
    %v1559 = vld [vmem:[#allocation7 + $0x4b8] sm:$0xff]
    %v1560 = vld [vmem:[#allocation7 + $0x4c0] sm:$0xff]
    %v1561 = vld [vmem:[#allocation7 + $0x4c8] sm:$0xff]
    %v1562 = vld [vmem:[#allocation7 + $0x4d0] sm:$0xff]
    %v1563 = vld [vmem:[#allocation7 + $0x4d8] sm:$0xff]
    %v1564 = vld [vmem:[#allocation7 + $0x4e0] sm:$0xff]
    %v1565 = vld [vmem:[#allocation7 + $0x4e8] sm:$0xff]
    %v1566 = vld [vmem:[#allocation7 + $0x4f0] sm:$0xff]
    %v1567 = vld [vmem:[#allocation7 + $0x4f8] sm:$0xff]
    %v1568 = vld [vmem:[#allocation7 + $0x500] sm:$0xff]
    %v1569 = vld [vmem:[#allocation7 + $0x508] sm:$0xff]
    %v1570 = vld [vmem:[#allocation7 + $0x510] sm:$0xff]
    %v1571 = vld [vmem:[#allocation7 + $0x518] sm:$0xff]
    %v1572 = vld [vmem:[#allocation7 + $0x520] sm:$0xff]
    %v1573 = vld [vmem:[#allocation7 + $0x528] sm:$0xff]
    %v1574 = vld [vmem:[#allocation7 + $0x530] sm:$0xff]
    %v1575 = vld [vmem:[#allocation7 + $0x538] sm:$0xff]
    %v1576 = vld [vmem:[#allocation7 + $0x540] sm:$0xff]
    %v1577 = vld [vmem:[#allocation7 + $0x548] sm:$0xff]
    %v1578 = vld [vmem:[#allocation7 + $0x550] sm:$0xff]
    %v1579 = vld [vmem:[#allocation7 + $0x558] sm:$0xff]
    %v1580 = vld [vmem:[#allocation7 + $0x560] sm:$0xff]
    %v1581 = vld [vmem:[#allocation7 + $0x568] sm:$0xff]
    %v1582 = vld [vmem:[#allocation7 + $0x570] sm:$0xff]
    %v1583 = vld [vmem:[#allocation7 + $0x578] sm:$0xff]
    %v1584 = vld [vmem:[#allocation7 + $0x580] sm:$0xff]
    %v1585 = vld [vmem:[#allocation7 + $0x588] sm:$0xff]
    %v1586 = vld [vmem:[#allocation7 + $0x590] sm:$0xff]
    %v1587 = vld [vmem:[#allocation7 + $0x598] sm:$0xff]
    %v1588 = vld [vmem:[#allocation7 + $0x5a0] sm:$0xff]
    %v1589 = vld [vmem:[#allocation7 + $0x5a8] sm:$0xff]
    %v1590 = vld [vmem:[#allocation7 + $0x5b0] sm:$0xff]
    %v1591 = vld [vmem:[#allocation7 + $0x5b8] sm:$0xff]
    %v1592 = vld [vmem:[#allocation7 + $0x5c0] sm:$0xff]
    %v1593 = vld [vmem:[#allocation7 + $0x5c8] sm:$0xff]
    %v1594 = vld [vmem:[#allocation7 + $0x5d0] sm:$0xff]
    %v1595 = vld [vmem:[#allocation7 + $0x5d8] sm:$0xff]
    %v1596 = vld [vmem:[#allocation7 + $0x5e0] sm:$0xff]
    %v1597 = vld [vmem:[#allocation7 + $0x5e8] sm:$0xff]
    %v1598 = vld [vmem:[#allocation7 + $0x5f0] sm:$0xff]
    %v1599 = vld [vmem:[#allocation7 + $0x5f8] sm:$0xff]
    %v1600 = vld [vmem:[#allocation7 + $0x600] sm:$0xff]
    %v1601 = vld [vmem:[#allocation7 + $0x608] sm:$0xff]
    %v1602 = vld [vmem:[#allocation7 + $0x610] sm:$0xff]
    %v1603 = vld [vmem:[#allocation7 + $0x618] sm:$0xff]
    %v1604 = vld [vmem:[#allocation7 + $0x620] sm:$0xff]
    %v1605 = vld [vmem:[#allocation7 + $0x628] sm:$0xff]
    %v1606 = vld [vmem:[#allocation7 + $0x630] sm:$0xff]
    %v1607 = vld [vmem:[#allocation7 + $0x638] sm:$0xff]
    %v1608 = vld [vmem:[#allocation7 + $0x640] sm:$0xff]
    %v1609 = vld [vmem:[#allocation7 + $0x648] sm:$0xff]
    %v1610 = vld [vmem:[#allocation7 + $0x650] sm:$0xff]
    %v1611 = vld [vmem:[#allocation7 + $0x658] sm:$0xff]
    %v1612 = vld [vmem:[#allocation7 + $0x660] sm:$0xff]
    %v1613 = vld [vmem:[#allocation7 + $0x668] sm:$0xff]
    %v1614 = vld [vmem:[#allocation7 + $0x670] sm:$0xff]
    %v1615 = vld [vmem:[#allocation7 + $0x678] sm:$0xff]
    %v1616 = vld [vmem:[#allocation7 + $0x680] sm:$0xff]
    %v1617 = vld [vmem:[#allocation7 + $0x688] sm:$0xff]
    %v1618 = vld [vmem:[#allocation7 + $0x690] sm:$0xff]
    %v1619 = vld [vmem:[#allocation7 + $0x698] sm:$0xff]
    %v1620 = vld [vmem:[#allocation7 + $0x6a0] sm:$0xff]
    %v1621 = vld [vmem:[#allocation7 + $0x6a8] sm:$0xff]
    %v1622 = vld [vmem:[#allocation7 + $0x6b0] sm:$0xff]
    %v1623 = vld [vmem:[#allocation7 + $0x6b8] sm:$0xff]
    %v1624 = vld [vmem:[#allocation7 + $0x6c0] sm:$0xff]
    %v1625 = vld [vmem:[#allocation7 + $0x6c8] sm:$0xff]
    %v1626 = vld [vmem:[#allocation7 + $0x6d0] sm:$0xff]
    %v1627 = vld [vmem:[#allocation7 + $0x6d8] sm:$0xff]
    %v1628 = vld [vmem:[#allocation7 + $0x6e0] sm:$0xff]
    %v1629 = vld [vmem:[#allocation7 + $0x6e8] sm:$0xff]
    %v1630 = vld [vmem:[#allocation7 + $0x6f0] sm:$0xff]
    %v1631 = vld [vmem:[#allocation7 + $0x6f8] sm:$0xff]
    %v1632 = vld [vmem:[#allocation7 + $0x700] sm:$0xff]
    %v1633 = vld [vmem:[#allocation7 + $0x708] sm:$0xff]
    %v1634 = vld [vmem:[#allocation7 + $0x710] sm:$0xff]
    %v1635 = vld [vmem:[#allocation7 + $0x718] sm:$0xff]
    %v1636 = vld [vmem:[#allocation7 + $0x720] sm:$0xff]
    %v1637 = vld [vmem:[#allocation7 + $0x728] sm:$0xff]
    %v1638 = vld [vmem:[#allocation7 + $0x730] sm:$0xff]
    %v1639 = vld [vmem:[#allocation7 + $0x738] sm:$0xff]
    %v1640 = vld [vmem:[#allocation7 + $0x740] sm:$0xff]
    %v1641 = vld [vmem:[#allocation7 + $0x748] sm:$0xff]
    %v1642 = vld [vmem:[#allocation7 + $0x750] sm:$0xff]
    %v1643 = vld [vmem:[#allocation7 + $0x758] sm:$0xff]
    %v1644 = vld [vmem:[#allocation7 + $0x760] sm:$0xff]
    %v1645 = vld [vmem:[#allocation7 + $0x768] sm:$0xff]
    %v1646 = vld [vmem:[#allocation7 + $0x770] sm:$0xff]
    %v1647 = vld [vmem:[#allocation7 + $0x778] sm:$0xff]
    %v1648 = vld [vmem:[#allocation7 + $0x780] sm:$0xff]
    %v1649 = vld [vmem:[#allocation7 + $0x788] sm:$0xff]
    %v1650 = vld [vmem:[#allocation7 + $0x790] sm:$0xff]
    %v1651 = vld [vmem:[#allocation7 + $0x798] sm:$0xff]
    %v1652 = vld [vmem:[#allocation7 + $0x7a0] sm:$0xff]
    %v1653 = vld [vmem:[#allocation7 + $0x7a8] sm:$0xff]
    %v1654 = vld [vmem:[#allocation7 + $0x7b0] sm:$0xff]
    %v1655 = vld [vmem:[#allocation7 + $0x7b8] sm:$0xff]
    %v1656 = vld [vmem:[#allocation7 + $0x7c0] sm:$0xff]
    %v1657 = vld [vmem:[#allocation7 + $0x7c8] sm:$0xff]
    %v1658 = vld [vmem:[#allocation7 + $0x7d0] sm:$0xff]
    %v1659 = vld [vmem:[#allocation7 + $0x7d8] sm:$0xff]
    %v1660 = vld [vmem:[#allocation7 + $0x7e0] sm:$0xff]
    %v1661 = vld [vmem:[#allocation7 + $0x7e8] sm:$0xff]
    %v1662 = vld [vmem:[#allocation7 + $0x7f0] sm:$0xff]
    %v1663 = vld [vmem:[#allocation7 + $0x7f8] sm:$0xff]
    %v1664 = vld [vmem:[%s4] sm:$0xff]
    %v1666 = vlaneseq
    %v1667 = vshrl.u32 %v1666, 7
    %v1668 = vsub.s32 0, %v1667
    %v1669 = vrot.slane %v1664, %v1668
    %v1670 = vlaneseq
    %v1671 = vshrl.u32 %v1670, 7
    %v1672 = vsub.s32 1, %v1671
    %v1673 = vrot.slane %v1664, %v1672
    %v1674 = vlaneseq
    %v1675 = vshrl.u32 %v1674, 7
    %v1676 = vsub.s32 2, %v1675
    %v1677 = vrot.slane %v1664, %v1676
    %v1678 = vlaneseq
    %v1679 = vshrl.u32 %v1678, 7
    %v1680 = vsub.s32 3, %v1679
    %v1681 = vrot.slane %v1664, %v1680
    %v1682 = vlaneseq
    %v1683 = vshrl.u32 %v1682, 7
    %v1684 = vsub.s32 4, %v1683
    %v1685 = vrot.slane %v1664, %v1684
    %v1686 = vlaneseq
    %v1687 = vshrl.u32 %v1686, 7
    %v1688 = vsub.s32 5, %v1687
    %v1689 = vrot.slane %v1664, %v1688
    %v1690 = vlaneseq
    %v1691 = vshrl.u32 %v1690, 7
    %v1692 = vsub.s32 6, %v1691
    %v1693 = vrot.slane %v1664, %v1692
    %v1694 = vlaneseq
    %v1695 = vshrl.u32 %v1694, 7
    %v1696 = vsub.s32 7, %v1695
    %v1697 = vrot.slane %v1664, %v1696
    %v1962 = vunpack.c.l.b16 %v1408
    %v1963 = vunpack.c.h.b16 %v1408
    %v1964 = vunpack.c.l.b16 %v1409
    %v1965 = vunpack.c.h.b16 %v1409
    %v1966 = vunpack.c.l.b16 %v1410
    %v1967 = vunpack.c.h.b16 %v1410
    %v1968 = vunpack.c.l.b16 %v1411
    %v1969 = vunpack.c.h.b16 %v1411
    %v1970 = vunpack.c.l.b16 %v1412
    %v1971 = vunpack.c.h.b16 %v1412
    %v1972 = vunpack.c.l.b16 %v1413
    %v1973 = vunpack.c.h.b16 %v1413
    %v1974 = vunpack.c.l.b16 %v1414
    %v1975 = vunpack.c.h.b16 %v1414
    %v1976 = vunpack.c.l.b16 %v1415
    %v1977 = vunpack.c.h.b16 %v1415
    %v1978 = vunpack.c.l.b16 %v1416
    %v1979 = vunpack.c.h.b16 %v1416
    %v1980 = vunpack.c.l.b16 %v1417
    %v1981 = vunpack.c.h.b16 %v1417
    %v1982 = vunpack.c.l.b16 %v1418
    %v1983 = vunpack.c.h.b16 %v1418
    %v1984 = vunpack.c.l.b16 %v1419
    %v1985 = vunpack.c.h.b16 %v1419
    %v1986 = vunpack.c.l.b16 %v1420
    %v1987 = vunpack.c.h.b16 %v1420
    %v1988 = vunpack.c.l.b16 %v1421
    %v1989 = vunpack.c.h.b16 %v1421
    %v1990 = vunpack.c.l.b16 %v1422
    %v1991 = vunpack.c.h.b16 %v1422
    %v1992 = vunpack.c.l.b16 %v1423
    %v1993 = vunpack.c.h.b16 %v1423
    %v1994 = vunpack.c.l.b16 %v1424
    %v1995 = vunpack.c.h.b16 %v1424
    %v1996 = vunpack.c.l.b16 %v1425
    %v1997 = vunpack.c.h.b16 %v1425
    %v1998 = vunpack.c.l.b16 %v1426
    %v1999 = vunpack.c.h.b16 %v1426
    %v2000 = vunpack.c.l.b16 %v1427
    %v2001 = vunpack.c.h.b16 %v1427
    %v2002 = vunpack.c.l.b16 %v1428
    %v2003 = vunpack.c.h.b16 %v1428
    %v2004 = vunpack.c.l.b16 %v1429
    %v2005 = vunpack.c.h.b16 %v1429
    %v2006 = vunpack.c.l.b16 %v1430
    %v2007 = vunpack.c.h.b16 %v1430
    %v2008 = vunpack.c.l.b16 %v1431
    %v2009 = vunpack.c.h.b16 %v1431
    %v2010 = vunpack.c.l.b16 %v1432
    %v2011 = vunpack.c.h.b16 %v1432
    %v2012 = vunpack.c.l.b16 %v1433
    %v2013 = vunpack.c.h.b16 %v1433
    %v2014 = vunpack.c.l.b16 %v1434
    %v2015 = vunpack.c.h.b16 %v1434
    %v2016 = vunpack.c.l.b16 %v1435
    %v2017 = vunpack.c.h.b16 %v1435
    %v2018 = vunpack.c.l.b16 %v1436
    %v2019 = vunpack.c.h.b16 %v1436
    %v2020 = vunpack.c.l.b16 %v1437
    %v2021 = vunpack.c.h.b16 %v1437
    %v2022 = vunpack.c.l.b16 %v1438
    %v2023 = vunpack.c.h.b16 %v1438
    %v2024 = vunpack.c.l.b16 %v1439
    %v2025 = vunpack.c.h.b16 %v1439
    %v2026 = vunpack.c.l.b16 %v1440
    %v2027 = vunpack.c.h.b16 %v1440
    %v2028 = vunpack.c.l.b16 %v1441
    %v2029 = vunpack.c.h.b16 %v1441
    %v2030 = vunpack.c.l.b16 %v1442
    %v2031 = vunpack.c.h.b16 %v1442
    %v2032 = vunpack.c.l.b16 %v1443
    %v2033 = vunpack.c.h.b16 %v1443
    %v2034 = vunpack.c.l.b16 %v1444
    %v2035 = vunpack.c.h.b16 %v1444
    %v2036 = vunpack.c.l.b16 %v1445
    %v2037 = vunpack.c.h.b16 %v1445
    %v2038 = vunpack.c.l.b16 %v1446
    %v2039 = vunpack.c.h.b16 %v1446
    %v2040 = vunpack.c.l.b16 %v1447
    %v2041 = vunpack.c.h.b16 %v1447
    %v2042 = vunpack.c.l.b16 %v1448
    %v2043 = vunpack.c.h.b16 %v1448
    %v2044 = vunpack.c.l.b16 %v1449
    %v2045 = vunpack.c.h.b16 %v1449
    %v2046 = vunpack.c.l.b16 %v1450
    %v2047 = vunpack.c.h.b16 %v1450
    %v2048 = vunpack.c.l.b16 %v1451
    %v2049 = vunpack.c.h.b16 %v1451
    %v2050 = vunpack.c.l.b16 %v1452
    %v2051 = vunpack.c.h.b16 %v1452
    %v2052 = vunpack.c.l.b16 %v1453
    %v2053 = vunpack.c.h.b16 %v1453
    %v2054 = vunpack.c.l.b16 %v1454
    %v2055 = vunpack.c.h.b16 %v1454
    %v2056 = vunpack.c.l.b16 %v1455
    %v2057 = vunpack.c.h.b16 %v1455
    %v2058 = vunpack.c.l.b16 %v1456
    %v2059 = vunpack.c.h.b16 %v1456
    %v2060 = vunpack.c.l.b16 %v1457
    %v2061 = vunpack.c.h.b16 %v1457
    %v2062 = vunpack.c.l.b16 %v1458
    %v2063 = vunpack.c.h.b16 %v1458
    %v2064 = vunpack.c.l.b16 %v1459
    %v2065 = vunpack.c.h.b16 %v1459
    %v2066 = vunpack.c.l.b16 %v1460
    %v2067 = vunpack.c.h.b16 %v1460
    %v2068 = vunpack.c.l.b16 %v1461
    %v2069 = vunpack.c.h.b16 %v1461
    %v2070 = vunpack.c.l.b16 %v1462
    %v2071 = vunpack.c.h.b16 %v1462
    %v2072 = vunpack.c.l.b16 %v1463
    %v2073 = vunpack.c.h.b16 %v1463
    %v2074 = vunpack.c.l.b16 %v1464
    %v2075 = vunpack.c.h.b16 %v1464
    %v2076 = vunpack.c.l.b16 %v1465
    %v2077 = vunpack.c.h.b16 %v1465
    %v2078 = vunpack.c.l.b16 %v1466
    %v2079 = vunpack.c.h.b16 %v1466
    %v2080 = vunpack.c.l.b16 %v1467
    %v2081 = vunpack.c.h.b16 %v1467
    %v2082 = vunpack.c.l.b16 %v1468
    %v2083 = vunpack.c.h.b16 %v1468
    %v2084 = vunpack.c.l.b16 %v1469
    %v2085 = vunpack.c.h.b16 %v1469
    %v2086 = vunpack.c.l.b16 %v1470
    %v2087 = vunpack.c.h.b16 %v1470
    %v2088 = vunpack.c.l.b16 %v1471
    %v2089 = vunpack.c.h.b16 %v1471
    %v2090 = vunpack.c.l.b16 %v1472
    %v2091 = vunpack.c.h.b16 %v1472
    %v2092 = vunpack.c.l.b16 %v1473
    %v2093 = vunpack.c.h.b16 %v1473
    %v2094 = vunpack.c.l.b16 %v1474
    %v2095 = vunpack.c.h.b16 %v1474
    %v2096 = vunpack.c.l.b16 %v1475
    %v2097 = vunpack.c.h.b16 %v1475
    %v2098 = vunpack.c.l.b16 %v1476
    %v2099 = vunpack.c.h.b16 %v1476
    %v2100 = vunpack.c.l.b16 %v1477
    %v2101 = vunpack.c.h.b16 %v1477
    %v2102 = vunpack.c.l.b16 %v1478
    %v2103 = vunpack.c.h.b16 %v1478
    %v2104 = vunpack.c.l.b16 %v1479
    %v2105 = vunpack.c.h.b16 %v1479
    %v2106 = vunpack.c.l.b16 %v1480
    %v2107 = vunpack.c.h.b16 %v1480
    %v2108 = vunpack.c.l.b16 %v1481
    %v2109 = vunpack.c.h.b16 %v1481
    %v2110 = vunpack.c.l.b16 %v1482
    %v2111 = vunpack.c.h.b16 %v1482
    %v2112 = vunpack.c.l.b16 %v1483
    %v2113 = vunpack.c.h.b16 %v1483
    %v2114 = vunpack.c.l.b16 %v1484
    %v2115 = vunpack.c.h.b16 %v1484
    %v2116 = vunpack.c.l.b16 %v1485
    %v2117 = vunpack.c.h.b16 %v1485
    %v2118 = vunpack.c.l.b16 %v1486
    %v2119 = vunpack.c.h.b16 %v1486
    %v2120 = vunpack.c.l.b16 %v1487
    %v2121 = vunpack.c.h.b16 %v1487
    %v2122 = vunpack.c.l.b16 %v1488
    %v2123 = vunpack.c.h.b16 %v1488
    %v2124 = vunpack.c.l.b16 %v1489
    %v2125 = vunpack.c.h.b16 %v1489
    %v2126 = vunpack.c.l.b16 %v1490
    %v2127 = vunpack.c.h.b16 %v1490
    %v2128 = vunpack.c.l.b16 %v1491
    %v2129 = vunpack.c.h.b16 %v1491
    %v2130 = vunpack.c.l.b16 %v1492
    %v2131 = vunpack.c.h.b16 %v1492
    %v2132 = vunpack.c.l.b16 %v1493
    %v2133 = vunpack.c.h.b16 %v1493
    %v2134 = vunpack.c.l.b16 %v1494
    %v2135 = vunpack.c.h.b16 %v1494
    %v2136 = vunpack.c.l.b16 %v1495
    %v2137 = vunpack.c.h.b16 %v1495
    %v2138 = vunpack.c.l.b16 %v1496
    %v2139 = vunpack.c.h.b16 %v1496
    %v2140 = vunpack.c.l.b16 %v1497
    %v2141 = vunpack.c.h.b16 %v1497
    %v2142 = vunpack.c.l.b16 %v1498
    %v2143 = vunpack.c.h.b16 %v1498
    %v2144 = vunpack.c.l.b16 %v1499
    %v2145 = vunpack.c.h.b16 %v1499
    %v2146 = vunpack.c.l.b16 %v1500
    %v2147 = vunpack.c.h.b16 %v1500
    %v2148 = vunpack.c.l.b16 %v1501
    %v2149 = vunpack.c.h.b16 %v1501
    %v2150 = vunpack.c.l.b16 %v1502
    %v2151 = vunpack.c.h.b16 %v1502
    %v2152 = vunpack.c.l.b16 %v1503
    %v2153 = vunpack.c.h.b16 %v1503
    %v2154 = vunpack.c.l.b16 %v1504
    %v2155 = vunpack.c.h.b16 %v1504
    %v2156 = vunpack.c.l.b16 %v1505
    %v2157 = vunpack.c.h.b16 %v1505
    %v2158 = vunpack.c.l.b16 %v1506
    %v2159 = vunpack.c.h.b16 %v1506
    %v2160 = vunpack.c.l.b16 %v1507
    %v2161 = vunpack.c.h.b16 %v1507
    %v2162 = vunpack.c.l.b16 %v1508
    %v2163 = vunpack.c.h.b16 %v1508
    %v2164 = vunpack.c.l.b16 %v1509
    %v2165 = vunpack.c.h.b16 %v1509
    %v2166 = vunpack.c.l.b16 %v1510
    %v2167 = vunpack.c.h.b16 %v1510
    %v2168 = vunpack.c.l.b16 %v1511
    %v2169 = vunpack.c.h.b16 %v1511
    %v2170 = vunpack.c.l.b16 %v1512
    %v2171 = vunpack.c.h.b16 %v1512
    %v2172 = vunpack.c.l.b16 %v1513
    %v2173 = vunpack.c.h.b16 %v1513
    %v2174 = vunpack.c.l.b16 %v1514
    %v2175 = vunpack.c.h.b16 %v1514
    %v2176 = vunpack.c.l.b16 %v1515
    %v2177 = vunpack.c.h.b16 %v1515
    %v2178 = vunpack.c.l.b16 %v1516
    %v2179 = vunpack.c.h.b16 %v1516
    %v2180 = vunpack.c.l.b16 %v1517
    %v2181 = vunpack.c.h.b16 %v1517
    %v2182 = vunpack.c.l.b16 %v1518
    %v2183 = vunpack.c.h.b16 %v1518
    %v2184 = vunpack.c.l.b16 %v1519
    %v2185 = vunpack.c.h.b16 %v1519
    %v2186 = vunpack.c.l.b16 %v1520
    %v2187 = vunpack.c.h.b16 %v1520
    %v2188 = vunpack.c.l.b16 %v1521
    %v2189 = vunpack.c.h.b16 %v1521
    %v2190 = vunpack.c.l.b16 %v1522
    %v2191 = vunpack.c.h.b16 %v1522
    %v2192 = vunpack.c.l.b16 %v1523
    %v2193 = vunpack.c.h.b16 %v1523
    %v2194 = vunpack.c.l.b16 %v1524
    %v2195 = vunpack.c.h.b16 %v1524
    %v2196 = vunpack.c.l.b16 %v1525
    %v2197 = vunpack.c.h.b16 %v1525
    %v2198 = vunpack.c.l.b16 %v1526
    %v2199 = vunpack.c.h.b16 %v1526
    %v2200 = vunpack.c.l.b16 %v1527
    %v2201 = vunpack.c.h.b16 %v1527
    %v2202 = vunpack.c.l.b16 %v1528
    %v2203 = vunpack.c.h.b16 %v1528
    %v2204 = vunpack.c.l.b16 %v1529
    %v2205 = vunpack.c.h.b16 %v1529
    %v2206 = vunpack.c.l.b16 %v1530
    %v2207 = vunpack.c.h.b16 %v1530
    %v2208 = vunpack.c.l.b16 %v1531
    %v2209 = vunpack.c.h.b16 %v1531
    %v2210 = vunpack.c.l.b16 %v1532
    %v2211 = vunpack.c.h.b16 %v1532
    %v2212 = vunpack.c.l.b16 %v1533
    %v2213 = vunpack.c.h.b16 %v1533
    %v2214 = vunpack.c.l.b16 %v1534
    %v2215 = vunpack.c.h.b16 %v1534
    %v2216 = vunpack.c.l.b16 %v1535
    %v2217 = vunpack.c.h.b16 %v1535
    %v2218 = vunpack.c.l.b16 %v1536
    %v2219 = vunpack.c.h.b16 %v1536
    %v2220 = vunpack.c.l.b16 %v1537
    %v2221 = vunpack.c.h.b16 %v1537
    %v2222 = vunpack.c.l.b16 %v1538
    %v2223 = vunpack.c.h.b16 %v1538
    %v2224 = vunpack.c.l.b16 %v1539
    %v2225 = vunpack.c.h.b16 %v1539
    %v2226 = vunpack.c.l.b16 %v1540
    %v2227 = vunpack.c.h.b16 %v1540
    %v2228 = vunpack.c.l.b16 %v1541
    %v2229 = vunpack.c.h.b16 %v1541
    %v2230 = vunpack.c.l.b16 %v1542
    %v2231 = vunpack.c.h.b16 %v1542
    %v2232 = vunpack.c.l.b16 %v1543
    %v2233 = vunpack.c.h.b16 %v1543
    %v2234 = vunpack.c.l.b16 %v1544
    %v2235 = vunpack.c.h.b16 %v1544
    %v2236 = vunpack.c.l.b16 %v1545
    %v2237 = vunpack.c.h.b16 %v1545
    %v2238 = vunpack.c.l.b16 %v1546
    %v2239 = vunpack.c.h.b16 %v1546
    %v2240 = vunpack.c.l.b16 %v1547
    %v2241 = vunpack.c.h.b16 %v1547
    %v2242 = vunpack.c.l.b16 %v1548
    %v2243 = vunpack.c.h.b16 %v1548
    %v2244 = vunpack.c.l.b16 %v1549
    %v2245 = vunpack.c.h.b16 %v1549
    %v2246 = vunpack.c.l.b16 %v1550
    %v2247 = vunpack.c.h.b16 %v1550
    %v2248 = vunpack.c.l.b16 %v1551
    %v2249 = vunpack.c.h.b16 %v1551
    %v2250 = vunpack.c.l.b16 %v1552
    %v2251 = vunpack.c.h.b16 %v1552
    %v2252 = vunpack.c.l.b16 %v1553
    %v2253 = vunpack.c.h.b16 %v1553
    %v2254 = vunpack.c.l.b16 %v1554
    %v2255 = vunpack.c.h.b16 %v1554
    %v2256 = vunpack.c.l.b16 %v1555
    %v2257 = vunpack.c.h.b16 %v1555
    %v2258 = vunpack.c.l.b16 %v1556
    %v2259 = vunpack.c.h.b16 %v1556
    %v2260 = vunpack.c.l.b16 %v1557
    %v2261 = vunpack.c.h.b16 %v1557
    %v2262 = vunpack.c.l.b16 %v1558
    %v2263 = vunpack.c.h.b16 %v1558
    %v2264 = vunpack.c.l.b16 %v1559
    %v2265 = vunpack.c.h.b16 %v1559
    %v2266 = vunpack.c.l.b16 %v1560
    %v2267 = vunpack.c.h.b16 %v1560
    %v2268 = vunpack.c.l.b16 %v1561
    %v2269 = vunpack.c.h.b16 %v1561
    %v2270 = vunpack.c.l.b16 %v1562
    %v2271 = vunpack.c.h.b16 %v1562
    %v2272 = vunpack.c.l.b16 %v1563
    %v2273 = vunpack.c.h.b16 %v1563
    %v2274 = vunpack.c.l.b16 %v1564
    %v2275 = vunpack.c.h.b16 %v1564
    %v2276 = vunpack.c.l.b16 %v1565
    %v2277 = vunpack.c.h.b16 %v1565
    %v2278 = vunpack.c.l.b16 %v1566
    %v2279 = vunpack.c.h.b16 %v1566
    %v2280 = vunpack.c.l.b16 %v1567
    %v2281 = vunpack.c.h.b16 %v1567
    %v2282 = vunpack.c.l.b16 %v1568
    %v2283 = vunpack.c.h.b16 %v1568
    %v2284 = vunpack.c.l.b16 %v1569
    %v2285 = vunpack.c.h.b16 %v1569
    %v2286 = vunpack.c.l.b16 %v1570
    %v2287 = vunpack.c.h.b16 %v1570
    %v2288 = vunpack.c.l.b16 %v1571
    %v2289 = vunpack.c.h.b16 %v1571
    %v2290 = vunpack.c.l.b16 %v1572
    %v2291 = vunpack.c.h.b16 %v1572
    %v2292 = vunpack.c.l.b16 %v1573
    %v2293 = vunpack.c.h.b16 %v1573
    %v2294 = vunpack.c.l.b16 %v1574
    %v2295 = vunpack.c.h.b16 %v1574
    %v2296 = vunpack.c.l.b16 %v1575
    %v2297 = vunpack.c.h.b16 %v1575
    %v2298 = vunpack.c.l.b16 %v1576
    %v2299 = vunpack.c.h.b16 %v1576
    %v2300 = vunpack.c.l.b16 %v1577
    %v2301 = vunpack.c.h.b16 %v1577
    %v2302 = vunpack.c.l.b16 %v1578
    %v2303 = vunpack.c.h.b16 %v1578
    %v2304 = vunpack.c.l.b16 %v1579
    %v2305 = vunpack.c.h.b16 %v1579
    %v2306 = vunpack.c.l.b16 %v1580
    %v2307 = vunpack.c.h.b16 %v1580
    %v2308 = vunpack.c.l.b16 %v1581
    %v2309 = vunpack.c.h.b16 %v1581
    %v2310 = vunpack.c.l.b16 %v1582
    %v2311 = vunpack.c.h.b16 %v1582
    %v2312 = vunpack.c.l.b16 %v1583
    %v2313 = vunpack.c.h.b16 %v1583
    %v2314 = vunpack.c.l.b16 %v1584
    %v2315 = vunpack.c.h.b16 %v1584
    %v2316 = vunpack.c.l.b16 %v1585
    %v2317 = vunpack.c.h.b16 %v1585
    %v2318 = vunpack.c.l.b16 %v1586
    %v2319 = vunpack.c.h.b16 %v1586
    %v2320 = vunpack.c.l.b16 %v1587
    %v2321 = vunpack.c.h.b16 %v1587
    %v2322 = vunpack.c.l.b16 %v1588
    %v2323 = vunpack.c.h.b16 %v1588
    %v2324 = vunpack.c.l.b16 %v1589
    %v2325 = vunpack.c.h.b16 %v1589
    %v2326 = vunpack.c.l.b16 %v1590
    %v2327 = vunpack.c.h.b16 %v1590
    %v2328 = vunpack.c.l.b16 %v1591
    %v2329 = vunpack.c.h.b16 %v1591
    %v2330 = vunpack.c.l.b16 %v1592
    %v2331 = vunpack.c.h.b16 %v1592
    %v2332 = vunpack.c.l.b16 %v1593
    %v2333 = vunpack.c.h.b16 %v1593
    %v2334 = vunpack.c.l.b16 %v1594
    %v2335 = vunpack.c.h.b16 %v1594
    %v2336 = vunpack.c.l.b16 %v1595
    %v2337 = vunpack.c.h.b16 %v1595
    %v2338 = vunpack.c.l.b16 %v1596
    %v2339 = vunpack.c.h.b16 %v1596
    %v2340 = vunpack.c.l.b16 %v1597
    %v2341 = vunpack.c.h.b16 %v1597
    %v2342 = vunpack.c.l.b16 %v1598
    %v2343 = vunpack.c.h.b16 %v1598
    %v2344 = vunpack.c.l.b16 %v1599
    %v2345 = vunpack.c.h.b16 %v1599
    %v2346 = vunpack.c.l.b16 %v1600
    %v2347 = vunpack.c.h.b16 %v1600
    %v2348 = vunpack.c.l.b16 %v1601
    %v2349 = vunpack.c.h.b16 %v1601
    %v2350 = vunpack.c.l.b16 %v1602
    %v2351 = vunpack.c.h.b16 %v1602
    %v2352 = vunpack.c.l.b16 %v1603
    %v2353 = vunpack.c.h.b16 %v1603
    %v2354 = vunpack.c.l.b16 %v1604
    %v2355 = vunpack.c.h.b16 %v1604
    %v2356 = vunpack.c.l.b16 %v1605
    %v2357 = vunpack.c.h.b16 %v1605
    %v2358 = vunpack.c.l.b16 %v1606
    %v2359 = vunpack.c.h.b16 %v1606
    %v2360 = vunpack.c.l.b16 %v1607
    %v2361 = vunpack.c.h.b16 %v1607
    %v2362 = vunpack.c.l.b16 %v1608
    %v2363 = vunpack.c.h.b16 %v1608
    %v2364 = vunpack.c.l.b16 %v1609
    %v2365 = vunpack.c.h.b16 %v1609
    %v2366 = vunpack.c.l.b16 %v1610
    %v2367 = vunpack.c.h.b16 %v1610
    %v2368 = vunpack.c.l.b16 %v1611
    %v2369 = vunpack.c.h.b16 %v1611
    %v2370 = vunpack.c.l.b16 %v1612
    %v2371 = vunpack.c.h.b16 %v1612
    %v2372 = vunpack.c.l.b16 %v1613
    %v2373 = vunpack.c.h.b16 %v1613
    %v2374 = vunpack.c.l.b16 %v1614
    %v2375 = vunpack.c.h.b16 %v1614
    %v2376 = vunpack.c.l.b16 %v1615
    %v2377 = vunpack.c.h.b16 %v1615
    %v2378 = vunpack.c.l.b16 %v1616
    %v2379 = vunpack.c.h.b16 %v1616
    %v2380 = vunpack.c.l.b16 %v1617
    %v2381 = vunpack.c.h.b16 %v1617
    %v2382 = vunpack.c.l.b16 %v1618
    %v2383 = vunpack.c.h.b16 %v1618
    %v2384 = vunpack.c.l.b16 %v1619
    %v2385 = vunpack.c.h.b16 %v1619
    %v2386 = vunpack.c.l.b16 %v1620
    %v2387 = vunpack.c.h.b16 %v1620
    %v2388 = vunpack.c.l.b16 %v1621
    %v2389 = vunpack.c.h.b16 %v1621
    %v2390 = vunpack.c.l.b16 %v1622
    %v2391 = vunpack.c.h.b16 %v1622
    %v2392 = vunpack.c.l.b16 %v1623
    %v2393 = vunpack.c.h.b16 %v1623
    %v2394 = vunpack.c.l.b16 %v1624
    %v2395 = vunpack.c.h.b16 %v1624
    %v2396 = vunpack.c.l.b16 %v1625
    %v2397 = vunpack.c.h.b16 %v1625
    %v2398 = vunpack.c.l.b16 %v1626
    %v2399 = vunpack.c.h.b16 %v1626
    %v2400 = vunpack.c.l.b16 %v1627
    %v2401 = vunpack.c.h.b16 %v1627
    %v2402 = vunpack.c.l.b16 %v1628
    %v2403 = vunpack.c.h.b16 %v1628
    %v2404 = vunpack.c.l.b16 %v1629
    %v2405 = vunpack.c.h.b16 %v1629
    %v2406 = vunpack.c.l.b16 %v1630
    %v2407 = vunpack.c.h.b16 %v1630
    %v2408 = vunpack.c.l.b16 %v1631
    %v2409 = vunpack.c.h.b16 %v1631
    %v2410 = vunpack.c.l.b16 %v1632
    %v2411 = vunpack.c.h.b16 %v1632
    %v2412 = vunpack.c.l.b16 %v1633
    %v2413 = vunpack.c.h.b16 %v1633
    %v2414 = vunpack.c.l.b16 %v1634
    %v2415 = vunpack.c.h.b16 %v1634
    %v2416 = vunpack.c.l.b16 %v1635
    %v2417 = vunpack.c.h.b16 %v1635
    %v2418 = vunpack.c.l.b16 %v1636
    %v2419 = vunpack.c.h.b16 %v1636
    %v2420 = vunpack.c.l.b16 %v1637
    %v2421 = vunpack.c.h.b16 %v1637
    %v2422 = vunpack.c.l.b16 %v1638
    %v2423 = vunpack.c.h.b16 %v1638
    %v2424 = vunpack.c.l.b16 %v1639
    %v2425 = vunpack.c.h.b16 %v1639
    %v2426 = vunpack.c.l.b16 %v1640
    %v2427 = vunpack.c.h.b16 %v1640
    %v2428 = vunpack.c.l.b16 %v1641
    %v2429 = vunpack.c.h.b16 %v1641
    %v2430 = vunpack.c.l.b16 %v1642
    %v2431 = vunpack.c.h.b16 %v1642
    %v2432 = vunpack.c.l.b16 %v1643
    %v2433 = vunpack.c.h.b16 %v1643
    %v2434 = vunpack.c.l.b16 %v1644
    %v2435 = vunpack.c.h.b16 %v1644
    %v2436 = vunpack.c.l.b16 %v1645
    %v2437 = vunpack.c.h.b16 %v1645
    %v2438 = vunpack.c.l.b16 %v1646
    %v2439 = vunpack.c.h.b16 %v1646
    %v2440 = vunpack.c.l.b16 %v1647
    %v2441 = vunpack.c.h.b16 %v1647
    %v2442 = vunpack.c.l.b16 %v1648
    %v2443 = vunpack.c.h.b16 %v1648
    %v2444 = vunpack.c.l.b16 %v1649
    %v2445 = vunpack.c.h.b16 %v1649
    %v2446 = vunpack.c.l.b16 %v1650
    %v2447 = vunpack.c.h.b16 %v1650
    %v2448 = vunpack.c.l.b16 %v1651
    %v2449 = vunpack.c.h.b16 %v1651
    %v2450 = vunpack.c.l.b16 %v1652
    %v2451 = vunpack.c.h.b16 %v1652
    %v2452 = vunpack.c.l.b16 %v1653
    %v2453 = vunpack.c.h.b16 %v1653
    %v2454 = vunpack.c.l.b16 %v1654
    %v2455 = vunpack.c.h.b16 %v1654
    %v2456 = vunpack.c.l.b16 %v1655
    %v2457 = vunpack.c.h.b16 %v1655
    %v2458 = vunpack.c.l.b16 %v1656
    %v2459 = vunpack.c.h.b16 %v1656
    %v2460 = vunpack.c.l.b16 %v1657
    %v2461 = vunpack.c.h.b16 %v1657
    %v2462 = vunpack.c.l.b16 %v1658
    %v2463 = vunpack.c.h.b16 %v1658
    %v2464 = vunpack.c.l.b16 %v1659
    %v2465 = vunpack.c.h.b16 %v1659
    %v2466 = vunpack.c.l.b16 %v1660
    %v2467 = vunpack.c.h.b16 %v1660
    %v2468 = vunpack.c.l.b16 %v1661
    %v2469 = vunpack.c.h.b16 %v1661
    %v2470 = vunpack.c.l.b16 %v1662
    %v2471 = vunpack.c.h.b16 %v1662
    %v2472 = vunpack.c.l.b16 %v1663
    %v2473 = vunpack.c.h.b16 %v1663
    %v2474 = vpack.c.b16 %v1970, %v1962
    %v2475 = vpack.c.b16 %v1971, %v1963
    %v2476 = vpack.c.b16 %v1972, %v1964
    %v2477 = vpack.c.b16 %v1973, %v1965
    %v2478 = vpack.c.b16 %v1974, %v1966
    %v2479 = vpack.c.b16 %v1975, %v1967
    %v2480 = vpack.c.b16 %v1976, %v1968
    %v2481 = vpack.c.b16 %v1977, %v1969
    %v2482 = vpack.c.b16 %v1986, %v1978
    %v2483 = vpack.c.b16 %v1987, %v1979
    %v2484 = vpack.c.b16 %v1988, %v1980
    %v2485 = vpack.c.b16 %v1989, %v1981
    %v2486 = vpack.c.b16 %v1990, %v1982
    %v2487 = vpack.c.b16 %v1991, %v1983
    %v2488 = vpack.c.b16 %v1992, %v1984
    %v2489 = vpack.c.b16 %v1993, %v1985
    %v2490 = vpack.c.b16 %v2002, %v1994
    %v2491 = vpack.c.b16 %v2003, %v1995
    %v2492 = vpack.c.b16 %v2004, %v1996
    %v2493 = vpack.c.b16 %v2005, %v1997
    %v2494 = vpack.c.b16 %v2006, %v1998
    %v2495 = vpack.c.b16 %v2007, %v1999
    %v2496 = vpack.c.b16 %v2008, %v2000
    %v2497 = vpack.c.b16 %v2009, %v2001
    %v2498 = vpack.c.b16 %v2018, %v2010
    %v2499 = vpack.c.b16 %v2019, %v2011
    %v2500 = vpack.c.b16 %v2020, %v2012
    %v2501 = vpack.c.b16 %v2021, %v2013
    %v2502 = vpack.c.b16 %v2022, %v2014
    %v2503 = vpack.c.b16 %v2023, %v2015
    %v2504 = vpack.c.b16 %v2024, %v2016
    %v2505 = vpack.c.b16 %v2025, %v2017
    %v2506 = vpack.c.b16 %v2034, %v2026
    %v2507 = vpack.c.b16 %v2035, %v2027
    %v2508 = vpack.c.b16 %v2036, %v2028
    %v2509 = vpack.c.b16 %v2037, %v2029
    %v2510 = vpack.c.b16 %v2038, %v2030
    %v2511 = vpack.c.b16 %v2039, %v2031
    %v2512 = vpack.c.b16 %v2040, %v2032
    %v2513 = vpack.c.b16 %v2041, %v2033
    %v2514 = vpack.c.b16 %v2050, %v2042
    %v2515 = vpack.c.b16 %v2051, %v2043
    %v2516 = vpack.c.b16 %v2052, %v2044
    %v2517 = vpack.c.b16 %v2053, %v2045
    %v2518 = vpack.c.b16 %v2054, %v2046
    %v2519 = vpack.c.b16 %v2055, %v2047
    %v2520 = vpack.c.b16 %v2056, %v2048
    %v2521 = vpack.c.b16 %v2057, %v2049
    %v2522 = vpack.c.b16 %v2066, %v2058
    %v2523 = vpack.c.b16 %v2067, %v2059
    %v2524 = vpack.c.b16 %v2068, %v2060
    %v2525 = vpack.c.b16 %v2069, %v2061
    %v2526 = vpack.c.b16 %v2070, %v2062
    %v2527 = vpack.c.b16 %v2071, %v2063
    %v2528 = vpack.c.b16 %v2072, %v2064
    %v2529 = vpack.c.b16 %v2073, %v2065
    %v2530 = vpack.c.b16 %v2082, %v2074
    %v2531 = vpack.c.b16 %v2083, %v2075
    %v2532 = vpack.c.b16 %v2084, %v2076
    %v2533 = vpack.c.b16 %v2085, %v2077
    %v2534 = vpack.c.b16 %v2086, %v2078
    %v2535 = vpack.c.b16 %v2087, %v2079
    %v2536 = vpack.c.b16 %v2088, %v2080
    %v2537 = vpack.c.b16 %v2089, %v2081
    %v2538 = vpack.c.b16 %v2098, %v2090
    %v2539 = vpack.c.b16 %v2099, %v2091
    %v2540 = vpack.c.b16 %v2100, %v2092
    %v2541 = vpack.c.b16 %v2101, %v2093
    %v2542 = vpack.c.b16 %v2102, %v2094
    %v2543 = vpack.c.b16 %v2103, %v2095
    %v2544 = vpack.c.b16 %v2104, %v2096
    %v2545 = vpack.c.b16 %v2105, %v2097
    %v2546 = vpack.c.b16 %v2114, %v2106
    %v2547 = vpack.c.b16 %v2115, %v2107
    %v2548 = vpack.c.b16 %v2116, %v2108
    %v2549 = vpack.c.b16 %v2117, %v2109
    %v2550 = vpack.c.b16 %v2118, %v2110
    %v2551 = vpack.c.b16 %v2119, %v2111
    %v2552 = vpack.c.b16 %v2120, %v2112
    %v2553 = vpack.c.b16 %v2121, %v2113
    %v2554 = vpack.c.b16 %v2130, %v2122
    %v2555 = vpack.c.b16 %v2131, %v2123
    %v2556 = vpack.c.b16 %v2132, %v2124
    %v2557 = vpack.c.b16 %v2133, %v2125
    %v2558 = vpack.c.b16 %v2134, %v2126
    %v2559 = vpack.c.b16 %v2135, %v2127
    %v2560 = vpack.c.b16 %v2136, %v2128
    %v2561 = vpack.c.b16 %v2137, %v2129
    %v2562 = vpack.c.b16 %v2146, %v2138
    %v2563 = vpack.c.b16 %v2147, %v2139
    %v2564 = vpack.c.b16 %v2148, %v2140
    %v2565 = vpack.c.b16 %v2149, %v2141
    %v2566 = vpack.c.b16 %v2150, %v2142
    %v2567 = vpack.c.b16 %v2151, %v2143
    %v2568 = vpack.c.b16 %v2152, %v2144
    %v2569 = vpack.c.b16 %v2153, %v2145
    %v2570 = vpack.c.b16 %v2162, %v2154
    %v2571 = vpack.c.b16 %v2163, %v2155
    %v2572 = vpack.c.b16 %v2164, %v2156
    %v2573 = vpack.c.b16 %v2165, %v2157
    %v2574 = vpack.c.b16 %v2166, %v2158
    %v2575 = vpack.c.b16 %v2167, %v2159
    %v2576 = vpack.c.b16 %v2168, %v2160
    %v2577 = vpack.c.b16 %v2169, %v2161
    %v2578 = vpack.c.b16 %v2178, %v2170
    %v2579 = vpack.c.b16 %v2179, %v2171
    %v2580 = vpack.c.b16 %v2180, %v2172
    %v2581 = vpack.c.b16 %v2181, %v2173
    %v2582 = vpack.c.b16 %v2182, %v2174
    %v2583 = vpack.c.b16 %v2183, %v2175
    %v2584 = vpack.c.b16 %v2184, %v2176
    %v2585 = vpack.c.b16 %v2185, %v2177
    %v2586 = vpack.c.b16 %v2194, %v2186
    %v2587 = vpack.c.b16 %v2195, %v2187
    %v2588 = vpack.c.b16 %v2196, %v2188
    %v2589 = vpack.c.b16 %v2197, %v2189
    %v2590 = vpack.c.b16 %v2198, %v2190
    %v2591 = vpack.c.b16 %v2199, %v2191
    %v2592 = vpack.c.b16 %v2200, %v2192
    %v2593 = vpack.c.b16 %v2201, %v2193
    %v2594 = vpack.c.b16 %v2210, %v2202
    %v2595 = vpack.c.b16 %v2211, %v2203
    %v2596 = vpack.c.b16 %v2212, %v2204
    %v2597 = vpack.c.b16 %v2213, %v2205
    %v2598 = vpack.c.b16 %v2214, %v2206
    %v2599 = vpack.c.b16 %v2215, %v2207
    %v2600 = vpack.c.b16 %v2216, %v2208
    %v2601 = vpack.c.b16 %v2217, %v2209
    %v2602 = vpack.c.b16 %v2226, %v2218
    %v2603 = vpack.c.b16 %v2227, %v2219
    %v2604 = vpack.c.b16 %v2228, %v2220
    %v2605 = vpack.c.b16 %v2229, %v2221
    %v2606 = vpack.c.b16 %v2230, %v2222
    %v2607 = vpack.c.b16 %v2231, %v2223
    %v2608 = vpack.c.b16 %v2232, %v2224
    %v2609 = vpack.c.b16 %v2233, %v2225
    %v2610 = vpack.c.b16 %v2242, %v2234
    %v2611 = vpack.c.b16 %v2243, %v2235
    %v2612 = vpack.c.b16 %v2244, %v2236
    %v2613 = vpack.c.b16 %v2245, %v2237
    %v2614 = vpack.c.b16 %v2246, %v2238
    %v2615 = vpack.c.b16 %v2247, %v2239
    %v2616 = vpack.c.b16 %v2248, %v2240
    %v2617 = vpack.c.b16 %v2249, %v2241
    %v2618 = vpack.c.b16 %v2258, %v2250
    %v2619 = vpack.c.b16 %v2259, %v2251
    %v2620 = vpack.c.b16 %v2260, %v2252
    %v2621 = vpack.c.b16 %v2261, %v2253
    %v2622 = vpack.c.b16 %v2262, %v2254
    %v2623 = vpack.c.b16 %v2263, %v2255
    %v2624 = vpack.c.b16 %v2264, %v2256
    %v2625 = vpack.c.b16 %v2265, %v2257
    %v2626 = vpack.c.b16 %v2274, %v2266
    %v2627 = vpack.c.b16 %v2275, %v2267
    %v2628 = vpack.c.b16 %v2276, %v2268
    %v2629 = vpack.c.b16 %v2277, %v2269
    %v2630 = vpack.c.b16 %v2278, %v2270
    %v2631 = vpack.c.b16 %v2279, %v2271
    %v2632 = vpack.c.b16 %v2280, %v2272
    %v2633 = vpack.c.b16 %v2281, %v2273
    %v2634 = vpack.c.b16 %v2290, %v2282
    %v2635 = vpack.c.b16 %v2291, %v2283
    %v2636 = vpack.c.b16 %v2292, %v2284
    %v2637 = vpack.c.b16 %v2293, %v2285
    %v2638 = vpack.c.b16 %v2294, %v2286
    %v2639 = vpack.c.b16 %v2295, %v2287
    %v2640 = vpack.c.b16 %v2296, %v2288
    %v2641 = vpack.c.b16 %v2297, %v2289
    %v2642 = vpack.c.b16 %v2306, %v2298
    %v2643 = vpack.c.b16 %v2307, %v2299
    %v2644 = vpack.c.b16 %v2308, %v2300
    %v2645 = vpack.c.b16 %v2309, %v2301
    %v2646 = vpack.c.b16 %v2310, %v2302
    %v2647 = vpack.c.b16 %v2311, %v2303
    %v2648 = vpack.c.b16 %v2312, %v2304
    %v2649 = vpack.c.b16 %v2313, %v2305
    %v2650 = vpack.c.b16 %v2322, %v2314
    %v2651 = vpack.c.b16 %v2323, %v2315
    %v2652 = vpack.c.b16 %v2324, %v2316
    %v2653 = vpack.c.b16 %v2325, %v2317
    %v2654 = vpack.c.b16 %v2326, %v2318
    %v2655 = vpack.c.b16 %v2327, %v2319
    %v2656 = vpack.c.b16 %v2328, %v2320
    %v2657 = vpack.c.b16 %v2329, %v2321
    %v2658 = vpack.c.b16 %v2338, %v2330
    %v2659 = vpack.c.b16 %v2339, %v2331
    %v2660 = vpack.c.b16 %v2340, %v2332
    %v2661 = vpack.c.b16 %v2341, %v2333
    %v2662 = vpack.c.b16 %v2342, %v2334
    %v2663 = vpack.c.b16 %v2343, %v2335
    %v2664 = vpack.c.b16 %v2344, %v2336
    %v2665 = vpack.c.b16 %v2345, %v2337
    %v2666 = vpack.c.b16 %v2354, %v2346
    %v2667 = vpack.c.b16 %v2355, %v2347
    %v2668 = vpack.c.b16 %v2356, %v2348
    %v2669 = vpack.c.b16 %v2357, %v2349
    %v2670 = vpack.c.b16 %v2358, %v2350
    %v2671 = vpack.c.b16 %v2359, %v2351
    %v2672 = vpack.c.b16 %v2360, %v2352
    %v2673 = vpack.c.b16 %v2361, %v2353
    %v2674 = vpack.c.b16 %v2370, %v2362
    %v2675 = vpack.c.b16 %v2371, %v2363
    %v2676 = vpack.c.b16 %v2372, %v2364
    %v2677 = vpack.c.b16 %v2373, %v2365
    %v2678 = vpack.c.b16 %v2374, %v2366
    %v2679 = vpack.c.b16 %v2375, %v2367
    %v2680 = vpack.c.b16 %v2376, %v2368
    %v2681 = vpack.c.b16 %v2377, %v2369
    %v2682 = vpack.c.b16 %v2386, %v2378
    %v2683 = vpack.c.b16 %v2387, %v2379
    %v2684 = vpack.c.b16 %v2388, %v2380
    %v2685 = vpack.c.b16 %v2389, %v2381
    %v2686 = vpack.c.b16 %v2390, %v2382
    %v2687 = vpack.c.b16 %v2391, %v2383
    %v2688 = vpack.c.b16 %v2392, %v2384
    %v2689 = vpack.c.b16 %v2393, %v2385
    %v2690 = vpack.c.b16 %v2402, %v2394
    %v2691 = vpack.c.b16 %v2403, %v2395
    %v2692 = vpack.c.b16 %v2404, %v2396
    %v2693 = vpack.c.b16 %v2405, %v2397
    %v2694 = vpack.c.b16 %v2406, %v2398
    %v2695 = vpack.c.b16 %v2407, %v2399
    %v2696 = vpack.c.b16 %v2408, %v2400
    %v2697 = vpack.c.b16 %v2409, %v2401
    %v2698 = vpack.c.b16 %v2418, %v2410
    %v2699 = vpack.c.b16 %v2419, %v2411
    %v2700 = vpack.c.b16 %v2420, %v2412
    %v2701 = vpack.c.b16 %v2421, %v2413
    %v2702 = vpack.c.b16 %v2422, %v2414
    %v2703 = vpack.c.b16 %v2423, %v2415
    %v2704 = vpack.c.b16 %v2424, %v2416
    %v2705 = vpack.c.b16 %v2425, %v2417
    %v2706 = vpack.c.b16 %v2434, %v2426
    %v2707 = vpack.c.b16 %v2435, %v2427
    %v2708 = vpack.c.b16 %v2436, %v2428
    %v2709 = vpack.c.b16 %v2437, %v2429
    %v2710 = vpack.c.b16 %v2438, %v2430
    %v2711 = vpack.c.b16 %v2439, %v2431
    %v2712 = vpack.c.b16 %v2440, %v2432
    %v2713 = vpack.c.b16 %v2441, %v2433
    %v2714 = vpack.c.b16 %v2450, %v2442
    %v2715 = vpack.c.b16 %v2451, %v2443
    %v2716 = vpack.c.b16 %v2452, %v2444
    %v2717 = vpack.c.b16 %v2453, %v2445
    %v2718 = vpack.c.b16 %v2454, %v2446
    %v2719 = vpack.c.b16 %v2455, %v2447
    %v2720 = vpack.c.b16 %v2456, %v2448
    %v2721 = vpack.c.b16 %v2457, %v2449
    %v2722 = vpack.c.b16 %v2466, %v2458
    %v2723 = vpack.c.b16 %v2467, %v2459
    %v2724 = vpack.c.b16 %v2468, %v2460
    %v2725 = vpack.c.b16 %v2469, %v2461
    %v2726 = vpack.c.b16 %v2470, %v2462
    %v2727 = vpack.c.b16 %v2471, %v2463
    %v2728 = vpack.c.b16 %v2472, %v2464
    %v2729 = vpack.c.b16 %v2473, %v2465
    %2986 = vmatprep.subr.bf16.mxu0 %v2475
    %2987 = vmatpush1.bf16.msra.mxu0 %v2474
    %2988 = vmatprep.subr.bf16.mxu0 %v2483
    %2989 = vmatpush1.bf16.msra.mxu0 %v2482
    %2990 = vmatprep.subr.bf16.mxu0 %v2491
    %2991 = vmatpush1.bf16.msra.mxu0 %v2490
    %2992 = vmatprep.subr.bf16.mxu0 %v2499
    %2993 = vmatpush1.bf16.msra.mxu0 %v2498
    %2994 = vmatprep.subr.bf16.mxu0 %v2507
    %2995 = vmatpush1.bf16.msra.mxu0 %v2506
    %2996 = vmatprep.subr.bf16.mxu0 %v2515
    %2997 = vmatpush1.bf16.msra.mxu0 %v2514
    %2998 = vmatprep.subr.bf16.mxu0 %v2523
    %2999 = vmatpush1.bf16.msra.mxu0 %v2522
    %3000 = vmatprep.subr.bf16.mxu0 %v2531
    %3001 = vmatpush1.bf16.msra.mxu0 %v2530
    %3002 = vmatprep.subr.bf16.mxu0 %v2539
    %3003 = vmatpush1.bf16.msra.mxu0 %v2538
    %3004 = vmatprep.subr.bf16.mxu0 %v2547
    %3005 = vmatpush1.bf16.msra.mxu0 %v2546
    %3006 = vmatprep.subr.bf16.mxu0 %v2555
    %3007 = vmatpush1.bf16.msra.mxu0 %v2554
    %3008 = vmatprep.subr.bf16.mxu0 %v2563
    %3009 = vmatpush1.bf16.msra.mxu0 %v2562
    %3010 = vmatprep.subr.bf16.mxu0 %v2571
    %3011 = vmatpush1.bf16.msra.mxu0 %v2570
    %3012 = vmatprep.subr.bf16.mxu0 %v2579
    %3013 = vmatpush1.bf16.msra.mxu0 %v2578
    %3014 = vmatprep.subr.bf16.mxu0 %v2587
    %3015 = vmatpush1.bf16.msra.mxu0 %v2586
    %3016 = vmatprep.subr.bf16.mxu0 %v2595
    %3017 = vmatpush1.bf16.msra.mxu0 %v2594
    %3018 = vmatprep.mubr.bf16.mxu0 %v1377
    %3019 = vmatmul.mubr.bf16.gmra.mrb[0].mxu0 %v1376
    %v3020 = vpop.f32.mrb[0].mxu0
    %v3021 = vadd.f32 %v1669, %v3020
    %v3022 = vpop.f32.mrb[0].mxu0
    %v3023 = vadd.f32 %v1673, %v3022
    %v3024 = vpop.f32.mrb[0].mxu0
    %v3025 = vadd.f32 %v1669, %v3024
    %v3026 = vpop.f32.mrb[0].mxu0
    %v3027 = vadd.f32 %v1673, %v3026
    %3028 = vmatprep.mubr.bf16.mxu0 %v1381
    %3029 = vmatmul.mubr.bf16.gmra.mrb[0].mxu0 %v1380
    %v3030 = vpop.f32.mrb[0].mxu0
    %v3031 = vadd.f32 %v1669, %v3030
    %v3032 = vpop.f32.mrb[0].mxu0
    %v3033 = vadd.f32 %v1673, %v3032
    %v3034 = vpop.f32.mrb[0].mxu0
    %v3035 = vadd.f32 %v1669, %v3034
    %v3036 = vpop.f32.mrb[0].mxu0
    %v3037 = vadd.f32 %v1673, %v3036
    %3038 = vmatprep.mubr.bf16.mxu0 %v1385
    %3039 = vmatmul.mubr.bf16.gmra.mrb[0].mxu0 %v1384
    %v3040 = vpop.f32.mrb[0].mxu0
    %v3041 = vadd.f32 %v1669, %v3040
    %v3042 = vpop.f32.mrb[0].mxu0
    %v3043 = vadd.f32 %v1673, %v3042
    %v3044 = vpop.f32.mrb[0].mxu0
    %v3045 = vadd.f32 %v1669, %v3044
    %v3046 = vpop.f32.mrb[0].mxu0
    %v3047 = vadd.f32 %v1673, %v3046
    %3048 = vmatprep.mubr.bf16.mxu0 %v1389
    %3049 = vmatmul.mubr.bf16.gmra.mrb[0].mxu0 %v1388
    %v3050 = vpop.f32.mrb[0].mxu0
    %v3051 = vadd.f32 %v1669, %v3050
    %v3052 = vpop.f32.mrb[0].mxu0
    %v3053 = vadd.f32 %v1673, %v3052
    %v3054 = vpop.f32.mrb[0].mxu0
    %v3055 = vadd.f32 %v1669, %v3054
    %v3056 = vpop.f32.mrb[0].mxu0
    %v3057 = vadd.f32 %v1673, %v3056
    %3058 = vmatprep.mubr.bf16.mxu0 %v1393
    %3059 = vmatmul.mubr.bf16.gmra.mrb[0].mxu0 %v1392
    %v3060 = vpop.f32.mrb[0].mxu0
    %v3061 = vadd.f32 %v1669, %v3060
    %v3062 = vpop.f32.mrb[0].mxu0
    %v3063 = vadd.f32 %v1673, %v3062
    %v3064 = vpop.f32.mrb[0].mxu0
    %v3065 = vadd.f32 %v1669, %v3064
    %v3066 = vpop.f32.mrb[0].mxu0
    %v3067 = vadd.f32 %v1673, %v3066
    %3068 = vmatprep.mubr.bf16.mxu0 %v1397
    %3069 = vmatmul.mubr.bf16.gmra.mrb[0].mxu0 %v1396
    %v3070 = vpop.f32.mrb[0].mxu0
    %v3071 = vadd.f32 %v1669, %v3070
    %v3072 = vpop.f32.mrb[0].mxu0
    %v3073 = vadd.f32 %v1673, %v3072
    %v3074 = vpop.f32.mrb[0].mxu0
    %v3075 = vadd.f32 %v1669, %v3074
    %v3076 = vpop.f32.mrb[0].mxu0
    %v3077 = vadd.f32 %v1673, %v3076
    %3078 = vmatprep.mubr.bf16.mxu0 %v1401
    %3079 = vmatmul.mubr.bf16.gmra.mrb[0].mxu0 %v1400
    %v3080 = vpop.f32.mrb[0].mxu0
    %v3081 = vadd.f32 %v1669, %v3080
    %v3082 = vpop.f32.mrb[0].mxu0
    %v3083 = vadd.f32 %v1673, %v3082
    %v3084 = vpop.f32.mrb[0].mxu0
    %v3085 = vadd.f32 %v1669, %v3084
    %v3086 = vpop.f32.mrb[0].mxu0
    %v3087 = vadd.f32 %v1673, %v3086
    %3088 = vmatprep.mubr.bf16.mxu0 %v1405
    %3089 = vmatmul.mubr.bf16.gmra.mrb[0].mxu0 %v1404
    %v3090 = vpop.f32.mrb[0].mxu0
    %v3091 = vadd.f32 %v1669, %v3090
    %v3092 = vpop.f32.mrb[0].mxu0
    %v3093 = vadd.f32 %v1673, %v3092
    %v3094 = vpop.f32.mrb[0].mxu0
    %v3095 = vadd.f32 %v1669, %v3094
    %v3096 = vpop.f32.mrb[0].mxu0
    %v3097 = vadd.f32 %v1673, %v3096
    %3098 = vdwg.mxu0
    %3099 = vmatprep.subr.bf16.mxu0 %v2603
    %3100 = vmatpush1.bf16.msra.mxu0 %v2602
    %3101 = vmatprep.subr.bf16.mxu0 %v2611
    %3102 = vmatpush1.bf16.msra.mxu0 %v2610
    %3103 = vmatprep.subr.bf16.mxu0 %v2619
    %3104 = vmatpush1.bf16.msra.mxu0 %v2618
    %3105 = vmatprep.subr.bf16.mxu0 %v2627
    %3106 = vmatpush1.bf16.msra.mxu0 %v2626
    %3107 = vmatprep.subr.bf16.mxu0 %v2635
    %3108 = vmatpush1.bf16.msra.mxu0 %v2634
    %3109 = vmatprep.subr.bf16.mxu0 %v2643
    %3110 = vmatpush1.bf16.msra.mxu0 %v2642
    %3111 = vmatprep.subr.bf16.mxu0 %v2651
    %3112 = vmatpush1.bf16.msra.mxu0 %v2650
    %3113 = vmatprep.subr.bf16.mxu0 %v2659
    %3114 = vmatpush1.bf16.msra.mxu0 %v2658
    %3115 = vmatprep.subr.bf16.mxu0 %v2667
    %3116 = vmatpush1.bf16.msra.mxu0 %v2666
    %3117 = vmatprep.subr.bf16.mxu0 %v2675
    %3118 = vmatpush1.bf16.msra.mxu0 %v2674
    %3119 = vmatprep.subr.bf16.mxu0 %v2683
    %3120 = vmatpush1.bf16.msra.mxu0 %v2682
    %3121 = vmatprep.subr.bf16.mxu0 %v2691
    %3122 = vmatpush1.bf16.msra.mxu0 %v2690
    %3123 = vmatprep.subr.bf16.mxu0 %v2699
    %3124 = vmatpush1.bf16.msra.mxu0 %v2698
    %3125 = vmatprep.subr.bf16.mxu0 %v2707
    %3126 = vmatpush1.bf16.msra.mxu0 %v2706
    %3127 = vmatprep.subr.bf16.mxu0 %v2715
    %3128 = vmatpush1.bf16.msra.mxu0 %v2714
    %3129 = vmatprep.subr.bf16.mxu0 %v2723
    %3130 = vmatpush1.bf16.msra.mxu0 %v2722
    %3131 = vmatprep.mubr.bf16.mxu0 %v1379
    %3132 = vmatmul.mubr.bf16.gmra.mrb[0].mxu0 %v1378
    %v3133 = vpop.f32.mrb[0].mxu0
    %v3134 = vadd.f32 %v3021, %v3133
    %v3135 = vpop.f32.mrb[0].mxu0
    %v3136 = vadd.f32 %v3023, %v3135
    %v3137 = vpop.f32.mrb[0].mxu0
    %v3138 = vadd.f32 %v3025, %v3137
    %v3139 = vpop.f32.mrb[0].mxu0
    %v3140 = vadd.f32 %v3027, %v3139
    %3141 = vmatprep.mubr.bf16.mxu0 %v1383
    %3142 = vmatmul.mubr.bf16.gmra.mrb[0].mxu0 %v1382
    %v3143 = vpop.f32.mrb[0].mxu0
    %v3144 = vadd.f32 %v3031, %v3143
    %v3145 = vpop.f32.mrb[0].mxu0
    %v3146 = vadd.f32 %v3033, %v3145
    %v3147 = vpop.f32.mrb[0].mxu0
    %v3148 = vadd.f32 %v3035, %v3147
    %v3149 = vpop.f32.mrb[0].mxu0
    %v3150 = vadd.f32 %v3037, %v3149
    %3151 = vmatprep.mubr.bf16.mxu0 %v1387
    %3152 = vmatmul.mubr.bf16.gmra.mrb[0].mxu0 %v1386
    %v3153 = vpop.f32.mrb[0].mxu0
    %v3154 = vadd.f32 %v3041, %v3153
    %v3155 = vpop.f32.mrb[0].mxu0
    %v3156 = vadd.f32 %v3043, %v3155
    %v3157 = vpop.f32.mrb[0].mxu0
    %v3158 = vadd.f32 %v3045, %v3157
    %v3159 = vpop.f32.mrb[0].mxu0
    %v3160 = vadd.f32 %v3047, %v3159
    %3161 = vmatprep.mubr.bf16.mxu0 %v1391
    %3162 = vmatmul.mubr.bf16.gmra.mrb[0].mxu0 %v1390
    %v3163 = vpop.f32.mrb[0].mxu0
    %v3164 = vadd.f32 %v3051, %v3163
    %v3165 = vpop.f32.mrb[0].mxu0
    %v3166 = vadd.f32 %v3053, %v3165
    %v3167 = vpop.f32.mrb[0].mxu0
    %v3168 = vadd.f32 %v3055, %v3167
    %v3169 = vpop.f32.mrb[0].mxu0
    %v3170 = vadd.f32 %v3057, %v3169
    %3171 = vmatprep.mubr.bf16.mxu0 %v1395
    %3172 = vmatmul.mubr.bf16.gmra.mrb[0].mxu0 %v1394
    %v3173 = vpop.f32.mrb[0].mxu0
    %v3174 = vadd.f32 %v3061, %v3173
    %v3175 = vpop.f32.mrb[0].mxu0
    %v3176 = vadd.f32 %v3063, %v3175
    %v3177 = vpop.f32.mrb[0].mxu0
    %v3178 = vadd.f32 %v3065, %v3177
    %v3179 = vpop.f32.mrb[0].mxu0
    %v3180 = vadd.f32 %v3067, %v3179
    %3181 = vmatprep.mubr.bf16.mxu0 %v1399
    %3182 = vmatmul.mubr.bf16.gmra.mrb[0].mxu0 %v1398
    %v3183 = vpop.f32.mrb[0].mxu0
    %v3184 = vadd.f32 %v3071, %v3183
    %v3185 = vpop.f32.mrb[0].mxu0
    %v3186 = vadd.f32 %v3073, %v3185
    %v3187 = vpop.f32.mrb[0].mxu0
    %v3188 = vadd.f32 %v3075, %v3187
    %v3189 = vpop.f32.mrb[0].mxu0
    %v3190 = vadd.f32 %v3077, %v3189
    %3191 = vmatprep.mubr.bf16.mxu0 %v1403
    %3192 = vmatmul.mubr.bf16.gmra.mrb[0].mxu0 %v1402
    %v3193 = vpop.f32.mrb[0].mxu0
    %v3194 = vadd.f32 %v3081, %v3193
    %v3195 = vpop.f32.mrb[0].mxu0
    %v3196 = vadd.f32 %v3083, %v3195
    %v3197 = vpop.f32.mrb[0].mxu0
    %v3198 = vadd.f32 %v3085, %v3197
    %v3199 = vpop.f32.mrb[0].mxu0
    %v3200 = vadd.f32 %v3087, %v3199
    %3201 = vmatprep.mubr.bf16.mxu0 %v1407
    %3202 = vmatmul.mubr.bf16.gmra.mrb[0].mxu0 %v1406
    %v3203 = vpop.f32.mrb[0].mxu0
    %v3204 = vadd.f32 %v3091, %v3203
    %v3205 = vpop.f32.mrb[0].mxu0
    %v3206 = vadd.f32 %v3093, %v3205
    %v3207 = vpop.f32.mrb[0].mxu0
    %v3208 = vadd.f32 %v3095, %v3207
    %v3209 = vpop.f32.mrb[0].mxu0
    %v3210 = vadd.f32 %v3097, %v3209
    %3211 = vdwg.mxu0
    %3212 = vmatprep.subr.bf16.mxu0 %v2477
    %3213 = vmatpush1.bf16.msra.mxu0 %v2476
    %3214 = vmatprep.subr.bf16.mxu0 %v2485
    %3215 = vmatpush1.bf16.msra.mxu0 %v2484
    %3216 = vmatprep.subr.bf16.mxu0 %v2493
    %3217 = vmatpush1.bf16.msra.mxu0 %v2492
    %3218 = vmatprep.subr.bf16.mxu0 %v2501
    %3219 = vmatpush1.bf16.msra.mxu0 %v2500
    %3220 = vmatprep.subr.bf16.mxu0 %v2509
    %3221 = vmatpush1.bf16.msra.mxu0 %v2508
    %3222 = vmatprep.subr.bf16.mxu0 %v2517
    %3223 = vmatpush1.bf16.msra.mxu0 %v2516
    %3224 = vmatprep.subr.bf16.mxu0 %v2525
    %3225 = vmatpush1.bf16.msra.mxu0 %v2524
    %3226 = vmatprep.subr.bf16.mxu0 %v2533
    %3227 = vmatpush1.bf16.msra.mxu0 %v2532
    %3228 = vmatprep.subr.bf16.mxu0 %v2541
    %3229 = vmatpush1.bf16.msra.mxu0 %v2540
    %3230 = vmatprep.subr.bf16.mxu0 %v2549
    %3231 = vmatpush1.bf16.msra.mxu0 %v2548
    %3232 = vmatprep.subr.bf16.mxu0 %v2557
    %3233 = vmatpush1.bf16.msra.mxu0 %v2556
    %3234 = vmatprep.subr.bf16.mxu0 %v2565
    %3235 = vmatpush1.bf16.msra.mxu0 %v2564
    %3236 = vmatprep.subr.bf16.mxu0 %v2573
    %3237 = vmatpush1.bf16.msra.mxu0 %v2572
    %3238 = vmatprep.subr.bf16.mxu0 %v2581
    %3239 = vmatpush1.bf16.msra.mxu0 %v2580
    %3240 = vmatprep.subr.bf16.mxu0 %v2589
    %3241 = vmatpush1.bf16.msra.mxu0 %v2588
    %3242 = vmatprep.subr.bf16.mxu0 %v2597
    %3243 = vmatpush1.bf16.msra.mxu0 %v2596
    %3244 = vmatprep.mubr.bf16.mxu0 %v1377
    %3245 = vmatmul.mubr.bf16.gmra.mrb[0].mxu0 %v1376
    %v3246 = vpop.f32.mrb[0].mxu0
    %v3247 = vadd.f32 %v1677, %v3246
    %v3248 = vpop.f32.mrb[0].mxu0
    %v3249 = vadd.f32 %v1681, %v3248
    %v3250 = vpop.f32.mrb[0].mxu0
    %v3251 = vadd.f32 %v1677, %v3250
    %v3252 = vpop.f32.mrb[0].mxu0
    %v3253 = vadd.f32 %v1681, %v3252
    %3254 = vmatprep.mubr.bf16.mxu0 %v1381
    %3255 = vmatmul.mubr.bf16.gmra.mrb[0].mxu0 %v1380
    %v3256 = vpop.f32.mrb[0].mxu0
    %v3257 = vadd.f32 %v1677, %v3256
    %v3258 = vpop.f32.mrb[0].mxu0
    %v3259 = vadd.f32 %v1681, %v3258
    %v3260 = vpop.f32.mrb[0].mxu0
    %v3261 = vadd.f32 %v1677, %v3260
    %v3262 = vpop.f32.mrb[0].mxu0
    %v3263 = vadd.f32 %v1681, %v3262
    %3264 = vmatprep.mubr.bf16.mxu0 %v1385
    %3265 = vmatmul.mubr.bf16.gmra.mrb[0].mxu0 %v1384
    %v3266 = vpop.f32.mrb[0].mxu0
    %v3267 = vadd.f32 %v1677, %v3266
    %v3268 = vpop.f32.mrb[0].mxu0
    %v3269 = vadd.f32 %v1681, %v3268
    %v3270 = vpop.f32.mrb[0].mxu0
    %v3271 = vadd.f32 %v1677, %v3270
    %v3272 = vpop.f32.mrb[0].mxu0
    %v3273 = vadd.f32 %v1681, %v3272
    %3274 = vmatprep.mubr.bf16.mxu0 %v1389
    %3275 = vmatmul.mubr.bf16.gmra.mrb[0].mxu0 %v1388
    %v3276 = vpop.f32.mrb[0].mxu0
    %v3277 = vadd.f32 %v1677, %v3276
    %v3278 = vpop.f32.mrb[0].mxu0
    %v3279 = vadd.f32 %v1681, %v3278
    %v3280 = vpop.f32.mrb[0].mxu0
    %v3281 = vadd.f32 %v1677, %v3280
    %v3282 = vpop.f32.mrb[0].mxu0
    %v3283 = vadd.f32 %v1681, %v3282
    %3284 = vmatprep.mubr.bf16.mxu0 %v1393
    %3285 = vmatmul.mubr.bf16.gmra.mrb[0].mxu0 %v1392
    %v3286 = vpop.f32.mrb[0].mxu0
    %v3287 = vadd.f32 %v1677, %v3286
    %v3288 = vpop.f32.mrb[0].mxu0
    %v3289 = vadd.f32 %v1681, %v3288
    %v3290 = vpop.f32.mrb[0].mxu0
    %v3291 = vadd.f32 %v1677, %v3290
    %v3292 = vpop.f32.mrb[0].mxu0
    %v3293 = vadd.f32 %v1681, %v3292
    %3294 = vmatprep.mubr.bf16.mxu0 %v1397
    %3295 = vmatmul.mubr.bf16.gmra.mrb[0].mxu0 %v1396
    %v3296 = vpop.f32.mrb[0].mxu0
    %v3297 = vadd.f32 %v1677, %v3296
    %v3298 = vpop.f32.mrb[0].mxu0
    %v3299 = vadd.f32 %v1681, %v3298
    %v3300 = vpop.f32.mrb[0].mxu0
    %v3301 = vadd.f32 %v1677, %v3300
    %v3302 = vpop.f32.mrb[0].mxu0
    %v3303 = vadd.f32 %v1681, %v3302
    %3304 = vmatprep.mubr.bf16.mxu0 %v1401
    %3305 = vmatmul.mubr.bf16.gmra.mrb[0].mxu0 %v1400
    %v3306 = vpop.f32.mrb[0].mxu0
    %v3307 = vadd.f32 %v1677, %v3306
    %v3308 = vpop.f32.mrb[0].mxu0
    %v3309 = vadd.f32 %v1681, %v3308
    %v3310 = vpop.f32.mrb[0].mxu0
    %v3311 = vadd.f32 %v1677, %v3310
    %v3312 = vpop.f32.mrb[0].mxu0
    %v3313 = vadd.f32 %v1681, %v3312
    %3314 = vmatprep.mubr.bf16.mxu0 %v1405
    %3315 = vmatmul.mubr.bf16.gmra.mrb[0].mxu0 %v1404
    %v3316 = vpop.f32.mrb[0].mxu0
    %v3317 = vadd.f32 %v1677, %v3316
    %v3318 = vpop.f32.mrb[0].mxu0
    %v3319 = vadd.f32 %v1681, %v3318
    %v3320 = vpop.f32.mrb[0].mxu0
    %v3321 = vadd.f32 %v1677, %v3320
    %v3322 = vpop.f32.mrb[0].mxu0
    %v3323 = vadd.f32 %v1681, %v3322
    %3324 = vdwg.mxu0
    %3325 = vmatprep.subr.bf16.mxu0 %v2605
    %3326 = vmatpush1.bf16.msra.mxu0 %v2604
    %3327 = vmatprep.subr.bf16.mxu0 %v2613
    %3328 = vmatpush1.bf16.msra.mxu0 %v2612
    %3329 = vmatprep.subr.bf16.mxu0 %v2621
    %3330 = vmatpush1.bf16.msra.mxu0 %v2620
    %3331 = vmatprep.subr.bf16.mxu0 %v2629
    %3332 = vmatpush1.bf16.msra.mxu0 %v2628
    %3333 = vmatprep.subr.bf16.mxu0 %v2637
    %3334 = vmatpush1.bf16.msra.mxu0 %v2636
    %3335 = vmatprep.subr.bf16.mxu0 %v2645
    %3336 = vmatpush1.bf16.msra.mxu0 %v2644
    %3337 = vmatprep.subr.bf16.mxu0 %v2653
    %3338 = vmatpush1.bf16.msra.mxu0 %v2652
    %3339 = vmatprep.subr.bf16.mxu0 %v2661
    %3340 = vmatpush1.bf16.msra.mxu0 %v2660
    %3341 = vmatprep.subr.bf16.mxu0 %v2669
    %3342 = vmatpush1.bf16.msra.mxu0 %v2668
    %3343 = vmatprep.subr.bf16.mxu0 %v2677
    %3344 = vmatpush1.bf16.msra.mxu0 %v2676
    %3345 = vmatprep.subr.bf16.mxu0 %v2685
    %3346 = vmatpush1.bf16.msra.mxu0 %v2684
    %3347 = vmatprep.subr.bf16.mxu0 %v2693
    %3348 = vmatpush1.bf16.msra.mxu0 %v2692
    %3349 = vmatprep.subr.bf16.mxu0 %v2701
    %3350 = vmatpush1.bf16.msra.mxu0 %v2700
    %3351 = vmatprep.subr.bf16.mxu0 %v2709
    %3352 = vmatpush1.bf16.msra.mxu0 %v2708
    %3353 = vmatprep.subr.bf16.mxu0 %v2717
    %3354 = vmatpush1.bf16.msra.mxu0 %v2716
    %3355 = vmatprep.subr.bf16.mxu0 %v2725
    %3356 = vmatpush1.bf16.msra.mxu0 %v2724
    %3357 = vmatprep.mubr.bf16.mxu0 %v1379
    %3358 = vmatmul.mubr.bf16.gmra.mrb[0].mxu0 %v1378
    %v3359 = vpop.f32.mrb[0].mxu0
    %v3360 = vadd.f32 %v3247, %v3359
    %v3361 = vpop.f32.mrb[0].mxu0
    %v3362 = vadd.f32 %v3249, %v3361
    %v3363 = vpop.f32.mrb[0].mxu0
    %v3364 = vadd.f32 %v3251, %v3363
    %v3365 = vpop.f32.mrb[0].mxu0
    %v3366 = vadd.f32 %v3253, %v3365
    %3367 = vmatprep.mubr.bf16.mxu0 %v1383
    %3368 = vmatmul.mubr.bf16.gmra.mrb[0].mxu0 %v1382
    %v3369 = vpop.f32.mrb[0].mxu0
    %v3370 = vadd.f32 %v3257, %v3369
    %v3371 = vpop.f32.mrb[0].mxu0
    %v3372 = vadd.f32 %v3259, %v3371
    %v3373 = vpop.f32.mrb[0].mxu0
    %v3374 = vadd.f32 %v3261, %v3373
    %v3375 = vpop.f32.mrb[0].mxu0
    %v3376 = vadd.f32 %v3263, %v3375
    %3377 = vmatprep.mubr.bf16.mxu0 %v1387
    %3378 = vmatmul.mubr.bf16.gmra.mrb[0].mxu0 %v1386
    %v3379 = vpop.f32.mrb[0].mxu0
    %v3380 = vadd.f32 %v3267, %v3379
    %v3381 = vpop.f32.mrb[0].mxu0
    %v3382 = vadd.f32 %v3269, %v3381
    %v3383 = vpop.f32.mrb[0].mxu0
    %v3384 = vadd.f32 %v3271, %v3383
    %v3385 = vpop.f32.mrb[0].mxu0
    %v3386 = vadd.f32 %v3273, %v3385
    %3387 = vmatprep.mubr.bf16.mxu0 %v1391
    %3388 = vmatmul.mubr.bf16.gmra.mrb[0].mxu0 %v1390
    %v3389 = vpop.f32.mrb[0].mxu0
    %v3390 = vadd.f32 %v3277, %v3389
    %v3391 = vpop.f32.mrb[0].mxu0
    %v3392 = vadd.f32 %v3279, %v3391
    %v3393 = vpop.f32.mrb[0].mxu0
    %v3394 = vadd.f32 %v3281, %v3393
    %v3395 = vpop.f32.mrb[0].mxu0
    %v3396 = vadd.f32 %v3283, %v3395
    %3397 = vmatprep.mubr.bf16.mxu0 %v1395
    %3398 = vmatmul.mubr.bf16.gmra.mrb[0].mxu0 %v1394
    %v3399 = vpop.f32.mrb[0].mxu0
    %v3400 = vadd.f32 %v3287, %v3399
    %v3401 = vpop.f32.mrb[0].mxu0
    %v3402 = vadd.f32 %v3289, %v3401
    %v3403 = vpop.f32.mrb[0].mxu0
    %v3404 = vadd.f32 %v3291, %v3403
    %v3405 = vpop.f32.mrb[0].mxu0
    %v3406 = vadd.f32 %v3293, %v3405
    %3407 = vmatprep.mubr.bf16.mxu0 %v1399
    %3408 = vmatmul.mubr.bf16.gmra.mrb[0].mxu0 %v1398
    %v3409 = vpop.f32.mrb[0].mxu0
    %v3410 = vadd.f32 %v3297, %v3409
    %v3411 = vpop.f32.mrb[0].mxu0
    %v3412 = vadd.f32 %v3299, %v3411
    %v3413 = vpop.f32.mrb[0].mxu0
    %v3414 = vadd.f32 %v3301, %v3413
    %v3415 = vpop.f32.mrb[0].mxu0
    %v3416 = vadd.f32 %v3303, %v3415
    %3417 = vmatprep.mubr.bf16.mxu0 %v1403
    %3418 = vmatmul.mubr.bf16.gmra.mrb[0].mxu0 %v1402
    %v3419 = vpop.f32.mrb[0].mxu0
    %v3420 = vadd.f32 %v3307, %v3419
    %v3421 = vpop.f32.mrb[0].mxu0
    %v3422 = vadd.f32 %v3309, %v3421
    %v3423 = vpop.f32.mrb[0].mxu0
    %v3424 = vadd.f32 %v3311, %v3423
    %v3425 = vpop.f32.mrb[0].mxu0
    %v3426 = vadd.f32 %v3313, %v3425
    %3427 = vmatprep.mubr.bf16.mxu0 %v1407
    %3428 = vmatmul.mubr.bf16.gmra.mrb[0].mxu0 %v1406
    %v3429 = vpop.f32.mrb[0].mxu0
    %v3430 = vadd.f32 %v3317, %v3429
    %v3431 = vpop.f32.mrb[0].mxu0
    %v3432 = vadd.f32 %v3319, %v3431
    %v3433 = vpop.f32.mrb[0].mxu0
    %v3434 = vadd.f32 %v3321, %v3433
    %v3435 = vpop.f32.mrb[0].mxu0
    %v3436 = vadd.f32 %v3323, %v3435
    %3437 = vdwg.mxu0
    %3438 = vmatprep.subr.bf16.mxu0 %v2479
    %3439 = vmatpush1.bf16.msra.mxu0 %v2478
    %3440 = vmatprep.subr.bf16.mxu0 %v2487
    %3441 = vmatpush1.bf16.msra.mxu0 %v2486
    %3442 = vmatprep.subr.bf16.mxu0 %v2495
    %3443 = vmatpush1.bf16.msra.mxu0 %v2494
    %3444 = vmatprep.subr.bf16.mxu0 %v2503
    %3445 = vmatpush1.bf16.msra.mxu0 %v2502
    %3446 = vmatprep.subr.bf16.mxu0 %v2511
    %3447 = vmatpush1.bf16.msra.mxu0 %v2510
    %3448 = vmatprep.subr.bf16.mxu0 %v2519
    %3449 = vmatpush1.bf16.msra.mxu0 %v2518
    %3450 = vmatprep.subr.bf16.mxu0 %v2527
    %3451 = vmatpush1.bf16.msra.mxu0 %v2526
    %3452 = vmatprep.subr.bf16.mxu0 %v2535
    %3453 = vmatpush1.bf16.msra.mxu0 %v2534
    %3454 = vmatprep.subr.bf16.mxu0 %v2543
    %3455 = vmatpush1.bf16.msra.mxu0 %v2542
    %3456 = vmatprep.subr.bf16.mxu0 %v2551
    %3457 = vmatpush1.bf16.msra.mxu0 %v2550
    %3458 = vmatprep.subr.bf16.mxu0 %v2559
    %3459 = vmatpush1.bf16.msra.mxu0 %v2558
    %3460 = vmatprep.subr.bf16.mxu0 %v2567
    %3461 = vmatpush1.bf16.msra.mxu0 %v2566
    %3462 = vmatprep.subr.bf16.mxu0 %v2575
    %3463 = vmatpush1.bf16.msra.mxu0 %v2574
    %3464 = vmatprep.subr.bf16.mxu0 %v2583
    %3465 = vmatpush1.bf16.msra.mxu0 %v2582
    %3466 = vmatprep.subr.bf16.mxu0 %v2591
    %3467 = vmatpush1.bf16.msra.mxu0 %v2590
    %3468 = vmatprep.subr.bf16.mxu0 %v2599
    %3469 = vmatpush1.bf16.msra.mxu0 %v2598
    %3470 = vmatprep.mubr.bf16.mxu0 %v1377
    %3471 = vmatmul.mubr.bf16.gmra.mrb[0].mxu0 %v1376
    %v3472 = vpop.f32.mrb[0].mxu0
    %v3473 = vadd.f32 %v1685, %v3472
    %v3474 = vpop.f32.mrb[0].mxu0
    %v3475 = vadd.f32 %v1689, %v3474
    %v3476 = vpop.f32.mrb[0].mxu0
    %v3477 = vadd.f32 %v1685, %v3476
    %v3478 = vpop.f32.mrb[0].mxu0
    %v3479 = vadd.f32 %v1689, %v3478
    %3480 = vmatprep.mubr.bf16.mxu0 %v1381
    %3481 = vmatmul.mubr.bf16.gmra.mrb[0].mxu0 %v1380
    %v3482 = vpop.f32.mrb[0].mxu0
    %v3483 = vadd.f32 %v1685, %v3482
    %v3484 = vpop.f32.mrb[0].mxu0
    %v3485 = vadd.f32 %v1689, %v3484
    %v3486 = vpop.f32.mrb[0].mxu0
    %v3487 = vadd.f32 %v1685, %v3486
    %v3488 = vpop.f32.mrb[0].mxu0
    %v3489 = vadd.f32 %v1689, %v3488
    %3490 = vmatprep.mubr.bf16.mxu0 %v1385
    %3491 = vmatmul.mubr.bf16.gmra.mrb[0].mxu0 %v1384
    %v3492 = vpop.f32.mrb[0].mxu0
    %v3493 = vadd.f32 %v1685, %v3492
    %v3494 = vpop.f32.mrb[0].mxu0
    %v3495 = vadd.f32 %v1689, %v3494
    %v3496 = vpop.f32.mrb[0].mxu0
    %v3497 = vadd.f32 %v1685, %v3496
    %v3498 = vpop.f32.mrb[0].mxu0
    %v3499 = vadd.f32 %v1689, %v3498
    %3500 = vmatprep.mubr.bf16.mxu0 %v1389
    %3501 = vmatmul.mubr.bf16.gmra.mrb[0].mxu0 %v1388
    %v3502 = vpop.f32.mrb[0].mxu0
    %v3503 = vadd.f32 %v1685, %v3502
    %v3504 = vpop.f32.mrb[0].mxu0
    %v3505 = vadd.f32 %v1689, %v3504
    %v3506 = vpop.f32.mrb[0].mxu0
    %v3507 = vadd.f32 %v1685, %v3506
    %v3508 = vpop.f32.mrb[0].mxu0
    %v3509 = vadd.f32 %v1689, %v3508
    %3510 = vmatprep.mubr.bf16.mxu0 %v1393
    %3511 = vmatmul.mubr.bf16.gmra.mrb[0].mxu0 %v1392
    %v3512 = vpop.f32.mrb[0].mxu0
    %v3513 = vadd.f32 %v1685, %v3512
    %v3514 = vpop.f32.mrb[0].mxu0
    %v3515 = vadd.f32 %v1689, %v3514
    %v3516 = vpop.f32.mrb[0].mxu0
    %v3517 = vadd.f32 %v1685, %v3516
    %v3518 = vpop.f32.mrb[0].mxu0
    %v3519 = vadd.f32 %v1689, %v3518
    %3520 = vmatprep.mubr.bf16.mxu0 %v1397
    %3521 = vmatmul.mubr.bf16.gmra.mrb[0].mxu0 %v1396
    %v3522 = vpop.f32.mrb[0].mxu0
    %v3523 = vadd.f32 %v1685, %v3522
    %v3524 = vpop.f32.mrb[0].mxu0
    %v3525 = vadd.f32 %v1689, %v3524
    %v3526 = vpop.f32.mrb[0].mxu0
    %v3527 = vadd.f32 %v1685, %v3526
    %v3528 = vpop.f32.mrb[0].mxu0
    %v3529 = vadd.f32 %v1689, %v3528
    %3530 = vmatprep.mubr.bf16.mxu0 %v1401
    %3531 = vmatmul.mubr.bf16.gmra.mrb[0].mxu0 %v1400
    %v3532 = vpop.f32.mrb[0].mxu0
    %v3533 = vadd.f32 %v1685, %v3532
    %v3534 = vpop.f32.mrb[0].mxu0
    %v3535 = vadd.f32 %v1689, %v3534
    %v3536 = vpop.f32.mrb[0].mxu0
    %v3537 = vadd.f32 %v1685, %v3536
    %v3538 = vpop.f32.mrb[0].mxu0
    %v3539 = vadd.f32 %v1689, %v3538
    %3540 = vmatprep.mubr.bf16.mxu0 %v1405
    %3541 = vmatmul.mubr.bf16.gmra.mrb[0].mxu0 %v1404
    %v3542 = vpop.f32.mrb[0].mxu0
    %v3543 = vadd.f32 %v1685, %v3542
    %v3544 = vpop.f32.mrb[0].mxu0
    %v3545 = vadd.f32 %v1689, %v3544
    %v3546 = vpop.f32.mrb[0].mxu0
    %v3547 = vadd.f32 %v1685, %v3546
    %v3548 = vpop.f32.mrb[0].mxu0
    %v3549 = vadd.f32 %v1689, %v3548
    %3550 = vdwg.mxu0
    %3551 = vmatprep.subr.bf16.mxu0 %v2607
    %3552 = vmatpush1.bf16.msra.mxu0 %v2606
    %3553 = vmatprep.subr.bf16.mxu0 %v2615
    %3554 = vmatpush1.bf16.msra.mxu0 %v2614
    %3555 = vmatprep.subr.bf16.mxu0 %v2623
    %3556 = vmatpush1.bf16.msra.mxu0 %v2622
    %3557 = vmatprep.subr.bf16.mxu0 %v2631
    %3558 = vmatpush1.bf16.msra.mxu0 %v2630
    %3559 = vmatprep.subr.bf16.mxu0 %v2639
    %3560 = vmatpush1.bf16.msra.mxu0 %v2638
    %3561 = vmatprep.subr.bf16.mxu0 %v2647
    %3562 = vmatpush1.bf16.msra.mxu0 %v2646
    %3563 = vmatprep.subr.bf16.mxu0 %v2655
    %3564 = vmatpush1.bf16.msra.mxu0 %v2654
    %3565 = vmatprep.subr.bf16.mxu0 %v2663
    %3566 = vmatpush1.bf16.msra.mxu0 %v2662
    %3567 = vmatprep.subr.bf16.mxu0 %v2671
    %3568 = vmatpush1.bf16.msra.mxu0 %v2670
    %3569 = vmatprep.subr.bf16.mxu0 %v2679
    %3570 = vmatpush1.bf16.msra.mxu0 %v2678
    %3571 = vmatprep.subr.bf16.mxu0 %v2687
    %3572 = vmatpush1.bf16.msra.mxu0 %v2686
    %3573 = vmatprep.subr.bf16.mxu0 %v2695
    %3574 = vmatpush1.bf16.msra.mxu0 %v2694
    %3575 = vmatprep.subr.bf16.mxu0 %v2703
    %3576 = vmatpush1.bf16.msra.mxu0 %v2702
    %3577 = vmatprep.subr.bf16.mxu0 %v2711
    %3578 = vmatpush1.bf16.msra.mxu0 %v2710
    %3579 = vmatprep.subr.bf16.mxu0 %v2719
    %3580 = vmatpush1.bf16.msra.mxu0 %v2718
    %3581 = vmatprep.subr.bf16.mxu0 %v2727
    %3582 = vmatpush1.bf16.msra.mxu0 %v2726
    %3583 = vmatprep.mubr.bf16.mxu0 %v1379
    %3584 = vmatmul.mubr.bf16.gmra.mrb[0].mxu0 %v1378
    %v3585 = vpop.f32.mrb[0].mxu0
    %v3586 = vadd.f32 %v3473, %v3585
    %v3587 = vpop.f32.mrb[0].mxu0
    %v3588 = vadd.f32 %v3475, %v3587
    %v3589 = vpop.f32.mrb[0].mxu0
    %v3590 = vadd.f32 %v3477, %v3589
    %v3591 = vpop.f32.mrb[0].mxu0
    %v3592 = vadd.f32 %v3479, %v3591
    %3593 = vmatprep.mubr.bf16.mxu0 %v1383
    %3594 = vmatmul.mubr.bf16.gmra.mrb[0].mxu0 %v1382
    %v3595 = vpop.f32.mrb[0].mxu0
    %v3596 = vadd.f32 %v3483, %v3595
    %v3597 = vpop.f32.mrb[0].mxu0
    %v3598 = vadd.f32 %v3485, %v3597
    %v3599 = vpop.f32.mrb[0].mxu0
    %v3600 = vadd.f32 %v3487, %v3599
    %v3601 = vpop.f32.mrb[0].mxu0
    %v3602 = vadd.f32 %v3489, %v3601
    %3603 = vmatprep.mubr.bf16.mxu0 %v1387
    %3604 = vmatmul.mubr.bf16.gmra.mrb[0].mxu0 %v1386
    %v3605 = vpop.f32.mrb[0].mxu0
    %v3606 = vadd.f32 %v3493, %v3605
    %v3607 = vpop.f32.mrb[0].mxu0
    %v3608 = vadd.f32 %v3495, %v3607
    %v3609 = vpop.f32.mrb[0].mxu0
    %v3610 = vadd.f32 %v3497, %v3609
    %v3611 = vpop.f32.mrb[0].mxu0
    %v3612 = vadd.f32 %v3499, %v3611
    %3613 = vmatprep.mubr.bf16.mxu0 %v1391
    %3614 = vmatmul.mubr.bf16.gmra.mrb[0].mxu0 %v1390
    %v3615 = vpop.f32.mrb[0].mxu0
    %v3616 = vadd.f32 %v3503, %v3615
    %v3617 = vpop.f32.mrb[0].mxu0
    %v3618 = vadd.f32 %v3505, %v3617
    %v3619 = vpop.f32.mrb[0].mxu0
    %v3620 = vadd.f32 %v3507, %v3619
    %v3621 = vpop.f32.mrb[0].mxu0
    %v3622 = vadd.f32 %v3509, %v3621
    %3623 = vmatprep.mubr.bf16.mxu0 %v1395
    %3624 = vmatmul.mubr.bf16.gmra.mrb[0].mxu0 %v1394
    %v3625 = vpop.f32.mrb[0].mxu0
    %v3626 = vadd.f32 %v3513, %v3625
    %v3627 = vpop.f32.mrb[0].mxu0
    %v3628 = vadd.f32 %v3515, %v3627
    %v3629 = vpop.f32.mrb[0].mxu0
    %v3630 = vadd.f32 %v3517, %v3629
    %v3631 = vpop.f32.mrb[0].mxu0
    %v3632 = vadd.f32 %v3519, %v3631
    %3633 = vmatprep.mubr.bf16.mxu0 %v1399
    %3634 = vmatmul.mubr.bf16.gmra.mrb[0].mxu0 %v1398
    %v3635 = vpop.f32.mrb[0].mxu0
    %v3636 = vadd.f32 %v3523, %v3635
    %v3637 = vpop.f32.mrb[0].mxu0
    %v3638 = vadd.f32 %v3525, %v3637
    %v3639 = vpop.f32.mrb[0].mxu0
    %v3640 = vadd.f32 %v3527, %v3639
    %v3641 = vpop.f32.mrb[0].mxu0
    %v3642 = vadd.f32 %v3529, %v3641
    %3643 = vmatprep.mubr.bf16.mxu0 %v1403
    %3644 = vmatmul.mubr.bf16.gmra.mrb[0].mxu0 %v1402
    %v3645 = vpop.f32.mrb[0].mxu0
    %v3646 = vadd.f32 %v3533, %v3645
    %v3647 = vpop.f32.mrb[0].mxu0
    %v3648 = vadd.f32 %v3535, %v3647
    %v3649 = vpop.f32.mrb[0].mxu0
    %v3650 = vadd.f32 %v3537, %v3649
    %v3651 = vpop.f32.mrb[0].mxu0
    %v3652 = vadd.f32 %v3539, %v3651
    %3653 = vmatprep.mubr.bf16.mxu0 %v1407
    %3654 = vmatmul.mubr.bf16.gmra.mrb[0].mxu0 %v1406
    %v3655 = vpop.f32.mrb[0].mxu0
    %v3656 = vadd.f32 %v3543, %v3655
    %v3657 = vpop.f32.mrb[0].mxu0
    %v3658 = vadd.f32 %v3545, %v3657
    %v3659 = vpop.f32.mrb[0].mxu0
    %v3660 = vadd.f32 %v3547, %v3659
    %v3661 = vpop.f32.mrb[0].mxu0
    %v3662 = vadd.f32 %v3549, %v3661
    %3663 = vdwg.mxu0
    %3664 = vmatprep.subr.bf16.mxu0 %v2481
    %3665 = vmatpush1.bf16.msra.mxu0 %v2480
    %3666 = vmatprep.subr.bf16.mxu0 %v2489
    %3667 = vmatpush1.bf16.msra.mxu0 %v2488
    %3668 = vmatprep.subr.bf16.mxu0 %v2497
    %3669 = vmatpush1.bf16.msra.mxu0 %v2496
    %3670 = vmatprep.subr.bf16.mxu0 %v2505
    %3671 = vmatpush1.bf16.msra.mxu0 %v2504
    %3672 = vmatprep.subr.bf16.mxu0 %v2513
    %3673 = vmatpush1.bf16.msra.mxu0 %v2512
    %3674 = vmatprep.subr.bf16.mxu0 %v2521
    %3675 = vmatpush1.bf16.msra.mxu0 %v2520
    %3676 = vmatprep.subr.bf16.mxu0 %v2529
    %3677 = vmatpush1.bf16.msra.mxu0 %v2528
    %3678 = vmatprep.subr.bf16.mxu0 %v2537
    %3679 = vmatpush1.bf16.msra.mxu0 %v2536
    %3680 = vmatprep.subr.bf16.mxu0 %v2545
    %3681 = vmatpush1.bf16.msra.mxu0 %v2544
    %3682 = vmatprep.subr.bf16.mxu0 %v2553
    %3683 = vmatpush1.bf16.msra.mxu0 %v2552
    %3684 = vmatprep.subr.bf16.mxu0 %v2561
    %3685 = vmatpush1.bf16.msra.mxu0 %v2560
    %3686 = vmatprep.subr.bf16.mxu0 %v2569
    %3687 = vmatpush1.bf16.msra.mxu0 %v2568
    %3688 = vmatprep.subr.bf16.mxu0 %v2577
    %3689 = vmatpush1.bf16.msra.mxu0 %v2576
    %3690 = vmatprep.subr.bf16.mxu0 %v2585
    %3691 = vmatpush1.bf16.msra.mxu0 %v2584
    %3692 = vmatprep.subr.bf16.mxu0 %v2593
    %3693 = vmatpush1.bf16.msra.mxu0 %v2592
    %3694 = vmatprep.subr.bf16.mxu0 %v2601
    %3695 = vmatpush1.bf16.msra.mxu0 %v2600
    %3696 = vmatprep.mubr.bf16.mxu0 %v1377
    %3697 = vmatmul.mubr.bf16.gmra.mrb[0].mxu0 %v1376
    %v3698 = vpop.f32.mrb[0].mxu0
    %v3699 = vadd.f32 %v1693, %v3698
    %v3700 = vpop.f32.mrb[0].mxu0
    %v3701 = vadd.f32 %v1697, %v3700
    %v3702 = vpop.f32.mrb[0].mxu0
    %v3703 = vadd.f32 %v1693, %v3702
    %v3704 = vpop.f32.mrb[0].mxu0
    %v3705 = vadd.f32 %v1697, %v3704
    %3706 = vmatprep.mubr.bf16.mxu0 %v1381
    %3707 = vmatmul.mubr.bf16.gmra.mrb[0].mxu0 %v1380
    %v3708 = vpop.f32.mrb[0].mxu0
    %v3709 = vadd.f32 %v1693, %v3708
    %v3710 = vpop.f32.mrb[0].mxu0
    %v3711 = vadd.f32 %v1697, %v3710
    %v3712 = vpop.f32.mrb[0].mxu0
    %v3713 = vadd.f32 %v1693, %v3712
    %v3714 = vpop.f32.mrb[0].mxu0
    %v3715 = vadd.f32 %v1697, %v3714
    %3716 = vmatprep.mubr.bf16.mxu0 %v1385
    %3717 = vmatmul.mubr.bf16.gmra.mrb[0].mxu0 %v1384
    %v3718 = vpop.f32.mrb[0].mxu0
    %v3719 = vadd.f32 %v1693, %v3718
    %v3720 = vpop.f32.mrb[0].mxu0
    %v3721 = vadd.f32 %v1697, %v3720
    %v3722 = vpop.f32.mrb[0].mxu0
    %v3723 = vadd.f32 %v1693, %v3722
    %v3724 = vpop.f32.mrb[0].mxu0
    %v3725 = vadd.f32 %v1697, %v3724
    %3726 = vmatprep.mubr.bf16.mxu0 %v1389
    %3727 = vmatmul.mubr.bf16.gmra.mrb[0].mxu0 %v1388
    %v3728 = vpop.f32.mrb[0].mxu0
    %v3729 = vadd.f32 %v1693, %v3728
    %v3730 = vpop.f32.mrb[0].mxu0
    %v3731 = vadd.f32 %v1697, %v3730
    %v3732 = vpop.f32.mrb[0].mxu0
    %v3733 = vadd.f32 %v1693, %v3732
    %v3734 = vpop.f32.mrb[0].mxu0
    %v3735 = vadd.f32 %v1697, %v3734
    %3736 = vmatprep.mubr.bf16.mxu0 %v1393
    %3737 = vmatmul.mubr.bf16.gmra.mrb[0].mxu0 %v1392
    %v3738 = vpop.f32.mrb[0].mxu0
    %v3739 = vadd.f32 %v1693, %v3738
    %v3740 = vpop.f32.mrb[0].mxu0
    %v3741 = vadd.f32 %v1697, %v3740
    %v3742 = vpop.f32.mrb[0].mxu0
    %v3743 = vadd.f32 %v1693, %v3742
    %v3744 = vpop.f32.mrb[0].mxu0
    %v3745 = vadd.f32 %v1697, %v3744
    %3746 = vmatprep.mubr.bf16.mxu0 %v1397
    %3747 = vmatmul.mubr.bf16.gmra.mrb[0].mxu0 %v1396
    %v3748 = vpop.f32.mrb[0].mxu0
    %v3749 = vadd.f32 %v1693, %v3748
    %v3750 = vpop.f32.mrb[0].mxu0
    %v3751 = vadd.f32 %v1697, %v3750
    %v3752 = vpop.f32.mrb[0].mxu0
    %v3753 = vadd.f32 %v1693, %v3752
    %v3754 = vpop.f32.mrb[0].mxu0
    %v3755 = vadd.f32 %v1697, %v3754
    %3756 = vmatprep.mubr.bf16.mxu0 %v1401
    %3757 = vmatmul.mubr.bf16.gmra.mrb[0].mxu0 %v1400
    %v3758 = vpop.f32.mrb[0].mxu0
    %v3759 = vadd.f32 %v1693, %v3758
    %v3760 = vpop.f32.mrb[0].mxu0
    %v3761 = vadd.f32 %v1697, %v3760
    %v3762 = vpop.f32.mrb[0].mxu0
    %v3763 = vadd.f32 %v1693, %v3762
    %v3764 = vpop.f32.mrb[0].mxu0
    %v3765 = vadd.f32 %v1697, %v3764
    %3766 = vmatprep.mubr.bf16.mxu0 %v1405
    %3767 = vmatmul.mubr.bf16.gmra.mrb[0].mxu0 %v1404
    %v3768 = vpop.f32.mrb[0].mxu0
    %v3769 = vadd.f32 %v1693, %v3768
    %v3770 = vpop.f32.mrb[0].mxu0
    %v3771 = vadd.f32 %v1697, %v3770
    %v3772 = vpop.f32.mrb[0].mxu0
    %v3773 = vadd.f32 %v1693, %v3772
    %v3774 = vpop.f32.mrb[0].mxu0
    %v3775 = vadd.f32 %v1697, %v3774
    %3776 = vdwg.mxu0
    %3777 = vmatprep.subr.bf16.mxu0 %v2609
    %3778 = vmatpush1.bf16.msra.mxu0 %v2608
    %3779 = vmatprep.subr.bf16.mxu0 %v2617
    %3780 = vmatpush1.bf16.msra.mxu0 %v2616
    %3781 = vmatprep.subr.bf16.mxu0 %v2625
    %3782 = vmatpush1.bf16.msra.mxu0 %v2624
    %3783 = vmatprep.subr.bf16.mxu0 %v2633
    %3784 = vmatpush1.bf16.msra.mxu0 %v2632
    %3785 = vmatprep.subr.bf16.mxu0 %v2641
    %3786 = vmatpush1.bf16.msra.mxu0 %v2640
    %3787 = vmatprep.subr.bf16.mxu0 %v2649
    %3788 = vmatpush1.bf16.msra.mxu0 %v2648
    %3789 = vmatprep.subr.bf16.mxu0 %v2657
    %3790 = vmatpush1.bf16.msra.mxu0 %v2656
    %3791 = vmatprep.subr.bf16.mxu0 %v2665
    %3792 = vmatpush1.bf16.msra.mxu0 %v2664
    %3793 = vmatprep.subr.bf16.mxu0 %v2673
    %3794 = vmatpush1.bf16.msra.mxu0 %v2672
    %3795 = vmatprep.subr.bf16.mxu0 %v2681
    %3796 = vmatpush1.bf16.msra.mxu0 %v2680
    %3797 = vmatprep.subr.bf16.mxu0 %v2689
    %3798 = vmatpush1.bf16.msra.mxu0 %v2688
    %3799 = vmatprep.subr.bf16.mxu0 %v2697
    %3800 = vmatpush1.bf16.msra.mxu0 %v2696
    %3801 = vmatprep.subr.bf16.mxu0 %v2705
    %3802 = vmatpush1.bf16.msra.mxu0 %v2704
    %3803 = vmatprep.subr.bf16.mxu0 %v2713
    %3804 = vmatpush1.bf16.msra.mxu0 %v2712
    %3805 = vmatprep.subr.bf16.mxu0 %v2721
    %3806 = vmatpush1.bf16.msra.mxu0 %v2720
    %3807 = vmatprep.subr.bf16.mxu0 %v2729
    %3808 = vmatpush1.bf16.msra.mxu0 %v2728
    %3809 = vmatprep.mubr.bf16.mxu0 %v1379
    %3810 = vmatmul.mubr.bf16.gmra.mrb[0].mxu0 %v1378
    %v3811 = vpop.f32.mrb[0].mxu0
    %v3812 = vadd.f32 %v3699, %v3811
    %v3813 = vpop.f32.mrb[0].mxu0
    %v3814 = vadd.f32 %v3701, %v3813
    %v3815 = vpop.f32.mrb[0].mxu0
    %v3816 = vadd.f32 %v3703, %v3815
    %v3817 = vpop.f32.mrb[0].mxu0
    %v3818 = vadd.f32 %v3705, %v3817
    %3819 = vmatprep.mubr.bf16.mxu0 %v1383
    %3820 = vmatmul.mubr.bf16.gmra.mrb[0].mxu0 %v1382
    %v3821 = vpop.f32.mrb[0].mxu0
    %v3822 = vadd.f32 %v3709, %v3821
    %v3823 = vpop.f32.mrb[0].mxu0
    %v3824 = vadd.f32 %v3711, %v3823
    %v3825 = vpop.f32.mrb[0].mxu0
    %v3826 = vadd.f32 %v3713, %v3825
    %v3827 = vpop.f32.mrb[0].mxu0
    %v3828 = vadd.f32 %v3715, %v3827
    %3829 = vmatprep.mubr.bf16.mxu0 %v1387
    %3830 = vmatmul.mubr.bf16.gmra.mrb[0].mxu0 %v1386
    %v3831 = vpop.f32.mrb[0].mxu0
    %v3832 = vadd.f32 %v3719, %v3831
    %v3833 = vpop.f32.mrb[0].mxu0
    %v3834 = vadd.f32 %v3721, %v3833
    %v3835 = vpop.f32.mrb[0].mxu0
    %v3836 = vadd.f32 %v3723, %v3835
    %v3837 = vpop.f32.mrb[0].mxu0
    %v3838 = vadd.f32 %v3725, %v3837
    %3839 = vmatprep.mubr.bf16.mxu0 %v1391
    %3840 = vmatmul.mubr.bf16.gmra.mrb[0].mxu0 %v1390
    %v3841 = vpop.f32.mrb[0].mxu0
    %v3842 = vadd.f32 %v3729, %v3841
    %v3843 = vpop.f32.mrb[0].mxu0
    %v3844 = vadd.f32 %v3731, %v3843
    %v3845 = vpop.f32.mrb[0].mxu0
    %v3846 = vadd.f32 %v3733, %v3845
    %v3847 = vpop.f32.mrb[0].mxu0
    %v3848 = vadd.f32 %v3735, %v3847
    %3849 = vmatprep.mubr.bf16.mxu0 %v1395
    %3850 = vmatmul.mubr.bf16.gmra.mrb[0].mxu0 %v1394
    %v3851 = vpop.f32.mrb[0].mxu0
    %v3852 = vadd.f32 %v3739, %v3851
    %v3853 = vpop.f32.mrb[0].mxu0
    %v3854 = vadd.f32 %v3741, %v3853
    %v3855 = vpop.f32.mrb[0].mxu0
    %v3856 = vadd.f32 %v3743, %v3855
    %v3857 = vpop.f32.mrb[0].mxu0
    %v3858 = vadd.f32 %v3745, %v3857
    %3859 = vmatprep.mubr.bf16.mxu0 %v1399
    %3860 = vmatmul.mubr.bf16.gmra.mrb[0].mxu0 %v1398
    %v3861 = vpop.f32.mrb[0].mxu0
    %v3862 = vadd.f32 %v3749, %v3861
    %v3863 = vpop.f32.mrb[0].mxu0
    %v3864 = vadd.f32 %v3751, %v3863
    %v3865 = vpop.f32.mrb[0].mxu0
    %v3866 = vadd.f32 %v3753, %v3865
    %v3867 = vpop.f32.mrb[0].mxu0
    %v3868 = vadd.f32 %v3755, %v3867
    %3869 = vmatprep.mubr.bf16.mxu0 %v1403
    %3870 = vmatmul.mubr.bf16.gmra.mrb[0].mxu0 %v1402
    %v3871 = vpop.f32.mrb[0].mxu0
    %v3872 = vadd.f32 %v3759, %v3871
    %v3873 = vpop.f32.mrb[0].mxu0
    %v3874 = vadd.f32 %v3761, %v3873
    %v3875 = vpop.f32.mrb[0].mxu0
    %v3876 = vadd.f32 %v3763, %v3875
    %v3877 = vpop.f32.mrb[0].mxu0
    %v3878 = vadd.f32 %v3765, %v3877
    %3879 = vmatprep.mubr.bf16.mxu0 %v1407
    %3880 = vmatmul.mubr.bf16.gmra.mrb[0].mxu0 %v1406
    %v3881 = vpop.f32.mrb[0].mxu0
    %v3882 = vadd.f32 %v3769, %v3881
    %v3883 = vpop.f32.mrb[0].mxu0
    %v3884 = vadd.f32 %v3771, %v3883
    %v3885 = vpop.f32.mrb[0].mxu0
    %v3886 = vadd.f32 %v3773, %v3885
    %v3887 = vpop.f32.mrb[0].mxu0
    %v3888 = vadd.f32 %v3775, %v3887
    %3889 = vdwg.mxu0
    %v3890 = vmax.f32 %v3134, 0.0
    %v3891 = vmax.f32 %v3136, 0.0
    %v3892 = vmax.f32 %v3360, 0.0
    %v3893 = vmax.f32 %v3362, 0.0
    %v3894 = vmax.f32 %v3586, 0.0
    %v3895 = vmax.f32 %v3588, 0.0
    %v3896 = vmax.f32 %v3812, 0.0
    %v3897 = vmax.f32 %v3814, 0.0
    %v3898 = vmax.f32 %v3138, 0.0
    %v3899 = vmax.f32 %v3140, 0.0
    %v3900 = vmax.f32 %v3364, 0.0
    %v3901 = vmax.f32 %v3366, 0.0
    %v3902 = vmax.f32 %v3590, 0.0
    %v3903 = vmax.f32 %v3592, 0.0
    %v3904 = vmax.f32 %v3816, 0.0
    %v3905 = vmax.f32 %v3818, 0.0
    %v3906 = vmax.f32 %v3144, 0.0
    %v3907 = vmax.f32 %v3146, 0.0
    %v3908 = vmax.f32 %v3370, 0.0
    %v3909 = vmax.f32 %v3372, 0.0
    %v3910 = vmax.f32 %v3596, 0.0
    %v3911 = vmax.f32 %v3598, 0.0
    %v3912 = vmax.f32 %v3822, 0.0
    %v3913 = vmax.f32 %v3824, 0.0
    %v3914 = vmax.f32 %v3148, 0.0
    %v3915 = vmax.f32 %v3150, 0.0
    %v3916 = vmax.f32 %v3374, 0.0
    %v3917 = vmax.f32 %v3376, 0.0
    %v3918 = vmax.f32 %v3600, 0.0
    %v3919 = vmax.f32 %v3602, 0.0
    %v3920 = vmax.f32 %v3826, 0.0
    %v3921 = vmax.f32 %v3828, 0.0
    %v3922 = vmax.f32 %v3154, 0.0
    %v3923 = vmax.f32 %v3156, 0.0
    %v3924 = vmax.f32 %v3380, 0.0
    %v3925 = vmax.f32 %v3382, 0.0
    %v3926 = vmax.f32 %v3606, 0.0
    %v3927 = vmax.f32 %v3608, 0.0
    %v3928 = vmax.f32 %v3832, 0.0
    %v3929 = vmax.f32 %v3834, 0.0
    %v3930 = vmax.f32 %v3158, 0.0
    %v3931 = vmax.f32 %v3160, 0.0
    %v3932 = vmax.f32 %v3384, 0.0
    %v3933 = vmax.f32 %v3386, 0.0
    %v3934 = vmax.f32 %v3610, 0.0
    %v3935 = vmax.f32 %v3612, 0.0
    %v3936 = vmax.f32 %v3836, 0.0
    %v3937 = vmax.f32 %v3838, 0.0
    %v3938 = vmax.f32 %v3164, 0.0
    %v3939 = vmax.f32 %v3166, 0.0
    %v3940 = vmax.f32 %v3390, 0.0
    %v3941 = vmax.f32 %v3392, 0.0
    %v3942 = vmax.f32 %v3616, 0.0
    %v3943 = vmax.f32 %v3618, 0.0
    %v3944 = vmax.f32 %v3842, 0.0
    %v3945 = vmax.f32 %v3844, 0.0
    %v3946 = vmax.f32 %v3168, 0.0
    %v3947 = vmax.f32 %v3170, 0.0
    %v3948 = vmax.f32 %v3394, 0.0
    %v3949 = vmax.f32 %v3396, 0.0
    %v3950 = vmax.f32 %v3620, 0.0
    %v3951 = vmax.f32 %v3622, 0.0
    %v3952 = vmax.f32 %v3846, 0.0
    %v3953 = vmax.f32 %v3848, 0.0
    %v3954 = vmax.f32 %v3174, 0.0
    %v3955 = vmax.f32 %v3176, 0.0
    %v3956 = vmax.f32 %v3400, 0.0
    %v3957 = vmax.f32 %v3402, 0.0
    %v3958 = vmax.f32 %v3626, 0.0
    %v3959 = vmax.f32 %v3628, 0.0
    %v3960 = vmax.f32 %v3852, 0.0
    %v3961 = vmax.f32 %v3854, 0.0
    %v3962 = vmax.f32 %v3178, 0.0
    %v3963 = vmax.f32 %v3180, 0.0
    %v3964 = vmax.f32 %v3404, 0.0
    %v3965 = vmax.f32 %v3406, 0.0
    %v3966 = vmax.f32 %v3630, 0.0
    %v3967 = vmax.f32 %v3632, 0.0
    %v3968 = vmax.f32 %v3856, 0.0
    %v3969 = vmax.f32 %v3858, 0.0
    %v3970 = vmax.f32 %v3184, 0.0
    %v3971 = vmax.f32 %v3186, 0.0
    %v3972 = vmax.f32 %v3410, 0.0
    %v3973 = vmax.f32 %v3412, 0.0
    %v3974 = vmax.f32 %v3636, 0.0
    %v3975 = vmax.f32 %v3638, 0.0
    %v3976 = vmax.f32 %v3862, 0.0
    %v3977 = vmax.f32 %v3864, 0.0
    %v3978 = vmax.f32 %v3188, 0.0
    %v3979 = vmax.f32 %v3190, 0.0
    %v3980 = vmax.f32 %v3414, 0.0
    %v3981 = vmax.f32 %v3416, 0.0
    %v3982 = vmax.f32 %v3640, 0.0
    %v3983 = vmax.f32 %v3642, 0.0
    %v3984 = vmax.f32 %v3866, 0.0
    %v3985 = vmax.f32 %v3868, 0.0
    %v3986 = vmax.f32 %v3194, 0.0
    %v3987 = vmax.f32 %v3196, 0.0
    %v3988 = vmax.f32 %v3420, 0.0
    %v3989 = vmax.f32 %v3422, 0.0
    %v3990 = vmax.f32 %v3646, 0.0
    %v3991 = vmax.f32 %v3648, 0.0
    %v3992 = vmax.f32 %v3872, 0.0
    %v3993 = vmax.f32 %v3874, 0.0
    %v3994 = vmax.f32 %v3198, 0.0
    %v3995 = vmax.f32 %v3200, 0.0
    %v3996 = vmax.f32 %v3424, 0.0
    %v3997 = vmax.f32 %v3426, 0.0
    %v3998 = vmax.f32 %v3650, 0.0
    %v3999 = vmax.f32 %v3652, 0.0
    %v4000 = vmax.f32 %v3876, 0.0
    %v4001 = vmax.f32 %v3878, 0.0
    %v4002 = vmax.f32 %v3204, 0.0
    %v4003 = vmax.f32 %v3206, 0.0
    %v4004 = vmax.f32 %v3430, 0.0
    %v4005 = vmax.f32 %v3432, 0.0
    %v4006 = vmax.f32 %v3656, 0.0
    %v4007 = vmax.f32 %v3658, 0.0
    %v4008 = vmax.f32 %v3882, 0.0
    %v4009 = vmax.f32 %v3884, 0.0
    %v4010 = vmax.f32 %v3208, 0.0
    %v4011 = vmax.f32 %v3210, 0.0
    %v4012 = vmax.f32 %v3434, 0.0
    %v4013 = vmax.f32 %v3436, 0.0
    %v4014 = vmax.f32 %v3660, 0.0
    %v4015 = vmax.f32 %v3662, 0.0
    %v4016 = vmax.f32 %v3886, 0.0
    %v4017 = vmax.f32 %v3888, 0.0
    %v4018 = vpack.c.bf16 %v3898, %v3890
    %v4019 = vpack.c.bf16 %v3899, %v3891
    %v4020 = vpack.c.bf16 %v3900, %v3892
    %v4021 = vpack.c.bf16 %v3901, %v3893
    %v4022 = vpack.c.bf16 %v3902, %v3894
    %v4023 = vpack.c.bf16 %v3903, %v3895
    %v4024 = vpack.c.bf16 %v3904, %v3896
    %v4025 = vpack.c.bf16 %v3905, %v3897
    %v4026 = vpack.c.bf16 %v3914, %v3906
    %v4027 = vpack.c.bf16 %v3915, %v3907
    %v4028 = vpack.c.bf16 %v3916, %v3908
    %v4029 = vpack.c.bf16 %v3917, %v3909
    %v4030 = vpack.c.bf16 %v3918, %v3910
    %v4031 = vpack.c.bf16 %v3919, %v3911
    %v4032 = vpack.c.bf16 %v3920, %v3912
    %v4033 = vpack.c.bf16 %v3921, %v3913
    %v4034 = vpack.c.bf16 %v3930, %v3922
    %v4035 = vpack.c.bf16 %v3931, %v3923
    %v4036 = vpack.c.bf16 %v3932, %v3924
    %v4037 = vpack.c.bf16 %v3933, %v3925
    %v4038 = vpack.c.bf16 %v3934, %v3926
    %v4039 = vpack.c.bf16 %v3935, %v3927
    %v4040 = vpack.c.bf16 %v3936, %v3928
    %v4041 = vpack.c.bf16 %v3937, %v3929
    %v4042 = vpack.c.bf16 %v3946, %v3938
    %v4043 = vpack.c.bf16 %v3947, %v3939
    %v4044 = vpack.c.bf16 %v3948, %v3940
    %v4045 = vpack.c.bf16 %v3949, %v3941
    %v4046 = vpack.c.bf16 %v3950, %v3942
    %v4047 = vpack.c.bf16 %v3951, %v3943
    %v4048 = vpack.c.bf16 %v3952, %v3944
    %v4049 = vpack.c.bf16 %v3953, %v3945
    %v4050 = vpack.c.bf16 %v3962, %v3954
    %v4051 = vpack.c.bf16 %v3963, %v3955
    %v4052 = vpack.c.bf16 %v3964, %v3956
    %v4053 = vpack.c.bf16 %v3965, %v3957
    %v4054 = vpack.c.bf16 %v3966, %v3958
    %v4055 = vpack.c.bf16 %v3967, %v3959
    %v4056 = vpack.c.bf16 %v3968, %v3960
    %v4057 = vpack.c.bf16 %v3969, %v3961
    %v4058 = vpack.c.bf16 %v3978, %v3970
    %v4059 = vpack.c.bf16 %v3979, %v3971
    %v4060 = vpack.c.bf16 %v3980, %v3972
    %v4061 = vpack.c.bf16 %v3981, %v3973
    %v4062 = vpack.c.bf16 %v3982, %v3974
    %v4063 = vpack.c.bf16 %v3983, %v3975
    %v4064 = vpack.c.bf16 %v3984, %v3976
    %v4065 = vpack.c.bf16 %v3985, %v3977
    %v4066 = vpack.c.bf16 %v3994, %v3986
    %v4067 = vpack.c.bf16 %v3995, %v3987
    %v4068 = vpack.c.bf16 %v3996, %v3988
    %v4069 = vpack.c.bf16 %v3997, %v3989
    %v4070 = vpack.c.bf16 %v3998, %v3990
    %v4071 = vpack.c.bf16 %v3999, %v3991
    %v4072 = vpack.c.bf16 %v4000, %v3992
    %v4073 = vpack.c.bf16 %v4001, %v3993
    %v4074 = vpack.c.bf16 %v4010, %v4002
    %v4075 = vpack.c.bf16 %v4011, %v4003
    %v4076 = vpack.c.bf16 %v4012, %v4004
    %v4077 = vpack.c.bf16 %v4013, %v4005
    %v4078 = vpack.c.bf16 %v4014, %v4006
    %v4079 = vpack.c.bf16 %v4015, %v4007
    %v4080 = vpack.c.bf16 %v4016, %v4008
    %v4081 = vpack.c.bf16 %v4017, %v4009
    %v4082 = vld [vmem:[#allocation8] sm:$0xff]
    %v4083 = vld [vmem:[#allocation8 + $0x8] sm:$0xff]
    %v4084 = vld [vmem:[#allocation8 + $0x10] sm:$0xff]
    %v4085 = vld [vmem:[#allocation8 + $0x18] sm:$0xff]
    %v4086 = vld [vmem:[#allocation8 + $0x20] sm:$0xff]
    %v4087 = vld [vmem:[#allocation8 + $0x28] sm:$0xff]
    %v4088 = vld [vmem:[#allocation8 + $0x30] sm:$0xff]
    %v4089 = vld [vmem:[#allocation8 + $0x38] sm:$0xff]
    %v4090 = vld [vmem:[#allocation8 + $0x40] sm:$0xff]
    %v4091 = vld [vmem:[#allocation8 + $0x48] sm:$0xff]
    %v4092 = vld [vmem:[#allocation8 + $0x50] sm:$0xff]
    %v4093 = vld [vmem:[#allocation8 + $0x58] sm:$0xff]
    %v4094 = vld [vmem:[#allocation8 + $0x60] sm:$0xff]
    %v4095 = vld [vmem:[#allocation8 + $0x68] sm:$0xff]
    %v4096 = vld [vmem:[#allocation8 + $0x70] sm:$0xff]
    %v4097 = vld [vmem:[#allocation8 + $0x78] sm:$0xff]
    %v4098 = vld [vmem:[#allocation8 + $0x80] sm:$0xff]
    %v4099 = vld [vmem:[#allocation8 + $0x88] sm:$0xff]
    %v4100 = vld [vmem:[#allocation8 + $0x90] sm:$0xff]
    %v4101 = vld [vmem:[#allocation8 + $0x98] sm:$0xff]
    %v4102 = vld [vmem:[#allocation8 + $0xa0] sm:$0xff]
    %v4103 = vld [vmem:[#allocation8 + $0xa8] sm:$0xff]
    %v4104 = vld [vmem:[#allocation8 + $0xb0] sm:$0xff]
    %v4105 = vld [vmem:[#allocation8 + $0xb8] sm:$0xff]
    %v4106 = vld [vmem:[#allocation8 + $0xc0] sm:$0xff]
    %v4107 = vld [vmem:[#allocation8 + $0xc8] sm:$0xff]
    %v4108 = vld [vmem:[#allocation8 + $0xd0] sm:$0xff]
    %v4109 = vld [vmem:[#allocation8 + $0xd8] sm:$0xff]
    %v4110 = vld [vmem:[#allocation8 + $0xe0] sm:$0xff]
    %v4111 = vld [vmem:[#allocation8 + $0xe8] sm:$0xff]
    %v4112 = vld [vmem:[#allocation8 + $0xf0] sm:$0xff]
    %v4113 = vld [vmem:[#allocation8 + $0xf8] sm:$0xff]
    %v4114 = vld [vmem:[#allocation8 + $0x100] sm:$0xff]
    %v4115 = vld [vmem:[#allocation8 + $0x108] sm:$0xff]
    %v4116 = vld [vmem:[#allocation8 + $0x110] sm:$0xff]
    %v4117 = vld [vmem:[#allocation8 + $0x118] sm:$0xff]
    %v4118 = vld [vmem:[#allocation8 + $0x120] sm:$0xff]
    %v4119 = vld [vmem:[#allocation8 + $0x128] sm:$0xff]
    %v4120 = vld [vmem:[#allocation8 + $0x130] sm:$0xff]
    %v4121 = vld [vmem:[#allocation8 + $0x138] sm:$0xff]
    %v4122 = vld [vmem:[#allocation8 + $0x140] sm:$0xff]
    %v4123 = vld [vmem:[#allocation8 + $0x148] sm:$0xff]
    %v4124 = vld [vmem:[#allocation8 + $0x150] sm:$0xff]
    %v4125 = vld [vmem:[#allocation8 + $0x158] sm:$0xff]
    %v4126 = vld [vmem:[#allocation8 + $0x160] sm:$0xff]
    %v4127 = vld [vmem:[#allocation8 + $0x168] sm:$0xff]
    %v4128 = vld [vmem:[#allocation8 + $0x170] sm:$0xff]
    %v4129 = vld [vmem:[#allocation8 + $0x178] sm:$0xff]
    %v4130 = vld [vmem:[#allocation8 + $0x180] sm:$0xff]
    %v4131 = vld [vmem:[#allocation8 + $0x188] sm:$0xff]
    %v4132 = vld [vmem:[#allocation8 + $0x190] sm:$0xff]
    %v4133 = vld [vmem:[#allocation8 + $0x198] sm:$0xff]
    %v4134 = vld [vmem:[#allocation8 + $0x1a0] sm:$0xff]
    %v4135 = vld [vmem:[#allocation8 + $0x1a8] sm:$0xff]
    %v4136 = vld [vmem:[#allocation8 + $0x1b0] sm:$0xff]
    %v4137 = vld [vmem:[#allocation8 + $0x1b8] sm:$0xff]
    %v4138 = vld [vmem:[#allocation8 + $0x1c0] sm:$0xff]
    %v4139 = vld [vmem:[#allocation8 + $0x1c8] sm:$0xff]
    %v4140 = vld [vmem:[#allocation8 + $0x1d0] sm:$0xff]
    %v4141 = vld [vmem:[#allocation8 + $0x1d8] sm:$0xff]
    %v4142 = vld [vmem:[#allocation8 + $0x1e0] sm:$0xff]
    %v4143 = vld [vmem:[#allocation8 + $0x1e8] sm:$0xff]
    %v4144 = vld [vmem:[#allocation8 + $0x1f0] sm:$0xff]
    %v4145 = vld [vmem:[#allocation8 + $0x1f8] sm:$0xff]
    %v4146 = vld [vmem:[#allocation8 + $0x200] sm:$0xff]
    %v4147 = vld [vmem:[#allocation8 + $0x208] sm:$0xff]
    %v4148 = vld [vmem:[#allocation8 + $0x210] sm:$0xff]
    %v4149 = vld [vmem:[#allocation8 + $0x218] sm:$0xff]
    %v4150 = vld [vmem:[#allocation8 + $0x220] sm:$0xff]
    %v4151 = vld [vmem:[#allocation8 + $0x228] sm:$0xff]
    %v4152 = vld [vmem:[#allocation8 + $0x230] sm:$0xff]
    %v4153 = vld [vmem:[#allocation8 + $0x238] sm:$0xff]
    %v4154 = vld [vmem:[#allocation8 + $0x240] sm:$0xff]
    %v4155 = vld [vmem:[#allocation8 + $0x248] sm:$0xff]
    %v4156 = vld [vmem:[#allocation8 + $0x250] sm:$0xff]
    %v4157 = vld [vmem:[#allocation8 + $0x258] sm:$0xff]
    %v4158 = vld [vmem:[#allocation8 + $0x260] sm:$0xff]
    %v4159 = vld [vmem:[#allocation8 + $0x268] sm:$0xff]
    %v4160 = vld [vmem:[#allocation8 + $0x270] sm:$0xff]
    %v4161 = vld [vmem:[#allocation8 + $0x278] sm:$0xff]
    %v4162 = vld [vmem:[#allocation8 + $0x280] sm:$0xff]
    %v4163 = vld [vmem:[#allocation8 + $0x288] sm:$0xff]
    %v4164 = vld [vmem:[#allocation8 + $0x290] sm:$0xff]
    %v4165 = vld [vmem:[#allocation8 + $0x298] sm:$0xff]
    %v4166 = vld [vmem:[#allocation8 + $0x2a0] sm:$0xff]
    %v4167 = vld [vmem:[#allocation8 + $0x2a8] sm:$0xff]
    %v4168 = vld [vmem:[#allocation8 + $0x2b0] sm:$0xff]
    %v4169 = vld [vmem:[#allocation8 + $0x2b8] sm:$0xff]
    %v4170 = vld [vmem:[#allocation8 + $0x2c0] sm:$0xff]
    %v4171 = vld [vmem:[#allocation8 + $0x2c8] sm:$0xff]
    %v4172 = vld [vmem:[#allocation8 + $0x2d0] sm:$0xff]
    %v4173 = vld [vmem:[#allocation8 + $0x2d8] sm:$0xff]
    %v4174 = vld [vmem:[#allocation8 + $0x2e0] sm:$0xff]
    %v4175 = vld [vmem:[#allocation8 + $0x2e8] sm:$0xff]
    %v4176 = vld [vmem:[#allocation8 + $0x2f0] sm:$0xff]
    %v4177 = vld [vmem:[#allocation8 + $0x2f8] sm:$0xff]
    %v4178 = vld [vmem:[#allocation8 + $0x300] sm:$0xff]
    %v4179 = vld [vmem:[#allocation8 + $0x308] sm:$0xff]
    %v4180 = vld [vmem:[#allocation8 + $0x310] sm:$0xff]
    %v4181 = vld [vmem:[#allocation8 + $0x318] sm:$0xff]
    %v4182 = vld [vmem:[#allocation8 + $0x320] sm:$0xff]
    %v4183 = vld [vmem:[#allocation8 + $0x328] sm:$0xff]
    %v4184 = vld [vmem:[#allocation8 + $0x330] sm:$0xff]
    %v4185 = vld [vmem:[#allocation8 + $0x338] sm:$0xff]
    %v4186 = vld [vmem:[#allocation8 + $0x340] sm:$0xff]
    %v4187 = vld [vmem:[#allocation8 + $0x348] sm:$0xff]
    %v4188 = vld [vmem:[#allocation8 + $0x350] sm:$0xff]
    %v4189 = vld [vmem:[#allocation8 + $0x358] sm:$0xff]
    %v4190 = vld [vmem:[#allocation8 + $0x360] sm:$0xff]
    %v4191 = vld [vmem:[#allocation8 + $0x368] sm:$0xff]
    %v4192 = vld [vmem:[#allocation8 + $0x370] sm:$0xff]
    %v4193 = vld [vmem:[#allocation8 + $0x378] sm:$0xff]
    %v4194 = vld [vmem:[#allocation8 + $0x380] sm:$0xff]
    %v4195 = vld [vmem:[#allocation8 + $0x388] sm:$0xff]
    %v4196 = vld [vmem:[#allocation8 + $0x390] sm:$0xff]
    %v4197 = vld [vmem:[#allocation8 + $0x398] sm:$0xff]
    %v4198 = vld [vmem:[#allocation8 + $0x3a0] sm:$0xff]
    %v4199 = vld [vmem:[#allocation8 + $0x3a8] sm:$0xff]
    %v4200 = vld [vmem:[#allocation8 + $0x3b0] sm:$0xff]
    %v4201 = vld [vmem:[#allocation8 + $0x3b8] sm:$0xff]
    %v4202 = vld [vmem:[#allocation8 + $0x3c0] sm:$0xff]
    %v4203 = vld [vmem:[#allocation8 + $0x3c8] sm:$0xff]
    %v4204 = vld [vmem:[#allocation8 + $0x3d0] sm:$0xff]
    %v4205 = vld [vmem:[#allocation8 + $0x3d8] sm:$0xff]
    %v4206 = vld [vmem:[#allocation8 + $0x3e0] sm:$0xff]
    %v4207 = vld [vmem:[#allocation8 + $0x3e8] sm:$0xff]
    %v4208 = vld [vmem:[#allocation8 + $0x3f0] sm:$0xff]
    %v4209 = vld [vmem:[#allocation8 + $0x3f8] sm:$0xff]
    %v4210 = vld [vmem:[#allocation8 + $0x400] sm:$0xff]
    %v4211 = vld [vmem:[#allocation8 + $0x408] sm:$0xff]
    %v4212 = vld [vmem:[#allocation8 + $0x410] sm:$0xff]
    %v4213 = vld [vmem:[#allocation8 + $0x418] sm:$0xff]
    %v4214 = vld [vmem:[#allocation8 + $0x420] sm:$0xff]
    %v4215 = vld [vmem:[#allocation8 + $0x428] sm:$0xff]
    %v4216 = vld [vmem:[#allocation8 + $0x430] sm:$0xff]
    %v4217 = vld [vmem:[#allocation8 + $0x438] sm:$0xff]
    %v4218 = vld [vmem:[#allocation8 + $0x440] sm:$0xff]
    %v4219 = vld [vmem:[#allocation8 + $0x448] sm:$0xff]
    %v4220 = vld [vmem:[#allocation8 + $0x450] sm:$0xff]
    %v4221 = vld [vmem:[#allocation8 + $0x458] sm:$0xff]
    %v4222 = vld [vmem:[#allocation8 + $0x460] sm:$0xff]
    %v4223 = vld [vmem:[#allocation8 + $0x468] sm:$0xff]
    %v4224 = vld [vmem:[#allocation8 + $0x470] sm:$0xff]
    %v4225 = vld [vmem:[#allocation8 + $0x478] sm:$0xff]
    %v4226 = vld [vmem:[#allocation8 + $0x480] sm:$0xff]
    %v4227 = vld [vmem:[#allocation8 + $0x488] sm:$0xff]
    %v4228 = vld [vmem:[#allocation8 + $0x490] sm:$0xff]
    %v4229 = vld [vmem:[#allocation8 + $0x498] sm:$0xff]
    %v4230 = vld [vmem:[#allocation8 + $0x4a0] sm:$0xff]
    %v4231 = vld [vmem:[#allocation8 + $0x4a8] sm:$0xff]
    %v4232 = vld [vmem:[#allocation8 + $0x4b0] sm:$0xff]
    %v4233 = vld [vmem:[#allocation8 + $0x4b8] sm:$0xff]
    %v4234 = vld [vmem:[#allocation8 + $0x4c0] sm:$0xff]
    %v4235 = vld [vmem:[#allocation8 + $0x4c8] sm:$0xff]
    %v4236 = vld [vmem:[#allocation8 + $0x4d0] sm:$0xff]
    %v4237 = vld [vmem:[#allocation8 + $0x4d8] sm:$0xff]
    %v4238 = vld [vmem:[#allocation8 + $0x4e0] sm:$0xff]
    %v4239 = vld [vmem:[#allocation8 + $0x4e8] sm:$0xff]
    %v4240 = vld [vmem:[#allocation8 + $0x4f0] sm:$0xff]
    %v4241 = vld [vmem:[#allocation8 + $0x4f8] sm:$0xff]
    %v4242 = vld [vmem:[#allocation8 + $0x500] sm:$0xff]
    %v4243 = vld [vmem:[#allocation8 + $0x508] sm:$0xff]
    %v4244 = vld [vmem:[#allocation8 + $0x510] sm:$0xff]
    %v4245 = vld [vmem:[#allocation8 + $0x518] sm:$0xff]
    %v4246 = vld [vmem:[#allocation8 + $0x520] sm:$0xff]
    %v4247 = vld [vmem:[#allocation8 + $0x528] sm:$0xff]
    %v4248 = vld [vmem:[#allocation8 + $0x530] sm:$0xff]
    %v4249 = vld [vmem:[#allocation8 + $0x538] sm:$0xff]
    %v4250 = vld [vmem:[#allocation8 + $0x540] sm:$0xff]
    %v4251 = vld [vmem:[#allocation8 + $0x548] sm:$0xff]
    %v4252 = vld [vmem:[#allocation8 + $0x550] sm:$0xff]
    %v4253 = vld [vmem:[#allocation8 + $0x558] sm:$0xff]
    %v4254 = vld [vmem:[#allocation8 + $0x560] sm:$0xff]
    %v4255 = vld [vmem:[#allocation8 + $0x568] sm:$0xff]
    %v4256 = vld [vmem:[#allocation8 + $0x570] sm:$0xff]
    %v4257 = vld [vmem:[#allocation8 + $0x578] sm:$0xff]
    %v4258 = vld [vmem:[#allocation8 + $0x580] sm:$0xff]
    %v4259 = vld [vmem:[#allocation8 + $0x588] sm:$0xff]
    %v4260 = vld [vmem:[#allocation8 + $0x590] sm:$0xff]
    %v4261 = vld [vmem:[#allocation8 + $0x598] sm:$0xff]
    %v4262 = vld [vmem:[#allocation8 + $0x5a0] sm:$0xff]
    %v4263 = vld [vmem:[#allocation8 + $0x5a8] sm:$0xff]
    %v4264 = vld [vmem:[#allocation8 + $0x5b0] sm:$0xff]
    %v4265 = vld [vmem:[#allocation8 + $0x5b8] sm:$0xff]
    %v4266 = vld [vmem:[#allocation8 + $0x5c0] sm:$0xff]
    %v4267 = vld [vmem:[#allocation8 + $0x5c8] sm:$0xff]
    %v4268 = vld [vmem:[#allocation8 + $0x5d0] sm:$0xff]
    %v4269 = vld [vmem:[#allocation8 + $0x5d8] sm:$0xff]
    %v4270 = vld [vmem:[#allocation8 + $0x5e0] sm:$0xff]
    %v4271 = vld [vmem:[#allocation8 + $0x5e8] sm:$0xff]
    %v4272 = vld [vmem:[#allocation8 + $0x5f0] sm:$0xff]
    %v4273 = vld [vmem:[#allocation8 + $0x5f8] sm:$0xff]
    %v4274 = vld [vmem:[#allocation8 + $0x600] sm:$0xff]
    %v4275 = vld [vmem:[#allocation8 + $0x608] sm:$0xff]
    %v4276 = vld [vmem:[#allocation8 + $0x610] sm:$0xff]
    %v4277 = vld [vmem:[#allocation8 + $0x618] sm:$0xff]
    %v4278 = vld [vmem:[#allocation8 + $0x620] sm:$0xff]
    %v4279 = vld [vmem:[#allocation8 + $0x628] sm:$0xff]
    %v4280 = vld [vmem:[#allocation8 + $0x630] sm:$0xff]
    %v4281 = vld [vmem:[#allocation8 + $0x638] sm:$0xff]
    %v4282 = vld [vmem:[#allocation8 + $0x640] sm:$0xff]
    %v4283 = vld [vmem:[#allocation8 + $0x648] sm:$0xff]
    %v4284 = vld [vmem:[#allocation8 + $0x650] sm:$0xff]
    %v4285 = vld [vmem:[#allocation8 + $0x658] sm:$0xff]
    %v4286 = vld [vmem:[#allocation8 + $0x660] sm:$0xff]
    %v4287 = vld [vmem:[#allocation8 + $0x668] sm:$0xff]
    %v4288 = vld [vmem:[#allocation8 + $0x670] sm:$0xff]
    %v4289 = vld [vmem:[#allocation8 + $0x678] sm:$0xff]
    %v4290 = vld [vmem:[#allocation8 + $0x680] sm:$0xff]
    %v4291 = vld [vmem:[#allocation8 + $0x688] sm:$0xff]
    %v4292 = vld [vmem:[#allocation8 + $0x690] sm:$0xff]
    %v4293 = vld [vmem:[#allocation8 + $0x698] sm:$0xff]
    %v4294 = vld [vmem:[#allocation8 + $0x6a0] sm:$0xff]
    %v4295 = vld [vmem:[#allocation8 + $0x6a8] sm:$0xff]
    %v4296 = vld [vmem:[#allocation8 + $0x6b0] sm:$0xff]
    %v4297 = vld [vmem:[#allocation8 + $0x6b8] sm:$0xff]
    %v4298 = vld [vmem:[#allocation8 + $0x6c0] sm:$0xff]
    %v4299 = vld [vmem:[#allocation8 + $0x6c8] sm:$0xff]
    %v4300 = vld [vmem:[#allocation8 + $0x6d0] sm:$0xff]
    %v4301 = vld [vmem:[#allocation8 + $0x6d8] sm:$0xff]
    %v4302 = vld [vmem:[#allocation8 + $0x6e0] sm:$0xff]
    %v4303 = vld [vmem:[#allocation8 + $0x6e8] sm:$0xff]
    %v4304 = vld [vmem:[#allocation8 + $0x6f0] sm:$0xff]
    %v4305 = vld [vmem:[#allocation8 + $0x6f8] sm:$0xff]
    %v4306 = vld [vmem:[#allocation8 + $0x700] sm:$0xff]
    %v4307 = vld [vmem:[#allocation8 + $0x708] sm:$0xff]
    %v4308 = vld [vmem:[#allocation8 + $0x710] sm:$0xff]
    %v4309 = vld [vmem:[#allocation8 + $0x718] sm:$0xff]
    %v4310 = vld [vmem:[#allocation8 + $0x720] sm:$0xff]
    %v4311 = vld [vmem:[#allocation8 + $0x728] sm:$0xff]
    %v4312 = vld [vmem:[#allocation8 + $0x730] sm:$0xff]
    %v4313 = vld [vmem:[#allocation8 + $0x738] sm:$0xff]
    %v4314 = vld [vmem:[#allocation8 + $0x740] sm:$0xff]
    %v4315 = vld [vmem:[#allocation8 + $0x748] sm:$0xff]
    %v4316 = vld [vmem:[#allocation8 + $0x750] sm:$0xff]
    %v4317 = vld [vmem:[#allocation8 + $0x758] sm:$0xff]
    %v4318 = vld [vmem:[#allocation8 + $0x760] sm:$0xff]
    %v4319 = vld [vmem:[#allocation8 + $0x768] sm:$0xff]
    %v4320 = vld [vmem:[#allocation8 + $0x770] sm:$0xff]
    %v4321 = vld [vmem:[#allocation8 + $0x778] sm:$0xff]
    %v4322 = vld [vmem:[#allocation8 + $0x780] sm:$0xff]
    %v4323 = vld [vmem:[#allocation8 + $0x788] sm:$0xff]
    %v4324 = vld [vmem:[#allocation8 + $0x790] sm:$0xff]
    %v4325 = vld [vmem:[#allocation8 + $0x798] sm:$0xff]
    %v4326 = vld [vmem:[#allocation8 + $0x7a0] sm:$0xff]
    %v4327 = vld [vmem:[#allocation8 + $0x7a8] sm:$0xff]
    %v4328 = vld [vmem:[#allocation8 + $0x7b0] sm:$0xff]
    %v4329 = vld [vmem:[#allocation8 + $0x7b8] sm:$0xff]
    %v4330 = vld [vmem:[#allocation8 + $0x7c0] sm:$0xff]
    %v4331 = vld [vmem:[#allocation8 + $0x7c8] sm:$0xff]
    %v4332 = vld [vmem:[#allocation8 + $0x7d0] sm:$0xff]
    %v4333 = vld [vmem:[#allocation8 + $0x7d8] sm:$0xff]
    %v4334 = vld [vmem:[#allocation8 + $0x7e0] sm:$0xff]
    %v4335 = vld [vmem:[#allocation8 + $0x7e8] sm:$0xff]
    %v4336 = vld [vmem:[#allocation8 + $0x7f0] sm:$0xff]
    %v4337 = vld [vmem:[#allocation8 + $0x7f8] sm:$0xff]
    %v4338 = vld [vmem:[%s6] sm:$0xf]
    %v4340 = vlaneseq
    %v4341 = vshrl.u32 %v4340, 7
    %v4342 = vsub.s32 0, %v4341
    %v4343 = vrot.slane %v4338, %v4342
    %v4344 = vlaneseq
    %v4345 = vshrl.u32 %v4344, 7
    %v4346 = vsub.s32 1, %v4345
    %v4347 = vrot.slane %v4338, %v4346
    %v4348 = vlaneseq
    %v4349 = vshrl.u32 %v4348, 7
    %v4350 = vsub.s32 2, %v4349
    %v4351 = vrot.slane %v4338, %v4350
    %v4352 = vlaneseq
    %v4353 = vshrl.u32 %v4352, 7
    %v4354 = vsub.s32 3, %v4353
    %v4355 = vrot.slane %v4338, %v4354
    %v4616 = vunpack.c.l.b16 %v4082
    %v4617 = vunpack.c.h.b16 %v4082
    %v4618 = vunpack.c.l.b16 %v4083
    %v4619 = vunpack.c.h.b16 %v4083
    %v4620 = vunpack.c.l.b16 %v4084
    %v4621 = vunpack.c.h.b16 %v4084
    %v4622 = vunpack.c.l.b16 %v4085
    %v4623 = vunpack.c.h.b16 %v4085
    %v4624 = vunpack.c.l.b16 %v4086
    %v4625 = vunpack.c.h.b16 %v4086
    %v4626 = vunpack.c.l.b16 %v4087
    %v4627 = vunpack.c.h.b16 %v4087
    %v4628 = vunpack.c.l.b16 %v4088
    %v4629 = vunpack.c.h.b16 %v4088
    %v4630 = vunpack.c.l.b16 %v4089
    %v4631 = vunpack.c.h.b16 %v4089
    %v4632 = vunpack.c.l.b16 %v4090
    %v4633 = vunpack.c.h.b16 %v4090
    %v4634 = vunpack.c.l.b16 %v4091
    %v4635 = vunpack.c.h.b16 %v4091
    %v4636 = vunpack.c.l.b16 %v4092
    %v4637 = vunpack.c.h.b16 %v4092
    %v4638 = vunpack.c.l.b16 %v4093
    %v4639 = vunpack.c.h.b16 %v4093
    %v4640 = vunpack.c.l.b16 %v4094
    %v4641 = vunpack.c.h.b16 %v4094
    %v4642 = vunpack.c.l.b16 %v4095
    %v4643 = vunpack.c.h.b16 %v4095
    %v4644 = vunpack.c.l.b16 %v4096
    %v4645 = vunpack.c.h.b16 %v4096
    %v4646 = vunpack.c.l.b16 %v4097
    %v4647 = vunpack.c.h.b16 %v4097
    %v4648 = vunpack.c.l.b16 %v4098
    %v4649 = vunpack.c.h.b16 %v4098
    %v4650 = vunpack.c.l.b16 %v4099
    %v4651 = vunpack.c.h.b16 %v4099
    %v4652 = vunpack.c.l.b16 %v4100
    %v4653 = vunpack.c.h.b16 %v4100
    %v4654 = vunpack.c.l.b16 %v4101
    %v4655 = vunpack.c.h.b16 %v4101
    %v4656 = vunpack.c.l.b16 %v4102
    %v4657 = vunpack.c.h.b16 %v4102
    %v4658 = vunpack.c.l.b16 %v4103
    %v4659 = vunpack.c.h.b16 %v4103
    %v4660 = vunpack.c.l.b16 %v4104
    %v4661 = vunpack.c.h.b16 %v4104
    %v4662 = vunpack.c.l.b16 %v4105
    %v4663 = vunpack.c.h.b16 %v4105
    %v4664 = vunpack.c.l.b16 %v4106
    %v4665 = vunpack.c.h.b16 %v4106
    %v4666 = vunpack.c.l.b16 %v4107
    %v4667 = vunpack.c.h.b16 %v4107
    %v4668 = vunpack.c.l.b16 %v4108
    %v4669 = vunpack.c.h.b16 %v4108
    %v4670 = vunpack.c.l.b16 %v4109
    %v4671 = vunpack.c.h.b16 %v4109
    %v4672 = vunpack.c.l.b16 %v4110
    %v4673 = vunpack.c.h.b16 %v4110
    %v4674 = vunpack.c.l.b16 %v4111
    %v4675 = vunpack.c.h.b16 %v4111
    %v4676 = vunpack.c.l.b16 %v4112
    %v4677 = vunpack.c.h.b16 %v4112
    %v4678 = vunpack.c.l.b16 %v4113
    %v4679 = vunpack.c.h.b16 %v4113
    %v4680 = vunpack.c.l.b16 %v4114
    %v4681 = vunpack.c.h.b16 %v4114
    %v4682 = vunpack.c.l.b16 %v4115
    %v4683 = vunpack.c.h.b16 %v4115
    %v4684 = vunpack.c.l.b16 %v4116
    %v4685 = vunpack.c.h.b16 %v4116
    %v4686 = vunpack.c.l.b16 %v4117
    %v4687 = vunpack.c.h.b16 %v4117
    %v4688 = vunpack.c.l.b16 %v4118
    %v4689 = vunpack.c.h.b16 %v4118
    %v4690 = vunpack.c.l.b16 %v4119
    %v4691 = vunpack.c.h.b16 %v4119
    %v4692 = vunpack.c.l.b16 %v4120
    %v4693 = vunpack.c.h.b16 %v4120
    %v4694 = vunpack.c.l.b16 %v4121
    %v4695 = vunpack.c.h.b16 %v4121
    %v4696 = vunpack.c.l.b16 %v4122
    %v4697 = vunpack.c.h.b16 %v4122
    %v4698 = vunpack.c.l.b16 %v4123
    %v4699 = vunpack.c.h.b16 %v4123
    %v4700 = vunpack.c.l.b16 %v4124
    %v4701 = vunpack.c.h.b16 %v4124
    %v4702 = vunpack.c.l.b16 %v4125
    %v4703 = vunpack.c.h.b16 %v4125
    %v4704 = vunpack.c.l.b16 %v4126
    %v4705 = vunpack.c.h.b16 %v4126
    %v4706 = vunpack.c.l.b16 %v4127
    %v4707 = vunpack.c.h.b16 %v4127
    %v4708 = vunpack.c.l.b16 %v4128
    %v4709 = vunpack.c.h.b16 %v4128
    %v4710 = vunpack.c.l.b16 %v4129
    %v4711 = vunpack.c.h.b16 %v4129
    %v4712 = vunpack.c.l.b16 %v4130
    %v4713 = vunpack.c.h.b16 %v4130
    %v4714 = vunpack.c.l.b16 %v4131
    %v4715 = vunpack.c.h.b16 %v4131
    %v4716 = vunpack.c.l.b16 %v4132
    %v4717 = vunpack.c.h.b16 %v4132
    %v4718 = vunpack.c.l.b16 %v4133
    %v4719 = vunpack.c.h.b16 %v4133
    %v4720 = vunpack.c.l.b16 %v4134
    %v4721 = vunpack.c.h.b16 %v4134
    %v4722 = vunpack.c.l.b16 %v4135
    %v4723 = vunpack.c.h.b16 %v4135
    %v4724 = vunpack.c.l.b16 %v4136
    %v4725 = vunpack.c.h.b16 %v4136
    %v4726 = vunpack.c.l.b16 %v4137
    %v4727 = vunpack.c.h.b16 %v4137
    %v4728 = vunpack.c.l.b16 %v4138
    %v4729 = vunpack.c.h.b16 %v4138
    %v4730 = vunpack.c.l.b16 %v4139
    %v4731 = vunpack.c.h.b16 %v4139
    %v4732 = vunpack.c.l.b16 %v4140
    %v4733 = vunpack.c.h.b16 %v4140
    %v4734 = vunpack.c.l.b16 %v4141
    %v4735 = vunpack.c.h.b16 %v4141
    %v4736 = vunpack.c.l.b16 %v4142
    %v4737 = vunpack.c.h.b16 %v4142
    %v4738 = vunpack.c.l.b16 %v4143
    %v4739 = vunpack.c.h.b16 %v4143
    %v4740 = vunpack.c.l.b16 %v4144
    %v4741 = vunpack.c.h.b16 %v4144
    %v4742 = vunpack.c.l.b16 %v4145
    %v4743 = vunpack.c.h.b16 %v4145
    %v4744 = vunpack.c.l.b16 %v4146
    %v4745 = vunpack.c.h.b16 %v4146
    %v4746 = vunpack.c.l.b16 %v4147
    %v4747 = vunpack.c.h.b16 %v4147
    %v4748 = vunpack.c.l.b16 %v4148
    %v4749 = vunpack.c.h.b16 %v4148
    %v4750 = vunpack.c.l.b16 %v4149
    %v4751 = vunpack.c.h.b16 %v4149
    %v4752 = vunpack.c.l.b16 %v4150
    %v4753 = vunpack.c.h.b16 %v4150
    %v4754 = vunpack.c.l.b16 %v4151
    %v4755 = vunpack.c.h.b16 %v4151
    %v4756 = vunpack.c.l.b16 %v4152
    %v4757 = vunpack.c.h.b16 %v4152
    %v4758 = vunpack.c.l.b16 %v4153
    %v4759 = vunpack.c.h.b16 %v4153
    %v4760 = vunpack.c.l.b16 %v4154
    %v4761 = vunpack.c.h.b16 %v4154
    %v4762 = vunpack.c.l.b16 %v4155
    %v4763 = vunpack.c.h.b16 %v4155
    %v4764 = vunpack.c.l.b16 %v4156
    %v4765 = vunpack.c.h.b16 %v4156
    %v4766 = vunpack.c.l.b16 %v4157
    %v4767 = vunpack.c.h.b16 %v4157
    %v4768 = vunpack.c.l.b16 %v4158
    %v4769 = vunpack.c.h.b16 %v4158
    %v4770 = vunpack.c.l.b16 %v4159
    %v4771 = vunpack.c.h.b16 %v4159
    %v4772 = vunpack.c.l.b16 %v4160
    %v4773 = vunpack.c.h.b16 %v4160
    %v4774 = vunpack.c.l.b16 %v4161
    %v4775 = vunpack.c.h.b16 %v4161
    %v4776 = vunpack.c.l.b16 %v4162
    %v4777 = vunpack.c.h.b16 %v4162
    %v4778 = vunpack.c.l.b16 %v4163
    %v4779 = vunpack.c.h.b16 %v4163
    %v4780 = vunpack.c.l.b16 %v4164
    %v4781 = vunpack.c.h.b16 %v4164
    %v4782 = vunpack.c.l.b16 %v4165
    %v4783 = vunpack.c.h.b16 %v4165
    %v4784 = vunpack.c.l.b16 %v4166
    %v4785 = vunpack.c.h.b16 %v4166
    %v4786 = vunpack.c.l.b16 %v4167
    %v4787 = vunpack.c.h.b16 %v4167
    %v4788 = vunpack.c.l.b16 %v4168
    %v4789 = vunpack.c.h.b16 %v4168
    %v4790 = vunpack.c.l.b16 %v4169
    %v4791 = vunpack.c.h.b16 %v4169
    %v4792 = vunpack.c.l.b16 %v4170
    %v4793 = vunpack.c.h.b16 %v4170
    %v4794 = vunpack.c.l.b16 %v4171
    %v4795 = vunpack.c.h.b16 %v4171
    %v4796 = vunpack.c.l.b16 %v4172
    %v4797 = vunpack.c.h.b16 %v4172
    %v4798 = vunpack.c.l.b16 %v4173
    %v4799 = vunpack.c.h.b16 %v4173
    %v4800 = vunpack.c.l.b16 %v4174
    %v4801 = vunpack.c.h.b16 %v4174
    %v4802 = vunpack.c.l.b16 %v4175
    %v4803 = vunpack.c.h.b16 %v4175
    %v4804 = vunpack.c.l.b16 %v4176
    %v4805 = vunpack.c.h.b16 %v4176
    %v4806 = vunpack.c.l.b16 %v4177
    %v4807 = vunpack.c.h.b16 %v4177
    %v4808 = vunpack.c.l.b16 %v4178
    %v4809 = vunpack.c.h.b16 %v4178
    %v4810 = vunpack.c.l.b16 %v4179
    %v4811 = vunpack.c.h.b16 %v4179
    %v4812 = vunpack.c.l.b16 %v4180
    %v4813 = vunpack.c.h.b16 %v4180
    %v4814 = vunpack.c.l.b16 %v4181
    %v4815 = vunpack.c.h.b16 %v4181
    %v4816 = vunpack.c.l.b16 %v4182
    %v4817 = vunpack.c.h.b16 %v4182
    %v4818 = vunpack.c.l.b16 %v4183
    %v4819 = vunpack.c.h.b16 %v4183
    %v4820 = vunpack.c.l.b16 %v4184
    %v4821 = vunpack.c.h.b16 %v4184
    %v4822 = vunpack.c.l.b16 %v4185
    %v4823 = vunpack.c.h.b16 %v4185
    %v4824 = vunpack.c.l.b16 %v4186
    %v4825 = vunpack.c.h.b16 %v4186
    %v4826 = vunpack.c.l.b16 %v4187
    %v4827 = vunpack.c.h.b16 %v4187
    %v4828 = vunpack.c.l.b16 %v4188
    %v4829 = vunpack.c.h.b16 %v4188
    %v4830 = vunpack.c.l.b16 %v4189
    %v4831 = vunpack.c.h.b16 %v4189
    %v4832 = vunpack.c.l.b16 %v4190
    %v4833 = vunpack.c.h.b16 %v4190
    %v4834 = vunpack.c.l.b16 %v4191
    %v4835 = vunpack.c.h.b16 %v4191
    %v4836 = vunpack.c.l.b16 %v4192
    %v4837 = vunpack.c.h.b16 %v4192
    %v4838 = vunpack.c.l.b16 %v4193
    %v4839 = vunpack.c.h.b16 %v4193
    %v4840 = vunpack.c.l.b16 %v4194
    %v4841 = vunpack.c.h.b16 %v4194
    %v4842 = vunpack.c.l.b16 %v4195
    %v4843 = vunpack.c.h.b16 %v4195
    %v4844 = vunpack.c.l.b16 %v4196
    %v4845 = vunpack.c.h.b16 %v4196
    %v4846 = vunpack.c.l.b16 %v4197
    %v4847 = vunpack.c.h.b16 %v4197
    %v4848 = vunpack.c.l.b16 %v4198
    %v4849 = vunpack.c.h.b16 %v4198
    %v4850 = vunpack.c.l.b16 %v4199
    %v4851 = vunpack.c.h.b16 %v4199
    %v4852 = vunpack.c.l.b16 %v4200
    %v4853 = vunpack.c.h.b16 %v4200
    %v4854 = vunpack.c.l.b16 %v4201
    %v4855 = vunpack.c.h.b16 %v4201
    %v4856 = vunpack.c.l.b16 %v4202
    %v4857 = vunpack.c.h.b16 %v4202
    %v4858 = vunpack.c.l.b16 %v4203
    %v4859 = vunpack.c.h.b16 %v4203
    %v4860 = vunpack.c.l.b16 %v4204
    %v4861 = vunpack.c.h.b16 %v4204
    %v4862 = vunpack.c.l.b16 %v4205
    %v4863 = vunpack.c.h.b16 %v4205
    %v4864 = vunpack.c.l.b16 %v4206
    %v4865 = vunpack.c.h.b16 %v4206
    %v4866 = vunpack.c.l.b16 %v4207
    %v4867 = vunpack.c.h.b16 %v4207
    %v4868 = vunpack.c.l.b16 %v4208
    %v4869 = vunpack.c.h.b16 %v4208
    %v4870 = vunpack.c.l.b16 %v4209
    %v4871 = vunpack.c.h.b16 %v4209
    %v4872 = vunpack.c.l.b16 %v4210
    %v4873 = vunpack.c.h.b16 %v4210
    %v4874 = vunpack.c.l.b16 %v4211
    %v4875 = vunpack.c.h.b16 %v4211
    %v4876 = vunpack.c.l.b16 %v4212
    %v4877 = vunpack.c.h.b16 %v4212
    %v4878 = vunpack.c.l.b16 %v4213
    %v4879 = vunpack.c.h.b16 %v4213
    %v4880 = vunpack.c.l.b16 %v4214
    %v4881 = vunpack.c.h.b16 %v4214
    %v4882 = vunpack.c.l.b16 %v4215
    %v4883 = vunpack.c.h.b16 %v4215
    %v4884 = vunpack.c.l.b16 %v4216
    %v4885 = vunpack.c.h.b16 %v4216
    %v4886 = vunpack.c.l.b16 %v4217
    %v4887 = vunpack.c.h.b16 %v4217
    %v4888 = vunpack.c.l.b16 %v4218
    %v4889 = vunpack.c.h.b16 %v4218
    %v4890 = vunpack.c.l.b16 %v4219
    %v4891 = vunpack.c.h.b16 %v4219
    %v4892 = vunpack.c.l.b16 %v4220
    %v4893 = vunpack.c.h.b16 %v4220
    %v4894 = vunpack.c.l.b16 %v4221
    %v4895 = vunpack.c.h.b16 %v4221
    %v4896 = vunpack.c.l.b16 %v4222
    %v4897 = vunpack.c.h.b16 %v4222
    %v4898 = vunpack.c.l.b16 %v4223
    %v4899 = vunpack.c.h.b16 %v4223
    %v4900 = vunpack.c.l.b16 %v4224
    %v4901 = vunpack.c.h.b16 %v4224
    %v4902 = vunpack.c.l.b16 %v4225
    %v4903 = vunpack.c.h.b16 %v4225
    %v4904 = vunpack.c.l.b16 %v4226
    %v4905 = vunpack.c.h.b16 %v4226
    %v4906 = vunpack.c.l.b16 %v4227
    %v4907 = vunpack.c.h.b16 %v4227
    %v4908 = vunpack.c.l.b16 %v4228
    %v4909 = vunpack.c.h.b16 %v4228
    %v4910 = vunpack.c.l.b16 %v4229
    %v4911 = vunpack.c.h.b16 %v4229
    %v4912 = vunpack.c.l.b16 %v4230
    %v4913 = vunpack.c.h.b16 %v4230
    %v4914 = vunpack.c.l.b16 %v4231
    %v4915 = vunpack.c.h.b16 %v4231
    %v4916 = vunpack.c.l.b16 %v4232
    %v4917 = vunpack.c.h.b16 %v4232
    %v4918 = vunpack.c.l.b16 %v4233
    %v4919 = vunpack.c.h.b16 %v4233
    %v4920 = vunpack.c.l.b16 %v4234
    %v4921 = vunpack.c.h.b16 %v4234
    %v4922 = vunpack.c.l.b16 %v4235
    %v4923 = vunpack.c.h.b16 %v4235
    %v4924 = vunpack.c.l.b16 %v4236
    %v4925 = vunpack.c.h.b16 %v4236
    %v4926 = vunpack.c.l.b16 %v4237
    %v4927 = vunpack.c.h.b16 %v4237
    %v4928 = vunpack.c.l.b16 %v4238
    %v4929 = vunpack.c.h.b16 %v4238
    %v4930 = vunpack.c.l.b16 %v4239
    %v4931 = vunpack.c.h.b16 %v4239
    %v4932 = vunpack.c.l.b16 %v4240
    %v4933 = vunpack.c.h.b16 %v4240
    %v4934 = vunpack.c.l.b16 %v4241
    %v4935 = vunpack.c.h.b16 %v4241
    %v4936 = vunpack.c.l.b16 %v4242
    %v4937 = vunpack.c.h.b16 %v4242
    %v4938 = vunpack.c.l.b16 %v4243
    %v4939 = vunpack.c.h.b16 %v4243
    %v4940 = vunpack.c.l.b16 %v4244
    %v4941 = vunpack.c.h.b16 %v4244
    %v4942 = vunpack.c.l.b16 %v4245
    %v4943 = vunpack.c.h.b16 %v4245
    %v4944 = vunpack.c.l.b16 %v4246
    %v4945 = vunpack.c.h.b16 %v4246
    %v4946 = vunpack.c.l.b16 %v4247
    %v4947 = vunpack.c.h.b16 %v4247
    %v4948 = vunpack.c.l.b16 %v4248
    %v4949 = vunpack.c.h.b16 %v4248
    %v4950 = vunpack.c.l.b16 %v4249
    %v4951 = vunpack.c.h.b16 %v4249
    %v4952 = vunpack.c.l.b16 %v4250
    %v4953 = vunpack.c.h.b16 %v4250
    %v4954 = vunpack.c.l.b16 %v4251
    %v4955 = vunpack.c.h.b16 %v4251
    %v4956 = vunpack.c.l.b16 %v4252
    %v4957 = vunpack.c.h.b16 %v4252
    %v4958 = vunpack.c.l.b16 %v4253
    %v4959 = vunpack.c.h.b16 %v4253
    %v4960 = vunpack.c.l.b16 %v4254
    %v4961 = vunpack.c.h.b16 %v4254
    %v4962 = vunpack.c.l.b16 %v4255
    %v4963 = vunpack.c.h.b16 %v4255
    %v4964 = vunpack.c.l.b16 %v4256
    %v4965 = vunpack.c.h.b16 %v4256
    %v4966 = vunpack.c.l.b16 %v4257
    %v4967 = vunpack.c.h.b16 %v4257
    %v4968 = vunpack.c.l.b16 %v4258
    %v4969 = vunpack.c.h.b16 %v4258
    %v4970 = vunpack.c.l.b16 %v4259
    %v4971 = vunpack.c.h.b16 %v4259
    %v4972 = vunpack.c.l.b16 %v4260
    %v4973 = vunpack.c.h.b16 %v4260
    %v4974 = vunpack.c.l.b16 %v4261
    %v4975 = vunpack.c.h.b16 %v4261
    %v4976 = vunpack.c.l.b16 %v4262
    %v4977 = vunpack.c.h.b16 %v4262
    %v4978 = vunpack.c.l.b16 %v4263
    %v4979 = vunpack.c.h.b16 %v4263
    %v4980 = vunpack.c.l.b16 %v4264
    %v4981 = vunpack.c.h.b16 %v4264
    %v4982 = vunpack.c.l.b16 %v4265
    %v4983 = vunpack.c.h.b16 %v4265
    %v4984 = vunpack.c.l.b16 %v4266
    %v4985 = vunpack.c.h.b16 %v4266
    %v4986 = vunpack.c.l.b16 %v4267
    %v4987 = vunpack.c.h.b16 %v4267
    %v4988 = vunpack.c.l.b16 %v4268
    %v4989 = vunpack.c.h.b16 %v4268
    %v4990 = vunpack.c.l.b16 %v4269
    %v4991 = vunpack.c.h.b16 %v4269
    %v4992 = vunpack.c.l.b16 %v4270
    %v4993 = vunpack.c.h.b16 %v4270
    %v4994 = vunpack.c.l.b16 %v4271
    %v4995 = vunpack.c.h.b16 %v4271
    %v4996 = vunpack.c.l.b16 %v4272
    %v4997 = vunpack.c.h.b16 %v4272
    %v4998 = vunpack.c.l.b16 %v4273
    %v4999 = vunpack.c.h.b16 %v4273
    %v5000 = vunpack.c.l.b16 %v4274
    %v5001 = vunpack.c.h.b16 %v4274
    %v5002 = vunpack.c.l.b16 %v4275
    %v5003 = vunpack.c.h.b16 %v4275
    %v5004 = vunpack.c.l.b16 %v4276
    %v5005 = vunpack.c.h.b16 %v4276
    %v5006 = vunpack.c.l.b16 %v4277
    %v5007 = vunpack.c.h.b16 %v4277
    %v5008 = vunpack.c.l.b16 %v4278
    %v5009 = vunpack.c.h.b16 %v4278
    %v5010 = vunpack.c.l.b16 %v4279
    %v5011 = vunpack.c.h.b16 %v4279
    %v5012 = vunpack.c.l.b16 %v4280
    %v5013 = vunpack.c.h.b16 %v4280
    %v5014 = vunpack.c.l.b16 %v4281
    %v5015 = vunpack.c.h.b16 %v4281
    %v5016 = vunpack.c.l.b16 %v4282
    %v5017 = vunpack.c.h.b16 %v4282
    %v5018 = vunpack.c.l.b16 %v4283
    %v5019 = vunpack.c.h.b16 %v4283
    %v5020 = vunpack.c.l.b16 %v4284
    %v5021 = vunpack.c.h.b16 %v4284
    %v5022 = vunpack.c.l.b16 %v4285
    %v5023 = vunpack.c.h.b16 %v4285
    %v5024 = vunpack.c.l.b16 %v4286
    %v5025 = vunpack.c.h.b16 %v4286
    %v5026 = vunpack.c.l.b16 %v4287
    %v5027 = vunpack.c.h.b16 %v4287
    %v5028 = vunpack.c.l.b16 %v4288
    %v5029 = vunpack.c.h.b16 %v4288
    %v5030 = vunpack.c.l.b16 %v4289
    %v5031 = vunpack.c.h.b16 %v4289
    %v5032 = vunpack.c.l.b16 %v4290
    %v5033 = vunpack.c.h.b16 %v4290
    %v5034 = vunpack.c.l.b16 %v4291
    %v5035 = vunpack.c.h.b16 %v4291
    %v5036 = vunpack.c.l.b16 %v4292
    %v5037 = vunpack.c.h.b16 %v4292
    %v5038 = vunpack.c.l.b16 %v4293
    %v5039 = vunpack.c.h.b16 %v4293
    %v5040 = vunpack.c.l.b16 %v4294
    %v5041 = vunpack.c.h.b16 %v4294
    %v5042 = vunpack.c.l.b16 %v4295
    %v5043 = vunpack.c.h.b16 %v4295
    %v5044 = vunpack.c.l.b16 %v4296
    %v5045 = vunpack.c.h.b16 %v4296
    %v5046 = vunpack.c.l.b16 %v4297
    %v5047 = vunpack.c.h.b16 %v4297
    %v5048 = vunpack.c.l.b16 %v4298
    %v5049 = vunpack.c.h.b16 %v4298
    %v5050 = vunpack.c.l.b16 %v4299
    %v5051 = vunpack.c.h.b16 %v4299
    %v5052 = vunpack.c.l.b16 %v4300
    %v5053 = vunpack.c.h.b16 %v4300
    %v5054 = vunpack.c.l.b16 %v4301
    %v5055 = vunpack.c.h.b16 %v4301
    %v5056 = vunpack.c.l.b16 %v4302
    %v5057 = vunpack.c.h.b16 %v4302
    %v5058 = vunpack.c.l.b16 %v4303
    %v5059 = vunpack.c.h.b16 %v4303
    %v5060 = vunpack.c.l.b16 %v4304
    %v5061 = vunpack.c.h.b16 %v4304
    %v5062 = vunpack.c.l.b16 %v4305
    %v5063 = vunpack.c.h.b16 %v4305
    %v5064 = vunpack.c.l.b16 %v4306
    %v5065 = vunpack.c.h.b16 %v4306
    %v5066 = vunpack.c.l.b16 %v4307
    %v5067 = vunpack.c.h.b16 %v4307
    %v5068 = vunpack.c.l.b16 %v4308
    %v5069 = vunpack.c.h.b16 %v4308
    %v5070 = vunpack.c.l.b16 %v4309
    %v5071 = vunpack.c.h.b16 %v4309
    %v5072 = vunpack.c.l.b16 %v4310
    %v5073 = vunpack.c.h.b16 %v4310
    %v5074 = vunpack.c.l.b16 %v4311
    %v5075 = vunpack.c.h.b16 %v4311
    %v5076 = vunpack.c.l.b16 %v4312
    %v5077 = vunpack.c.h.b16 %v4312
    %v5078 = vunpack.c.l.b16 %v4313
    %v5079 = vunpack.c.h.b16 %v4313
    %v5080 = vunpack.c.l.b16 %v4314
    %v5081 = vunpack.c.h.b16 %v4314
    %v5082 = vunpack.c.l.b16 %v4315
    %v5083 = vunpack.c.h.b16 %v4315
    %v5084 = vunpack.c.l.b16 %v4316
    %v5085 = vunpack.c.h.b16 %v4316
    %v5086 = vunpack.c.l.b16 %v4317
    %v5087 = vunpack.c.h.b16 %v4317
    %v5088 = vunpack.c.l.b16 %v4318
    %v5089 = vunpack.c.h.b16 %v4318
    %v5090 = vunpack.c.l.b16 %v4319
    %v5091 = vunpack.c.h.b16 %v4319
    %v5092 = vunpack.c.l.b16 %v4320
    %v5093 = vunpack.c.h.b16 %v4320
    %v5094 = vunpack.c.l.b16 %v4321
    %v5095 = vunpack.c.h.b16 %v4321
    %v5096 = vunpack.c.l.b16 %v4322
    %v5097 = vunpack.c.h.b16 %v4322
    %v5098 = vunpack.c.l.b16 %v4323
    %v5099 = vunpack.c.h.b16 %v4323
    %v5100 = vunpack.c.l.b16 %v4324
    %v5101 = vunpack.c.h.b16 %v4324
    %v5102 = vunpack.c.l.b16 %v4325
    %v5103 = vunpack.c.h.b16 %v4325
    %v5104 = vunpack.c.l.b16 %v4326
    %v5105 = vunpack.c.h.b16 %v4326
    %v5106 = vunpack.c.l.b16 %v4327
    %v5107 = vunpack.c.h.b16 %v4327
    %v5108 = vunpack.c.l.b16 %v4328
    %v5109 = vunpack.c.h.b16 %v4328
    %v5110 = vunpack.c.l.b16 %v4329
    %v5111 = vunpack.c.h.b16 %v4329
    %v5112 = vunpack.c.l.b16 %v4330
    %v5113 = vunpack.c.h.b16 %v4330
    %v5114 = vunpack.c.l.b16 %v4331
    %v5115 = vunpack.c.h.b16 %v4331
    %v5116 = vunpack.c.l.b16 %v4332
    %v5117 = vunpack.c.h.b16 %v4332
    %v5118 = vunpack.c.l.b16 %v4333
    %v5119 = vunpack.c.h.b16 %v4333
    %v5120 = vunpack.c.l.b16 %v4334
    %v5121 = vunpack.c.h.b16 %v4334
    %v5122 = vunpack.c.l.b16 %v4335
    %v5123 = vunpack.c.h.b16 %v4335
    %v5124 = vunpack.c.l.b16 %v4336
    %v5125 = vunpack.c.h.b16 %v4336
    %v5126 = vunpack.c.l.b16 %v4337
    %v5127 = vunpack.c.h.b16 %v4337
    %v5128 = vpack.c.b16 %v4620, %v4616
    %v5129 = vpack.c.b16 %v4621, %v4617
    %v5130 = vpack.c.b16 %v4622, %v4618
    %v5131 = vpack.c.b16 %v4623, %v4619
    %v5132 = vpack.c.b16 %v4628, %v4624
    %v5133 = vpack.c.b16 %v4629, %v4625
    %v5134 = vpack.c.b16 %v4630, %v4626
    %v5135 = vpack.c.b16 %v4631, %v4627
    %v5136 = vpack.c.b16 %v4636, %v4632
    %v5137 = vpack.c.b16 %v4637, %v4633
    %v5138 = vpack.c.b16 %v4638, %v4634
    %v5139 = vpack.c.b16 %v4639, %v4635
    %v5140 = vpack.c.b16 %v4644, %v4640
    %v5141 = vpack.c.b16 %v4645, %v4641
    %v5142 = vpack.c.b16 %v4646, %v4642
    %v5143 = vpack.c.b16 %v4647, %v4643
    %v5144 = vpack.c.b16 %v4652, %v4648
    %v5145 = vpack.c.b16 %v4653, %v4649
    %v5146 = vpack.c.b16 %v4654, %v4650
    %v5147 = vpack.c.b16 %v4655, %v4651
    %v5148 = vpack.c.b16 %v4660, %v4656
    %v5149 = vpack.c.b16 %v4661, %v4657
    %v5150 = vpack.c.b16 %v4662, %v4658
    %v5151 = vpack.c.b16 %v4663, %v4659
    %v5152 = vpack.c.b16 %v4668, %v4664
    %v5153 = vpack.c.b16 %v4669, %v4665
    %v5154 = vpack.c.b16 %v4670, %v4666
    %v5155 = vpack.c.b16 %v4671, %v4667
    %v5156 = vpack.c.b16 %v4676, %v4672
    %v5157 = vpack.c.b16 %v4677, %v4673
    %v5158 = vpack.c.b16 %v4678, %v4674
    %v5159 = vpack.c.b16 %v4679, %v4675
    %v5160 = vpack.c.b16 %v4684, %v4680
    %v5161 = vpack.c.b16 %v4685, %v4681
    %v5162 = vpack.c.b16 %v4686, %v4682
    %v5163 = vpack.c.b16 %v4687, %v4683
    %v5164 = vpack.c.b16 %v4692, %v4688
    %v5165 = vpack.c.b16 %v4693, %v4689
    %v5166 = vpack.c.b16 %v4694, %v4690
    %v5167 = vpack.c.b16 %v4695, %v4691
    %v5168 = vpack.c.b16 %v4700, %v4696
    %v5169 = vpack.c.b16 %v4701, %v4697
    %v5170 = vpack.c.b16 %v4702, %v4698
    %v5171 = vpack.c.b16 %v4703, %v4699
    %v5172 = vpack.c.b16 %v4708, %v4704
    %v5173 = vpack.c.b16 %v4709, %v4705
    %v5174 = vpack.c.b16 %v4710, %v4706
    %v5175 = vpack.c.b16 %v4711, %v4707
    %v5176 = vpack.c.b16 %v4716, %v4712
    %v5177 = vpack.c.b16 %v4717, %v4713
    %v5178 = vpack.c.b16 %v4718, %v4714
    %v5179 = vpack.c.b16 %v4719, %v4715
    %v5180 = vpack.c.b16 %v4724, %v4720
    %v5181 = vpack.c.b16 %v4725, %v4721
    %v5182 = vpack.c.b16 %v4726, %v4722
    %v5183 = vpack.c.b16 %v4727, %v4723
    %v5184 = vpack.c.b16 %v4732, %v4728
    %v5185 = vpack.c.b16 %v4733, %v4729
    %v5186 = vpack.c.b16 %v4734, %v4730
    %v5187 = vpack.c.b16 %v4735, %v4731
    %v5188 = vpack.c.b16 %v4740, %v4736
    %v5189 = vpack.c.b16 %v4741, %v4737
    %v5190 = vpack.c.b16 %v4742, %v4738
    %v5191 = vpack.c.b16 %v4743, %v4739
    %v5192 = vpack.c.b16 %v4748, %v4744
    %v5193 = vpack.c.b16 %v4749, %v4745
    %v5194 = vpack.c.b16 %v4750, %v4746
    %v5195 = vpack.c.b16 %v4751, %v4747
    %v5196 = vpack.c.b16 %v4756, %v4752
    %v5197 = vpack.c.b16 %v4757, %v4753
    %v5198 = vpack.c.b16 %v4758, %v4754
    %v5199 = vpack.c.b16 %v4759, %v4755
    %v5200 = vpack.c.b16 %v4764, %v4760
    %v5201 = vpack.c.b16 %v4765, %v4761
    %v5202 = vpack.c.b16 %v4766, %v4762
    %v5203 = vpack.c.b16 %v4767, %v4763
    %v5204 = vpack.c.b16 %v4772, %v4768
    %v5205 = vpack.c.b16 %v4773, %v4769
    %v5206 = vpack.c.b16 %v4774, %v4770
    %v5207 = vpack.c.b16 %v4775, %v4771
    %v5208 = vpack.c.b16 %v4780, %v4776
    %v5209 = vpack.c.b16 %v4781, %v4777
    %v5210 = vpack.c.b16 %v4782, %v4778
    %v5211 = vpack.c.b16 %v4783, %v4779
    %v5212 = vpack.c.b16 %v4788, %v4784
    %v5213 = vpack.c.b16 %v4789, %v4785
    %v5214 = vpack.c.b16 %v4790, %v4786
    %v5215 = vpack.c.b16 %v4791, %v4787
    %v5216 = vpack.c.b16 %v4796, %v4792
    %v5217 = vpack.c.b16 %v4797, %v4793
    %v5218 = vpack.c.b16 %v4798, %v4794
    %v5219 = vpack.c.b16 %v4799, %v4795
    %v5220 = vpack.c.b16 %v4804, %v4800
    %v5221 = vpack.c.b16 %v4805, %v4801
    %v5222 = vpack.c.b16 %v4806, %v4802
    %v5223 = vpack.c.b16 %v4807, %v4803
    %v5224 = vpack.c.b16 %v4812, %v4808
    %v5225 = vpack.c.b16 %v4813, %v4809
    %v5226 = vpack.c.b16 %v4814, %v4810
    %v5227 = vpack.c.b16 %v4815, %v4811
    %v5228 = vpack.c.b16 %v4820, %v4816
    %v5229 = vpack.c.b16 %v4821, %v4817
    %v5230 = vpack.c.b16 %v4822, %v4818
    %v5231 = vpack.c.b16 %v4823, %v4819
    %v5232 = vpack.c.b16 %v4828, %v4824
    %v5233 = vpack.c.b16 %v4829, %v4825
    %v5234 = vpack.c.b16 %v4830, %v4826
    %v5235 = vpack.c.b16 %v4831, %v4827
    %v5236 = vpack.c.b16 %v4836, %v4832
    %v5237 = vpack.c.b16 %v4837, %v4833
    %v5238 = vpack.c.b16 %v4838, %v4834
    %v5239 = vpack.c.b16 %v4839, %v4835
    %v5240 = vpack.c.b16 %v4844, %v4840
    %v5241 = vpack.c.b16 %v4845, %v4841
    %v5242 = vpack.c.b16 %v4846, %v4842
    %v5243 = vpack.c.b16 %v4847, %v4843
    %v5244 = vpack.c.b16 %v4852, %v4848
    %v5245 = vpack.c.b16 %v4853, %v4849
    %v5246 = vpack.c.b16 %v4854, %v4850
    %v5247 = vpack.c.b16 %v4855, %v4851
    %v5248 = vpack.c.b16 %v4860, %v4856
    %v5249 = vpack.c.b16 %v4861, %v4857
    %v5250 = vpack.c.b16 %v4862, %v4858
    %v5251 = vpack.c.b16 %v4863, %v4859
    %v5252 = vpack.c.b16 %v4868, %v4864
    %v5253 = vpack.c.b16 %v4869, %v4865
    %v5254 = vpack.c.b16 %v4870, %v4866
    %v5255 = vpack.c.b16 %v4871, %v4867
    %v5256 = vpack.c.b16 %v4876, %v4872
    %v5257 = vpack.c.b16 %v4877, %v4873
    %v5258 = vpack.c.b16 %v4878, %v4874
    %v5259 = vpack.c.b16 %v4879, %v4875
    %v5260 = vpack.c.b16 %v4884, %v4880
    %v5261 = vpack.c.b16 %v4885, %v4881
    %v5262 = vpack.c.b16 %v4886, %v4882
    %v5263 = vpack.c.b16 %v4887, %v4883
    %v5264 = vpack.c.b16 %v4892, %v4888
    %v5265 = vpack.c.b16 %v4893, %v4889
    %v5266 = vpack.c.b16 %v4894, %v4890
    %v5267 = vpack.c.b16 %v4895, %v4891
    %v5268 = vpack.c.b16 %v4900, %v4896
    %v5269 = vpack.c.b16 %v4901, %v4897
    %v5270 = vpack.c.b16 %v4902, %v4898
    %v5271 = vpack.c.b16 %v4903, %v4899
    %v5272 = vpack.c.b16 %v4908, %v4904
    %v5273 = vpack.c.b16 %v4909, %v4905
    %v5274 = vpack.c.b16 %v4910, %v4906
    %v5275 = vpack.c.b16 %v4911, %v4907
    %v5276 = vpack.c.b16 %v4916, %v4912
    %v5277 = vpack.c.b16 %v4917, %v4913
    %v5278 = vpack.c.b16 %v4918, %v4914
    %v5279 = vpack.c.b16 %v4919, %v4915
    %v5280 = vpack.c.b16 %v4924, %v4920
    %v5281 = vpack.c.b16 %v4925, %v4921
    %v5282 = vpack.c.b16 %v4926, %v4922
    %v5283 = vpack.c.b16 %v4927, %v4923
    %v5284 = vpack.c.b16 %v4932, %v4928
    %v5285 = vpack.c.b16 %v4933, %v4929
    %v5286 = vpack.c.b16 %v4934, %v4930
    %v5287 = vpack.c.b16 %v4935, %v4931
    %v5288 = vpack.c.b16 %v4940, %v4936
    %v5289 = vpack.c.b16 %v4941, %v4937
    %v5290 = vpack.c.b16 %v4942, %v4938
    %v5291 = vpack.c.b16 %v4943, %v4939
    %v5292 = vpack.c.b16 %v4948, %v4944
    %v5293 = vpack.c.b16 %v4949, %v4945
    %v5294 = vpack.c.b16 %v4950, %v4946
    %v5295 = vpack.c.b16 %v4951, %v4947
    %v5296 = vpack.c.b16 %v4956, %v4952
    %v5297 = vpack.c.b16 %v4957, %v4953
    %v5298 = vpack.c.b16 %v4958, %v4954
    %v5299 = vpack.c.b16 %v4959, %v4955
    %v5300 = vpack.c.b16 %v4964, %v4960
    %v5301 = vpack.c.b16 %v4965, %v4961
    %v5302 = vpack.c.b16 %v4966, %v4962
    %v5303 = vpack.c.b16 %v4967, %v4963
    %v5304 = vpack.c.b16 %v4972, %v4968
    %v5305 = vpack.c.b16 %v4973, %v4969
    %v5306 = vpack.c.b16 %v4974, %v4970
    %v5307 = vpack.c.b16 %v4975, %v4971
    %v5308 = vpack.c.b16 %v4980, %v4976
    %v5309 = vpack.c.b16 %v4981, %v4977
    %v5310 = vpack.c.b16 %v4982, %v4978
    %v5311 = vpack.c.b16 %v4983, %v4979
    %v5312 = vpack.c.b16 %v4988, %v4984
    %v5313 = vpack.c.b16 %v4989, %v4985
    %v5314 = vpack.c.b16 %v4990, %v4986
    %v5315 = vpack.c.b16 %v4991, %v4987
    %v5316 = vpack.c.b16 %v4996, %v4992
    %v5317 = vpack.c.b16 %v4997, %v4993
    %v5318 = vpack.c.b16 %v4998, %v4994
    %v5319 = vpack.c.b16 %v4999, %v4995
    %v5320 = vpack.c.b16 %v5004, %v5000
    %v5321 = vpack.c.b16 %v5005, %v5001
    %v5322 = vpack.c.b16 %v5006, %v5002
    %v5323 = vpack.c.b16 %v5007, %v5003
    %v5324 = vpack.c.b16 %v5012, %v5008
    %v5325 = vpack.c.b16 %v5013, %v5009
    %v5326 = vpack.c.b16 %v5014, %v5010
    %v5327 = vpack.c.b16 %v5015, %v5011
    %v5328 = vpack.c.b16 %v5020, %v5016
    %v5329 = vpack.c.b16 %v5021, %v5017
    %v5330 = vpack.c.b16 %v5022, %v5018
    %v5331 = vpack.c.b16 %v5023, %v5019
    %v5332 = vpack.c.b16 %v5028, %v5024
    %v5333 = vpack.c.b16 %v5029, %v5025
    %v5334 = vpack.c.b16 %v5030, %v5026
    %v5335 = vpack.c.b16 %v5031, %v5027
    %v5336 = vpack.c.b16 %v5036, %v5032
    %v5337 = vpack.c.b16 %v5037, %v5033
    %v5338 = vpack.c.b16 %v5038, %v5034
    %v5339 = vpack.c.b16 %v5039, %v5035
    %v5340 = vpack.c.b16 %v5044, %v5040
    %v5341 = vpack.c.b16 %v5045, %v5041
    %v5342 = vpack.c.b16 %v5046, %v5042
    %v5343 = vpack.c.b16 %v5047, %v5043
    %v5344 = vpack.c.b16 %v5052, %v5048
    %v5345 = vpack.c.b16 %v5053, %v5049
    %v5346 = vpack.c.b16 %v5054, %v5050
    %v5347 = vpack.c.b16 %v5055, %v5051
    %v5348 = vpack.c.b16 %v5060, %v5056
    %v5349 = vpack.c.b16 %v5061, %v5057
    %v5350 = vpack.c.b16 %v5062, %v5058
    %v5351 = vpack.c.b16 %v5063, %v5059
    %v5352 = vpack.c.b16 %v5068, %v5064
    %v5353 = vpack.c.b16 %v5069, %v5065
    %v5354 = vpack.c.b16 %v5070, %v5066
    %v5355 = vpack.c.b16 %v5071, %v5067
    %v5356 = vpack.c.b16 %v5076, %v5072
    %v5357 = vpack.c.b16 %v5077, %v5073
    %v5358 = vpack.c.b16 %v5078, %v5074
    %v5359 = vpack.c.b16 %v5079, %v5075
    %v5360 = vpack.c.b16 %v5084, %v5080
    %v5361 = vpack.c.b16 %v5085, %v5081
    %v5362 = vpack.c.b16 %v5086, %v5082
    %v5363 = vpack.c.b16 %v5087, %v5083
    %v5364 = vpack.c.b16 %v5092, %v5088
    %v5365 = vpack.c.b16 %v5093, %v5089
    %v5366 = vpack.c.b16 %v5094, %v5090
    %v5367 = vpack.c.b16 %v5095, %v5091
    %v5368 = vpack.c.b16 %v5100, %v5096
    %v5369 = vpack.c.b16 %v5101, %v5097
    %v5370 = vpack.c.b16 %v5102, %v5098
    %v5371 = vpack.c.b16 %v5103, %v5099
    %v5372 = vpack.c.b16 %v5108, %v5104
    %v5373 = vpack.c.b16 %v5109, %v5105
    %v5374 = vpack.c.b16 %v5110, %v5106
    %v5375 = vpack.c.b16 %v5111, %v5107
    %v5376 = vpack.c.b16 %v5116, %v5112
    %v5377 = vpack.c.b16 %v5117, %v5113
    %v5378 = vpack.c.b16 %v5118, %v5114
    %v5379 = vpack.c.b16 %v5119, %v5115
    %v5380 = vpack.c.b16 %v5124, %v5120
    %v5381 = vpack.c.b16 %v5125, %v5121
    %v5382 = vpack.c.b16 %v5126, %v5122
    %v5383 = vpack.c.b16 %v5127, %v5123
    %5640 = vmatprep.subr.bf16.mxu0 %v5129
    %5641 = vmatpush1.bf16.msra.mxu0 %v5128
    %5642 = vmatprep.subr.bf16.mxu0 %v5133
    %5643 = vmatpush1.bf16.msra.mxu0 %v5132
    %5644 = vmatprep.subr.bf16.mxu0 %v5137
    %5645 = vmatpush1.bf16.msra.mxu0 %v5136
    %5646 = vmatprep.subr.bf16.mxu0 %v5141
    %5647 = vmatpush1.bf16.msra.mxu0 %v5140
    %5648 = vmatprep.subr.bf16.mxu0 %v5145
    %5649 = vmatpush1.bf16.msra.mxu0 %v5144
    %5650 = vmatprep.subr.bf16.mxu0 %v5149
    %5651 = vmatpush1.bf16.msra.mxu0 %v5148
    %5652 = vmatprep.subr.bf16.mxu0 %v5153
    %5653 = vmatpush1.bf16.msra.mxu0 %v5152
    %5654 = vmatprep.subr.bf16.mxu0 %v5157
    %5655 = vmatpush1.bf16.msra.mxu0 %v5156
    %5656 = vmatprep.subr.bf16.mxu0 %v5161
    %5657 = vmatpush1.bf16.msra.mxu0 %v5160
    %5658 = vmatprep.subr.bf16.mxu0 %v5165
    %5659 = vmatpush1.bf16.msra.mxu0 %v5164
    %5660 = vmatprep.subr.bf16.mxu0 %v5169
    %5661 = vmatpush1.bf16.msra.mxu0 %v5168
    %5662 = vmatprep.subr.bf16.mxu0 %v5173
    %5663 = vmatpush1.bf16.msra.mxu0 %v5172
    %5664 = vmatprep.subr.bf16.mxu0 %v5177
    %5665 = vmatpush1.bf16.msra.mxu0 %v5176
    %5666 = vmatprep.subr.bf16.mxu0 %v5181
    %5667 = vmatpush1.bf16.msra.mxu0 %v5180
    %5668 = vmatprep.subr.bf16.mxu0 %v5185
    %5669 = vmatpush1.bf16.msra.mxu0 %v5184
    %5670 = vmatprep.subr.bf16.mxu0 %v5189
    %5671 = vmatpush1.bf16.msra.mxu0 %v5188
    %5672 = vmatprep.mubr.bf16.mxu0 %v4019
    %5673 = vmatmul.mubr.bf16.gmra.mrb[0].mxu0 %v4018
    %v5674 = vpop.f32.mrb[0].mxu0
    %v5675 = vadd.f32 %v4343, %v5674
    %v5676 = vpop.f32.mrb[0].mxu0
    %v5677 = vadd.f32 %v4347, %v5676
    %v5678 = vpop.f32.mrb[0].mxu0
    %v5679 = vadd.f32 %v4343, %v5678
    %v5680 = vpop.f32.mrb[0].mxu0
    %v5681 = vadd.f32 %v4347, %v5680
    %5682 = vmatprep.mubr.bf16.mxu0 %v4027
    %5683 = vmatmul.mubr.bf16.gmra.mrb[0].mxu0 %v4026
    %v5684 = vpop.f32.mrb[0].mxu0
    %v5685 = vadd.f32 %v4343, %v5684
    %v5686 = vpop.f32.mrb[0].mxu0
    %v5687 = vadd.f32 %v4347, %v5686
    %v5688 = vpop.f32.mrb[0].mxu0
    %v5689 = vadd.f32 %v4343, %v5688
    %v5690 = vpop.f32.mrb[0].mxu0
    %v5691 = vadd.f32 %v4347, %v5690
    %5692 = vmatprep.mubr.bf16.mxu0 %v4035
    %5693 = vmatmul.mubr.bf16.gmra.mrb[0].mxu0 %v4034
    %v5694 = vpop.f32.mrb[0].mxu0
    %v5695 = vadd.f32 %v4343, %v5694
    %v5696 = vpop.f32.mrb[0].mxu0
    %v5697 = vadd.f32 %v4347, %v5696
    %v5698 = vpop.f32.mrb[0].mxu0
    %v5699 = vadd.f32 %v4343, %v5698
    %v5700 = vpop.f32.mrb[0].mxu0
    %v5701 = vadd.f32 %v4347, %v5700
    %5702 = vmatprep.mubr.bf16.mxu0 %v4043
    %5703 = vmatmul.mubr.bf16.gmra.mrb[0].mxu0 %v4042
    %v5704 = vpop.f32.mrb[0].mxu0
    %v5705 = vadd.f32 %v4343, %v5704
    %v5706 = vpop.f32.mrb[0].mxu0
    %v5707 = vadd.f32 %v4347, %v5706
    %v5708 = vpop.f32.mrb[0].mxu0
    %v5709 = vadd.f32 %v4343, %v5708
    %v5710 = vpop.f32.mrb[0].mxu0
    %v5711 = vadd.f32 %v4347, %v5710
    %5712 = vmatprep.mubr.bf16.mxu0 %v4051
    %5713 = vmatmul.mubr.bf16.gmra.mrb[0].mxu0 %v4050
    %v5714 = vpop.f32.mrb[0].mxu0
    %v5715 = vadd.f32 %v4343, %v5714
    %v5716 = vpop.f32.mrb[0].mxu0
    %v5717 = vadd.f32 %v4347, %v5716
    %v5718 = vpop.f32.mrb[0].mxu0
    %v5719 = vadd.f32 %v4343, %v5718
    %v5720 = vpop.f32.mrb[0].mxu0
    %v5721 = vadd.f32 %v4347, %v5720
    %5722 = vmatprep.mubr.bf16.mxu0 %v4059
    %5723 = vmatmul.mubr.bf16.gmra.mrb[0].mxu0 %v4058
    %v5724 = vpop.f32.mrb[0].mxu0
    %v5725 = vadd.f32 %v4343, %v5724
    %v5726 = vpop.f32.mrb[0].mxu0
    %v5727 = vadd.f32 %v4347, %v5726
    %v5728 = vpop.f32.mrb[0].mxu0
    %v5729 = vadd.f32 %v4343, %v5728
    %v5730 = vpop.f32.mrb[0].mxu0
    %v5731 = vadd.f32 %v4347, %v5730
    %5732 = vmatprep.mubr.bf16.mxu0 %v4067
    %5733 = vmatmul.mubr.bf16.gmra.mrb[0].mxu0 %v4066
    %v5734 = vpop.f32.mrb[0].mxu0
    %v5735 = vadd.f32 %v4343, %v5734
    %v5736 = vpop.f32.mrb[0].mxu0
    %v5737 = vadd.f32 %v4347, %v5736
    %v5738 = vpop.f32.mrb[0].mxu0
    %v5739 = vadd.f32 %v4343, %v5738
    %v5740 = vpop.f32.mrb[0].mxu0
    %v5741 = vadd.f32 %v4347, %v5740
    %5742 = vmatprep.mubr.bf16.mxu0 %v4075
    %5743 = vmatmul.mubr.bf16.gmra.mrb[0].mxu0 %v4074
    %v5744 = vpop.f32.mrb[0].mxu0
    %v5745 = vadd.f32 %v4343, %v5744
    %v5746 = vpop.f32.mrb[0].mxu0
    %v5747 = vadd.f32 %v4347, %v5746
    %v5748 = vpop.f32.mrb[0].mxu0
    %v5749 = vadd.f32 %v4343, %v5748
    %v5750 = vpop.f32.mrb[0].mxu0
    %v5751 = vadd.f32 %v4347, %v5750
    %5752 = vdwg.mxu0
    %5753 = vmatprep.subr.bf16.mxu0 %v5193
    %5754 = vmatpush1.bf16.msra.mxu0 %v5192
    %5755 = vmatprep.subr.bf16.mxu0 %v5197
    %5756 = vmatpush1.bf16.msra.mxu0 %v5196
    %5757 = vmatprep.subr.bf16.mxu0 %v5201
    %5758 = vmatpush1.bf16.msra.mxu0 %v5200
    %5759 = vmatprep.subr.bf16.mxu0 %v5205
    %5760 = vmatpush1.bf16.msra.mxu0 %v5204
    %5761 = vmatprep.subr.bf16.mxu0 %v5209
    %5762 = vmatpush1.bf16.msra.mxu0 %v5208
    %5763 = vmatprep.subr.bf16.mxu0 %v5213
    %5764 = vmatpush1.bf16.msra.mxu0 %v5212
    %5765 = vmatprep.subr.bf16.mxu0 %v5217
    %5766 = vmatpush1.bf16.msra.mxu0 %v5216
    %5767 = vmatprep.subr.bf16.mxu0 %v5221
    %5768 = vmatpush1.bf16.msra.mxu0 %v5220
    %5769 = vmatprep.subr.bf16.mxu0 %v5225
    %5770 = vmatpush1.bf16.msra.mxu0 %v5224
    %5771 = vmatprep.subr.bf16.mxu0 %v5229
    %5772 = vmatpush1.bf16.msra.mxu0 %v5228
    %5773 = vmatprep.subr.bf16.mxu0 %v5233
    %5774 = vmatpush1.bf16.msra.mxu0 %v5232
    %5775 = vmatprep.subr.bf16.mxu0 %v5237
    %5776 = vmatpush1.bf16.msra.mxu0 %v5236
    %5777 = vmatprep.subr.bf16.mxu0 %v5241
    %5778 = vmatpush1.bf16.msra.mxu0 %v5240
    %5779 = vmatprep.subr.bf16.mxu0 %v5245
    %5780 = vmatpush1.bf16.msra.mxu0 %v5244
    %5781 = vmatprep.subr.bf16.mxu0 %v5249
    %5782 = vmatpush1.bf16.msra.mxu0 %v5248
    %5783 = vmatprep.subr.bf16.mxu0 %v5253
    %5784 = vmatpush1.bf16.msra.mxu0 %v5252
    %5785 = vmatprep.mubr.bf16.mxu0 %v4021
    %5786 = vmatmul.mubr.bf16.gmra.mrb[0].mxu0 %v4020
    %v5787 = vpop.f32.mrb[0].mxu0
    %v5788 = vadd.f32 %v5675, %v5787
    %v5789 = vpop.f32.mrb[0].mxu0
    %v5790 = vadd.f32 %v5677, %v5789
    %v5791 = vpop.f32.mrb[0].mxu0
    %v5792 = vadd.f32 %v5679, %v5791
    %v5793 = vpop.f32.mrb[0].mxu0
    %v5794 = vadd.f32 %v5681, %v5793
    %5795 = vmatprep.mubr.bf16.mxu0 %v4029
    %5796 = vmatmul.mubr.bf16.gmra.mrb[0].mxu0 %v4028
    %v5797 = vpop.f32.mrb[0].mxu0
    %v5798 = vadd.f32 %v5685, %v5797
    %v5799 = vpop.f32.mrb[0].mxu0
    %v5800 = vadd.f32 %v5687, %v5799
    %v5801 = vpop.f32.mrb[0].mxu0
    %v5802 = vadd.f32 %v5689, %v5801
    %v5803 = vpop.f32.mrb[0].mxu0
    %v5804 = vadd.f32 %v5691, %v5803
    %5805 = vmatprep.mubr.bf16.mxu0 %v4037
    %5806 = vmatmul.mubr.bf16.gmra.mrb[0].mxu0 %v4036
    %v5807 = vpop.f32.mrb[0].mxu0
    %v5808 = vadd.f32 %v5695, %v5807
    %v5809 = vpop.f32.mrb[0].mxu0
    %v5810 = vadd.f32 %v5697, %v5809
    %v5811 = vpop.f32.mrb[0].mxu0
    %v5812 = vadd.f32 %v5699, %v5811
    %v5813 = vpop.f32.mrb[0].mxu0
    %v5814 = vadd.f32 %v5701, %v5813
    %5815 = vmatprep.mubr.bf16.mxu0 %v4045
    %5816 = vmatmul.mubr.bf16.gmra.mrb[0].mxu0 %v4044
    %v5817 = vpop.f32.mrb[0].mxu0
    %v5818 = vadd.f32 %v5705, %v5817
    %v5819 = vpop.f32.mrb[0].mxu0
    %v5820 = vadd.f32 %v5707, %v5819
    %v5821 = vpop.f32.mrb[0].mxu0
    %v5822 = vadd.f32 %v5709, %v5821
    %v5823 = vpop.f32.mrb[0].mxu0
    %v5824 = vadd.f32 %v5711, %v5823
    %5825 = vmatprep.mubr.bf16.mxu0 %v4053
    %5826 = vmatmul.mubr.bf16.gmra.mrb[0].mxu0 %v4052
    %v5827 = vpop.f32.mrb[0].mxu0
    %v5828 = vadd.f32 %v5715, %v5827
    %v5829 = vpop.f32.mrb[0].mxu0
    %v5830 = vadd.f32 %v5717, %v5829
    %v5831 = vpop.f32.mrb[0].mxu0
    %v5832 = vadd.f32 %v5719, %v5831
    %v5833 = vpop.f32.mrb[0].mxu0
    %v5834 = vadd.f32 %v5721, %v5833
    %5835 = vmatprep.mubr.bf16.mxu0 %v4061
    %5836 = vmatmul.mubr.bf16.gmra.mrb[0].mxu0 %v4060
    %v5837 = vpop.f32.mrb[0].mxu0
    %v5838 = vadd.f32 %v5725, %v5837
    %v5839 = vpop.f32.mrb[0].mxu0
    %v5840 = vadd.f32 %v5727, %v5839
    %v5841 = vpop.f32.mrb[0].mxu0
    %v5842 = vadd.f32 %v5729, %v5841
    %v5843 = vpop.f32.mrb[0].mxu0
    %v5844 = vadd.f32 %v5731, %v5843
    %5845 = vmatprep.mubr.bf16.mxu0 %v4069
    %5846 = vmatmul.mubr.bf16.gmra.mrb[0].mxu0 %v4068
    %v5847 = vpop.f32.mrb[0].mxu0
    %v5848 = vadd.f32 %v5735, %v5847
    %v5849 = vpop.f32.mrb[0].mxu0
    %v5850 = vadd.f32 %v5737, %v5849
    %v5851 = vpop.f32.mrb[0].mxu0
    %v5852 = vadd.f32 %v5739, %v5851
    %v5853 = vpop.f32.mrb[0].mxu0
    %v5854 = vadd.f32 %v5741, %v5853
    %5855 = vmatprep.mubr.bf16.mxu0 %v4077
    %5856 = vmatmul.mubr.bf16.gmra.mrb[0].mxu0 %v4076
    %v5857 = vpop.f32.mrb[0].mxu0
    %v5858 = vadd.f32 %v5745, %v5857
    %v5859 = vpop.f32.mrb[0].mxu0
    %v5860 = vadd.f32 %v5747, %v5859
    %v5861 = vpop.f32.mrb[0].mxu0
    %v5862 = vadd.f32 %v5749, %v5861
    %v5863 = vpop.f32.mrb[0].mxu0
    %v5864 = vadd.f32 %v5751, %v5863
    %5865 = vdwg.mxu0
    %5866 = vmatprep.subr.bf16.mxu0 %v5257
    %5867 = vmatpush1.bf16.msra.mxu0 %v5256
    %5868 = vmatprep.subr.bf16.mxu0 %v5261
    %5869 = vmatpush1.bf16.msra.mxu0 %v5260
    %5870 = vmatprep.subr.bf16.mxu0 %v5265
    %5871 = vmatpush1.bf16.msra.mxu0 %v5264
    %5872 = vmatprep.subr.bf16.mxu0 %v5269
    %5873 = vmatpush1.bf16.msra.mxu0 %v5268
    %5874 = vmatprep.subr.bf16.mxu0 %v5273
    %5875 = vmatpush1.bf16.msra.mxu0 %v5272
    %5876 = vmatprep.subr.bf16.mxu0 %v5277
    %5877 = vmatpush1.bf16.msra.mxu0 %v5276
    %5878 = vmatprep.subr.bf16.mxu0 %v5281
    %5879 = vmatpush1.bf16.msra.mxu0 %v5280
    %5880 = vmatprep.subr.bf16.mxu0 %v5285
    %5881 = vmatpush1.bf16.msra.mxu0 %v5284
    %5882 = vmatprep.subr.bf16.mxu0 %v5289
    %5883 = vmatpush1.bf16.msra.mxu0 %v5288
    %5884 = vmatprep.subr.bf16.mxu0 %v5293
    %5885 = vmatpush1.bf16.msra.mxu0 %v5292
    %5886 = vmatprep.subr.bf16.mxu0 %v5297
    %5887 = vmatpush1.bf16.msra.mxu0 %v5296
    %5888 = vmatprep.subr.bf16.mxu0 %v5301
    %5889 = vmatpush1.bf16.msra.mxu0 %v5300
    %5890 = vmatprep.subr.bf16.mxu0 %v5305
    %5891 = vmatpush1.bf16.msra.mxu0 %v5304
    %5892 = vmatprep.subr.bf16.mxu0 %v5309
    %5893 = vmatpush1.bf16.msra.mxu0 %v5308
    %5894 = vmatprep.subr.bf16.mxu0 %v5313
    %5895 = vmatpush1.bf16.msra.mxu0 %v5312
    %5896 = vmatprep.subr.bf16.mxu0 %v5317
    %5897 = vmatpush1.bf16.msra.mxu0 %v5316
    %5898 = vmatprep.mubr.bf16.mxu0 %v4023
    %5899 = vmatmul.mubr.bf16.gmra.mrb[0].mxu0 %v4022
    %v5900 = vpop.f32.mrb[0].mxu0
    %v5901 = vadd.f32 %v5788, %v5900
    %v5902 = vpop.f32.mrb[0].mxu0
    %v5903 = vadd.f32 %v5790, %v5902
    %v5904 = vpop.f32.mrb[0].mxu0
    %v5905 = vadd.f32 %v5792, %v5904
    %v5906 = vpop.f32.mrb[0].mxu0
    %v5907 = vadd.f32 %v5794, %v5906
    %5908 = vmatprep.mubr.bf16.mxu0 %v4031
    %5909 = vmatmul.mubr.bf16.gmra.mrb[0].mxu0 %v4030
    %v5910 = vpop.f32.mrb[0].mxu0
    %v5911 = vadd.f32 %v5798, %v5910
    %v5912 = vpop.f32.mrb[0].mxu0
    %v5913 = vadd.f32 %v5800, %v5912
    %v5914 = vpop.f32.mrb[0].mxu0
    %v5915 = vadd.f32 %v5802, %v5914
    %v5916 = vpop.f32.mrb[0].mxu0
    %v5917 = vadd.f32 %v5804, %v5916
    %5918 = vmatprep.mubr.bf16.mxu0 %v4039
    %5919 = vmatmul.mubr.bf16.gmra.mrb[0].mxu0 %v4038
    %v5920 = vpop.f32.mrb[0].mxu0
    %v5921 = vadd.f32 %v5808, %v5920
    %v5922 = vpop.f32.mrb[0].mxu0
    %v5923 = vadd.f32 %v5810, %v5922
    %v5924 = vpop.f32.mrb[0].mxu0
    %v5925 = vadd.f32 %v5812, %v5924
    %v5926 = vpop.f32.mrb[0].mxu0
    %v5927 = vadd.f32 %v5814, %v5926
    %5928 = vmatprep.mubr.bf16.mxu0 %v4047
    %5929 = vmatmul.mubr.bf16.gmra.mrb[0].mxu0 %v4046
    %v5930 = vpop.f32.mrb[0].mxu0
    %v5931 = vadd.f32 %v5818, %v5930
    %v5932 = vpop.f32.mrb[0].mxu0
    %v5933 = vadd.f32 %v5820, %v5932
    %v5934 = vpop.f32.mrb[0].mxu0
    %v5935 = vadd.f32 %v5822, %v5934
    %v5936 = vpop.f32.mrb[0].mxu0
    %v5937 = vadd.f32 %v5824, %v5936
    %5938 = vmatprep.mubr.bf16.mxu0 %v4055
    %5939 = vmatmul.mubr.bf16.gmra.mrb[0].mxu0 %v4054
    %v5940 = vpop.f32.mrb[0].mxu0
    %v5941 = vadd.f32 %v5828, %v5940
    %v5942 = vpop.f32.mrb[0].mxu0
    %v5943 = vadd.f32 %v5830, %v5942
    %v5944 = vpop.f32.mrb[0].mxu0
    %v5945 = vadd.f32 %v5832, %v5944
    %v5946 = vpop.f32.mrb[0].mxu0
    %v5947 = vadd.f32 %v5834, %v5946
    %5948 = vmatprep.mubr.bf16.mxu0 %v4063
    %5949 = vmatmul.mubr.bf16.gmra.mrb[0].mxu0 %v4062
    %v5950 = vpop.f32.mrb[0].mxu0
    %v5951 = vadd.f32 %v5838, %v5950
    %v5952 = vpop.f32.mrb[0].mxu0
    %v5953 = vadd.f32 %v5840, %v5952
    %v5954 = vpop.f32.mrb[0].mxu0
    %v5955 = vadd.f32 %v5842, %v5954
    %v5956 = vpop.f32.mrb[0].mxu0
    %v5957 = vadd.f32 %v5844, %v5956
    %5958 = vmatprep.mubr.bf16.mxu0 %v4071
    %5959 = vmatmul.mubr.bf16.gmra.mrb[0].mxu0 %v4070
    %v5960 = vpop.f32.mrb[0].mxu0
    %v5961 = vadd.f32 %v5848, %v5960
    %v5962 = vpop.f32.mrb[0].mxu0
    %v5963 = vadd.f32 %v5850, %v5962
    %v5964 = vpop.f32.mrb[0].mxu0
    %v5965 = vadd.f32 %v5852, %v5964
    %v5966 = vpop.f32.mrb[0].mxu0
    %v5967 = vadd.f32 %v5854, %v5966
    %5968 = vmatprep.mubr.bf16.mxu0 %v4079
    %5969 = vmatmul.mubr.bf16.gmra.mrb[0].mxu0 %v4078
    %v5970 = vpop.f32.mrb[0].mxu0
    %v5971 = vadd.f32 %v5858, %v5970
    %v5972 = vpop.f32.mrb[0].mxu0
    %v5973 = vadd.f32 %v5860, %v5972
    %v5974 = vpop.f32.mrb[0].mxu0
    %v5975 = vadd.f32 %v5862, %v5974
    %v5976 = vpop.f32.mrb[0].mxu0
    %v5977 = vadd.f32 %v5864, %v5976
    %5978 = vdwg.mxu0
    %5979 = vmatprep.subr.bf16.mxu0 %v5321
    %5980 = vmatpush1.bf16.msra.mxu0 %v5320
    %5981 = vmatprep.subr.bf16.mxu0 %v5325
    %5982 = vmatpush1.bf16.msra.mxu0 %v5324
    %5983 = vmatprep.subr.bf16.mxu0 %v5329
    %5984 = vmatpush1.bf16.msra.mxu0 %v5328
    %5985 = vmatprep.subr.bf16.mxu0 %v5333
    %5986 = vmatpush1.bf16.msra.mxu0 %v5332
    %5987 = vmatprep.subr.bf16.mxu0 %v5337
    %5988 = vmatpush1.bf16.msra.mxu0 %v5336
    %5989 = vmatprep.subr.bf16.mxu0 %v5341
    %5990 = vmatpush1.bf16.msra.mxu0 %v5340
    %5991 = vmatprep.subr.bf16.mxu0 %v5345
    %5992 = vmatpush1.bf16.msra.mxu0 %v5344
    %5993 = vmatprep.subr.bf16.mxu0 %v5349
    %5994 = vmatpush1.bf16.msra.mxu0 %v5348
    %5995 = vmatprep.subr.bf16.mxu0 %v5353
    %5996 = vmatpush1.bf16.msra.mxu0 %v5352
    %5997 = vmatprep.subr.bf16.mxu0 %v5357
    %5998 = vmatpush1.bf16.msra.mxu0 %v5356
    %5999 = vmatprep.subr.bf16.mxu0 %v5361
    %6000 = vmatpush1.bf16.msra.mxu0 %v5360
    %6001 = vmatprep.subr.bf16.mxu0 %v5365
    %6002 = vmatpush1.bf16.msra.mxu0 %v5364
    %6003 = vmatprep.subr.bf16.mxu0 %v5369
    %6004 = vmatpush1.bf16.msra.mxu0 %v5368
    %6005 = vmatprep.subr.bf16.mxu0 %v5373
    %6006 = vmatpush1.bf16.msra.mxu0 %v5372
    %6007 = vmatprep.subr.bf16.mxu0 %v5377
    %6008 = vmatpush1.bf16.msra.mxu0 %v5376
    %6009 = vmatprep.subr.bf16.mxu0 %v5381
    %6010 = vmatpush1.bf16.msra.mxu0 %v5380
    %6011 = vmatprep.mubr.bf16.mxu0 %v4025
    %6012 = vmatmul.mubr.bf16.gmra.mrb[0].mxu0 %v4024
    %v6013 = vpop.f32.mrb[0].mxu0
    %v6014 = vadd.f32 %v5901, %v6013
    %v6015 = vpop.f32.mrb[0].mxu0
    %v6016 = vadd.f32 %v5903, %v6015
    %v6017 = vpop.f32.mrb[0].mxu0
    %v6018 = vadd.f32 %v5905, %v6017
    %v6019 = vpop.f32.mrb[0].mxu0
    %v6020 = vadd.f32 %v5907, %v6019
    %6021 = vmatprep.mubr.bf16.mxu0 %v4033
    %6022 = vmatmul.mubr.bf16.gmra.mrb[0].mxu0 %v4032
    %v6023 = vpop.f32.mrb[0].mxu0
    %v6024 = vadd.f32 %v5911, %v6023
    %v6025 = vpop.f32.mrb[0].mxu0
    %v6026 = vadd.f32 %v5913, %v6025
    %v6027 = vpop.f32.mrb[0].mxu0
    %v6028 = vadd.f32 %v5915, %v6027
    %v6029 = vpop.f32.mrb[0].mxu0
    %v6030 = vadd.f32 %v5917, %v6029
    %6031 = vmatprep.mubr.bf16.mxu0 %v4041
    %6032 = vmatmul.mubr.bf16.gmra.mrb[0].mxu0 %v4040
    %v6033 = vpop.f32.mrb[0].mxu0
    %v6034 = vadd.f32 %v5921, %v6033
    %v6035 = vpop.f32.mrb[0].mxu0
    %v6036 = vadd.f32 %v5923, %v6035
    %v6037 = vpop.f32.mrb[0].mxu0
    %v6038 = vadd.f32 %v5925, %v6037
    %v6039 = vpop.f32.mrb[0].mxu0
    %v6040 = vadd.f32 %v5927, %v6039
    %6041 = vmatprep.mubr.bf16.mxu0 %v4049
    %6042 = vmatmul.mubr.bf16.gmra.mrb[0].mxu0 %v4048
    %v6043 = vpop.f32.mrb[0].mxu0
    %v6044 = vadd.f32 %v5931, %v6043
    %v6045 = vpop.f32.mrb[0].mxu0
    %v6046 = vadd.f32 %v5933, %v6045
    %v6047 = vpop.f32.mrb[0].mxu0
    %v6048 = vadd.f32 %v5935, %v6047
    %v6049 = vpop.f32.mrb[0].mxu0
    %v6050 = vadd.f32 %v5937, %v6049
    %6051 = vmatprep.mubr.bf16.mxu0 %v4057
    %6052 = vmatmul.mubr.bf16.gmra.mrb[0].mxu0 %v4056
    %v6053 = vpop.f32.mrb[0].mxu0
    %v6054 = vadd.f32 %v5941, %v6053
    %v6055 = vpop.f32.mrb[0].mxu0
    %v6056 = vadd.f32 %v5943, %v6055
    %v6057 = vpop.f32.mrb[0].mxu0
    %v6058 = vadd.f32 %v5945, %v6057
    %v6059 = vpop.f32.mrb[0].mxu0
    %v6060 = vadd.f32 %v5947, %v6059
    %6061 = vmatprep.mubr.bf16.mxu0 %v4065
    %6062 = vmatmul.mubr.bf16.gmra.mrb[0].mxu0 %v4064
    %v6063 = vpop.f32.mrb[0].mxu0
    %v6064 = vadd.f32 %v5951, %v6063
    %v6065 = vpop.f32.mrb[0].mxu0
    %v6066 = vadd.f32 %v5953, %v6065
    %v6067 = vpop.f32.mrb[0].mxu0
    %v6068 = vadd.f32 %v5955, %v6067
    %v6069 = vpop.f32.mrb[0].mxu0
    %v6070 = vadd.f32 %v5957, %v6069
    %6071 = vmatprep.mubr.bf16.mxu0 %v4073
    %6072 = vmatmul.mubr.bf16.gmra.mrb[0].mxu0 %v4072
    %v6073 = vpop.f32.mrb[0].mxu0
    %v6074 = vadd.f32 %v5961, %v6073
    %v6075 = vpop.f32.mrb[0].mxu0
    %v6076 = vadd.f32 %v5963, %v6075
    %v6077 = vpop.f32.mrb[0].mxu0
    %v6078 = vadd.f32 %v5965, %v6077
    %v6079 = vpop.f32.mrb[0].mxu0
    %v6080 = vadd.f32 %v5967, %v6079
    %6081 = vmatprep.mubr.bf16.mxu0 %v4081
    %6082 = vmatmul.mubr.bf16.gmra.mrb[0].mxu0 %v4080
    %v6083 = vpop.f32.mrb[0].mxu0
    %v6084 = vadd.f32 %v5971, %v6083
    %v6085 = vpop.f32.mrb[0].mxu0
    %v6086 = vadd.f32 %v5973, %v6085
    %v6087 = vpop.f32.mrb[0].mxu0
    %v6088 = vadd.f32 %v5975, %v6087
    %v6089 = vpop.f32.mrb[0].mxu0
    %v6090 = vadd.f32 %v5977, %v6089
    %6091 = vdwg.mxu0
    %6092 = vmatprep.subr.bf16.mxu0 %v5131
    %6093 = vmatpush1.bf16.msra.mxu0 %v5130
    %6094 = vmatprep.subr.bf16.mxu0 %v5135
    %6095 = vmatpush1.bf16.msra.mxu0 %v5134
    %6096 = vmatprep.subr.bf16.mxu0 %v5139
    %6097 = vmatpush1.bf16.msra.mxu0 %v5138
    %6098 = vmatprep.subr.bf16.mxu0 %v5143
    %6099 = vmatpush1.bf16.msra.mxu0 %v5142
    %6100 = vmatprep.subr.bf16.mxu0 %v5147
    %6101 = vmatpush1.bf16.msra.mxu0 %v5146
    %6102 = vmatprep.subr.bf16.mxu0 %v5151
    %6103 = vmatpush1.bf16.msra.mxu0 %v5150
    %6104 = vmatprep.subr.bf16.mxu0 %v5155
    %6105 = vmatpush1.bf16.msra.mxu0 %v5154
    %6106 = vmatprep.subr.bf16.mxu0 %v5159
    %6107 = vmatpush1.bf16.msra.mxu0 %v5158
    %6108 = vmatprep.subr.bf16.mxu0 %v5163
    %6109 = vmatpush1.bf16.msra.mxu0 %v5162
    %6110 = vmatprep.subr.bf16.mxu0 %v5167
    %6111 = vmatpush1.bf16.msra.mxu0 %v5166
    %6112 = vmatprep.subr.bf16.mxu0 %v5171
    %6113 = vmatpush1.bf16.msra.mxu0 %v5170
    %6114 = vmatprep.subr.bf16.mxu0 %v5175
    %6115 = vmatpush1.bf16.msra.mxu0 %v5174
    %6116 = vmatprep.subr.bf16.mxu0 %v5179
    %6117 = vmatpush1.bf16.msra.mxu0 %v5178
    %6118 = vmatprep.subr.bf16.mxu0 %v5183
    %6119 = vmatpush1.bf16.msra.mxu0 %v5182
    %6120 = vmatprep.subr.bf16.mxu0 %v5187
    %6121 = vmatpush1.bf16.msra.mxu0 %v5186
    %6122 = vmatprep.subr.bf16.mxu0 %v5191
    %6123 = vmatpush1.bf16.msra.mxu0 %v5190
    %6124 = vmatprep.mubr.bf16.mxu0 %v4019
    %6125 = vmatmul.mubr.bf16.gmra.mrb[0].mxu0 %v4018
    %v6126 = vpop.f32.mrb[0].mxu0
    %v6127 = vadd.f32 %v4351, %v6126
    %v6128 = vpop.f32.mrb[0].mxu0
    %v6129 = vadd.f32 %v4355, %v6128
    %v6130 = vpop.f32.mrb[0].mxu0
    %v6131 = vadd.f32 %v4351, %v6130
    %v6132 = vpop.f32.mrb[0].mxu0
    %v6133 = vadd.f32 %v4355, %v6132
    %6134 = vmatprep.mubr.bf16.mxu0 %v4027
    %6135 = vmatmul.mubr.bf16.gmra.mrb[0].mxu0 %v4026
    %v6136 = vpop.f32.mrb[0].mxu0
    %v6137 = vadd.f32 %v4351, %v6136
    %v6138 = vpop.f32.mrb[0].mxu0
    %v6139 = vadd.f32 %v4355, %v6138
    %v6140 = vpop.f32.mrb[0].mxu0
    %v6141 = vadd.f32 %v4351, %v6140
    %v6142 = vpop.f32.mrb[0].mxu0
    %v6143 = vadd.f32 %v4355, %v6142
    %6144 = vmatprep.mubr.bf16.mxu0 %v4035
    %6145 = vmatmul.mubr.bf16.gmra.mrb[0].mxu0 %v4034
    %v6146 = vpop.f32.mrb[0].mxu0
    %v6147 = vadd.f32 %v4351, %v6146
    %v6148 = vpop.f32.mrb[0].mxu0
    %v6149 = vadd.f32 %v4355, %v6148
    %v6150 = vpop.f32.mrb[0].mxu0
    %v6151 = vadd.f32 %v4351, %v6150
    %v6152 = vpop.f32.mrb[0].mxu0
    %v6153 = vadd.f32 %v4355, %v6152
    %6154 = vmatprep.mubr.bf16.mxu0 %v4043
    %6155 = vmatmul.mubr.bf16.gmra.mrb[0].mxu0 %v4042
    %v6156 = vpop.f32.mrb[0].mxu0
    %v6157 = vadd.f32 %v4351, %v6156
    %v6158 = vpop.f32.mrb[0].mxu0
    %v6159 = vadd.f32 %v4355, %v6158
    %v6160 = vpop.f32.mrb[0].mxu0
    %v6161 = vadd.f32 %v4351, %v6160
    %v6162 = vpop.f32.mrb[0].mxu0
    %v6163 = vadd.f32 %v4355, %v6162
    %6164 = vmatprep.mubr.bf16.mxu0 %v4051
    %6165 = vmatmul.mubr.bf16.gmra.mrb[0].mxu0 %v4050
    %v6166 = vpop.f32.mrb[0].mxu0
    %v6167 = vadd.f32 %v4351, %v6166
    %v6168 = vpop.f32.mrb[0].mxu0
    %v6169 = vadd.f32 %v4355, %v6168
    %v6170 = vpop.f32.mrb[0].mxu0
    %v6171 = vadd.f32 %v4351, %v6170
    %v6172 = vpop.f32.mrb[0].mxu0
    %v6173 = vadd.f32 %v4355, %v6172
    %6174 = vmatprep.mubr.bf16.mxu0 %v4059
    %6175 = vmatmul.mubr.bf16.gmra.mrb[0].mxu0 %v4058
    %v6176 = vpop.f32.mrb[0].mxu0
    %v6177 = vadd.f32 %v4351, %v6176
    %v6178 = vpop.f32.mrb[0].mxu0
    %v6179 = vadd.f32 %v4355, %v6178
    %v6180 = vpop.f32.mrb[0].mxu0
    %v6181 = vadd.f32 %v4351, %v6180
    %v6182 = vpop.f32.mrb[0].mxu0
    %v6183 = vadd.f32 %v4355, %v6182
    %6184 = vmatprep.mubr.bf16.mxu0 %v4067
    %6185 = vmatmul.mubr.bf16.gmra.mrb[0].mxu0 %v4066
    %v6186 = vpop.f32.mrb[0].mxu0
    %v6187 = vadd.f32 %v4351, %v6186
    %v6188 = vpop.f32.mrb[0].mxu0
    %v6189 = vadd.f32 %v4355, %v6188
    %v6190 = vpop.f32.mrb[0].mxu0
    %v6191 = vadd.f32 %v4351, %v6190
    %v6192 = vpop.f32.mrb[0].mxu0
    %v6193 = vadd.f32 %v4355, %v6192
    %6194 = vmatprep.mubr.bf16.mxu0 %v4075
    %6195 = vmatmul.mubr.bf16.gmra.mrb[0].mxu0 %v4074
    %v6196 = vpop.f32.mrb[0].mxu0
    %v6197 = vadd.f32 %v4351, %v6196
    %v6198 = vpop.f32.mrb[0].mxu0
    %v6199 = vadd.f32 %v4355, %v6198
    %v6200 = vpop.f32.mrb[0].mxu0
    %v6201 = vadd.f32 %v4351, %v6200
    %v6202 = vpop.f32.mrb[0].mxu0
    %v6203 = vadd.f32 %v4355, %v6202
    %6204 = vdwg.mxu0
    %6205 = vmatprep.subr.bf16.mxu0 %v5195
    %6206 = vmatpush1.bf16.msra.mxu0 %v5194
    %6207 = vmatprep.subr.bf16.mxu0 %v5199
    %6208 = vmatpush1.bf16.msra.mxu0 %v5198
    %6209 = vmatprep.subr.bf16.mxu0 %v5203
    %6210 = vmatpush1.bf16.msra.mxu0 %v5202
    %6211 = vmatprep.subr.bf16.mxu0 %v5207
    %6212 = vmatpush1.bf16.msra.mxu0 %v5206
    %6213 = vmatprep.subr.bf16.mxu0 %v5211
    %6214 = vmatpush1.bf16.msra.mxu0 %v5210
    %6215 = vmatprep.subr.bf16.mxu0 %v5215
    %6216 = vmatpush1.bf16.msra.mxu0 %v5214
    %6217 = vmatprep.subr.bf16.mxu0 %v5219
    %6218 = vmatpush1.bf16.msra.mxu0 %v5218
    %6219 = vmatprep.subr.bf16.mxu0 %v5223
    %6220 = vmatpush1.bf16.msra.mxu0 %v5222
    %6221 = vmatprep.subr.bf16.mxu0 %v5227
    %6222 = vmatpush1.bf16.msra.mxu0 %v5226
    %6223 = vmatprep.subr.bf16.mxu0 %v5231
    %6224 = vmatpush1.bf16.msra.mxu0 %v5230
    %6225 = vmatprep.subr.bf16.mxu0 %v5235
    %6226 = vmatpush1.bf16.msra.mxu0 %v5234
    %6227 = vmatprep.subr.bf16.mxu0 %v5239
    %6228 = vmatpush1.bf16.msra.mxu0 %v5238
    %6229 = vmatprep.subr.bf16.mxu0 %v5243
    %6230 = vmatpush1.bf16.msra.mxu0 %v5242
    %6231 = vmatprep.subr.bf16.mxu0 %v5247
    %6232 = vmatpush1.bf16.msra.mxu0 %v5246
    %6233 = vmatprep.subr.bf16.mxu0 %v5251
    %6234 = vmatpush1.bf16.msra.mxu0 %v5250
    %6235 = vmatprep.subr.bf16.mxu0 %v5255
    %6236 = vmatpush1.bf16.msra.mxu0 %v5254
    %6237 = vmatprep.mubr.bf16.mxu0 %v4021
    %6238 = vmatmul.mubr.bf16.gmra.mrb[0].mxu0 %v4020
    %v6239 = vpop.f32.mrb[0].mxu0
    %v6240 = vadd.f32 %v6127, %v6239
    %v6241 = vpop.f32.mrb[0].mxu0
    %v6242 = vadd.f32 %v6129, %v6241
    %v6243 = vpop.f32.mrb[0].mxu0
    %v6244 = vadd.f32 %v6131, %v6243
    %v6245 = vpop.f32.mrb[0].mxu0
    %v6246 = vadd.f32 %v6133, %v6245
    %6247 = vmatprep.mubr.bf16.mxu0 %v4029
    %6248 = vmatmul.mubr.bf16.gmra.mrb[0].mxu0 %v4028
    %v6249 = vpop.f32.mrb[0].mxu0
    %v6250 = vadd.f32 %v6137, %v6249
    %v6251 = vpop.f32.mrb[0].mxu0
    %v6252 = vadd.f32 %v6139, %v6251
    %v6253 = vpop.f32.mrb[0].mxu0
    %v6254 = vadd.f32 %v6141, %v6253
    %v6255 = vpop.f32.mrb[0].mxu0
    %v6256 = vadd.f32 %v6143, %v6255
    %6257 = vmatprep.mubr.bf16.mxu0 %v4037
    %6258 = vmatmul.mubr.bf16.gmra.mrb[0].mxu0 %v4036
    %v6259 = vpop.f32.mrb[0].mxu0
    %v6260 = vadd.f32 %v6147, %v6259
    %v6261 = vpop.f32.mrb[0].mxu0
    %v6262 = vadd.f32 %v6149, %v6261
    %v6263 = vpop.f32.mrb[0].mxu0
    %v6264 = vadd.f32 %v6151, %v6263
    %v6265 = vpop.f32.mrb[0].mxu0
    %v6266 = vadd.f32 %v6153, %v6265
    %6267 = vmatprep.mubr.bf16.mxu0 %v4045
    %6268 = vmatmul.mubr.bf16.gmra.mrb[0].mxu0 %v4044
    %v6269 = vpop.f32.mrb[0].mxu0
    %v6270 = vadd.f32 %v6157, %v6269
    %v6271 = vpop.f32.mrb[0].mxu0
    %v6272 = vadd.f32 %v6159, %v6271
    %v6273 = vpop.f32.mrb[0].mxu0
    %v6274 = vadd.f32 %v6161, %v6273
    %v6275 = vpop.f32.mrb[0].mxu0
    %v6276 = vadd.f32 %v6163, %v6275
    %6277 = vmatprep.mubr.bf16.mxu0 %v4053
    %6278 = vmatmul.mubr.bf16.gmra.mrb[0].mxu0 %v4052
    %v6279 = vpop.f32.mrb[0].mxu0
    %v6280 = vadd.f32 %v6167, %v6279
    %v6281 = vpop.f32.mrb[0].mxu0
    %v6282 = vadd.f32 %v6169, %v6281
    %v6283 = vpop.f32.mrb[0].mxu0
    %v6284 = vadd.f32 %v6171, %v6283
    %v6285 = vpop.f32.mrb[0].mxu0
    %v6286 = vadd.f32 %v6173, %v6285
    %6287 = vmatprep.mubr.bf16.mxu0 %v4061
    %6288 = vmatmul.mubr.bf16.gmra.mrb[0].mxu0 %v4060
    %v6289 = vpop.f32.mrb[0].mxu0
    %v6290 = vadd.f32 %v6177, %v6289
    %v6291 = vpop.f32.mrb[0].mxu0
    %v6292 = vadd.f32 %v6179, %v6291
    %v6293 = vpop.f32.mrb[0].mxu0
    %v6294 = vadd.f32 %v6181, %v6293
    %v6295 = vpop.f32.mrb[0].mxu0
    %v6296 = vadd.f32 %v6183, %v6295
    %6297 = vmatprep.mubr.bf16.mxu0 %v4069
    %6298 = vmatmul.mubr.bf16.gmra.mrb[0].mxu0 %v4068
    %v6299 = vpop.f32.mrb[0].mxu0
    %v6300 = vadd.f32 %v6187, %v6299
    %v6301 = vpop.f32.mrb[0].mxu0
    %v6302 = vadd.f32 %v6189, %v6301
    %v6303 = vpop.f32.mrb[0].mxu0
    %v6304 = vadd.f32 %v6191, %v6303
    %v6305 = vpop.f32.mrb[0].mxu0
    %v6306 = vadd.f32 %v6193, %v6305
    %6307 = vmatprep.mubr.bf16.mxu0 %v4077
    %6308 = vmatmul.mubr.bf16.gmra.mrb[0].mxu0 %v4076
    %v6309 = vpop.f32.mrb[0].mxu0
    %v6310 = vadd.f32 %v6197, %v6309
    %v6311 = vpop.f32.mrb[0].mxu0
    %v6312 = vadd.f32 %v6199, %v6311
    %v6313 = vpop.f32.mrb[0].mxu0
    %v6314 = vadd.f32 %v6201, %v6313
    %v6315 = vpop.f32.mrb[0].mxu0
    %v6316 = vadd.f32 %v6203, %v6315
    %6317 = vdwg.mxu0
    %6318 = vmatprep.subr.bf16.mxu0 %v5259
    %6319 = vmatpush1.bf16.msra.mxu0 %v5258
    %6320 = vmatprep.subr.bf16.mxu0 %v5263
    %6321 = vmatpush1.bf16.msra.mxu0 %v5262
    %6322 = vmatprep.subr.bf16.mxu0 %v5267
    %6323 = vmatpush1.bf16.msra.mxu0 %v5266
    %6324 = vmatprep.subr.bf16.mxu0 %v5271
    %6325 = vmatpush1.bf16.msra.mxu0 %v5270
    %6326 = vmatprep.subr.bf16.mxu0 %v5275
    %6327 = vmatpush1.bf16.msra.mxu0 %v5274
    %6328 = vmatprep.subr.bf16.mxu0 %v5279
    %6329 = vmatpush1.bf16.msra.mxu0 %v5278
    %6330 = vmatprep.subr.bf16.mxu0 %v5283
    %6331 = vmatpush1.bf16.msra.mxu0 %v5282
    %6332 = vmatprep.subr.bf16.mxu0 %v5287
    %6333 = vmatpush1.bf16.msra.mxu0 %v5286
    %6334 = vmatprep.subr.bf16.mxu0 %v5291
    %6335 = vmatpush1.bf16.msra.mxu0 %v5290
    %6336 = vmatprep.subr.bf16.mxu0 %v5295
    %6337 = vmatpush1.bf16.msra.mxu0 %v5294
    %6338 = vmatprep.subr.bf16.mxu0 %v5299
    %6339 = vmatpush1.bf16.msra.mxu0 %v5298
    %6340 = vmatprep.subr.bf16.mxu0 %v5303
    %6341 = vmatpush1.bf16.msra.mxu0 %v5302
    %6342 = vmatprep.subr.bf16.mxu0 %v5307
    %6343 = vmatpush1.bf16.msra.mxu0 %v5306
    %6344 = vmatprep.subr.bf16.mxu0 %v5311
    %6345 = vmatpush1.bf16.msra.mxu0 %v5310
    %6346 = vmatprep.subr.bf16.mxu0 %v5315
    %6347 = vmatpush1.bf16.msra.mxu0 %v5314
    %6348 = vmatprep.subr.bf16.mxu0 %v5319
    %6349 = vmatpush1.bf16.msra.mxu0 %v5318
    %6350 = vmatprep.mubr.bf16.mxu0 %v4023
    %6351 = vmatmul.mubr.bf16.gmra.mrb[0].mxu0 %v4022
    %v6352 = vpop.f32.mrb[0].mxu0
    %v6353 = vadd.f32 %v6240, %v6352
    %v6354 = vpop.f32.mrb[0].mxu0
    %v6355 = vadd.f32 %v6242, %v6354
    %v6356 = vpop.f32.mrb[0].mxu0
    %v6357 = vadd.f32 %v6244, %v6356
    %v6358 = vpop.f32.mrb[0].mxu0
    %v6359 = vadd.f32 %v6246, %v6358
    %6360 = vmatprep.mubr.bf16.mxu0 %v4031
    %6361 = vmatmul.mubr.bf16.gmra.mrb[0].mxu0 %v4030
    %v6362 = vpop.f32.mrb[0].mxu0
    %v6363 = vadd.f32 %v6250, %v6362
    %v6364 = vpop.f32.mrb[0].mxu0
    %v6365 = vadd.f32 %v6252, %v6364
    %v6366 = vpop.f32.mrb[0].mxu0
    %v6367 = vadd.f32 %v6254, %v6366
    %v6368 = vpop.f32.mrb[0].mxu0
    %v6369 = vadd.f32 %v6256, %v6368
    %6370 = vmatprep.mubr.bf16.mxu0 %v4039
    %6371 = vmatmul.mubr.bf16.gmra.mrb[0].mxu0 %v4038
    %v6372 = vpop.f32.mrb[0].mxu0
    %v6373 = vadd.f32 %v6260, %v6372
    %v6374 = vpop.f32.mrb[0].mxu0
    %v6375 = vadd.f32 %v6262, %v6374
    %v6376 = vpop.f32.mrb[0].mxu0
    %v6377 = vadd.f32 %v6264, %v6376
    %v6378 = vpop.f32.mrb[0].mxu0
    %v6379 = vadd.f32 %v6266, %v6378
    %6380 = vmatprep.mubr.bf16.mxu0 %v4047
    %6381 = vmatmul.mubr.bf16.gmra.mrb[0].mxu0 %v4046
    %v6382 = vpop.f32.mrb[0].mxu0
    %v6383 = vadd.f32 %v6270, %v6382
    %v6384 = vpop.f32.mrb[0].mxu0
    %v6385 = vadd.f32 %v6272, %v6384
    %v6386 = vpop.f32.mrb[0].mxu0
    %v6387 = vadd.f32 %v6274, %v6386
    %v6388 = vpop.f32.mrb[0].mxu0
    %v6389 = vadd.f32 %v6276, %v6388
    %6390 = vmatprep.mubr.bf16.mxu0 %v4055
    %6391 = vmatmul.mubr.bf16.gmra.mrb[0].mxu0 %v4054
    %v6392 = vpop.f32.mrb[0].mxu0
    %v6393 = vadd.f32 %v6280, %v6392
    %v6394 = vpop.f32.mrb[0].mxu0
    %v6395 = vadd.f32 %v6282, %v6394
    %v6396 = vpop.f32.mrb[0].mxu0
    %v6397 = vadd.f32 %v6284, %v6396
    %v6398 = vpop.f32.mrb[0].mxu0
    %v6399 = vadd.f32 %v6286, %v6398
    %6400 = vmatprep.mubr.bf16.mxu0 %v4063
    %6401 = vmatmul.mubr.bf16.gmra.mrb[0].mxu0 %v4062
    %v6402 = vpop.f32.mrb[0].mxu0
    %v6403 = vadd.f32 %v6290, %v6402
    %v6404 = vpop.f32.mrb[0].mxu0
    %v6405 = vadd.f32 %v6292, %v6404
    %v6406 = vpop.f32.mrb[0].mxu0
    %v6407 = vadd.f32 %v6294, %v6406
    %v6408 = vpop.f32.mrb[0].mxu0
    %v6409 = vadd.f32 %v6296, %v6408
    %6410 = vmatprep.mubr.bf16.mxu0 %v4071
    %6411 = vmatmul.mubr.bf16.gmra.mrb[0].mxu0 %v4070
    %v6412 = vpop.f32.mrb[0].mxu0
    %v6413 = vadd.f32 %v6300, %v6412
    %v6414 = vpop.f32.mrb[0].mxu0
    %v6415 = vadd.f32 %v6302, %v6414
    %v6416 = vpop.f32.mrb[0].mxu0
    %v6417 = vadd.f32 %v6304, %v6416
    %v6418 = vpop.f32.mrb[0].mxu0
    %v6419 = vadd.f32 %v6306, %v6418
    %6420 = vmatprep.mubr.bf16.mxu0 %v4079
    %6421 = vmatmul.mubr.bf16.gmra.mrb[0].mxu0 %v4078
    %v6422 = vpop.f32.mrb[0].mxu0
    %v6423 = vadd.f32 %v6310, %v6422
    %v6424 = vpop.f32.mrb[0].mxu0
    %v6425 = vadd.f32 %v6312, %v6424
    %v6426 = vpop.f32.mrb[0].mxu0
    %v6427 = vadd.f32 %v6314, %v6426
    %v6428 = vpop.f32.mrb[0].mxu0
    %v6429 = vadd.f32 %v6316, %v6428
    %6430 = vdwg.mxu0
    %6431 = vmatprep.subr.bf16.mxu0 %v5323
    %6432 = vmatpush1.bf16.msra.mxu0 %v5322
    %6433 = vmatprep.subr.bf16.mxu0 %v5327
    %6434 = vmatpush1.bf16.msra.mxu0 %v5326
    %6435 = vmatprep.subr.bf16.mxu0 %v5331
    %6436 = vmatpush1.bf16.msra.mxu0 %v5330
    %6437 = vmatprep.subr.bf16.mxu0 %v5335
    %6438 = vmatpush1.bf16.msra.mxu0 %v5334
    %6439 = vmatprep.subr.bf16.mxu0 %v5339
    %6440 = vmatpush1.bf16.msra.mxu0 %v5338
    %6441 = vmatprep.subr.bf16.mxu0 %v5343
    %6442 = vmatpush1.bf16.msra.mxu0 %v5342
    %6443 = vmatprep.subr.bf16.mxu0 %v5347
    %6444 = vmatpush1.bf16.msra.mxu0 %v5346
    %6445 = vmatprep.subr.bf16.mxu0 %v5351
    %6446 = vmatpush1.bf16.msra.mxu0 %v5350
    %6447 = vmatprep.subr.bf16.mxu0 %v5355
    %6448 = vmatpush1.bf16.msra.mxu0 %v5354
    %6449 = vmatprep.subr.bf16.mxu0 %v5359
    %6450 = vmatpush1.bf16.msra.mxu0 %v5358
    %6451 = vmatprep.subr.bf16.mxu0 %v5363
    %6452 = vmatpush1.bf16.msra.mxu0 %v5362
    %6453 = vmatprep.subr.bf16.mxu0 %v5367
    %6454 = vmatpush1.bf16.msra.mxu0 %v5366
    %6455 = vmatprep.subr.bf16.mxu0 %v5371
    %6456 = vmatpush1.bf16.msra.mxu0 %v5370
    %6457 = vmatprep.subr.bf16.mxu0 %v5375
    %6458 = vmatpush1.bf16.msra.mxu0 %v5374
    %6459 = vmatprep.subr.bf16.mxu0 %v5379
    %6460 = vmatpush1.bf16.msra.mxu0 %v5378
    %6461 = vmatprep.subr.bf16.mxu0 %v5383
    %6462 = vmatpush1.bf16.msra.mxu0 %v5382
    %6463 = vmatprep.mubr.bf16.mxu0 %v4025
    %6464 = vmatmul.mubr.bf16.gmra.mrb[0].mxu0 %v4024
    %v6465 = vpop.f32.mrb[0].mxu0
    %v6466 = vadd.f32 %v6353, %v6465
    %v6467 = vpop.f32.mrb[0].mxu0
    %v6468 = vadd.f32 %v6355, %v6467
    %v6469 = vpop.f32.mrb[0].mxu0
    %v6470 = vadd.f32 %v6357, %v6469
    %v6471 = vpop.f32.mrb[0].mxu0
    %v6472 = vadd.f32 %v6359, %v6471
    %6473 = vmatprep.mubr.bf16.mxu0 %v4033
    %6474 = vmatmul.mubr.bf16.gmra.mrb[0].mxu0 %v4032
    %v6475 = vpop.f32.mrb[0].mxu0
    %v6476 = vadd.f32 %v6363, %v6475
    %v6477 = vpop.f32.mrb[0].mxu0
    %v6478 = vadd.f32 %v6365, %v6477
    %v6479 = vpop.f32.mrb[0].mxu0
    %v6480 = vadd.f32 %v6367, %v6479
    %v6481 = vpop.f32.mrb[0].mxu0
    %v6482 = vadd.f32 %v6369, %v6481
    %6483 = vmatprep.mubr.bf16.mxu0 %v4041
    %6484 = vmatmul.mubr.bf16.gmra.mrb[0].mxu0 %v4040
    %v6485 = vpop.f32.mrb[0].mxu0
    %v6486 = vadd.f32 %v6373, %v6485
    %v6487 = vpop.f32.mrb[0].mxu0
    %v6488 = vadd.f32 %v6375, %v6487
    %v6489 = vpop.f32.mrb[0].mxu0
    %v6490 = vadd.f32 %v6377, %v6489
    %v6491 = vpop.f32.mrb[0].mxu0
    %v6492 = vadd.f32 %v6379, %v6491
    %6493 = vmatprep.mubr.bf16.mxu0 %v4049
    %6494 = vmatmul.mubr.bf16.gmra.mrb[0].mxu0 %v4048
    %v6495 = vpop.f32.mrb[0].mxu0
    %v6496 = vadd.f32 %v6383, %v6495
    %v6497 = vpop.f32.mrb[0].mxu0
    %v6498 = vadd.f32 %v6385, %v6497
    %v6499 = vpop.f32.mrb[0].mxu0
    %v6500 = vadd.f32 %v6387, %v6499
    %v6501 = vpop.f32.mrb[0].mxu0
    %v6502 = vadd.f32 %v6389, %v6501
    %6503 = vmatprep.mubr.bf16.mxu0 %v4057
    %6504 = vmatmul.mubr.bf16.gmra.mrb[0].mxu0 %v4056
    %v6505 = vpop.f32.mrb[0].mxu0
    %v6506 = vadd.f32 %v6393, %v6505
    %v6507 = vpop.f32.mrb[0].mxu0
    %v6508 = vadd.f32 %v6395, %v6507
    %v6509 = vpop.f32.mrb[0].mxu0
    %v6510 = vadd.f32 %v6397, %v6509
    %v6511 = vpop.f32.mrb[0].mxu0
    %v6512 = vadd.f32 %v6399, %v6511
    %6513 = vmatprep.mubr.bf16.mxu0 %v4065
    %6514 = vmatmul.mubr.bf16.gmra.mrb[0].mxu0 %v4064
    %v6515 = vpop.f32.mrb[0].mxu0
    %v6516 = vadd.f32 %v6403, %v6515
    %v6517 = vpop.f32.mrb[0].mxu0
    %v6518 = vadd.f32 %v6405, %v6517
    %v6519 = vpop.f32.mrb[0].mxu0
    %v6520 = vadd.f32 %v6407, %v6519
    %v6521 = vpop.f32.mrb[0].mxu0
    %v6522 = vadd.f32 %v6409, %v6521
    %6523 = vmatprep.mubr.bf16.mxu0 %v4073
    %6524 = vmatmul.mubr.bf16.gmra.mrb[0].mxu0 %v4072
    %v6525 = vpop.f32.mrb[0].mxu0
    %v6526 = vadd.f32 %v6413, %v6525
    %v6527 = vpop.f32.mrb[0].mxu0
    %v6528 = vadd.f32 %v6415, %v6527
    %v6529 = vpop.f32.mrb[0].mxu0
    %v6530 = vadd.f32 %v6417, %v6529
    %v6531 = vpop.f32.mrb[0].mxu0
    %v6532 = vadd.f32 %v6419, %v6531
    %6533 = vmatprep.mubr.bf16.mxu0 %v4081
    %6534 = vmatmul.mubr.bf16.gmra.mrb[0].mxu0 %v4080
    %v6535 = vpop.f32.mrb[0].mxu0
    %v6536 = vadd.f32 %v6423, %v6535
    %v6537 = vpop.f32.mrb[0].mxu0
    %v6538 = vadd.f32 %v6425, %v6537
    %v6539 = vpop.f32.mrb[0].mxu0
    %v6540 = vadd.f32 %v6427, %v6539
    %v6541 = vpop.f32.mrb[0].mxu0
    %v6542 = vadd.f32 %v6429, %v6541
    %6543 = vdwg.mxu0
    %v6544 = vmax.f32 %v6014, 0.0
    %v6545 = vmax.f32 %v6016, 0.0
    %v6546 = vmax.f32 %v6466, 0.0
    %v6547 = vmax.f32 %v6468, 0.0
    %v6548 = vmax.f32 %v6018, 0.0
    %v6549 = vmax.f32 %v6020, 0.0
    %v6550 = vmax.f32 %v6470, 0.0
    %v6551 = vmax.f32 %v6472, 0.0
    %v6552 = vmax.f32 %v6024, 0.0
    %v6553 = vmax.f32 %v6026, 0.0
    %v6554 = vmax.f32 %v6476, 0.0
    %v6555 = vmax.f32 %v6478, 0.0
    %v6556 = vmax.f32 %v6028, 0.0
    %v6557 = vmax.f32 %v6030, 0.0
    %v6558 = vmax.f32 %v6480, 0.0
    %v6559 = vmax.f32 %v6482, 0.0
    %v6560 = vmax.f32 %v6034, 0.0
    %v6561 = vmax.f32 %v6036, 0.0
    %v6562 = vmax.f32 %v6486, 0.0
    %v6563 = vmax.f32 %v6488, 0.0
    %v6564 = vmax.f32 %v6038, 0.0
    %v6565 = vmax.f32 %v6040, 0.0
    %v6566 = vmax.f32 %v6490, 0.0
    %v6567 = vmax.f32 %v6492, 0.0
    %v6568 = vmax.f32 %v6044, 0.0
    %v6569 = vmax.f32 %v6046, 0.0
    %v6570 = vmax.f32 %v6496, 0.0
    %v6571 = vmax.f32 %v6498, 0.0
    %v6572 = vmax.f32 %v6048, 0.0
    %v6573 = vmax.f32 %v6050, 0.0
    %v6574 = vmax.f32 %v6500, 0.0
    %v6575 = vmax.f32 %v6502, 0.0
    %v6576 = vmax.f32 %v6054, 0.0
    %v6577 = vmax.f32 %v6056, 0.0
    %v6578 = vmax.f32 %v6506, 0.0
    %v6579 = vmax.f32 %v6508, 0.0
    %v6580 = vmax.f32 %v6058, 0.0
    %v6581 = vmax.f32 %v6060, 0.0
    %v6582 = vmax.f32 %v6510, 0.0
    %v6583 = vmax.f32 %v6512, 0.0
    %v6584 = vmax.f32 %v6064, 0.0
    %v6585 = vmax.f32 %v6066, 0.0
    %v6586 = vmax.f32 %v6516, 0.0
    %v6587 = vmax.f32 %v6518, 0.0
    %v6588 = vmax.f32 %v6068, 0.0
    %v6589 = vmax.f32 %v6070, 0.0
    %v6590 = vmax.f32 %v6520, 0.0
    %v6591 = vmax.f32 %v6522, 0.0
    %v6592 = vmax.f32 %v6074, 0.0
    %v6593 = vmax.f32 %v6076, 0.0
    %v6594 = vmax.f32 %v6526, 0.0
    %v6595 = vmax.f32 %v6528, 0.0
    %v6596 = vmax.f32 %v6078, 0.0
    %v6597 = vmax.f32 %v6080, 0.0
    %v6598 = vmax.f32 %v6530, 0.0
    %v6599 = vmax.f32 %v6532, 0.0
    %v6600 = vmax.f32 %v6084, 0.0
    %v6601 = vmax.f32 %v6086, 0.0
    %v6602 = vmax.f32 %v6536, 0.0
    %v6603 = vmax.f32 %v6538, 0.0
    %v6604 = vmax.f32 %v6088, 0.0
    %v6605 = vmax.f32 %v6090, 0.0
    %v6606 = vmax.f32 %v6540, 0.0
    %v6607 = vmax.f32 %v6542, 0.0
    %v6608 = vpack.c.bf16 %v6548, %v6544
    %v6609 = vpack.c.bf16 %v6549, %v6545
    %v6610 = vpack.c.bf16 %v6550, %v6546
    %v6611 = vpack.c.bf16 %v6551, %v6547
    %v6612 = vpack.c.bf16 %v6556, %v6552
    %v6613 = vpack.c.bf16 %v6557, %v6553
    %v6614 = vpack.c.bf16 %v6558, %v6554
    %v6615 = vpack.c.bf16 %v6559, %v6555
    %v6616 = vpack.c.bf16 %v6564, %v6560
    %v6617 = vpack.c.bf16 %v6565, %v6561
    %v6618 = vpack.c.bf16 %v6566, %v6562
    %v6619 = vpack.c.bf16 %v6567, %v6563
    %v6620 = vpack.c.bf16 %v6572, %v6568
    %v6621 = vpack.c.bf16 %v6573, %v6569
    %v6622 = vpack.c.bf16 %v6574, %v6570
    %v6623 = vpack.c.bf16 %v6575, %v6571
    %v6624 = vpack.c.bf16 %v6580, %v6576
    %v6625 = vpack.c.bf16 %v6581, %v6577
    %v6626 = vpack.c.bf16 %v6582, %v6578
    %v6627 = vpack.c.bf16 %v6583, %v6579
    %v6628 = vpack.c.bf16 %v6588, %v6584
    %v6629 = vpack.c.bf16 %v6589, %v6585
    %v6630 = vpack.c.bf16 %v6590, %v6586
    %v6631 = vpack.c.bf16 %v6591, %v6587
    %v6632 = vpack.c.bf16 %v6596, %v6592
    %v6633 = vpack.c.bf16 %v6597, %v6593
    %v6634 = vpack.c.bf16 %v6598, %v6594
    %v6635 = vpack.c.bf16 %v6599, %v6595
    %v6636 = vpack.c.bf16 %v6604, %v6600
    %v6637 = vpack.c.bf16 %v6605, %v6601
    %v6638 = vpack.c.bf16 %v6606, %v6602
    %v6639 = vpack.c.bf16 %v6607, %v6603
    %v6640 = vld [vmem:[#allocation10] sm:$0xf]
    %v6641 = vld [vmem:[#allocation10 + $0x4] sm:$0xf]
    %v6642 = vld [vmem:[#allocation10 + $0x8] sm:$0xf]
    %v6643 = vld [vmem:[#allocation10 + $0xc] sm:$0xf]
    %v6644 = vld [vmem:[#allocation10 + $0x10] sm:$0xf]
    %v6645 = vld [vmem:[#allocation10 + $0x14] sm:$0xf]
    %v6646 = vld [vmem:[#allocation10 + $0x18] sm:$0xf]
    %v6647 = vld [vmem:[#allocation10 + $0x1c] sm:$0xf]
    %v6648 = vld [vmem:[#allocation10 + $0x20] sm:$0xf]
    %v6649 = vld [vmem:[#allocation10 + $0x24] sm:$0xf]
    %v6650 = vld [vmem:[#allocation10 + $0x28] sm:$0xf]
    %v6651 = vld [vmem:[#allocation10 + $0x2c] sm:$0xf]
    %v6652 = vld [vmem:[#allocation10 + $0x30] sm:$0xf]
    %v6653 = vld [vmem:[#allocation10 + $0x34] sm:$0xf]
    %v6654 = vld [vmem:[#allocation10 + $0x38] sm:$0xf]
    %v6655 = vld [vmem:[#allocation10 + $0x3c] sm:$0xf]
    %v6656 = vld [vmem:[#allocation10 + $0x40] sm:$0xf]
    %v6657 = vld [vmem:[#allocation10 + $0x44] sm:$0xf]
    %v6658 = vld [vmem:[#allocation10 + $0x48] sm:$0xf]
    %v6659 = vld [vmem:[#allocation10 + $0x4c] sm:$0xf]
    %v6660 = vld [vmem:[#allocation10 + $0x50] sm:$0xf]
    %v6661 = vld [vmem:[#allocation10 + $0x54] sm:$0xf]
    %v6662 = vld [vmem:[#allocation10 + $0x58] sm:$0xf]
    %v6663 = vld [vmem:[#allocation10 + $0x5c] sm:$0xf]
    %v6664 = vld [vmem:[#allocation10 + $0x60] sm:$0xf]
    %v6665 = vld [vmem:[#allocation10 + $0x64] sm:$0xf]
    %v6666 = vld [vmem:[#allocation10 + $0x68] sm:$0xf]
    %v6667 = vld [vmem:[#allocation10 + $0x6c] sm:$0xf]
    %v6668 = vld [vmem:[#allocation10 + $0x70] sm:$0xf]
    %v6669 = vld [vmem:[#allocation10 + $0x74] sm:$0xf]
    %v6670 = vld [vmem:[#allocation10 + $0x78] sm:$0xf]
    %v6671 = vld [vmem:[#allocation10 + $0x7c] sm:$0xf]
    %v6672 = vld [vmem:[#allocation10 + $0x80] sm:$0xf]
    %v6673 = vld [vmem:[#allocation10 + $0x84] sm:$0xf]
    %v6674 = vld [vmem:[#allocation10 + $0x88] sm:$0xf]
    %v6675 = vld [vmem:[#allocation10 + $0x8c] sm:$0xf]
    %v6676 = vld [vmem:[#allocation10 + $0x90] sm:$0xf]
    %v6677 = vld [vmem:[#allocation10 + $0x94] sm:$0xf]
    %v6678 = vld [vmem:[#allocation10 + $0x98] sm:$0xf]
    %v6679 = vld [vmem:[#allocation10 + $0x9c] sm:$0xf]
    %v6680 = vld [vmem:[#allocation10 + $0xa0] sm:$0xf]
    %v6681 = vld [vmem:[#allocation10 + $0xa4] sm:$0xf]
    %v6682 = vld [vmem:[#allocation10 + $0xa8] sm:$0xf]
    %v6683 = vld [vmem:[#allocation10 + $0xac] sm:$0xf]
    %v6684 = vld [vmem:[#allocation10 + $0xb0] sm:$0xf]
    %v6685 = vld [vmem:[#allocation10 + $0xb4] sm:$0xf]
    %v6686 = vld [vmem:[#allocation10 + $0xb8] sm:$0xf]
    %v6687 = vld [vmem:[#allocation10 + $0xbc] sm:$0xf]
    %v6688 = vld [vmem:[#allocation10 + $0xc0] sm:$0xf]
    %v6689 = vld [vmem:[#allocation10 + $0xc4] sm:$0xf]
    %v6690 = vld [vmem:[#allocation10 + $0xc8] sm:$0xf]
    %v6691 = vld [vmem:[#allocation10 + $0xcc] sm:$0xf]
    %v6692 = vld [vmem:[#allocation10 + $0xd0] sm:$0xf]
    %v6693 = vld [vmem:[#allocation10 + $0xd4] sm:$0xf]
    %v6694 = vld [vmem:[#allocation10 + $0xd8] sm:$0xf]
    %v6695 = vld [vmem:[#allocation10 + $0xdc] sm:$0xf]
    %v6696 = vld [vmem:[#allocation10 + $0xe0] sm:$0xf]
    %v6697 = vld [vmem:[#allocation10 + $0xe4] sm:$0xf]
    %v6698 = vld [vmem:[#allocation10 + $0xe8] sm:$0xf]
    %v6699 = vld [vmem:[#allocation10 + $0xec] sm:$0xf]
    %v6700 = vld [vmem:[#allocation10 + $0xf0] sm:$0xf]
    %v6701 = vld [vmem:[#allocation10 + $0xf4] sm:$0xf]
    %v6702 = vld [vmem:[#allocation10 + $0xf8] sm:$0xf]
    %v6703 = vld [vmem:[#allocation10 + $0xfc] sm:$0xf]
    %v6704 = vld [vmem:[%s8] sm:$0x1]
    %v6706 = vlaneseq
    %v6707 = vshrl.u32 %v6706, 7
    %v6708 = vsub.s32 0, %v6707
    %v6709 = vrot.slane %v6704, %v6708
    %v6775 = vunpack.c.l.b16 %v6640
    %v6776 = vunpack.c.l.b16 %v6641
    %v6777 = vunpack.c.l.b16 %v6642
    %v6778 = vunpack.c.l.b16 %v6643
    %v6779 = vunpack.c.l.b16 %v6644
    %v6780 = vunpack.c.l.b16 %v6645
    %v6781 = vunpack.c.l.b16 %v6646
    %v6782 = vunpack.c.l.b16 %v6647
    %v6783 = vunpack.c.l.b16 %v6648
    %v6784 = vunpack.c.l.b16 %v6649
    %v6785 = vunpack.c.l.b16 %v6650
    %v6786 = vunpack.c.l.b16 %v6651
    %v6787 = vunpack.c.l.b16 %v6652
    %v6788 = vunpack.c.l.b16 %v6653
    %v6789 = vunpack.c.l.b16 %v6654
    %v6790 = vunpack.c.l.b16 %v6655
    %v6791 = vunpack.c.l.b16 %v6656
    %v6792 = vunpack.c.l.b16 %v6657
    %v6793 = vunpack.c.l.b16 %v6658
    %v6794 = vunpack.c.l.b16 %v6659
    %v6795 = vunpack.c.l.b16 %v6660
    %v6796 = vunpack.c.l.b16 %v6661
    %v6797 = vunpack.c.l.b16 %v6662
    %v6798 = vunpack.c.l.b16 %v6663
    %v6799 = vunpack.c.l.b16 %v6664
    %v6800 = vunpack.c.l.b16 %v6665
    %v6801 = vunpack.c.l.b16 %v6666
    %v6802 = vunpack.c.l.b16 %v6667
    %v6803 = vunpack.c.l.b16 %v6668
    %v6804 = vunpack.c.l.b16 %v6669
    %v6805 = vunpack.c.l.b16 %v6670
    %v6806 = vunpack.c.l.b16 %v6671
    %v6807 = vunpack.c.l.b16 %v6672
    %v6808 = vunpack.c.l.b16 %v6673
    %v6809 = vunpack.c.l.b16 %v6674
    %v6810 = vunpack.c.l.b16 %v6675
    %v6811 = vunpack.c.l.b16 %v6676
    %v6812 = vunpack.c.l.b16 %v6677
    %v6813 = vunpack.c.l.b16 %v6678
    %v6814 = vunpack.c.l.b16 %v6679
    %v6815 = vunpack.c.l.b16 %v6680
    %v6816 = vunpack.c.l.b16 %v6681
    %v6817 = vunpack.c.l.b16 %v6682
    %v6818 = vunpack.c.l.b16 %v6683
    %v6819 = vunpack.c.l.b16 %v6684
    %v6820 = vunpack.c.l.b16 %v6685
    %v6821 = vunpack.c.l.b16 %v6686
    %v6822 = vunpack.c.l.b16 %v6687
    %v6823 = vunpack.c.l.b16 %v6688
    %v6824 = vunpack.c.l.b16 %v6689
    %v6825 = vunpack.c.l.b16 %v6690
    %v6826 = vunpack.c.l.b16 %v6691
    %v6827 = vunpack.c.l.b16 %v6692
    %v6828 = vunpack.c.l.b16 %v6693
    %v6829 = vunpack.c.l.b16 %v6694
    %v6830 = vunpack.c.l.b16 %v6695
    %v6831 = vunpack.c.l.b16 %v6696
    %v6832 = vunpack.c.l.b16 %v6697
    %v6833 = vunpack.c.l.b16 %v6698
    %v6834 = vunpack.c.l.b16 %v6699
    %v6835 = vunpack.c.l.b16 %v6700
    %v6836 = vunpack.c.l.b16 %v6701
    %v6837 = vunpack.c.l.b16 %v6702
    %v6838 = vunpack.c.l.b16 %v6703
    %v6839 = vpack.c.b16 %v6776, %v6775
    %v6840 = vpack.c.b16 %v6778, %v6777
    %v6841 = vpack.c.b16 %v6780, %v6779
    %v6842 = vpack.c.b16 %v6782, %v6781
    %v6843 = vpack.c.b16 %v6784, %v6783
    %v6844 = vpack.c.b16 %v6786, %v6785
    %v6845 = vpack.c.b16 %v6788, %v6787
    %v6846 = vpack.c.b16 %v6790, %v6789
    %v6847 = vpack.c.b16 %v6792, %v6791
    %v6848 = vpack.c.b16 %v6794, %v6793
    %v6849 = vpack.c.b16 %v6796, %v6795
    %v6850 = vpack.c.b16 %v6798, %v6797
    %v6851 = vpack.c.b16 %v6800, %v6799
    %v6852 = vpack.c.b16 %v6802, %v6801
    %v6853 = vpack.c.b16 %v6804, %v6803
    %v6854 = vpack.c.b16 %v6806, %v6805
    %v6855 = vpack.c.b16 %v6808, %v6807
    %v6856 = vpack.c.b16 %v6810, %v6809
    %v6857 = vpack.c.b16 %v6812, %v6811
    %v6858 = vpack.c.b16 %v6814, %v6813
    %v6859 = vpack.c.b16 %v6816, %v6815
    %v6860 = vpack.c.b16 %v6818, %v6817
    %v6861 = vpack.c.b16 %v6820, %v6819
    %v6862 = vpack.c.b16 %v6822, %v6821
    %v6863 = vpack.c.b16 %v6824, %v6823
    %v6864 = vpack.c.b16 %v6826, %v6825
    %v6865 = vpack.c.b16 %v6828, %v6827
    %v6866 = vpack.c.b16 %v6830, %v6829
    %v6867 = vpack.c.b16 %v6832, %v6831
    %v6868 = vpack.c.b16 %v6834, %v6833
    %v6869 = vpack.c.b16 %v6836, %v6835
    %v6870 = vpack.c.b16 %v6838, %v6837
    %6903 = vmatprep.subr.bf16.mxu0 0
    %6904 = vmatpush1.bf16.msra.mxu0 %v6839
    %6905 = vmatprep.subr.bf16.mxu0 0
    %6906 = vmatpush1.bf16.msra.mxu0 %v6840
    %6907 = vmatprep.subr.bf16.mxu0 0
    %6908 = vmatpush1.bf16.msra.mxu0 %v6841
    %6909 = vmatprep.subr.bf16.mxu0 0
    %6910 = vmatpush1.bf16.msra.mxu0 %v6842
    %6911 = vmatprep.subr.bf16.mxu0 0
    %6912 = vmatpush1.bf16.msra.mxu0 %v6843
    %6913 = vmatprep.subr.bf16.mxu0 0
    %6914 = vmatpush1.bf16.msra.mxu0 %v6844
    %6915 = vmatprep.subr.bf16.mxu0 0
    %6916 = vmatpush1.bf16.msra.mxu0 %v6845
    %6917 = vmatprep.subr.bf16.mxu0 0
    %6918 = vmatpush1.bf16.msra.mxu0 %v6846
    %6919 = vmatprep.subr.bf16.mxu0 0
    %6920 = vmatpush1.bf16.msra.mxu0 %v6847
    %6921 = vmatprep.subr.bf16.mxu0 0
    %6922 = vmatpush1.bf16.msra.mxu0 %v6848
    %6923 = vmatprep.subr.bf16.mxu0 0
    %6924 = vmatpush1.bf16.msra.mxu0 %v6849
    %6925 = vmatprep.subr.bf16.mxu0 0
    %6926 = vmatpush1.bf16.msra.mxu0 %v6850
    %6927 = vmatprep.subr.bf16.mxu0 0
    %6928 = vmatpush1.bf16.msra.mxu0 %v6851
    %6929 = vmatprep.subr.bf16.mxu0 0
    %6930 = vmatpush1.bf16.msra.mxu0 %v6852
    %6931 = vmatprep.subr.bf16.mxu0 0
    %6932 = vmatpush1.bf16.msra.mxu0 %v6853
    %6933 = vmatprep.subr.bf16.mxu0 0
    %6934 = vmatpush1.bf16.msra.mxu0 %v6854
    %6935 = vmatprep.mubr.bf16.mxu0 %v6609
    %6936 = vmatmul.mubr.bf16.gmra.mrb[0].mxu0 %v6608
    %v6937 = vpop.f32.mrb[0].mxu0
    %v6938 = vadd.f32 %v6709, %v6937
    %v6939 = vpop.f32.mrb[0].mxu0
    %v6940 = vpop.f32.mrb[0].mxu0
    %v6941 = vadd.f32 %v6709, %v6940
    %v6942 = vpop.f32.mrb[0].mxu0
    %6943 = vmatprep.mubr.bf16.mxu0 %v6613
    %6944 = vmatmul.mubr.bf16.gmra.mrb[0].mxu0 %v6612
    %v6945 = vpop.f32.mrb[0].mxu0
    %v6946 = vadd.f32 %v6709, %v6945
    %v6947 = vpop.f32.mrb[0].mxu0
    %v6948 = vpop.f32.mrb[0].mxu0
    %v6949 = vadd.f32 %v6709, %v6948
    %v6950 = vpop.f32.mrb[0].mxu0
    %6951 = vmatprep.mubr.bf16.mxu0 %v6617
    %6952 = vmatmul.mubr.bf16.gmra.mrb[0].mxu0 %v6616
    %v6953 = vpop.f32.mrb[0].mxu0
    %v6954 = vadd.f32 %v6709, %v6953
    %v6955 = vpop.f32.mrb[0].mxu0
    %v6956 = vpop.f32.mrb[0].mxu0
    %v6957 = vadd.f32 %v6709, %v6956
    %v6958 = vpop.f32.mrb[0].mxu0
    %6959 = vmatprep.mubr.bf16.mxu0 %v6621
    %6960 = vmatmul.mubr.bf16.gmra.mrb[0].mxu0 %v6620
    %v6961 = vpop.f32.mrb[0].mxu0
    %v6962 = vadd.f32 %v6709, %v6961
    %v6963 = vpop.f32.mrb[0].mxu0
    %v6964 = vpop.f32.mrb[0].mxu0
    %v6965 = vadd.f32 %v6709, %v6964
    %v6966 = vpop.f32.mrb[0].mxu0
    %6967 = vmatprep.mubr.bf16.mxu0 %v6625
    %6968 = vmatmul.mubr.bf16.gmra.mrb[0].mxu0 %v6624
    %v6969 = vpop.f32.mrb[0].mxu0
    %v6970 = vadd.f32 %v6709, %v6969
    %v6971 = vpop.f32.mrb[0].mxu0
    %v6972 = vpop.f32.mrb[0].mxu0
    %v6973 = vadd.f32 %v6709, %v6972
    %v6974 = vpop.f32.mrb[0].mxu0
    %6975 = vmatprep.mubr.bf16.mxu0 %v6629
    %6976 = vmatmul.mubr.bf16.gmra.mrb[0].mxu0 %v6628
    %v6977 = vpop.f32.mrb[0].mxu0
    %v6978 = vadd.f32 %v6709, %v6977
    %v6979 = vpop.f32.mrb[0].mxu0
    %v6980 = vpop.f32.mrb[0].mxu0
    %v6981 = vadd.f32 %v6709, %v6980
    %v6982 = vpop.f32.mrb[0].mxu0
    %6983 = vmatprep.mubr.bf16.mxu0 %v6633
    %6984 = vmatmul.mubr.bf16.gmra.mrb[0].mxu0 %v6632
    %v6985 = vpop.f32.mrb[0].mxu0
    %v6986 = vadd.f32 %v6709, %v6985
    %v6987 = vpop.f32.mrb[0].mxu0
    %v6988 = vpop.f32.mrb[0].mxu0
    %v6989 = vadd.f32 %v6709, %v6988
    %v6990 = vpop.f32.mrb[0].mxu0
    %6991 = vmatprep.mubr.bf16.mxu0 %v6637
    %6992 = vmatmul.mubr.bf16.gmra.mrb[0].mxu0 %v6636
    %v6993 = vpop.f32.mrb[0].mxu0
    %v6994 = vadd.f32 %v6709, %v6993
    %v6995 = vpop.f32.mrb[0].mxu0
    %v6996 = vpop.f32.mrb[0].mxu0
    %v6997 = vadd.f32 %v6709, %v6996
    %v6998 = vpop.f32.mrb[0].mxu0
    %6999 = vdwg.mxu0
    %7000 = vmatprep.subr.bf16.mxu0 0
    %7001 = vmatpush1.bf16.msra.mxu0 %v6855
    %7002 = vmatprep.subr.bf16.mxu0 0
    %7003 = vmatpush1.bf16.msra.mxu0 %v6856
    %7004 = vmatprep.subr.bf16.mxu0 0
    %7005 = vmatpush1.bf16.msra.mxu0 %v6857
    %7006 = vmatprep.subr.bf16.mxu0 0
    %7007 = vmatpush1.bf16.msra.mxu0 %v6858
    %7008 = vmatprep.subr.bf16.mxu0 0
    %7009 = vmatpush1.bf16.msra.mxu0 %v6859
    %7010 = vmatprep.subr.bf16.mxu0 0
    %7011 = vmatpush1.bf16.msra.mxu0 %v6860
    %7012 = vmatprep.subr.bf16.mxu0 0
    %7013 = vmatpush1.bf16.msra.mxu0 %v6861
    %7014 = vmatprep.subr.bf16.mxu0 0
    %7015 = vmatpush1.bf16.msra.mxu0 %v6862
    %7016 = vmatprep.subr.bf16.mxu0 0
    %7017 = vmatpush1.bf16.msra.mxu0 %v6863
    %7018 = vmatprep.subr.bf16.mxu0 0
    %7019 = vmatpush1.bf16.msra.mxu0 %v6864
    %7020 = vmatprep.subr.bf16.mxu0 0
    %7021 = vmatpush1.bf16.msra.mxu0 %v6865
    %7022 = vmatprep.subr.bf16.mxu0 0
    %7023 = vmatpush1.bf16.msra.mxu0 %v6866
    %7024 = vmatprep.subr.bf16.mxu0 0
    %7025 = vmatpush1.bf16.msra.mxu0 %v6867
    %7026 = vmatprep.subr.bf16.mxu0 0
    %7027 = vmatpush1.bf16.msra.mxu0 %v6868
    %7028 = vmatprep.subr.bf16.mxu0 0
    %7029 = vmatpush1.bf16.msra.mxu0 %v6869
    %7030 = vmatprep.subr.bf16.mxu0 0
    %7031 = vmatpush1.bf16.msra.mxu0 %v6870
    %7032 = vmatprep.mubr.bf16.mxu0 %v6611
    %7033 = vmatmul.mubr.bf16.gmra.mrb[0].mxu0 %v6610
    %v7034 = vpop.f32.mrb[0].mxu0
    %v7035 = vadd.f32 %v6938, %v7034
    %v7036 = vpop.f32.mrb[0].mxu0
    %v7037 = vpop.f32.mrb[0].mxu0
    %v7038 = vadd.f32 %v6941, %v7037
    %v7039 = vpop.f32.mrb[0].mxu0
    %7040 = vmatprep.mubr.bf16.mxu0 %v6615
    %7041 = vmatmul.mubr.bf16.gmra.mrb[0].mxu0 %v6614
    %v7042 = vpop.f32.mrb[0].mxu0
    %v7043 = vadd.f32 %v6946, %v7042
    %v7044 = vpop.f32.mrb[0].mxu0
    %v7045 = vpop.f32.mrb[0].mxu0
    %v7046 = vadd.f32 %v6949, %v7045
    %v7047 = vpop.f32.mrb[0].mxu0
    %7048 = vmatprep.mubr.bf16.mxu0 %v6619
    %7049 = vmatmul.mubr.bf16.gmra.mrb[0].mxu0 %v6618
    %v7050 = vpop.f32.mrb[0].mxu0
    %v7051 = vadd.f32 %v6954, %v7050
    %v7052 = vpop.f32.mrb[0].mxu0
    %v7053 = vpop.f32.mrb[0].mxu0
    %v7054 = vadd.f32 %v6957, %v7053
    %v7055 = vpop.f32.mrb[0].mxu0
    %7056 = vmatprep.mubr.bf16.mxu0 %v6623
    %7057 = vmatmul.mubr.bf16.gmra.mrb[0].mxu0 %v6622
    %v7058 = vpop.f32.mrb[0].mxu0
    %v7059 = vadd.f32 %v6962, %v7058
    %v7060 = vpop.f32.mrb[0].mxu0
    %v7061 = vpop.f32.mrb[0].mxu0
    %v7062 = vadd.f32 %v6965, %v7061
    %v7063 = vpop.f32.mrb[0].mxu0
    %7064 = vmatprep.mubr.bf16.mxu0 %v6627
    %7065 = vmatmul.mubr.bf16.gmra.mrb[0].mxu0 %v6626
    %v7066 = vpop.f32.mrb[0].mxu0
    %v7067 = vadd.f32 %v6970, %v7066
    %v7068 = vpop.f32.mrb[0].mxu0
    %v7069 = vpop.f32.mrb[0].mxu0
    %v7070 = vadd.f32 %v6973, %v7069
    %v7071 = vpop.f32.mrb[0].mxu0
    %7072 = vmatprep.mubr.bf16.mxu0 %v6631
    %7073 = vmatmul.mubr.bf16.gmra.mrb[0].mxu0 %v6630
    %v7074 = vpop.f32.mrb[0].mxu0
    %v7075 = vadd.f32 %v6978, %v7074
    %v7076 = vpop.f32.mrb[0].mxu0
    %v7077 = vpop.f32.mrb[0].mxu0
    %v7078 = vadd.f32 %v6981, %v7077
    %v7079 = vpop.f32.mrb[0].mxu0
    %7080 = vmatprep.mubr.bf16.mxu0 %v6635
    %7081 = vmatmul.mubr.bf16.gmra.mrb[0].mxu0 %v6634
    %v7082 = vpop.f32.mrb[0].mxu0
    %v7083 = vadd.f32 %v6986, %v7082
    %v7084 = vpop.f32.mrb[0].mxu0
    %v7085 = vpop.f32.mrb[0].mxu0
    %v7086 = vadd.f32 %v6989, %v7085
    %v7087 = vpop.f32.mrb[0].mxu0
    %7088 = vmatprep.mubr.bf16.mxu0 %v6639
    %7089 = vmatmul.mubr.bf16.gmra.mrb[0].mxu0 %v6638
    %v7090 = vpop.f32.mrb[0].mxu0
    %v7091 = vadd.f32 %v6994, %v7090
    %v7092 = vpop.f32.mrb[0].mxu0
    %v7093 = vpop.f32.mrb[0].mxu0
    %v7094 = vadd.f32 %v6997, %v7093
    %v7095 = vpop.f32.mrb[0].mxu0
    %7096 = vdwg.mxu0
    %v7097 = vmax.f32 %v7035, 0.0
    %v7098 = vmax.f32 %v7038, 0.0
    %v7099 = vmax.f32 %v7043, 0.0
    %v7100 = vmax.f32 %v7046, 0.0
    %v7101 = vmax.f32 %v7051, 0.0
    %v7102 = vmax.f32 %v7054, 0.0
    %v7103 = vmax.f32 %v7059, 0.0
    %v7104 = vmax.f32 %v7062, 0.0
    %v7105 = vmax.f32 %v7067, 0.0
    %v7106 = vmax.f32 %v7070, 0.0
    %v7107 = vmax.f32 %v7075, 0.0
    %v7108 = vmax.f32 %v7078, 0.0
    %v7109 = vmax.f32 %v7083, 0.0
    %v7110 = vmax.f32 %v7086, 0.0
    %v7111 = vmax.f32 %v7091, 0.0
    %v7112 = vmax.f32 %v7094, 0.0
    %7113 = vst [vmem:[#allocation11] sm:$0xff] %v7097
    %7114 = vst [vmem:[#allocation11 + $0x8] sm:$0xff] %v7098
    %7115 = vst [vmem:[#allocation11 + $0x10] sm:$0xff] %v7099
    %7116 = vst [vmem:[#allocation11 + $0x18] sm:$0xff] %v7100
    %7117 = vst [vmem:[#allocation11 + $0x20] sm:$0xff] %v7101
    %7118 = vst [vmem:[#allocation11 + $0x28] sm:$0xff] %v7102
    %7119 = vst [vmem:[#allocation11 + $0x30] sm:$0xff] %v7103
    %7120 = vst [vmem:[#allocation11 + $0x38] sm:$0xff] %v7104
    %7121 = vst [vmem:[#allocation11 + $0x40] sm:$0xff] %v7105
    %7122 = vst [vmem:[#allocation11 + $0x48] sm:$0xff] %v7106
    %7123 = vst [vmem:[#allocation11 + $0x50] sm:$0xff] %v7107
    %7124 = vst [vmem:[#allocation11 + $0x58] sm:$0xff] %v7108
    %7125 = vst [vmem:[#allocation11 + $0x60] sm:$0xff] %v7109
    %7126 = vst [vmem:[#allocation11 + $0x68] sm:$0xff] %v7110
    %7127 = vst [vmem:[#allocation11 + $0x70] sm:$0xff] %v7111
    %7128 = vst [vmem:[#allocation11 + $0x78] sm:$0xff] %v7112
    // Predicated region
    $region58: #{tpu_custom_call.1} parent=1 // pred_check
      _
    $region59: #{tpu_custom_call.1} parent=1 // pred_check_branch
      %7130 = sbr.rel (0) target = $region61
    $region60: #{tpu_custom_call.1} parent=1 // pred_region
      %s7132 = ssub.s32 2048, 2048
      %7133 = vsyncadd [#allocation4], %s7132
      %s7134 = sshll.u32 [#allocation11], 4
      %s7135 = int_to_ptr.vmem [resolvable:$true] %s7134
      %7140 = dma.vmem_to_hbm [thread:$0]  %s7135, 2048, %s9, [#allocation4], 128, 128, 8
    $region61: #{tpu_custom_call.1} parent=1 // pred_fallthru
      _
    // Predicated region
    $region62: #{tpu_custom_call.1} parent=1 // pred_check
      _
    $region63: #{tpu_custom_call.1} parent=1 // pred_check_branch
      %7142 = sbr.rel (0) target = $region65
    $region64: #{tpu_custom_call.1} parent=1 // pred_region
      %7143 = dma.done [#allocation4], 2048
    $region65: #{tpu_custom_call.1} parent=1 // pred_fallthru
      _
    %7144 = vsyncpa [#allocation3], 1
    %7145 = vsyncpa [#allocation6], 1
    %7146 = vsyncpa [#allocation9], 1
    %7147 = vsyncpa [#allocation4], 1

</llo_original>
